<compile_context>
chip_gen: v7x
topology: tpu7x:2x2x1
jax: 0.10.0
libtpu: 0.0.40
codegen_flags: <defaults>
</compile_context>

<pallas_src>
import jax
import jax.numpy as jnp
import numpy as np
from jax.experimental import pallas as pl
from jax.experimental.pallas import tpu as pltpu


def _audio_block_kernel(x_ref, rh_ref, bh_ref, rt5_ref, bt5_ref,
                        rt3_ref, bt3_ref, rl_ref, bl_ref, o_ref):
    Bblk, H, WCin = x_ref.shape
    WCout = o_ref.shape[-1]
    M = Bblk * H                                   # MXU M dimension (batch*H)

    x = x_ref[...]                                 # (Bblk, H, W*Cin) bf16
    zr = jnp.zeros((Bblk, 2, WCin), x.dtype)
    xp = jnp.concatenate([zr, x, zr], axis=1)      # per-item H zero-pad in VMEM

    # H-convs ((5,1) and (3,1)): 5 per-tap lane-dense dots accumulated in f32.
    # Both branches share each dot (rh tap blocks are [m5 | m3] column-wise).
    y = jnp.zeros((M, 2 * WCout), jnp.float32)
    for k in range(5):
        xk = xp[:, k:k + H, :].reshape(M, WCin)
        y = y + jnp.dot(xk, rh_ref[k], preferred_element_type=jnp.float32)
    y = jnp.maximum(y + bh_ref[...], 0.0)          # (M, 2*W*Cout)

    y5 = y[:, :WCout].astype(jnp.bfloat16)         # m5 branch
    y3 = y[:, WCout:].astype(jnp.bfloat16)         # m3 branch

    # (1,5)/(1,3) W-convs as banded lane-dense matmuls (padding lives in band).
    x5 = jnp.maximum(
        jnp.dot(y5, rt5_ref[...], preferred_element_type=jnp.float32)
        + bt5_ref[...], 0.0)
    x3 = jnp.maximum(
        jnp.dot(y3, rt3_ref[...], preferred_element_type=jnp.float32)
        + bt3_ref[...], 0.0)

    s = (x5 + x3).astype(jnp.bfloat16)
    out = jnp.maximum(
        jnp.dot(s, rl_ref[...], preferred_element_type=jnp.float32)
        + bl_ref[...], 0.0)

    # Lane-dense bf16 store (W*Cout lanes, multiple of 128).
    o_ref[...] = out.astype(o_ref.dtype).reshape(Bblk, H, WCout)


def _pick_block_batch(B, H, target_rows=256):
    """Largest divisor of B with Bblk*H <= target_rows (fills MXU M dim)."""
    best = 1
    for d in range(1, B + 1):
        if B % d == 0 and d * H <= target_rows:
            best = d
    return best


def audio_block(x_nchw, prepared, block_batch=None):
    """Fused Audio_Block forward. x_nchw: (B, Cin, H, W) -> (B, Cout, H, W) bf16."""
    rh, bh, rt5, bt5, rt3, bt3, rl, bl = prepared
    B, Cin, H, W = x_nchw.shape
    WCin = W * Cin
    WCout = rt5.shape[1]
    Cout = WCout // W

    if block_batch is None:
        block_batch = _pick_block_batch(B, H)
    assert B % block_batch == 0
    grid_b = B // block_batch

    # bf16 BEFORE the layout transpose -> halves the pre-kernel HBM pass.
    x_lane = jnp.transpose(x_nchw.astype(jnp.bfloat16),
                           (0, 2, 3, 1)).reshape(B, H, WCin)

    flops = 2 * B * H * WCout * (5 * WCin * 2 + 3 * WCout)
    bytes_accessed = (B * H * WCin * 2 + B * H * WCout * 2
                      + (5 * WCin * 2 * WCout + 3 * WCout * WCout) * 2
                      + (2 * WCout + 3 * WCout) * 4)

    w_shapes = [rh.shape, bh.shape, rt5.shape, bt5.shape,
                rt3.shape, bt3.shape, rl.shape, bl.shape]

    def _const_specs(single_buffer):
        specs = []
        for s in w_shapes:
            idx = (lambda n: (lambda b: (0,) * n))(len(s))
            if single_buffer:
                # Constant across the grid -> keep ONE VMEM copy (no dbl-buffer).
                specs.append(pl.BlockSpec(s, idx, pipeline_mode=pl.Buffered(1)))
            else:
                specs.append(pl.BlockSpec(s, idx))
        return specs

    def run(single_buffer):
        return pl.pallas_call(
            _audio_block_kernel,
            out_shape=jax.ShapeDtypeStruct((B, H, WCout), jnp.bfloat16),
            grid_spec=pltpu.PrefetchScalarGridSpec(
                num_scalar_prefetch=0,
                grid=(grid_b,),
                in_specs=[pl.BlockSpec((block_batch, H, WCin),
                                       lambda b: (b, 0, 0))]
                         + _const_specs(single_buffer),
                out_specs=pl.BlockSpec((block_batch, H, WCout),
                                       lambda b: (b, 0, 0)),
            ),
            compiler_params=pltpu.CompilerParams(
                dimension_semantics=("parallel",),
                vmem_limit_bytes=32 * 1024 * 1024),
            cost_estimate=pl.CostEstimate(
                flops=int(flops), transcendentals=0,
                bytes_accessed=int(bytes_accessed)),
        )(x_lane, rh, bh, rt5, bt5, rt3, bt3, rl, bl)

    try:
        out = run(True)
    except Exception:
        # Fallback if this JAX build rejects single-buffering on pallas_call specs.
        out = run(False)

    # (B, H, W*Cout) -> NCHW in bf16 (reshape free; one small transpose remains).
    return jnp.transpose(out.reshape(B, H, W, Cout), (0, 3, 1, 2))


def prepare_params(raw_params, W):
    """Host-side prep: fold BN into weights and build lane-dense (banded) RHS."""
    m3_w, t3_w, m5_w, t5_w, last_w, sb = raw_params
    Cin, Cout = m3_w.shape[1], m3_w.shape[2]

    # Fold BN scale into the conv output channels (eval-mode BN).
    m3_s = m3_w * sb[0, 0]
    t3_s = t3_w * sb[1, 0]
    m5_s = m5_w * sb[2, 0]
    t5_s = t5_w * sb[3, 0]
    last_s = last_w * sb[4, 0]

    eyeW = jnp.eye(W, dtype=jnp.float32)
    zblk = jnp.zeros((W * Cin, W * Cout), jnp.float32)

    # Per-tap fused H-conv RHS: rows = (w, ci), cols = (branch, w, co).
    taps = []
    for k in range(5):
        b5 = jnp.kron(eyeW, m5_s[k])
        b3 = jnp.kron(eyeW, m3_s[k - 1]) if 1 <= k <= 3 else zblk
        taps.append(jnp.concatenate([b5, b3], axis=1))
    rh = jnp.stack(taps, axis=0).astype(jnp.bfloat16)     # (5, W*Cin, 2*W*Cout)
    bh = jnp.concatenate([jnp.tile(sb[2, 1], W), jnp.tile(sb[0, 1], W)])[None, :]

    # Banded W-conv RHS: R[w'*C+ci, w*C+co] = t[w'-w+pad, ci, co] inside the band.
    def band(t, pad):
        return sum(jnp.kron(jnp.eye(W, k=-(k - pad), dtype=jnp.float32), t[k])
                   for k in range(t.shape[0]))

    rt5 = band(t5_s, 2).astype(jnp.bfloat16)               # (W*Cout, W*Cout)
    rt3 = band(t3_s, 1).astype(jnp.bfloat16)
    rl = jnp.kron(eyeW, last_s).astype(jnp.bfloat16)       # block-diag 1x1 conv
    bt5 = jnp.tile(sb[3, 1], W)[None, :]
    bt3 = jnp.tile(sb[1, 1], W)[None, :]
    bl = jnp.tile(sb[4, 1], W)[None, :]
    return (rh, bh, rt5, bt5, rt3, bt3, rl, bl)


def init_params(key, in_channels, out_channels):
    """Deterministic synthetic parameters (raw, PyTorch-equivalent).

    Conv weights are (taps, Cin, Cout); BN is folded (eval mode):
    sb[i,0] = gamma/sqrt(var+eps), sb[i,1] = beta - mean*sb[i,0].
    """
    keys = jax.random.split(key, 10)

    def w(k, shape, fan_in):
        return jax.random.normal(k, shape, jnp.float32) / np.sqrt(fan_in)

    m3_w = w(keys[0], (3, in_channels, out_channels), 3 * in_channels)
    t3_w = w(keys[1], (3, out_channels, out_channels), 3 * out_channels)
    m5_w = w(keys[2], (5, in_channels, out_channels), 5 * in_channels)
    t5_w = w(keys[3], (5, out_channels, out_channels), 5 * out_channels)
    last_w = w(keys[4], (out_channels, out_channels), out_channels)

    eps = 1e-3
    scales, biases = [], []
    for i in range(5):
        kg, kb, km, kv = jax.random.split(keys[5 + i], 4)
        gamma = 1.0 + 0.1 * jax.random.normal(kg, (out_channels,), jnp.float32)
        beta = 0.1 * jax.random.normal(kb, (out_channels,), jnp.float32)
        mean = 0.1 * jax.random.normal(km, (out_channels,), jnp.float32)
        var = 1.0 + 0.1 * jax.random.uniform(kv, (out_channels,), jnp.float32)
        scale = gamma / jnp.sqrt(var + eps)
        bias = beta - mean * scale
        scales.append(scale)
        biases.append(bias)
    sb = jnp.stack([jnp.stack([s, b]) for s, b in zip(scales, biases)])  # (5,2,C)

    return (m3_w, t3_w, m5_w, t5_w, last_w, sb)


def reference(x_nchw, params):
    """Plain-JAX f32 reference (lax conv) for correctness checking."""
    m3_w, t3_w, m5_w, t5_w, last_w, sb = params
    x = jnp.transpose(x_nchw, (0, 2, 3, 1)).astype(jnp.float32)
    dn = ('NHWC', 'HWIO', 'NHWC')

    def conv_h(inp, wt, pad):
        k, ci, co = wt.shape
        return jax.lax.conv_general_dilated(
            inp, wt.reshape(k, 1, ci, co), (1, 1),
            ((pad, pad), (0, 0)), dimension_numbers=dn)

    def conv_w(inp, wt, pad):
        k, ci, co = wt.shape
        return jax.lax.conv_general_dilated(
            inp, wt.reshape(1, k, ci, co), (1, 1),
            ((0, 0), (pad, pad)), dimension_numbers=dn)

    def bn_relu(y, i):
        return jnp.maximum(y * sb[i, 0] + sb[i, 1], 0.0)

    y3 = bn_relu(conv_h(x, m3_w, 1), 0)
    y3 = bn_relu(conv_w(y3, t3_w, 1), 1)
    y5 = bn_relu(conv_h(x, m5_w, 2), 2)
    y5 = bn_relu(conv_w(y5, t5_w, 2), 3)
    s = y3 + y5
    out = bn_relu(jnp.einsum('nhwc,cd->nhwd', s, last_w), 4)
    return jnp.transpose(out, (0, 3, 1, 2))


if __name__ == "__main__":
    key = jax.random.PRNGKey(0)
    kx, kp = jax.random.split(key)

    B, Cin, Cout, H, W = 2, 4, 32, 16, 16
    x = jax.random.normal(kx, (B, Cin, H, W), jnp.float32)
    raw = init_params(kp, Cin, Cout)
    prepared = prepare_params(raw, W)

    out = jax.block_until_ready(audio_block(x, prepared))

    ref = reference(x, raw)
    assert out.shape == (B, Cout, H, W)
    # bf16 MXU operands + bf16 output (f32 accumulation) vs pure-f32 reference.
    np.testing.assert_allclose(np.asarray(out.astype(jnp.float32)),
                               np.asarray(ref), rtol=3e-2, atol=3e-2)
    print("KERNEL_OK")
</pallas_src>

<mosaic_0001>
module attributes {stable_mosaic.version = 11 : i64} {
  func.func @_audio_block_kernel(%arg0: i32, %arg1: memref<2x16x64xbf16, #tpu.memory_space<vmem>>, %arg2: memref<5x64x1024xbf16, #tpu.memory_space<vmem>>, %arg3: memref<1x1024xf32, #tpu.memory_space<vmem>>, %arg4: memref<512x512xbf16, #tpu.memory_space<vmem>>, %arg5: memref<1x512xf32, #tpu.memory_space<vmem>>, %arg6: memref<512x512xbf16, #tpu.memory_space<vmem>>, %arg7: memref<1x512xf32, #tpu.memory_space<vmem>>, %arg8: memref<512x512xbf16, #tpu.memory_space<vmem>>, %arg9: memref<1x512xf32, #tpu.memory_space<vmem>>, %arg10: memref<2x16x512xbf16, #tpu.memory_space<vmem>>) attributes {dimension_semantics = [#tpu.dimension_semantics<parallel>], iteration_bounds = array<i64: 1>, scalar_prefetch = 0 : i64, scratch_operands = 0 : i64, tpu.core_type = #tpu.core_type<tc>, window_params = [{transform_indices = @transform_0, window_bounds = array<i64: 2, 16, 64>}, {pipeline_mode = #tpu.pipeline_mode<synchronous>, transform_indices = @transform_1, window_bounds = array<i64: 5, 64, 1024>}, {pipeline_mode = #tpu.pipeline_mode<synchronous>, transform_indices = @transform_2, window_bounds = array<i64: 1, 1024>}, {pipeline_mode = #tpu.pipeline_mode<synchronous>, transform_indices = @transform_3, window_bounds = array<i64: 512, 512>}, {pipeline_mode = #tpu.pipeline_mode<synchronous>, transform_indices = @transform_4, window_bounds = array<i64: 1, 512>}, {pipeline_mode = #tpu.pipeline_mode<synchronous>, transform_indices = @transform_5, window_bounds = array<i64: 512, 512>}, {pipeline_mode = #tpu.pipeline_mode<synchronous>, transform_indices = @transform_6, window_bounds = array<i64: 1, 512>}, {pipeline_mode = #tpu.pipeline_mode<synchronous>, transform_indices = @transform_7, window_bounds = array<i64: 512, 512>}, {pipeline_mode = #tpu.pipeline_mode<synchronous>, transform_indices = @transform_8, window_bounds = array<i64: 1, 512>}, {transform_indices = @transform_9, window_bounds = array<i64: 2, 16, 512>}]} {
    %c0 = arith.constant 0 : index
    %c0_0 = arith.constant 0 : index
    %c0_1 = arith.constant 0 : index
    %0 = vector.load %arg1[%c0, %c0_0, %c0_1] : memref<2x16x64xbf16, #tpu.memory_space<vmem>>, vector<2x16x64xbf16>
    %cst = arith.constant 0.000000e+00 : bf16
    %1 = vector.broadcast %cst : bf16 to vector<2x2x64xbf16>
    %2 = tpu.concatenate %1, %0, %1 in 1 : vector<2x2x64xbf16>, vector<2x16x64xbf16>, vector<2x2x64xbf16> -> vector<2x20x64xbf16>
    %cst_2 = arith.constant 0.000000e+00 : f32
    %3 = vector.broadcast %cst_2 : f32 to vector<32x1024xf32>
    %4 = vector.extract_strided_slice %2 {offsets = [0, 0, 0], sizes = [2, 16, 64], strides = [1, 1, 1]} : vector<2x20x64xbf16> to vector<2x16x64xbf16>
    %5 = vector.shape_cast %4 : vector<2x16x64xbf16> to vector<32x64xbf16>
    %c0_3 = arith.constant 0 : index
    %c0_4 = arith.constant 0 : index
    %c0_5 = arith.constant 0 : index
    %6 = vector.load %arg2[%c0_3, %c0_4, %c0_5] : memref<5x64x1024xbf16, #tpu.memory_space<vmem>>, vector<1x64x1024xbf16>
    %7 = vector.shape_cast %6 : vector<1x64x1024xbf16> to vector<64x1024xbf16>
    %cst_6 = arith.constant dense<0.000000e+00> : vector<32x1024xf32>
    %8 = tpu.matmul %5, %7, %cst_6 {dimension_numbers = #tpu.dot_dimension_numbers<[1], [0], [0], [1], [0, 0, 1, 1], [], []>} : vector<32x64xbf16>, vector<64x1024xbf16>, vector<32x1024xf32> -> vector<32x1024xf32>
    %9 = arith.addf %3, %8 : vector<32x1024xf32>
    %10 = vector.extract_strided_slice %2 {offsets = [0, 1, 0], sizes = [2, 16, 64], strides = [1, 1, 1]} : vector<2x20x64xbf16> to vector<2x16x64xbf16>
    %11 = vector.shape_cast %10 : vector<2x16x64xbf16> to vector<32x64xbf16>
    %c1 = arith.constant 1 : index
    %c0_7 = arith.constant 0 : index
    %c0_8 = arith.constant 0 : index
    %12 = vector.load %arg2[%c1, %c0_7, %c0_8] : memref<5x64x1024xbf16, #tpu.memory_space<vmem>>, vector<1x64x1024xbf16>
    %13 = vector.shape_cast %12 : vector<1x64x1024xbf16> to vector<64x1024xbf16>
    %cst_9 = arith.constant dense<0.000000e+00> : vector<32x1024xf32>
    %14 = tpu.matmul %11, %13, %cst_9 {dimension_numbers = #tpu.dot_dimension_numbers<[1], [0], [0], [1], [0, 0, 1, 1], [], []>} : vector<32x64xbf16>, vector<64x1024xbf16>, vector<32x1024xf32> -> vector<32x1024xf32>
    %15 = arith.addf %9, %14 : vector<32x1024xf32>
    %16 = vector.extract_strided_slice %2 {offsets = [0, 2, 0], sizes = [2, 16, 64], strides = [1, 1, 1]} : vector<2x20x64xbf16> to vector<2x16x64xbf16>
    %17 = vector.shape_cast %16 : vector<2x16x64xbf16> to vector<32x64xbf16>
    %c2 = arith.constant 2 : index
    %c0_10 = arith.constant 0 : index
    %c0_11 = arith.constant 0 : index
    %18 = vector.load %arg2[%c2, %c0_10, %c0_11] : memref<5x64x1024xbf16, #tpu.memory_space<vmem>>, vector<1x64x1024xbf16>
    %19 = vector.shape_cast %18 : vector<1x64x1024xbf16> to vector<64x1024xbf16>
    %cst_12 = arith.constant dense<0.000000e+00> : vector<32x1024xf32>
    %20 = tpu.matmul %17, %19, %cst_12 {dimension_numbers = #tpu.dot_dimension_numbers<[1], [0], [0], [1], [0, 0, 1, 1], [], []>} : vector<32x64xbf16>, vector<64x1024xbf16>, vector<32x1024xf32> -> vector<32x1024xf32>
    %21 = arith.addf %15, %20 : vector<32x1024xf32>
    %22 = vector.extract_strided_slice %2 {offsets = [0, 3, 0], sizes = [2, 16, 64], strides = [1, 1, 1]} : vector<2x20x64xbf16> to vector<2x16x64xbf16>
    %23 = vector.shape_cast %22 : vector<2x16x64xbf16> to vector<32x64xbf16>
    %c3 = arith.constant 3 : index
    %c0_13 = arith.constant 0 : index
    %c0_14 = arith.constant 0 : index
    %24 = vector.load %arg2[%c3, %c0_13, %c0_14] : memref<5x64x1024xbf16, #tpu.memory_space<vmem>>, vector<1x64x1024xbf16>
    %25 = vector.shape_cast %24 : vector<1x64x1024xbf16> to vector<64x1024xbf16>
    %cst_15 = arith.constant dense<0.000000e+00> : vector<32x1024xf32>
    %26 = tpu.matmul %23, %25, %cst_15 {dimension_numbers = #tpu.dot_dimension_numbers<[1], [0], [0], [1], [0, 0, 1, 1], [], []>} : vector<32x64xbf16>, vector<64x1024xbf16>, vector<32x1024xf32> -> vector<32x1024xf32>
    %27 = arith.addf %21, %26 : vector<32x1024xf32>
    %28 = vector.extract_strided_slice %2 {offsets = [0, 4, 0], sizes = [2, 16, 64], strides = [1, 1, 1]} : vector<2x20x64xbf16> to vector<2x16x64xbf16>
    %29 = vector.shape_cast %28 : vector<2x16x64xbf16> to vector<32x64xbf16>
    %c4 = arith.constant 4 : index
    %c0_16 = arith.constant 0 : index
    %c0_17 = arith.constant 0 : index
    %30 = vector.load %arg2[%c4, %c0_16, %c0_17] : memref<5x64x1024xbf16, #tpu.memory_space<vmem>>, vector<1x64x1024xbf16>
    %31 = vector.shape_cast %30 : vector<1x64x1024xbf16> to vector<64x1024xbf16>
    %cst_18 = arith.constant dense<0.000000e+00> : vector<32x1024xf32>
    %32 = tpu.matmul %29, %31, %cst_18 {dimension_numbers = #tpu.dot_dimension_numbers<[1], [0], [0], [1], [0, 0, 1, 1], [], []>} : vector<32x64xbf16>, vector<64x1024xbf16>, vector<32x1024xf32> -> vector<32x1024xf32>
    %33 = arith.addf %27, %32 : vector<32x1024xf32>
    %c0_19 = arith.constant 0 : index
    %c0_20 = arith.constant 0 : index
    %34 = vector.load %arg3[%c0_19, %c0_20] : memref<1x1024xf32, #tpu.memory_space<vmem>>, vector<1x1024xf32>
    %35 = vector.broadcast %34 : vector<1x1024xf32> to vector<32x1024xf32>
    %36 = arith.addf %33, %35 : vector<32x1024xf32>
    %cst_21 = arith.constant 0.000000e+00 : f32
    %37 = vector.broadcast %cst_21 : f32 to vector<32x1024xf32>
    %38 = arith.maximumf %36, %37 : vector<32x1024xf32>
    %39 = vector.extract_strided_slice %38 {offsets = [0, 0], sizes = [32, 512], strides = [1, 1]} : vector<32x1024xf32> to vector<32x512xf32>
    %40 = arith.truncf %39 : vector<32x512xf32> to vector<32x512xbf16>
    %41 = vector.extract_strided_slice %38 {offsets = [0, 512], sizes = [32, 512], strides = [1, 1]} : vector<32x1024xf32> to vector<32x512xf32>
    %42 = arith.truncf %41 : vector<32x512xf32> to vector<32x512xbf16>
    %c0_22 = arith.constant 0 : index
    %c0_23 = arith.constant 0 : index
    %43 = vector.load %arg4[%c0_22, %c0_23] : memref<512x512xbf16, #tpu.memory_space<vmem>>, vector<512x512xbf16>
    %cst_24 = arith.constant dense<0.000000e+00> : vector<32x512xf32>
    %44 = tpu.matmul %40, %43, %cst_24 {dimension_numbers = #tpu.dot_dimension_numbers<[1], [0], [0], [1], [0, 0, 1, 1], [], []>} : vector<32x512xbf16>, vector<512x512xbf16>, vector<32x512xf32> -> vector<32x512xf32>
    %c0_25 = arith.constant 0 : index
    %c0_26 = arith.constant 0 : index
    %45 = vector.load %arg5[%c0_25, %c0_26] : memref<1x512xf32, #tpu.memory_space<vmem>>, vector<1x512xf32>
    %46 = vector.broadcast %45 : vector<1x512xf32> to vector<32x512xf32>
    %47 = arith.addf %44, %46 : vector<32x512xf32>
    %cst_27 = arith.constant 0.000000e+00 : f32
    %48 = vector.broadcast %cst_27 : f32 to vector<32x512xf32>
    %49 = arith.maximumf %47, %48 : vector<32x512xf32>
    %c0_28 = arith.constant 0 : index
    %c0_29 = arith.constant 0 : index
    %50 = vector.load %arg6[%c0_28, %c0_29] : memref<512x512xbf16, #tpu.memory_space<vmem>>, vector<512x512xbf16>
    %cst_30 = arith.constant dense<0.000000e+00> : vector<32x512xf32>
    %51 = tpu.matmul %42, %50, %cst_30 {dimension_numbers = #tpu.dot_dimension_numbers<[1], [0], [0], [1], [0, 0, 1, 1], [], []>} : vector<32x512xbf16>, vector<512x512xbf16>, vector<32x512xf32> -> vector<32x512xf32>
    %c0_31 = arith.constant 0 : index
    %c0_32 = arith.constant 0 : index
    %52 = vector.load %arg7[%c0_31, %c0_32] : memref<1x512xf32, #tpu.memory_space<vmem>>, vector<1x512xf32>
    %53 = vector.broadcast %52 : vector<1x512xf32> to vector<32x512xf32>
    %54 = arith.addf %51, %53 : vector<32x512xf32>
    %cst_33 = arith.constant 0.000000e+00 : f32
    %55 = vector.broadcast %cst_33 : f32 to vector<32x512xf32>
    %56 = arith.maximumf %54, %55 : vector<32x512xf32>
    %57 = arith.addf %49, %56 : vector<32x512xf32>
    %58 = arith.truncf %57 : vector<32x512xf32> to vector<32x512xbf16>
    %c0_34 = arith.constant 0 : index
    %c0_35 = arith.constant 0 : index
    %59 = vector.load %arg8[%c0_34, %c0_35] : memref<512x512xbf16, #tpu.memory_space<vmem>>, vector<512x512xbf16>
    %cst_36 = arith.constant dense<0.000000e+00> : vector<32x512xf32>
    %60 = tpu.matmul %58, %59, %cst_36 {dimension_numbers = #tpu.dot_dimension_numbers<[1], [0], [0], [1], [0, 0, 1, 1], [], []>} : vector<32x512xbf16>, vector<512x512xbf16>, vector<32x512xf32> -> vector<32x512xf32>
    %c0_37 = arith.constant 0 : index
    %c0_38 = arith.constant 0 : index
    %61 = vector.load %arg9[%c0_37, %c0_38] : memref<1x512xf32, #tpu.memory_space<vmem>>, vector<1x512xf32>
    %62 = vector.broadcast %61 : vector<1x512xf32> to vector<32x512xf32>
    %63 = arith.addf %60, %62 : vector<32x512xf32>
    %cst_39 = arith.constant 0.000000e+00 : f32
    %64 = vector.broadcast %cst_39 : f32 to vector<32x512xf32>
    %65 = arith.maximumf %63, %64 : vector<32x512xf32>
    %66 = arith.truncf %65 : vector<32x512xf32> to vector<32x512xbf16>
    %67 = vector.shape_cast %66 : vector<32x512xbf16> to vector<2x16x512xbf16>
    %c0_40 = arith.constant 0 : index
    %c0_41 = arith.constant 0 : index
    %c0_42 = arith.constant 0 : index
    %68 = vector.load %arg10[%c0_40, %c0_41, %c0_42] : memref<2x16x512xbf16, #tpu.memory_space<vmem>>, vector<2x16x512xbf16>
    tpu.vector_store %arg10[%c0_40, %c0_41, %c0_42], %67 {strides = array<i32>} : memref<2x16x512xbf16, #tpu.memory_space<vmem>>, vector<2x16x512xbf16>,
    return
  }
  func.func @transform_0(%arg0: i32) -> (i32, i32, i32) {
    %c0_i32 = arith.constant 0 : i32
    %c0_i32_0 = arith.constant 0 : i32
    %c0_i32_1 = arith.constant 0 : i32
    return %arg0, %c0_i32, %c0_i32_0 : i32, i32, i32
  }
  func.func @transform_1(%arg0: i32) -> (i32, i32, i32) {
    %c0_i32 = arith.constant 0 : i32
    %c0_i32_0 = arith.constant 0 : i32
    %c0_i32_1 = arith.constant 0 : i32
    %c0_i32_2 = arith.constant 0 : i32
    return %c0_i32, %c0_i32_0, %c0_i32_1 : i32, i32, i32
  }
  func.func @transform_2(%arg0: i32) -> (i32, i32) {
    %c0_i32 = arith.constant 0 : i32
    %c0_i32_0 = arith.constant 0 : i32
    %c0_i32_1 = arith.constant 0 : i32
    return %c0_i32, %c0_i32_0 : i32, i32
  }
  func.func @transform_3(%arg0: i32) -> (i32, i32) {
    %c0_i32 = arith.constant 0 : i32
    %c0_i32_0 = arith.constant 0 : i32
    %c0_i32_1 = arith.constant 0 : i32
    return %c0_i32, %c0_i32_0 : i32, i32
  }
  func.func @transform_4(%arg0: i32) -> (i32, i32) {
    %c0_i32 = arith.constant 0 : i32
    %c0_i32_0 = arith.constant 0 : i32
    %c0_i32_1 = arith.constant 0 : i32
    return %c0_i32, %c0_i32_0 : i32, i32
  }
  func.func @transform_5(%arg0: i32) -> (i32, i32) {
    %c0_i32 = arith.constant 0 : i32
    %c0_i32_0 = arith.constant 0 : i32
    %c0_i32_1 = arith.constant 0 : i32
    return %c0_i32, %c0_i32_0 : i32, i32
  }
  func.func @transform_6(%arg0: i32) -> (i32, i32) {
    %c0_i32 = arith.constant 0 : i32
    %c0_i32_0 = arith.constant 0 : i32
    %c0_i32_1 = arith.constant 0 : i32
    return %c0_i32, %c0_i32_0 : i32, i32
  }
  func.func @transform_7(%arg0: i32) -> (i32, i32) {
    %c0_i32 = arith.constant 0 : i32
    %c0_i32_0 = arith.constant 0 : i32
    %c0_i32_1 = arith.constant 0 : i32
    return %c0_i32, %c0_i32_0 : i32, i32
  }
  func.func @transform_8(%arg0: i32) -> (i32, i32) {
    %c0_i32 = arith.constant 0 : i32
    %c0_i32_0 = arith.constant 0 : i32
    %c0_i32_1 = arith.constant 0 : i32
    return %c0_i32, %c0_i32_0 : i32, i32
  }
  func.func @transform_9(%arg0: i32) -> (i32, i32, i32) {
    %c0_i32 = arith.constant 0 : i32
    %c0_i32_0 = arith.constant 0 : i32
    %c0_i32_1 = arith.constant 0 : i32
    return %arg0, %c0_i32, %c0_i32_0 : i32, i32, i32
  }
}

module attributes {stable_mosaic.version = 11 : i64} {
  func.func @_audio_block_kernel(%arg0: i32, %arg1: memref<2x16x64xbf16, #tpu.memory_space<vmem>>, %arg2: memref<5x64x1024xbf16, #tpu.memory_space<vmem>>, %arg3: memref<1x1024xf32, #tpu.memory_space<vmem>>, %arg4: memref<512x512xbf16, #tpu.memory_space<vmem>>, %arg5: memref<1x512xf32, #tpu.memory_space<vmem>>, %arg6: memref<512x512xbf16, #tpu.memory_space<vmem>>, %arg7: memref<1x512xf32, #tpu.memory_space<vmem>>, %arg8: memref<512x512xbf16, #tpu.memory_space<vmem>>, %arg9: memref<1x512xf32, #tpu.memory_space<vmem>>, %arg10: memref<2x16x512xbf16, #tpu.memory_space<vmem>>) attributes {dimension_semantics = [#tpu.dimension_semantics<parallel>], iteration_bounds = array<i64: 1>, scalar_prefetch = 0 : i64, scratch_operands = 0 : i64, tpu.core_type = #tpu.core_type<tc>, window_params = [{transform_indices = @transform_0, window_bounds = array<i64: 2, 16, 64>}, {pipeline_mode = #tpu.pipeline_mode<synchronous>, transform_indices = @transform_1, window_bounds = array<i64: 5, 64, 1024>}, {pipeline_mode = #tpu.pipeline_mode<synchronous>, transform_indices = @transform_2, window_bounds = array<i64: 1, 1024>}, {pipeline_mode = #tpu.pipeline_mode<synchronous>, transform_indices = @transform_3, window_bounds = array<i64: 512, 512>}, {pipeline_mode = #tpu.pipeline_mode<synchronous>, transform_indices = @transform_4, window_bounds = array<i64: 1, 512>}, {pipeline_mode = #tpu.pipeline_mode<synchronous>, transform_indices = @transform_5, window_bounds = array<i64: 512, 512>}, {pipeline_mode = #tpu.pipeline_mode<synchronous>, transform_indices = @transform_6, window_bounds = array<i64: 1, 512>}, {pipeline_mode = #tpu.pipeline_mode<synchronous>, transform_indices = @transform_7, window_bounds = array<i64: 512, 512>}, {pipeline_mode = #tpu.pipeline_mode<synchronous>, transform_indices = @transform_8, window_bounds = array<i64: 1, 512>}, {transform_indices = @transform_9, window_bounds = array<i64: 2, 16, 512>}]} {
    %c0 = arith.constant 0 : index
    %c0_0 = arith.constant 0 : index
    %c0_1 = arith.constant 0 : index
    %0 = vector.load %arg1[%c0, %c0_0, %c0_1] : memref<2x16x64xbf16, #tpu.memory_space<vmem>>, vector<2x16x64xbf16>
    %cst = arith.constant 0.000000e+00 : bf16
    %1 = vector.broadcast %cst : bf16 to vector<2x2x64xbf16>
    %2 = tpu.concatenate %1, %0, %1 in 1 : vector<2x2x64xbf16>, vector<2x16x64xbf16>, vector<2x2x64xbf16> -> vector<2x20x64xbf16>
    %cst_2 = arith.constant 0.000000e+00 : f32
    %3 = vector.broadcast %cst_2 : f32 to vector<32x1024xf32>
    %4 = vector.extract_strided_slice %2 {offsets = [0, 0, 0], sizes = [2, 16, 64], strides = [1, 1, 1]} : vector<2x20x64xbf16> to vector<2x16x64xbf16>
    %5 = vector.shape_cast %4 : vector<2x16x64xbf16> to vector<32x64xbf16>
    %c0_3 = arith.constant 0 : index
    %c0_4 = arith.constant 0 : index
    %c0_5 = arith.constant 0 : index
    %6 = vector.load %arg2[%c0_3, %c0_4, %c0_5] : memref<5x64x1024xbf16, #tpu.memory_space<vmem>>, vector<1x64x1024xbf16>
    %7 = vector.shape_cast %6 : vector<1x64x1024xbf16> to vector<64x1024xbf16>
    %cst_6 = arith.constant dense<0.000000e+00> : vector<32x1024xf32>
    %8 = tpu.matmul %5, %7, %cst_6 {dimension_numbers = #tpu.dot_dimension_numbers<[1], [0], [0], [1], [0, 0, 1, 1], [], []>} : vector<32x64xbf16>, vector<64x1024xbf16>, vector<32x1024xf32> -> vector<32x1024xf32>
    %9 = arith.addf %3, %8 : vector<32x1024xf32>
    %10 = vector.extract_strided_slice %2 {offsets = [0, 1, 0], sizes = [2, 16, 64], strides = [1, 1, 1]} : vector<2x20x64xbf16> to vector<2x16x64xbf16>
    %11 = vector.shape_cast %10 : vector<2x16x64xbf16> to vector<32x64xbf16>
    %c1 = arith.constant 1 : index
    %c0_7 = arith.constant 0 : index
    %c0_8 = arith.constant 0 : index
    %12 = vector.load %arg2[%c1, %c0_7, %c0_8] : memref<5x64x1024xbf16, #tpu.memory_space<vmem>>, vector<1x64x1024xbf16>
    %13 = vector.shape_cast %12 : vector<1x64x1024xbf16> to vector<64x1024xbf16>
    %cst_9 = arith.constant dense<0.000000e+00> : vector<32x1024xf32>
    %14 = tpu.matmul %11, %13, %cst_9 {dimension_numbers = #tpu.dot_dimension_numbers<[1], [0], [0], [1], [0, 0, 1, 1], [], []>} : vector<32x64xbf16>, vector<64x1024xbf16>, vector<32x1024xf32> -> vector<32x1024xf32>
    %15 = arith.addf %9, %14 : vector<32x1024xf32>
    %16 = vector.extract_strided_slice %2 {offsets = [0, 2, 0], sizes = [2, 16, 64], strides = [1, 1, 1]} : vector<2x20x64xbf16> to vector<2x16x64xbf16>
    %17 = vector.shape_cast %16 : vector<2x16x64xbf16> to vector<32x64xbf16>
    %c2 = arith.constant 2 : index
    %c0_10 = arith.constant 0 : index
    %c0_11 = arith.constant 0 : index
    %18 = vector.load %arg2[%c2, %c0_10, %c0_11] : memref<5x64x1024xbf16, #tpu.memory_space<vmem>>, vector<1x64x1024xbf16>
    %19 = vector.shape_cast %18 : vector<1x64x1024xbf16> to vector<64x1024xbf16>
    %cst_12 = arith.constant dense<0.000000e+00> : vector<32x1024xf32>
    %20 = tpu.matmul %17, %19, %cst_12 {dimension_numbers = #tpu.dot_dimension_numbers<[1], [0], [0], [1], [0, 0, 1, 1], [], []>} : vector<32x64xbf16>, vector<64x1024xbf16>, vector<32x1024xf32> -> vector<32x1024xf32>
    %21 = arith.addf %15, %20 : vector<32x1024xf32>
    %22 = vector.extract_strided_slice %2 {offsets = [0, 3, 0], sizes = [2, 16, 64], strides = [1, 1, 1]} : vector<2x20x64xbf16> to vector<2x16x64xbf16>
    %23 = vector.shape_cast %22 : vector<2x16x64xbf16> to vector<32x64xbf16>
    %c3 = arith.constant 3 : index
    %c0_13 = arith.constant 0 : index
    %c0_14 = arith.constant 0 : index
    %24 = vector.load %arg2[%c3, %c0_13, %c0_14] : memref<5x64x1024xbf16, #tpu.memory_space<vmem>>, vector<1x64x1024xbf16>
    %25 = vector.shape_cast %24 : vector<1x64x1024xbf16> to vector<64x1024xbf16>
    %cst_15 = arith.constant dense<0.000000e+00> : vector<32x1024xf32>
    %26 = tpu.matmul %23, %25, %cst_15 {dimension_numbers = #tpu.dot_dimension_numbers<[1], [0], [0], [1], [0, 0, 1, 1], [], []>} : vector<32x64xbf16>, vector<64x1024xbf16>, vector<32x1024xf32> -> vector<32x1024xf32>
    %27 = arith.addf %21, %26 : vector<32x1024xf32>
    %28 = vector.extract_strided_slice %2 {offsets = [0, 4, 0], sizes = [2, 16, 64], strides = [1, 1, 1]} : vector<2x20x64xbf16> to vector<2x16x64xbf16>
    %29 = vector.shape_cast %28 : vector<2x16x64xbf16> to vector<32x64xbf16>
    %c4 = arith.constant 4 : index
    %c0_16 = arith.constant 0 : index
    %c0_17 = arith.constant 0 : index
    %30 = vector.load %arg2[%c4, %c0_16, %c0_17] : memref<5x64x1024xbf16, #tpu.memory_space<vmem>>, vector<1x64x1024xbf16>
    %31 = vector.shape_cast %30 : vector<1x64x1024xbf16> to vector<64x1024xbf16>
    %cst_18 = arith.constant dense<0.000000e+00> : vector<32x1024xf32>
    %32 = tpu.matmul %29, %31, %cst_18 {dimension_numbers = #tpu.dot_dimension_numbers<[1], [0], [0], [1], [0, 0, 1, 1], [], []>} : vector<32x64xbf16>, vector<64x1024xbf16>, vector<32x1024xf32> -> vector<32x1024xf32>
    %33 = arith.addf %27, %32 : vector<32x1024xf32>
    %c0_19 = arith.constant 0 : index
    %c0_20 = arith.constant 0 : index
    %34 = vector.load %arg3[%c0_19, %c0_20] : memref<1x1024xf32, #tpu.memory_space<vmem>>, vector<1x1024xf32>
    %35 = vector.broadcast %34 : vector<1x1024xf32> to vector<32x1024xf32>
    %36 = arith.addf %33, %35 : vector<32x1024xf32>
    %cst_21 = arith.constant 0.000000e+00 : f32
    %37 = vector.broadcast %cst_21 : f32 to vector<32x1024xf32>
    %38 = arith.maximumf %36, %37 : vector<32x1024xf32>
    %39 = vector.extract_strided_slice %38 {offsets = [0, 0], sizes = [32, 512], strides = [1, 1]} : vector<32x1024xf32> to vector<32x512xf32>
    %40 = arith.truncf %39 : vector<32x512xf32> to vector<32x512xbf16>
    %41 = vector.extract_strided_slice %38 {offsets = [0, 512], sizes = [32, 512], strides = [1, 1]} : vector<32x1024xf32> to vector<32x512xf32>
    %42 = arith.truncf %41 : vector<32x512xf32> to vector<32x512xbf16>
    %c0_22 = arith.constant 0 : index
    %c0_23 = arith.constant 0 : index
    %43 = vector.load %arg4[%c0_22, %c0_23] : memref<512x512xbf16, #tpu.memory_space<vmem>>, vector<512x512xbf16>
    %cst_24 = arith.constant dense<0.000000e+00> : vector<32x512xf32>
    %44 = tpu.matmul %40, %43, %cst_24 {dimension_numbers = #tpu.dot_dimension_numbers<[1], [0], [0], [1], [0, 0, 1, 1], [], []>} : vector<32x512xbf16>, vector<512x512xbf16>, vector<32x512xf32> -> vector<32x512xf32>
    %c0_25 = arith.constant 0 : index
    %c0_26 = arith.constant 0 : index
    %45 = vector.load %arg5[%c0_25, %c0_26] : memref<1x512xf32, #tpu.memory_space<vmem>>, vector<1x512xf32>
    %46 = vector.broadcast %45 : vector<1x512xf32> to vector<32x512xf32>
    %47 = arith.addf %44, %46 : vector<32x512xf32>
    %cst_27 = arith.constant 0.000000e+00 : f32
    %48 = vector.broadcast %cst_27 : f32 to vector<32x512xf32>
    %49 = arith.maximumf %47, %48 : vector<32x512xf32>
    %c0_28 = arith.constant 0 : index
    %c0_29 = arith.constant 0 : index
    %50 = vector.load %arg6[%c0_28, %c0_29] : memref<512x512xbf16, #tpu.memory_space<vmem>>, vector<512x512xbf16>
    %cst_30 = arith.constant dense<0.000000e+00> : vector<32x512xf32>
    %51 = tpu.matmul %42, %50, %cst_30 {dimension_numbers = #tpu.dot_dimension_numbers<[1], [0], [0], [1], [0, 0, 1, 1], [], []>} : vector<32x512xbf16>, vector<512x512xbf16>, vector<32x512xf32> -> vector<32x512xf32>
    %c0_31 = arith.constant 0 : index
    %c0_32 = arith.constant 0 : index
    %52 = vector.load %arg7[%c0_31, %c0_32] : memref<1x512xf32, #tpu.memory_space<vmem>>, vector<1x512xf32>
    %53 = vector.broadcast %52 : vector<1x512xf32> to vector<32x512xf32>
    %54 = arith.addf %51, %53 : vector<32x512xf32>
    %cst_33 = arith.constant 0.000000e+00 : f32
    %55 = vector.broadcast %cst_33 : f32 to vector<32x512xf32>
    %56 = arith.maximumf %54, %55 : vector<32x512xf32>
    %57 = arith.addf %49, %56 : vector<32x512xf32>
    %58 = arith.truncf %57 : vector<32x512xf32> to vector<32x512xbf16>
    %c0_34 = arith.constant 0 : index
    %c0_35 = arith.constant 0 : index
    %59 = vector.load %arg8[%c0_34, %c0_35] : memref<512x512xbf16, #tpu.memory_space<vmem>>, vector<512x512xbf16>
    %cst_36 = arith.constant dense<0.000000e+00> : vector<32x512xf32>
    %60 = tpu.matmul %58, %59, %cst_36 {dimension_numbers = #tpu.dot_dimension_numbers<[1], [0], [0], [1], [0, 0, 1, 1], [], []>} : vector<32x512xbf16>, vector<512x512xbf16>, vector<32x512xf32> -> vector<32x512xf32>
    %c0_37 = arith.constant 0 : index
    %c0_38 = arith.constant 0 : index
    %61 = vector.load %arg9[%c0_37, %c0_38] : memref<1x512xf32, #tpu.memory_space<vmem>>, vector<1x512xf32>
    %62 = vector.broadcast %61 : vector<1x512xf32> to vector<32x512xf32>
    %63 = arith.addf %60, %62 : vector<32x512xf32>
    %cst_39 = arith.constant 0.000000e+00 : f32
    %64 = vector.broadcast %cst_39 : f32 to vector<32x512xf32>
    %65 = arith.maximumf %63, %64 : vector<32x512xf32>
    %66 = arith.truncf %65 : vector<32x512xf32> to vector<32x512xbf16>
    %67 = vector.shape_cast %66 : vector<32x512xbf16> to vector<2x16x512xbf16>
    %c0_40 = arith.constant 0 : index
    %c0_41 = arith.constant 0 : index
    %c0_42 = arith.constant 0 : index
    %68 = vector.load %arg10[%c0_40, %c0_41, %c0_42] : memref<2x16x512xbf16, #tpu.memory_space<vmem>>, vector<2x16x512xbf16>
    tpu.vector_store %arg10[%c0_40, %c0_41, %c0_42], %67 {strides = array<i32>} : memref<2x16x512xbf16, #tpu.memory_space<vmem>>, vector<2x16x512xbf16>,
    return
  }
  func.func @transform_0(%arg0: i32) -> (i32, i32, i32) {
    %c0_i32 = arith.constant 0 : i32
    %c0_i32_0 = arith.constant 0 : i32
    %c0_i32_1 = arith.constant 0 : i32
    return %arg0, %c0_i32, %c0_i32_0 : i32, i32, i32
  }
  func.func @transform_1(%arg0: i32) -> (i32, i32, i32) {
    %c0_i32 = arith.constant 0 : i32
    %c0_i32_0 = arith.constant 0 : i32
    %c0_i32_1 = arith.constant 0 : i32
    %c0_i32_2 = arith.constant 0 : i32
    return %c0_i32, %c0_i32_0, %c0_i32_1 : i32, i32, i32
  }
  func.func @transform_2(%arg0: i32) -> (i32, i32) {
    %c0_i32 = arith.constant 0 : i32
    %c0_i32_0 = arith.constant 0 : i32
    %c0_i32_1 = arith.constant 0 : i32
    return %c0_i32, %c0_i32_0 : i32, i32
  }
  func.func @transform_3(%arg0: i32) -> (i32, i32) {
    %c0_i32 = arith.constant 0 : i32
    %c0_i32_0 = arith.constant 0 : i32
    %c0_i32_1 = arith.constant 0 : i32
    return %c0_i32, %c0_i32_0 : i32, i32
  }
  func.func @transform_4(%arg0: i32) -> (i32, i32) {
    %c0_i32 = arith.constant 0 : i32
    %c0_i32_0 = arith.constant 0 : i32
    %c0_i32_1 = arith.constant 0 : i32
    return %c0_i32, %c0_i32_0 : i32, i32
  }
  func.func @transform_5(%arg0: i32) -> (i32, i32) {
    %c0_i32 = arith.constant 0 : i32
    %c0_i32_0 = arith.constant 0 : i32
    %c0_i32_1 = arith.constant 0 : i32
    return %c0_i32, %c0_i32_0 : i32, i32
  }
  func.func @transform_6(%arg0: i32) -> (i32, i32) {
    %c0_i32 = arith.constant 0 : i32
    %c0_i32_0 = arith.constant 0 : i32
    %c0_i32_1 = arith.constant 0 : i32
    return %c0_i32, %c0_i32_0 : i32, i32
  }
  func.func @transform_7(%arg0: i32) -> (i32, i32) {
    %c0_i32 = arith.constant 0 : i32
    %c0_i32_0 = arith.constant 0 : i32
    %c0_i32_1 = arith.constant 0 : i32
    return %c0_i32, %c0_i32_0 : i32, i32
  }
  func.func @transform_8(%arg0: i32) -> (i32, i32) {
    %c0_i32 = arith.constant 0 : i32
    %c0_i32_0 = arith.constant 0 : i32
    %c0_i32_1 = arith.constant 0 : i32
    return %c0_i32, %c0_i32_0 : i32, i32
  }
  func.func @transform_9(%arg0: i32) -> (i32, i32, i32) {
    %c0_i32 = arith.constant 0 : i32
    %c0_i32_0 = arith.constant 0 : i32
    %c0_i32_1 = arith.constant 0 : i32
    return %arg0, %c0_i32, %c0_i32_0 : i32, i32, i32
  }
}

</mosaic_0001>

<llo_original>
// kernel: tpu_custom_call.1
$region0: #{tpu_custom_call.1}
  #allocation0 [shape = 'u32[]', space=smem, size = 0x4, offset = 0x4, fixed_abs, tag = 'smem constant byte address 0x4 - core index']
  #allocation1 [shape = 'u32[144,128]{1,0:T(1,128)}', space=vmem, size = 0x12000, scoped, tag = 'internal scratch']
  %s0 = inlined_call_operand.hbm [shape: bf16[2,16,64], index: 0, kind: input, shape index: {}]
  %s1 = inlined_call_operand.hbm [shape: bf16[5,64,1024], index: 1, kind: input, shape index: {}]
  %s2 = inlined_call_operand.hbm [shape: f32[1,1024], index: 2, kind: input, shape index: {}]
  %s3 = inlined_call_operand.hbm [shape: bf16[512,512], index: 3, kind: input, shape index: {}]
  %s4 = inlined_call_operand.vmem [shape: f32[1,512], index: 4, kind: input, shape index: {}]
  %s5 = inlined_call_operand.hbm [shape: bf16[512,512], index: 5, kind: input, shape index: {}]
  %s6 = inlined_call_operand.vmem [shape: f32[1,512], index: 6, kind: input, shape index: {}]
  %s7 = inlined_call_operand.hbm [shape: bf16[512,512], index: 7, kind: input, shape index: {}]
  %s8 = inlined_call_operand.vmem [shape: f32[1,512], index: 8, kind: input, shape index: {}]
  %s9 = inlined_call_operand.hbm [shape: bf16[2,16,512], index: 9, kind: output, shape index: {}]
  %s10 = sld [smem:[#allocation0]]
  $region70: #{tpu_custom_call.1} parent=0
    _
  %s12 = ssub.s32 1, %s10
  %s13 = scalar_select 0, %s12, %s10
  $region1: #{tpu_custom_call.1} parent=0
    #allocation2 [shape = 'u8[8192]{0}', space=vmem, size = 0x2000, scoped, tag = 'input window, operand 0, single buffered']
    #allocation3 [shape = 's32[1]{0}', space=sflag, size = 0x4, scoped, tag = 'scoped memory for tpu_custom_call.1']
    #allocation4 [shape = 's32[1]{0}', space=sflag, size = 0x4, scoped, tag = 'scoped memory for tpu_custom_call.1']
    #allocation5 [shape = 'u8[655360]{0}', space=vmem, size = 0xa0000, scoped, tag = 'input window, operand 1, single buffered']
    #allocation6 [shape = 's32[1]{0}', space=sflag, size = 0x4, scoped, tag = 'scoped memory for tpu_custom_call.1']
    #allocation7 [shape = 'u8[4096]{0}', space=vmem, size = 0x1000, scoped, tag = 'input window, operand 2, single buffered']
    #allocation8 [shape = 'u8[524288]{0}', space=vmem, size = 0x80000, scoped, tag = 'input window, operand 3, single buffered']
    #allocation9 [shape = 's32[1]{0}', space=sflag, size = 0x4, scoped, tag = 'scoped memory for tpu_custom_call.1']
    #allocation10 [shape = 'u8[524288]{0}', space=vmem, size = 0x80000, scoped, tag = 'input window, operand 5, single buffered']
    #allocation11 [shape = 'u8[524288]{0}', space=vmem, size = 0x80000, scoped, tag = 'input window, operand 7, single buffered']
    #allocation12 [shape = 's32[1]{0}', space=sflag, size = 0x4, scoped, tag = 'scoped memory for tpu_custom_call.1']
    #allocation13 [shape = 'u8[32768]{0}', space=vmem, size = 0x8000, scoped, tag = 'output window, operand 0, single buffered']
    %14 = vsyncpa [#allocation3], 0
    %15 = vsyncpa [#allocation6], 0
    %16 = vsyncpa [#allocation9], 0
    %17 = vsyncpa [#allocation12], 0
    %18 = vsyncpa [#allocation4], 0
    // Predicated region
    $region2: #{tpu_custom_call.1} parent=1 // pred_check
      _
    $region3: #{tpu_custom_call.1} parent=1 // pred_check_branch
      %20 = sbr.rel (0) target = $region5
    $region4: #{tpu_custom_call.1} parent=1 // pred_region
      %s22 = ssub.s32 256, 256
      %23 = vsyncadd [#allocation3], %s22
      %s24 = sshll.u32 [#allocation2], 4
      %s25 = int_to_ptr.vmem [resolvable:$true] %s24
      %30 = dma.hbm_to_vmem [thread:$0]  %s0, 256, %s25, [#allocation3], 64, 64, 4
    $region5: #{tpu_custom_call.1} parent=1 // pred_fallthru
      _
    // Predicated region
    $region6: #{tpu_custom_call.1} parent=1 // pred_check
      _
    $region7: #{tpu_custom_call.1} parent=1 // pred_check_branch
      %32 = sbr.rel (0) target = $region9
    $region8: #{tpu_custom_call.1} parent=1 // pred_region
      %s34 = ssub.s32 20480, 20480
      %35 = vsyncadd [#allocation6], %s34
      %s36 = sshll.u32 [#allocation5], 4
      %s37 = int_to_ptr.vmem [resolvable:$true] %s36
      %42 = dma.hbm_to_vmem [thread:$0]  %s1, 20480, %s37, [#allocation6], 512, 512, 32
    $region9: #{tpu_custom_call.1} parent=1 // pred_fallthru
      _
    // Predicated region
    $region10: #{tpu_custom_call.1} parent=1 // pred_check
      _
    $region11: #{tpu_custom_call.1} parent=1 // pred_check_branch
      %44 = sbr.rel (0) target = $region13
    $region12: #{tpu_custom_call.1} parent=1 // pred_region
      %s46 = ssub.s32 128, 128
      %47 = vsyncadd [#allocation6], %s46
      %s49 = sshll.u32 [#allocation7], 4
      %s50 = int_to_ptr.vmem [resolvable:$true] %s49
      %52 = dma.hbm_to_vmem [thread:$0]  %s2, 128, %s50, [#allocation6]
    $region13: #{tpu_custom_call.1} parent=1 // pred_fallthru
      _
    // Predicated region
    $region14: #{tpu_custom_call.1} parent=1 // pred_check
      _
    $region15: #{tpu_custom_call.1} parent=1 // pred_check_branch
      %54 = sbr.rel (0) target = $region17
    $region16: #{tpu_custom_call.1} parent=1 // pred_region
      %s56 = ssub.s32 16384, 16384
      %57 = vsyncadd [#allocation9], %s56
      %s58 = sshll.u32 [#allocation8], 4
      %s59 = int_to_ptr.vmem [resolvable:$true] %s58
      %64 = dma.hbm_to_vmem [thread:$0]  %s3, 16384, %s59, [#allocation9], 256, 256, 16
    $region17: #{tpu_custom_call.1} parent=1 // pred_fallthru
      _
    // Predicated region
    $region18: #{tpu_custom_call.1} parent=1 // pred_check
      _
    $region19: #{tpu_custom_call.1} parent=1 // pred_check_branch
      %66 = sbr.rel (0) target = $region21
    $region20: #{tpu_custom_call.1} parent=1 // pred_region
      _
    $region21: #{tpu_custom_call.1} parent=1 // pred_fallthru
      _
    // Predicated region
    $region22: #{tpu_custom_call.1} parent=1 // pred_check
      _
    $region23: #{tpu_custom_call.1} parent=1 // pred_check_branch
      %68 = sbr.rel (0) target = $region25
    $region24: #{tpu_custom_call.1} parent=1 // pred_region
      %s70 = ssub.s32 16384, 16384
      %71 = vsyncadd [#allocation9], %s70
      %s72 = sshll.u32 [#allocation10], 4
      %s73 = int_to_ptr.vmem [resolvable:$true] %s72
      %78 = dma.hbm_to_vmem [thread:$0]  %s5, 16384, %s73, [#allocation9], 256, 256, 16
    $region25: #{tpu_custom_call.1} parent=1 // pred_fallthru
      _
    // Predicated region
    $region26: #{tpu_custom_call.1} parent=1 // pred_check
      _
    $region27: #{tpu_custom_call.1} parent=1 // pred_check_branch
      %80 = sbr.rel (0) target = $region29
    $region28: #{tpu_custom_call.1} parent=1 // pred_region
      _
    $region29: #{tpu_custom_call.1} parent=1 // pred_fallthru
      _
    // Predicated region
    $region30: #{tpu_custom_call.1} parent=1 // pred_check
      _
    $region31: #{tpu_custom_call.1} parent=1 // pred_check_branch
      %82 = sbr.rel (0) target = $region33
    $region32: #{tpu_custom_call.1} parent=1 // pred_region
      %s84 = ssub.s32 16384, 16384
      %85 = vsyncadd [#allocation12], %s84
      %s86 = sshll.u32 [#allocation11], 4
      %s87 = int_to_ptr.vmem [resolvable:$true] %s86
      %92 = dma.hbm_to_vmem [thread:$0]  %s7, 16384, %s87, [#allocation12], 256, 256, 16
    $region33: #{tpu_custom_call.1} parent=1 // pred_fallthru
      _
    // Predicated region
    $region34: #{tpu_custom_call.1} parent=1 // pred_check
      _
    $region35: #{tpu_custom_call.1} parent=1 // pred_check_branch
      %94 = sbr.rel (0) target = $region37
    $region36: #{tpu_custom_call.1} parent=1 // pred_region
      _
    $region37: #{tpu_custom_call.1} parent=1 // pred_fallthru
      _
    // Predicated region
    $region38: #{tpu_custom_call.1} parent=1 // pred_check
      _
    $region39: #{tpu_custom_call.1} parent=1 // pred_check_branch
      %96 = sbr.rel (0) target = $region41
    $region40: #{tpu_custom_call.1} parent=1 // pred_region
      %97 = dma.done [#allocation3], 256
    $region41: #{tpu_custom_call.1} parent=1 // pred_fallthru
      _
    // Predicated region
    $region42: #{tpu_custom_call.1} parent=1 // pred_check
      _
    $region43: #{tpu_custom_call.1} parent=1 // pred_check_branch
      %99 = sbr.rel (0) target = $region45
    $region44: #{tpu_custom_call.1} parent=1 // pred_region
      %100 = dma.done [#allocation6], 20480
    $region45: #{tpu_custom_call.1} parent=1 // pred_fallthru
      _
    // Predicated region
    $region46: #{tpu_custom_call.1} parent=1 // pred_check
      _
    $region47: #{tpu_custom_call.1} parent=1 // pred_check_branch
      %102 = sbr.rel (0) target = $region49
    $region48: #{tpu_custom_call.1} parent=1 // pred_region
      %103 = dma.done [#allocation6], 128
    $region49: #{tpu_custom_call.1} parent=1 // pred_fallthru
      _
    // Predicated region
    $region50: #{tpu_custom_call.1} parent=1 // pred_check
      _
    $region51: #{tpu_custom_call.1} parent=1 // pred_check_branch
      %105 = sbr.rel (0) target = $region53
    $region52: #{tpu_custom_call.1} parent=1 // pred_region
      %106 = dma.done [#allocation9], 16384
    $region53: #{tpu_custom_call.1} parent=1 // pred_fallthru
      _
    // Predicated region
    $region54: #{tpu_custom_call.1} parent=1 // pred_check
      _
    $region55: #{tpu_custom_call.1} parent=1 // pred_check_branch
      %108 = sbr.rel (0) target = $region57
    $region56: #{tpu_custom_call.1} parent=1 // pred_region
      %109 = dma.done [#allocation9], 16384
    $region57: #{tpu_custom_call.1} parent=1 // pred_fallthru
      _
    // Predicated region
    $region58: #{tpu_custom_call.1} parent=1 // pred_check
      _
    $region59: #{tpu_custom_call.1} parent=1 // pred_check_branch
      %111 = sbr.rel (0) target = $region61
    $region60: #{tpu_custom_call.1} parent=1 // pred_region
      %112 = dma.done [#allocation12], 16384
    $region61: #{tpu_custom_call.1} parent=1 // pred_fallthru
      _
    %v114 = vld [vmem:[#allocation2] sm:$0xf]
    %v115 = vld [vmem:[#allocation2 + $0x4] sm:$0xf]
    %v116 = vld [vmem:[#allocation2 + $0x8] sm:$0xf]
    %v117 = vld [vmem:[#allocation2 + $0xc] sm:$0xf]
    %v122 = vunpack.c.l.b16 %v114
    %v123 = vunpack.c.l.b16 %v115
    %v124 = vunpack.c.l.b16 %v116
    %v125 = vunpack.c.l.b16 %v117
    %v126 = vpack.c.b16 %v123, %v122
    %v127 = vpack.c.b16 %v125, %v124
    %v128 = vrot.slane %v126, 7
    %v129 = vrot.slane %v127, 7
    %vm130 = vcmask 1040384
    %v133 = vsel %vm130, 0, %v128
    %v135 = vsel %vm130, 0, %v129
    %v136 = vsel %vm130, %v128, 0
    %v137 = vsel %vm130, %v129, 0
    %v138 = vld [vmem:[#allocation5] sm:$0xff]
    %v139 = vld [vmem:[#allocation5 + $0x8] sm:$0xff]
    %v140 = vld [vmem:[#allocation5 + $0x10] sm:$0xff]
    %v141 = vld [vmem:[#allocation5 + $0x18] sm:$0xff]
    %v142 = vld [vmem:[#allocation5 + $0x20] sm:$0xff]
    %v143 = vld [vmem:[#allocation5 + $0x28] sm:$0xff]
    %v144 = vld [vmem:[#allocation5 + $0x30] sm:$0xff]
    %v145 = vld [vmem:[#allocation5 + $0x38] sm:$0xff]
    %v146 = vld [vmem:[#allocation5 + $0x40] sm:$0xff]
    %v147 = vld [vmem:[#allocation5 + $0x48] sm:$0xff]
    %v148 = vld [vmem:[#allocation5 + $0x50] sm:$0xff]
    %v149 = vld [vmem:[#allocation5 + $0x58] sm:$0xff]
    %v150 = vld [vmem:[#allocation5 + $0x60] sm:$0xff]
    %v151 = vld [vmem:[#allocation5 + $0x68] sm:$0xff]
    %v152 = vld [vmem:[#allocation5 + $0x70] sm:$0xff]
    %v153 = vld [vmem:[#allocation5 + $0x78] sm:$0xff]
    %v154 = vld [vmem:[#allocation5 + $0x80] sm:$0xff]
    %v155 = vld [vmem:[#allocation5 + $0x88] sm:$0xff]
    %v156 = vld [vmem:[#allocation5 + $0x90] sm:$0xff]
    %v157 = vld [vmem:[#allocation5 + $0x98] sm:$0xff]
    %v158 = vld [vmem:[#allocation5 + $0xa0] sm:$0xff]
    %v159 = vld [vmem:[#allocation5 + $0xa8] sm:$0xff]
    %v160 = vld [vmem:[#allocation5 + $0xb0] sm:$0xff]
    %v161 = vld [vmem:[#allocation5 + $0xb8] sm:$0xff]
    %v162 = vld [vmem:[#allocation5 + $0xc0] sm:$0xff]
    %v163 = vld [vmem:[#allocation5 + $0xc8] sm:$0xff]
    %v164 = vld [vmem:[#allocation5 + $0xd0] sm:$0xff]
    %v165 = vld [vmem:[#allocation5 + $0xd8] sm:$0xff]
    %v166 = vld [vmem:[#allocation5 + $0xe0] sm:$0xff]
    %v167 = vld [vmem:[#allocation5 + $0xe8] sm:$0xff]
    %v168 = vld [vmem:[#allocation5 + $0xf0] sm:$0xff]
    %v169 = vld [vmem:[#allocation5 + $0xf8] sm:$0xff]
    %vm170 = vsmask.f32 7424
    %v171 = vshrl.u32 %v133, 16
    %v173 = vshll.u32 %v133, 16
    %v175 = vrot.slane %v173, 1
    %v176 = vor.u32 %v171, %v175
    %v177 = vshll.u32 %v136, 16
    %v179 = vrot.slane %v177, 1
    %v180 = vsel %vm170, %v176, %v179
    %v181 = vshrl.u32 %v135, 16
    %v183 = vshll.u32 %v135, 16
    %v185 = vrot.slane %v183, 1
    %v186 = vor.u32 %v181, %v185
    %v187 = vshll.u32 %v137, 16
    %v189 = vrot.slane %v187, 1
    %v190 = vsel %vm170, %v186, %v189
    %s191 = scalar_lea.vmem [#allocation5], 256
    %v192 = vld [vmem:[%s191] sm:$0xff]
    %v193 = vld [vmem:[%s191 + $0x8] sm:$0xff]
    %v194 = vld [vmem:[%s191 + $0x10] sm:$0xff]
    %v195 = vld [vmem:[%s191 + $0x18] sm:$0xff]
    %v196 = vld [vmem:[%s191 + $0x20] sm:$0xff]
    %v197 = vld [vmem:[%s191 + $0x28] sm:$0xff]
    %v198 = vld [vmem:[%s191 + $0x30] sm:$0xff]
    %v199 = vld [vmem:[%s191 + $0x38] sm:$0xff]
    %v200 = vld [vmem:[%s191 + $0x40] sm:$0xff]
    %v201 = vld [vmem:[%s191 + $0x48] sm:$0xff]
    %v202 = vld [vmem:[%s191 + $0x50] sm:$0xff]
    %v203 = vld [vmem:[%s191 + $0x58] sm:$0xff]
    %v204 = vld [vmem:[%s191 + $0x60] sm:$0xff]
    %v205 = vld [vmem:[%s191 + $0x68] sm:$0xff]
    %v206 = vld [vmem:[%s191 + $0x70] sm:$0xff]
    %v207 = vld [vmem:[%s191 + $0x78] sm:$0xff]
    %v208 = vld [vmem:[%s191 + $0x80] sm:$0xff]
    %v209 = vld [vmem:[%s191 + $0x88] sm:$0xff]
    %v210 = vld [vmem:[%s191 + $0x90] sm:$0xff]
    %v211 = vld [vmem:[%s191 + $0x98] sm:$0xff]
    %v212 = vld [vmem:[%s191 + $0xa0] sm:$0xff]
    %v213 = vld [vmem:[%s191 + $0xa8] sm:$0xff]
    %v214 = vld [vmem:[%s191 + $0xb0] sm:$0xff]
    %v215 = vld [vmem:[%s191 + $0xb8] sm:$0xff]
    %v216 = vld [vmem:[%s191 + $0xc0] sm:$0xff]
    %v217 = vld [vmem:[%s191 + $0xc8] sm:$0xff]
    %v218 = vld [vmem:[%s191 + $0xd0] sm:$0xff]
    %v219 = vld [vmem:[%s191 + $0xd8] sm:$0xff]
    %v220 = vld [vmem:[%s191 + $0xe0] sm:$0xff]
    %v221 = vld [vmem:[%s191 + $0xe8] sm:$0xff]
    %v222 = vld [vmem:[%s191 + $0xf0] sm:$0xff]
    %v223 = vld [vmem:[%s191 + $0xf8] sm:$0xff]
    %v256 = vunpack.c.l.b16 %v192
    %v257 = vunpack.c.h.b16 %v192
    %v258 = vunpack.c.l.b16 %v193
    %v259 = vunpack.c.h.b16 %v193
    %v260 = vunpack.c.l.b16 %v194
    %v261 = vunpack.c.h.b16 %v194
    %v262 = vunpack.c.l.b16 %v195
    %v263 = vunpack.c.h.b16 %v195
    %v264 = vunpack.c.l.b16 %v196
    %v265 = vunpack.c.h.b16 %v196
    %v266 = vunpack.c.l.b16 %v197
    %v267 = vunpack.c.h.b16 %v197
    %v268 = vunpack.c.l.b16 %v198
    %v269 = vunpack.c.h.b16 %v198
    %v270 = vunpack.c.l.b16 %v199
    %v271 = vunpack.c.h.b16 %v199
    %v272 = vunpack.c.l.b16 %v200
    %v273 = vunpack.c.h.b16 %v200
    %v274 = vunpack.c.l.b16 %v201
    %v275 = vunpack.c.h.b16 %v201
    %v276 = vunpack.c.l.b16 %v202
    %v277 = vunpack.c.h.b16 %v202
    %v278 = vunpack.c.l.b16 %v203
    %v279 = vunpack.c.h.b16 %v203
    %v280 = vunpack.c.l.b16 %v204
    %v281 = vunpack.c.h.b16 %v204
    %v282 = vunpack.c.l.b16 %v205
    %v283 = vunpack.c.h.b16 %v205
    %v284 = vunpack.c.l.b16 %v206
    %v285 = vunpack.c.h.b16 %v206
    %v286 = vunpack.c.l.b16 %v207
    %v287 = vunpack.c.h.b16 %v207
    %v288 = vunpack.c.l.b16 %v208
    %v289 = vunpack.c.h.b16 %v208
    %v290 = vunpack.c.l.b16 %v209
    %v291 = vunpack.c.h.b16 %v209
    %v292 = vunpack.c.l.b16 %v210
    %v293 = vunpack.c.h.b16 %v210
    %v294 = vunpack.c.l.b16 %v211
    %v295 = vunpack.c.h.b16 %v211
    %v296 = vunpack.c.l.b16 %v212
    %v297 = vunpack.c.h.b16 %v212
    %v298 = vunpack.c.l.b16 %v213
    %v299 = vunpack.c.h.b16 %v213
    %v300 = vunpack.c.l.b16 %v214
    %v301 = vunpack.c.h.b16 %v214
    %v302 = vunpack.c.l.b16 %v215
    %v303 = vunpack.c.h.b16 %v215
    %v304 = vunpack.c.l.b16 %v216
    %v305 = vunpack.c.h.b16 %v216
    %v306 = vunpack.c.l.b16 %v217
    %v307 = vunpack.c.h.b16 %v217
    %v308 = vunpack.c.l.b16 %v218
    %v309 = vunpack.c.h.b16 %v218
    %v310 = vunpack.c.l.b16 %v219
    %v311 = vunpack.c.h.b16 %v219
    %v312 = vunpack.c.l.b16 %v220
    %v313 = vunpack.c.h.b16 %v220
    %v314 = vunpack.c.l.b16 %v221
    %v315 = vunpack.c.h.b16 %v221
    %v316 = vunpack.c.l.b16 %v222
    %v317 = vunpack.c.h.b16 %v222
    %v318 = vunpack.c.l.b16 %v223
    %v319 = vunpack.c.h.b16 %v223
    %v320 = vpack.c.b16 %v264, %v256
    %v321 = vpack.c.b16 %v265, %v257
    %v322 = vpack.c.b16 %v266, %v258
    %v323 = vpack.c.b16 %v267, %v259
    %v324 = vpack.c.b16 %v268, %v260
    %v325 = vpack.c.b16 %v269, %v261
    %v326 = vpack.c.b16 %v270, %v262
    %v327 = vpack.c.b16 %v271, %v263
    %v328 = vpack.c.b16 %v280, %v272
    %v329 = vpack.c.b16 %v281, %v273
    %v330 = vpack.c.b16 %v282, %v274
    %v331 = vpack.c.b16 %v283, %v275
    %v332 = vpack.c.b16 %v284, %v276
    %v333 = vpack.c.b16 %v285, %v277
    %v334 = vpack.c.b16 %v286, %v278
    %v335 = vpack.c.b16 %v287, %v279
    %v336 = vpack.c.b16 %v296, %v288
    %v337 = vpack.c.b16 %v297, %v289
    %v338 = vpack.c.b16 %v298, %v290
    %v339 = vpack.c.b16 %v299, %v291
    %v340 = vpack.c.b16 %v300, %v292
    %v341 = vpack.c.b16 %v301, %v293
    %v342 = vpack.c.b16 %v302, %v294
    %v343 = vpack.c.b16 %v303, %v295
    %v344 = vpack.c.b16 %v312, %v304
    %v345 = vpack.c.b16 %v313, %v305
    %v346 = vpack.c.b16 %v314, %v306
    %v347 = vpack.c.b16 %v315, %v307
    %v348 = vpack.c.b16 %v316, %v308
    %v349 = vpack.c.b16 %v317, %v309
    %v350 = vpack.c.b16 %v318, %v310
    %v351 = vpack.c.b16 %v319, %v311
    %vm384 = vcmask 523264
    %v386 = vsel %vm384, %v180, 0
    %v389 = vsel %vm384, %v190, 0
    %391 = vmatprep.subr.bf16.mxu0 %v321
    %392 = vmatpush1.bf16.msra.mxu0 %v320
    %393 = vmatprep.subr.bf16.mxu0 %v329
    %394 = vmatpush1.bf16.msra.mxu0 %v328
    %395 = vmatprep.subr.bf16.mxu0 %v337
    %396 = vmatpush1.bf16.msra.mxu0 %v336
    %397 = vmatprep.subr.bf16.mxu0 %v345
    %398 = vmatpush1.bf16.msra.mxu0 %v344
    %399 = vmatprep.subr.bf16.mxu0 0
    %400 = vmatpush1.bf16.msra.mxu0 0
    %401 = vmatprep.subr.bf16.mxu0 0
    %402 = vmatpush1.bf16.msra.mxu0 0
    %403 = vmatprep.subr.bf16.mxu0 0
    %404 = vmatpush1.bf16.msra.mxu0 0
    %405 = vmatprep.subr.bf16.mxu0 0
    %406 = vmatpush1.bf16.msra.mxu0 0
    %407 = vmatprep.subr.bf16.mxu0 0
    %408 = vmatpush1.bf16.msra.mxu0 0
    %409 = vmatprep.subr.bf16.mxu0 0
    %410 = vmatpush1.bf16.msra.mxu0 0
    %411 = vmatprep.subr.bf16.mxu0 0
    %412 = vmatpush1.bf16.msra.mxu0 0
    %413 = vmatprep.subr.bf16.mxu0 0
    %414 = vmatpush1.bf16.msra.mxu0 0
    %415 = vmatprep.subr.bf16.mxu0 0
    %416 = vmatpush1.bf16.msra.mxu0 0
    %417 = vmatprep.subr.bf16.mxu0 0
    %418 = vmatpush1.bf16.msra.mxu0 0
    %419 = vmatprep.subr.bf16.mxu0 0
    %420 = vmatpush1.bf16.msra.mxu0 0
    %421 = vmatprep.subr.bf16.mxu0 0
    %422 = vmatpush1.bf16.msra.mxu0 0
    %423 = vmatprep.mubr.bf16.mxu0 0
    %424 = vmatmul.mubr.bf16.gmra.mrb[0].mxu0 %v386
    %v425 = vpop.f32.mrb[0].mxu0
    %v426 = vadd.f32 0.0, %v425
    %v427 = vpop.f32.mrb[0].mxu0
    %v428 = vadd.f32 0.0, %v427
    %v429 = vpop.f32.mrb[0].mxu0
    %v430 = vadd.f32 0.0, %v429
    %v431 = vpop.f32.mrb[0].mxu0
    %v432 = vadd.f32 0.0, %v431
    %433 = vmatprep.mubr.bf16.mxu0 0
    %434 = vmatmul.mubr.bf16.gmra.mrb[0].mxu0 %v389
    %v435 = vpop.f32.mrb[0].mxu0
    %v436 = vadd.f32 0.0, %v435
    %v437 = vpop.f32.mrb[0].mxu0
    %v438 = vadd.f32 0.0, %v437
    %v439 = vpop.f32.mrb[0].mxu0
    %v440 = vadd.f32 0.0, %v439
    %v441 = vpop.f32.mrb[0].mxu0
    %v442 = vadd.f32 0.0, %v441
    %443 = vdwg.mxu0
    %444 = vmatprep.subr.bf16.mxu0 %v323
    %445 = vmatpush1.bf16.msra.mxu0 %v322
    %446 = vmatprep.subr.bf16.mxu0 %v331
    %447 = vmatpush1.bf16.msra.mxu0 %v330
    %448 = vmatprep.subr.bf16.mxu0 %v339
    %449 = vmatpush1.bf16.msra.mxu0 %v338
    %450 = vmatprep.subr.bf16.mxu0 %v347
    %451 = vmatpush1.bf16.msra.mxu0 %v346
    %452 = vmatprep.subr.bf16.mxu0 0
    %453 = vmatpush1.bf16.msra.mxu0 0
    %454 = vmatprep.subr.bf16.mxu0 0
    %455 = vmatpush1.bf16.msra.mxu0 0
    %456 = vmatprep.subr.bf16.mxu0 0
    %457 = vmatpush1.bf16.msra.mxu0 0
    %458 = vmatprep.subr.bf16.mxu0 0
    %459 = vmatpush1.bf16.msra.mxu0 0
    %460 = vmatprep.subr.bf16.mxu0 0
    %461 = vmatpush1.bf16.msra.mxu0 0
    %462 = vmatprep.subr.bf16.mxu0 0
    %463 = vmatpush1.bf16.msra.mxu0 0
    %464 = vmatprep.subr.bf16.mxu0 0
    %465 = vmatpush1.bf16.msra.mxu0 0
    %466 = vmatprep.subr.bf16.mxu0 0
    %467 = vmatpush1.bf16.msra.mxu0 0
    %468 = vmatprep.subr.bf16.mxu0 0
    %469 = vmatpush1.bf16.msra.mxu0 0
    %470 = vmatprep.subr.bf16.mxu0 0
    %471 = vmatpush1.bf16.msra.mxu0 0
    %472 = vmatprep.subr.bf16.mxu0 0
    %473 = vmatpush1.bf16.msra.mxu0 0
    %474 = vmatprep.subr.bf16.mxu0 0
    %475 = vmatpush1.bf16.msra.mxu0 0
    %476 = vmatprep.mubr.bf16.mxu0 0
    %477 = vmatmul.mubr.bf16.gmra.mrb[0].mxu0 %v386
    %v478 = vpop.f32.mrb[0].mxu0
    %v479 = vadd.f32 0.0, %v478
    %v480 = vpop.f32.mrb[0].mxu0
    %v481 = vadd.f32 0.0, %v480
    %v482 = vpop.f32.mrb[0].mxu0
    %v483 = vadd.f32 0.0, %v482
    %v484 = vpop.f32.mrb[0].mxu0
    %v485 = vadd.f32 0.0, %v484
    %486 = vmatprep.mubr.bf16.mxu0 0
    %487 = vmatmul.mubr.bf16.gmra.mrb[0].mxu0 %v389
    %v488 = vpop.f32.mrb[0].mxu0
    %v489 = vadd.f32 0.0, %v488
    %v490 = vpop.f32.mrb[0].mxu0
    %v491 = vadd.f32 0.0, %v490
    %v492 = vpop.f32.mrb[0].mxu0
    %v493 = vadd.f32 0.0, %v492
    %v494 = vpop.f32.mrb[0].mxu0
    %v495 = vadd.f32 0.0, %v494
    %496 = vdwg.mxu0
    %497 = vmatprep.subr.bf16.mxu0 %v325
    %498 = vmatpush1.bf16.msra.mxu0 %v324
    %499 = vmatprep.subr.bf16.mxu0 %v333
    %500 = vmatpush1.bf16.msra.mxu0 %v332
    %501 = vmatprep.subr.bf16.mxu0 %v341
    %502 = vmatpush1.bf16.msra.mxu0 %v340
    %503 = vmatprep.subr.bf16.mxu0 %v349
    %504 = vmatpush1.bf16.msra.mxu0 %v348
    %505 = vmatprep.subr.bf16.mxu0 0
    %506 = vmatpush1.bf16.msra.mxu0 0
    %507 = vmatprep.subr.bf16.mxu0 0
    %508 = vmatpush1.bf16.msra.mxu0 0
    %509 = vmatprep.subr.bf16.mxu0 0
    %510 = vmatpush1.bf16.msra.mxu0 0
    %511 = vmatprep.subr.bf16.mxu0 0
    %512 = vmatpush1.bf16.msra.mxu0 0
    %513 = vmatprep.subr.bf16.mxu0 0
    %514 = vmatpush1.bf16.msra.mxu0 0
    %515 = vmatprep.subr.bf16.mxu0 0
    %516 = vmatpush1.bf16.msra.mxu0 0
    %517 = vmatprep.subr.bf16.mxu0 0
    %518 = vmatpush1.bf16.msra.mxu0 0
    %519 = vmatprep.subr.bf16.mxu0 0
    %520 = vmatpush1.bf16.msra.mxu0 0
    %521 = vmatprep.subr.bf16.mxu0 0
    %522 = vmatpush1.bf16.msra.mxu0 0
    %523 = vmatprep.subr.bf16.mxu0 0
    %524 = vmatpush1.bf16.msra.mxu0 0
    %525 = vmatprep.subr.bf16.mxu0 0
    %526 = vmatpush1.bf16.msra.mxu0 0
    %527 = vmatprep.subr.bf16.mxu0 0
    %528 = vmatpush1.bf16.msra.mxu0 0
    %529 = vmatprep.mubr.bf16.mxu0 0
    %530 = vmatmul.mubr.bf16.gmra.mrb[0].mxu0 %v386
    %v531 = vpop.f32.mrb[0].mxu0
    %v532 = vadd.f32 0.0, %v531
    %v533 = vpop.f32.mrb[0].mxu0
    %v534 = vadd.f32 0.0, %v533
    %v535 = vpop.f32.mrb[0].mxu0
    %v536 = vadd.f32 0.0, %v535
    %v537 = vpop.f32.mrb[0].mxu0
    %v538 = vadd.f32 0.0, %v537
    %539 = vmatprep.mubr.bf16.mxu0 0
    %540 = vmatmul.mubr.bf16.gmra.mrb[0].mxu0 %v389
    %v541 = vpop.f32.mrb[0].mxu0
    %v542 = vadd.f32 0.0, %v541
    %v543 = vpop.f32.mrb[0].mxu0
    %v544 = vadd.f32 0.0, %v543
    %v545 = vpop.f32.mrb[0].mxu0
    %v546 = vadd.f32 0.0, %v545
    %v547 = vpop.f32.mrb[0].mxu0
    %v548 = vadd.f32 0.0, %v547
    %549 = vdwg.mxu0
    %550 = vmatprep.subr.bf16.mxu0 %v327
    %551 = vmatpush1.bf16.msra.mxu0 %v326
    %552 = vmatprep.subr.bf16.mxu0 %v335
    %553 = vmatpush1.bf16.msra.mxu0 %v334
    %554 = vmatprep.subr.bf16.mxu0 %v343
    %555 = vmatpush1.bf16.msra.mxu0 %v342
    %556 = vmatprep.subr.bf16.mxu0 %v351
    %557 = vmatpush1.bf16.msra.mxu0 %v350
    %558 = vmatprep.subr.bf16.mxu0 0
    %559 = vmatpush1.bf16.msra.mxu0 0
    %560 = vmatprep.subr.bf16.mxu0 0
    %561 = vmatpush1.bf16.msra.mxu0 0
    %562 = vmatprep.subr.bf16.mxu0 0
    %563 = vmatpush1.bf16.msra.mxu0 0
    %564 = vmatprep.subr.bf16.mxu0 0
    %565 = vmatpush1.bf16.msra.mxu0 0
    %566 = vmatprep.subr.bf16.mxu0 0
    %567 = vmatpush1.bf16.msra.mxu0 0
    %568 = vmatprep.subr.bf16.mxu0 0
    %569 = vmatpush1.bf16.msra.mxu0 0
    %570 = vmatprep.subr.bf16.mxu0 0
    %571 = vmatpush1.bf16.msra.mxu0 0
    %572 = vmatprep.subr.bf16.mxu0 0
    %573 = vmatpush1.bf16.msra.mxu0 0
    %574 = vmatprep.subr.bf16.mxu0 0
    %575 = vmatpush1.bf16.msra.mxu0 0
    %576 = vmatprep.subr.bf16.mxu0 0
    %577 = vmatpush1.bf16.msra.mxu0 0
    %578 = vmatprep.subr.bf16.mxu0 0
    %579 = vmatpush1.bf16.msra.mxu0 0
    %580 = vmatprep.subr.bf16.mxu0 0
    %581 = vmatpush1.bf16.msra.mxu0 0
    %582 = vmatprep.mubr.bf16.mxu0 0
    %583 = vmatmul.mubr.bf16.gmra.mrb[0].mxu0 %v386
    %v584 = vpop.f32.mrb[0].mxu0
    %v585 = vadd.f32 0.0, %v584
    %v586 = vpop.f32.mrb[0].mxu0
    %v587 = vadd.f32 0.0, %v586
    %v588 = vpop.f32.mrb[0].mxu0
    %v589 = vadd.f32 0.0, %v588
    %v590 = vpop.f32.mrb[0].mxu0
    %v591 = vadd.f32 0.0, %v590
    %592 = vmatprep.mubr.bf16.mxu0 0
    %593 = vmatmul.mubr.bf16.gmra.mrb[0].mxu0 %v389
    %v594 = vpop.f32.mrb[0].mxu0
    %v595 = vadd.f32 0.0, %v594
    %v596 = vpop.f32.mrb[0].mxu0
    %v597 = vadd.f32 0.0, %v596
    %v598 = vpop.f32.mrb[0].mxu0
    %v599 = vadd.f32 0.0, %v598
    %v600 = vpop.f32.mrb[0].mxu0
    %v601 = vadd.f32 0.0, %v600
    %602 = vdwg.mxu0
    %v635 = vunpack.c.l.b16 %v138
    %v636 = vunpack.c.h.b16 %v138
    %v637 = vunpack.c.l.b16 %v139
    %v638 = vunpack.c.h.b16 %v139
    %v639 = vunpack.c.l.b16 %v140
    %v640 = vunpack.c.h.b16 %v140
    %v641 = vunpack.c.l.b16 %v141
    %v642 = vunpack.c.h.b16 %v141
    %v643 = vunpack.c.l.b16 %v142
    %v644 = vunpack.c.h.b16 %v142
    %v645 = vunpack.c.l.b16 %v143
    %v646 = vunpack.c.h.b16 %v143
    %v647 = vunpack.c.l.b16 %v144
    %v648 = vunpack.c.h.b16 %v144
    %v649 = vunpack.c.l.b16 %v145
    %v650 = vunpack.c.h.b16 %v145
    %v651 = vunpack.c.l.b16 %v146
    %v652 = vunpack.c.h.b16 %v146
    %v653 = vunpack.c.l.b16 %v147
    %v654 = vunpack.c.h.b16 %v147
    %v655 = vunpack.c.l.b16 %v148
    %v656 = vunpack.c.h.b16 %v148
    %v657 = vunpack.c.l.b16 %v149
    %v658 = vunpack.c.h.b16 %v149
    %v659 = vunpack.c.l.b16 %v150
    %v660 = vunpack.c.h.b16 %v150
    %v661 = vunpack.c.l.b16 %v151
    %v662 = vunpack.c.h.b16 %v151
    %v663 = vunpack.c.l.b16 %v152
    %v664 = vunpack.c.h.b16 %v152
    %v665 = vunpack.c.l.b16 %v153
    %v666 = vunpack.c.h.b16 %v153
    %v667 = vunpack.c.l.b16 %v154
    %v668 = vunpack.c.h.b16 %v154
    %v669 = vunpack.c.l.b16 %v155
    %v670 = vunpack.c.h.b16 %v155
    %v671 = vunpack.c.l.b16 %v156
    %v672 = vunpack.c.h.b16 %v156
    %v673 = vunpack.c.l.b16 %v157
    %v674 = vunpack.c.h.b16 %v157
    %v675 = vunpack.c.l.b16 %v158
    %v676 = vunpack.c.h.b16 %v158
    %v677 = vunpack.c.l.b16 %v159
    %v678 = vunpack.c.h.b16 %v159
    %v679 = vunpack.c.l.b16 %v160
    %v680 = vunpack.c.h.b16 %v160
    %v681 = vunpack.c.l.b16 %v161
    %v682 = vunpack.c.h.b16 %v161
    %v683 = vunpack.c.l.b16 %v162
    %v684 = vunpack.c.h.b16 %v162
    %v685 = vunpack.c.l.b16 %v163
    %v686 = vunpack.c.h.b16 %v163
    %v687 = vunpack.c.l.b16 %v164
    %v688 = vunpack.c.h.b16 %v164
    %v689 = vunpack.c.l.b16 %v165
    %v690 = vunpack.c.h.b16 %v165
    %v691 = vunpack.c.l.b16 %v166
    %v692 = vunpack.c.h.b16 %v166
    %v693 = vunpack.c.l.b16 %v167
    %v694 = vunpack.c.h.b16 %v167
    %v695 = vunpack.c.l.b16 %v168
    %v696 = vunpack.c.h.b16 %v168
    %v697 = vunpack.c.l.b16 %v169
    %v698 = vunpack.c.h.b16 %v169
    %v699 = vpack.c.b16 %v643, %v635
    %v700 = vpack.c.b16 %v644, %v636
    %v701 = vpack.c.b16 %v645, %v637
    %v702 = vpack.c.b16 %v646, %v638
    %v703 = vpack.c.b16 %v647, %v639
    %v704 = vpack.c.b16 %v648, %v640
    %v705 = vpack.c.b16 %v649, %v641
    %v706 = vpack.c.b16 %v650, %v642
    %v707 = vpack.c.b16 %v659, %v651
    %v708 = vpack.c.b16 %v660, %v652
    %v709 = vpack.c.b16 %v661, %v653
    %v710 = vpack.c.b16 %v662, %v654
    %v711 = vpack.c.b16 %v663, %v655
    %v712 = vpack.c.b16 %v664, %v656
    %v713 = vpack.c.b16 %v665, %v657
    %v714 = vpack.c.b16 %v666, %v658
    %v715 = vpack.c.b16 %v675, %v667
    %v716 = vpack.c.b16 %v676, %v668
    %v717 = vpack.c.b16 %v677, %v669
    %v718 = vpack.c.b16 %v678, %v670
    %v719 = vpack.c.b16 %v679, %v671
    %v720 = vpack.c.b16 %v680, %v672
    %v721 = vpack.c.b16 %v681, %v673
    %v722 = vpack.c.b16 %v682, %v674
    %v723 = vpack.c.b16 %v691, %v683
    %v724 = vpack.c.b16 %v692, %v684
    %v725 = vpack.c.b16 %v693, %v685
    %v726 = vpack.c.b16 %v694, %v686
    %v727 = vpack.c.b16 %v695, %v687
    %v728 = vpack.c.b16 %v696, %v688
    %v729 = vpack.c.b16 %v697, %v689
    %v730 = vpack.c.b16 %v698, %v690
    %v763 = vsel %vm384, %v133, 0
    %v765 = vsel %vm384, %v135, 0
    %767 = vmatprep.subr.bf16.mxu0 %v700
    %768 = vmatpush1.bf16.msra.mxu0 %v699
    %769 = vmatprep.subr.bf16.mxu0 %v708
    %770 = vmatpush1.bf16.msra.mxu0 %v707
    %771 = vmatprep.subr.bf16.mxu0 %v716
    %772 = vmatpush1.bf16.msra.mxu0 %v715
    %773 = vmatprep.subr.bf16.mxu0 %v724
    %774 = vmatpush1.bf16.msra.mxu0 %v723
    %775 = vmatprep.subr.bf16.mxu0 0
    %776 = vmatpush1.bf16.msra.mxu0 0
    %777 = vmatprep.subr.bf16.mxu0 0
    %778 = vmatpush1.bf16.msra.mxu0 0
    %779 = vmatprep.subr.bf16.mxu0 0
    %780 = vmatpush1.bf16.msra.mxu0 0
    %781 = vmatprep.subr.bf16.mxu0 0
    %782 = vmatpush1.bf16.msra.mxu0 0
    %783 = vmatprep.subr.bf16.mxu0 0
    %784 = vmatpush1.bf16.msra.mxu0 0
    %785 = vmatprep.subr.bf16.mxu0 0
    %786 = vmatpush1.bf16.msra.mxu0 0
    %787 = vmatprep.subr.bf16.mxu0 0
    %788 = vmatpush1.bf16.msra.mxu0 0
    %789 = vmatprep.subr.bf16.mxu0 0
    %790 = vmatpush1.bf16.msra.mxu0 0
    %791 = vmatprep.subr.bf16.mxu0 0
    %792 = vmatpush1.bf16.msra.mxu0 0
    %793 = vmatprep.subr.bf16.mxu0 0
    %794 = vmatpush1.bf16.msra.mxu0 0
    %795 = vmatprep.subr.bf16.mxu0 0
    %796 = vmatpush1.bf16.msra.mxu0 0
    %797 = vmatprep.subr.bf16.mxu0 0
    %798 = vmatpush1.bf16.msra.mxu0 0
    %799 = vmatprep.mubr.bf16.mxu0 0
    %800 = vmatmul.mubr.bf16.gmra.mrb[0].mxu0 %v763
    %v801 = vpop.f32.mrb[0].mxu0
    %v802 = vadd.f32 %v426, %v801
    %v803 = vpop.f32.mrb[0].mxu0
    %v804 = vadd.f32 %v428, %v803
    %v805 = vpop.f32.mrb[0].mxu0
    %v806 = vadd.f32 %v430, %v805
    %v807 = vpop.f32.mrb[0].mxu0
    %v808 = vadd.f32 %v432, %v807
    %809 = vmatprep.mubr.bf16.mxu0 0
    %810 = vmatmul.mubr.bf16.gmra.mrb[0].mxu0 %v765
    %v811 = vpop.f32.mrb[0].mxu0
    %v812 = vadd.f32 %v436, %v811
    %v813 = vpop.f32.mrb[0].mxu0
    %v814 = vadd.f32 %v438, %v813
    %v815 = vpop.f32.mrb[0].mxu0
    %v816 = vadd.f32 %v440, %v815
    %v817 = vpop.f32.mrb[0].mxu0
    %v818 = vadd.f32 %v442, %v817
    %819 = vdwg.mxu0
    %820 = vmatprep.subr.bf16.mxu0 %v702
    %821 = vmatpush1.bf16.msra.mxu0 %v701
    %822 = vmatprep.subr.bf16.mxu0 %v710
    %823 = vmatpush1.bf16.msra.mxu0 %v709
    %824 = vmatprep.subr.bf16.mxu0 %v718
    %825 = vmatpush1.bf16.msra.mxu0 %v717
    %826 = vmatprep.subr.bf16.mxu0 %v726
    %827 = vmatpush1.bf16.msra.mxu0 %v725
    %828 = vmatprep.subr.bf16.mxu0 0
    %829 = vmatpush1.bf16.msra.mxu0 0
    %830 = vmatprep.subr.bf16.mxu0 0
    %831 = vmatpush1.bf16.msra.mxu0 0
    %832 = vmatprep.subr.bf16.mxu0 0
    %833 = vmatpush1.bf16.msra.mxu0 0
    %834 = vmatprep.subr.bf16.mxu0 0
    %835 = vmatpush1.bf16.msra.mxu0 0
    %836 = vmatprep.subr.bf16.mxu0 0
    %837 = vmatpush1.bf16.msra.mxu0 0
    %838 = vmatprep.subr.bf16.mxu0 0
    %839 = vmatpush1.bf16.msra.mxu0 0
    %840 = vmatprep.subr.bf16.mxu0 0
    %841 = vmatpush1.bf16.msra.mxu0 0
    %842 = vmatprep.subr.bf16.mxu0 0
    %843 = vmatpush1.bf16.msra.mxu0 0
    %844 = vmatprep.subr.bf16.mxu0 0
    %845 = vmatpush1.bf16.msra.mxu0 0
    %846 = vmatprep.subr.bf16.mxu0 0
    %847 = vmatpush1.bf16.msra.mxu0 0
    %848 = vmatprep.subr.bf16.mxu0 0
    %849 = vmatpush1.bf16.msra.mxu0 0
    %850 = vmatprep.subr.bf16.mxu0 0
    %851 = vmatpush1.bf16.msra.mxu0 0
    %852 = vmatprep.mubr.bf16.mxu0 0
    %853 = vmatmul.mubr.bf16.gmra.mrb[0].mxu0 %v763
    %v854 = vpop.f32.mrb[0].mxu0
    %v855 = vadd.f32 %v479, %v854
    %v856 = vpop.f32.mrb[0].mxu0
    %v857 = vadd.f32 %v481, %v856
    %v858 = vpop.f32.mrb[0].mxu0
    %v859 = vadd.f32 %v483, %v858
    %v860 = vpop.f32.mrb[0].mxu0
    %v861 = vadd.f32 %v485, %v860
    %862 = vmatprep.mubr.bf16.mxu0 0
    %863 = vmatmul.mubr.bf16.gmra.mrb[0].mxu0 %v765
    %v864 = vpop.f32.mrb[0].mxu0
    %v865 = vadd.f32 %v489, %v864
    %v866 = vpop.f32.mrb[0].mxu0
    %v867 = vadd.f32 %v491, %v866
    %v868 = vpop.f32.mrb[0].mxu0
    %v869 = vadd.f32 %v493, %v868
    %v870 = vpop.f32.mrb[0].mxu0
    %v871 = vadd.f32 %v495, %v870
    %872 = vdwg.mxu0
    %873 = vmatprep.subr.bf16.mxu0 %v704
    %874 = vmatpush1.bf16.msra.mxu0 %v703
    %875 = vmatprep.subr.bf16.mxu0 %v712
    %876 = vmatpush1.bf16.msra.mxu0 %v711
    %877 = vmatprep.subr.bf16.mxu0 %v720
    %878 = vmatpush1.bf16.msra.mxu0 %v719
    %879 = vmatprep.subr.bf16.mxu0 %v728
    %880 = vmatpush1.bf16.msra.mxu0 %v727
    %881 = vmatprep.subr.bf16.mxu0 0
    %882 = vmatpush1.bf16.msra.mxu0 0
    %883 = vmatprep.subr.bf16.mxu0 0
    %884 = vmatpush1.bf16.msra.mxu0 0
    %885 = vmatprep.subr.bf16.mxu0 0
    %886 = vmatpush1.bf16.msra.mxu0 0
    %887 = vmatprep.subr.bf16.mxu0 0
    %888 = vmatpush1.bf16.msra.mxu0 0
    %889 = vmatprep.subr.bf16.mxu0 0
    %890 = vmatpush1.bf16.msra.mxu0 0
    %891 = vmatprep.subr.bf16.mxu0 0
    %892 = vmatpush1.bf16.msra.mxu0 0
    %893 = vmatprep.subr.bf16.mxu0 0
    %894 = vmatpush1.bf16.msra.mxu0 0
    %895 = vmatprep.subr.bf16.mxu0 0
    %896 = vmatpush1.bf16.msra.mxu0 0
    %897 = vmatprep.subr.bf16.mxu0 0
    %898 = vmatpush1.bf16.msra.mxu0 0
    %899 = vmatprep.subr.bf16.mxu0 0
    %900 = vmatpush1.bf16.msra.mxu0 0
    %901 = vmatprep.subr.bf16.mxu0 0
    %902 = vmatpush1.bf16.msra.mxu0 0
    %903 = vmatprep.subr.bf16.mxu0 0
    %904 = vmatpush1.bf16.msra.mxu0 0
    %905 = vmatprep.mubr.bf16.mxu0 0
    %906 = vmatmul.mubr.bf16.gmra.mrb[0].mxu0 %v763
    %v907 = vpop.f32.mrb[0].mxu0
    %v908 = vadd.f32 %v532, %v907
    %v909 = vpop.f32.mrb[0].mxu0
    %v910 = vadd.f32 %v534, %v909
    %v911 = vpop.f32.mrb[0].mxu0
    %v912 = vadd.f32 %v536, %v911
    %v913 = vpop.f32.mrb[0].mxu0
    %v914 = vadd.f32 %v538, %v913
    %915 = vmatprep.mubr.bf16.mxu0 0
    %916 = vmatmul.mubr.bf16.gmra.mrb[0].mxu0 %v765
    %v917 = vpop.f32.mrb[0].mxu0
    %v918 = vadd.f32 %v542, %v917
    %v919 = vpop.f32.mrb[0].mxu0
    %v920 = vadd.f32 %v544, %v919
    %v921 = vpop.f32.mrb[0].mxu0
    %v922 = vadd.f32 %v546, %v921
    %v923 = vpop.f32.mrb[0].mxu0
    %v924 = vadd.f32 %v548, %v923
    %925 = vdwg.mxu0
    %926 = vmatprep.subr.bf16.mxu0 %v706
    %927 = vmatpush1.bf16.msra.mxu0 %v705
    %928 = vmatprep.subr.bf16.mxu0 %v714
    %929 = vmatpush1.bf16.msra.mxu0 %v713
    %930 = vmatprep.subr.bf16.mxu0 %v722
    %931 = vmatpush1.bf16.msra.mxu0 %v721
    %932 = vmatprep.subr.bf16.mxu0 %v730
    %933 = vmatpush1.bf16.msra.mxu0 %v729
    %934 = vmatprep.subr.bf16.mxu0 0
    %935 = vmatpush1.bf16.msra.mxu0 0
    %936 = vmatprep.subr.bf16.mxu0 0
    %937 = vmatpush1.bf16.msra.mxu0 0
    %938 = vmatprep.subr.bf16.mxu0 0
    %939 = vmatpush1.bf16.msra.mxu0 0
    %940 = vmatprep.subr.bf16.mxu0 0
    %941 = vmatpush1.bf16.msra.mxu0 0
    %942 = vmatprep.subr.bf16.mxu0 0
    %943 = vmatpush1.bf16.msra.mxu0 0
    %944 = vmatprep.subr.bf16.mxu0 0
    %945 = vmatpush1.bf16.msra.mxu0 0
    %946 = vmatprep.subr.bf16.mxu0 0
    %947 = vmatpush1.bf16.msra.mxu0 0
    %948 = vmatprep.subr.bf16.mxu0 0
    %949 = vmatpush1.bf16.msra.mxu0 0
    %950 = vmatprep.subr.bf16.mxu0 0
    %951 = vmatpush1.bf16.msra.mxu0 0
    %952 = vmatprep.subr.bf16.mxu0 0
    %953 = vmatpush1.bf16.msra.mxu0 0
    %954 = vmatprep.subr.bf16.mxu0 0
    %955 = vmatpush1.bf16.msra.mxu0 0
    %956 = vmatprep.subr.bf16.mxu0 0
    %957 = vmatpush1.bf16.msra.mxu0 0
    %958 = vmatprep.mubr.bf16.mxu0 0
    %959 = vmatmul.mubr.bf16.gmra.mrb[0].mxu0 %v763
    %v960 = vpop.f32.mrb[0].mxu0
    %v961 = vadd.f32 %v585, %v960
    %v962 = vpop.f32.mrb[0].mxu0
    %v963 = vadd.f32 %v587, %v962
    %v964 = vpop.f32.mrb[0].mxu0
    %v965 = vadd.f32 %v589, %v964
    %v966 = vpop.f32.mrb[0].mxu0
    %v967 = vadd.f32 %v591, %v966
    %968 = vmatprep.mubr.bf16.mxu0 0
    %969 = vmatmul.mubr.bf16.gmra.mrb[0].mxu0 %v765
    %v970 = vpop.f32.mrb[0].mxu0
    %v971 = vadd.f32 %v595, %v970
    %v972 = vpop.f32.mrb[0].mxu0
    %v973 = vadd.f32 %v597, %v972
    %v974 = vpop.f32.mrb[0].mxu0
    %v975 = vadd.f32 %v599, %v974
    %v976 = vpop.f32.mrb[0].mxu0
    %v977 = vadd.f32 %v601, %v976
    %978 = vdwg.mxu0
    %vm983 = vcmask 1046528
    %v984 = vrot.slane %v133, 1
    %v985 = vrot.slane %v136, 1
    %v986 = vsel %vm983, %v984, %v985
    %v987 = vrot.slane %v135, 1
    %v988 = vrot.slane %v137, 1
    %v989 = vsel %vm983, %v987, %v988
    %s990 = scalar_lea.vmem [#allocation5], 512
    %v991 = vld [vmem:[%s990] sm:$0xff]
    %v992 = vld [vmem:[%s990 + $0x8] sm:$0xff]
    %v993 = vld [vmem:[%s990 + $0x10] sm:$0xff]
    %v994 = vld [vmem:[%s990 + $0x18] sm:$0xff]
    %v995 = vld [vmem:[%s990 + $0x20] sm:$0xff]
    %v996 = vld [vmem:[%s990 + $0x28] sm:$0xff]
    %v997 = vld [vmem:[%s990 + $0x30] sm:$0xff]
    %v998 = vld [vmem:[%s990 + $0x38] sm:$0xff]
    %v999 = vld [vmem:[%s990 + $0x40] sm:$0xff]
    %v1000 = vld [vmem:[%s990 + $0x48] sm:$0xff]
    %v1001 = vld [vmem:[%s990 + $0x50] sm:$0xff]
    %v1002 = vld [vmem:[%s990 + $0x58] sm:$0xff]
    %v1003 = vld [vmem:[%s990 + $0x60] sm:$0xff]
    %v1004 = vld [vmem:[%s990 + $0x68] sm:$0xff]
    %v1005 = vld [vmem:[%s990 + $0x70] sm:$0xff]
    %v1006 = vld [vmem:[%s990 + $0x78] sm:$0xff]
    %v1007 = vld [vmem:[%s990 + $0x80] sm:$0xff]
    %v1008 = vld [vmem:[%s990 + $0x88] sm:$0xff]
    %v1009 = vld [vmem:[%s990 + $0x90] sm:$0xff]
    %v1010 = vld [vmem:[%s990 + $0x98] sm:$0xff]
    %v1011 = vld [vmem:[%s990 + $0xa0] sm:$0xff]
    %v1012 = vld [vmem:[%s990 + $0xa8] sm:$0xff]
    %v1013 = vld [vmem:[%s990 + $0xb0] sm:$0xff]
    %v1014 = vld [vmem:[%s990 + $0xb8] sm:$0xff]
    %v1015 = vld [vmem:[%s990 + $0xc0] sm:$0xff]
    %v1016 = vld [vmem:[%s990 + $0xc8] sm:$0xff]
    %v1017 = vld [vmem:[%s990 + $0xd0] sm:$0xff]
    %v1018 = vld [vmem:[%s990 + $0xd8] sm:$0xff]
    %v1019 = vld [vmem:[%s990 + $0xe0] sm:$0xff]
    %v1020 = vld [vmem:[%s990 + $0xe8] sm:$0xff]
    %v1021 = vld [vmem:[%s990 + $0xf0] sm:$0xff]
    %v1022 = vld [vmem:[%s990 + $0xf8] sm:$0xff]
    %v1055 = vunpack.c.l.b16 %v991
    %v1056 = vunpack.c.h.b16 %v991
    %v1057 = vunpack.c.l.b16 %v992
    %v1058 = vunpack.c.h.b16 %v992
    %v1059 = vunpack.c.l.b16 %v993
    %v1060 = vunpack.c.h.b16 %v993
    %v1061 = vunpack.c.l.b16 %v994
    %v1062 = vunpack.c.h.b16 %v994
    %v1063 = vunpack.c.l.b16 %v995
    %v1064 = vunpack.c.h.b16 %v995
    %v1065 = vunpack.c.l.b16 %v996
    %v1066 = vunpack.c.h.b16 %v996
    %v1067 = vunpack.c.l.b16 %v997
    %v1068 = vunpack.c.h.b16 %v997
    %v1069 = vunpack.c.l.b16 %v998
    %v1070 = vunpack.c.h.b16 %v998
    %v1071 = vunpack.c.l.b16 %v999
    %v1072 = vunpack.c.h.b16 %v999
    %v1073 = vunpack.c.l.b16 %v1000
    %v1074 = vunpack.c.h.b16 %v1000
    %v1075 = vunpack.c.l.b16 %v1001
    %v1076 = vunpack.c.h.b16 %v1001
    %v1077 = vunpack.c.l.b16 %v1002
    %v1078 = vunpack.c.h.b16 %v1002
    %v1079 = vunpack.c.l.b16 %v1003
    %v1080 = vunpack.c.h.b16 %v1003
    %v1081 = vunpack.c.l.b16 %v1004
    %v1082 = vunpack.c.h.b16 %v1004
    %v1083 = vunpack.c.l.b16 %v1005
    %v1084 = vunpack.c.h.b16 %v1005
    %v1085 = vunpack.c.l.b16 %v1006
    %v1086 = vunpack.c.h.b16 %v1006
    %v1087 = vunpack.c.l.b16 %v1007
    %v1088 = vunpack.c.h.b16 %v1007
    %v1089 = vunpack.c.l.b16 %v1008
    %v1090 = vunpack.c.h.b16 %v1008
    %v1091 = vunpack.c.l.b16 %v1009
    %v1092 = vunpack.c.h.b16 %v1009
    %v1093 = vunpack.c.l.b16 %v1010
    %v1094 = vunpack.c.h.b16 %v1010
    %v1095 = vunpack.c.l.b16 %v1011
    %v1096 = vunpack.c.h.b16 %v1011
    %v1097 = vunpack.c.l.b16 %v1012
    %v1098 = vunpack.c.h.b16 %v1012
    %v1099 = vunpack.c.l.b16 %v1013
    %v1100 = vunpack.c.h.b16 %v1013
    %v1101 = vunpack.c.l.b16 %v1014
    %v1102 = vunpack.c.h.b16 %v1014
    %v1103 = vunpack.c.l.b16 %v1015
    %v1104 = vunpack.c.h.b16 %v1015
    %v1105 = vunpack.c.l.b16 %v1016
    %v1106 = vunpack.c.h.b16 %v1016
    %v1107 = vunpack.c.l.b16 %v1017
    %v1108 = vunpack.c.h.b16 %v1017
    %v1109 = vunpack.c.l.b16 %v1018
    %v1110 = vunpack.c.h.b16 %v1018
    %v1111 = vunpack.c.l.b16 %v1019
    %v1112 = vunpack.c.h.b16 %v1019
    %v1113 = vunpack.c.l.b16 %v1020
    %v1114 = vunpack.c.h.b16 %v1020
    %v1115 = vunpack.c.l.b16 %v1021
    %v1116 = vunpack.c.h.b16 %v1021
    %v1117 = vunpack.c.l.b16 %v1022
    %v1118 = vunpack.c.h.b16 %v1022
    %v1119 = vpack.c.b16 %v1063, %v1055
    %v1120 = vpack.c.b16 %v1064, %v1056
    %v1121 = vpack.c.b16 %v1065, %v1057
    %v1122 = vpack.c.b16 %v1066, %v1058
    %v1123 = vpack.c.b16 %v1067, %v1059
    %v1124 = vpack.c.b16 %v1068, %v1060
    %v1125 = vpack.c.b16 %v1069, %v1061
    %v1126 = vpack.c.b16 %v1070, %v1062
    %v1127 = vpack.c.b16 %v1079, %v1071
    %v1128 = vpack.c.b16 %v1080, %v1072
    %v1129 = vpack.c.b16 %v1081, %v1073
    %v1130 = vpack.c.b16 %v1082, %v1074
    %v1131 = vpack.c.b16 %v1083, %v1075
    %v1132 = vpack.c.b16 %v1084, %v1076
    %v1133 = vpack.c.b16 %v1085, %v1077
    %v1134 = vpack.c.b16 %v1086, %v1078
    %v1135 = vpack.c.b16 %v1095, %v1087
    %v1136 = vpack.c.b16 %v1096, %v1088
    %v1137 = vpack.c.b16 %v1097, %v1089
    %v1138 = vpack.c.b16 %v1098, %v1090
    %v1139 = vpack.c.b16 %v1099, %v1091
    %v1140 = vpack.c.b16 %v1100, %v1092
    %v1141 = vpack.c.b16 %v1101, %v1093
    %v1142 = vpack.c.b16 %v1102, %v1094
    %v1143 = vpack.c.b16 %v1111, %v1103
    %v1144 = vpack.c.b16 %v1112, %v1104
    %v1145 = vpack.c.b16 %v1113, %v1105
    %v1146 = vpack.c.b16 %v1114, %v1106
    %v1147 = vpack.c.b16 %v1115, %v1107
    %v1148 = vpack.c.b16 %v1116, %v1108
    %v1149 = vpack.c.b16 %v1117, %v1109
    %v1150 = vpack.c.b16 %v1118, %v1110
    %v1184 = vsel %vm384, %v986, 0
    %v1187 = vsel %vm384, %v989, 0
    %1189 = vmatprep.subr.bf16.mxu0 %v1120
    %1190 = vmatpush1.bf16.msra.mxu0 %v1119
    %1191 = vmatprep.subr.bf16.mxu0 %v1128
    %1192 = vmatpush1.bf16.msra.mxu0 %v1127
    %1193 = vmatprep.subr.bf16.mxu0 %v1136
    %1194 = vmatpush1.bf16.msra.mxu0 %v1135
    %1195 = vmatprep.subr.bf16.mxu0 %v1144
    %1196 = vmatpush1.bf16.msra.mxu0 %v1143
    %1197 = vmatprep.subr.bf16.mxu0 0
    %1198 = vmatpush1.bf16.msra.mxu0 0
    %1199 = vmatprep.subr.bf16.mxu0 0
    %1200 = vmatpush1.bf16.msra.mxu0 0
    %1201 = vmatprep.subr.bf16.mxu0 0
    %1202 = vmatpush1.bf16.msra.mxu0 0
    %1203 = vmatprep.subr.bf16.mxu0 0
    %1204 = vmatpush1.bf16.msra.mxu0 0
    %1205 = vmatprep.subr.bf16.mxu0 0
    %1206 = vmatpush1.bf16.msra.mxu0 0
    %1207 = vmatprep.subr.bf16.mxu0 0
    %1208 = vmatpush1.bf16.msra.mxu0 0
    %1209 = vmatprep.subr.bf16.mxu0 0
    %1210 = vmatpush1.bf16.msra.mxu0 0
    %1211 = vmatprep.subr.bf16.mxu0 0
    %1212 = vmatpush1.bf16.msra.mxu0 0
    %1213 = vmatprep.subr.bf16.mxu0 0
    %1214 = vmatpush1.bf16.msra.mxu0 0
    %1215 = vmatprep.subr.bf16.mxu0 0
    %1216 = vmatpush1.bf16.msra.mxu0 0
    %1217 = vmatprep.subr.bf16.mxu0 0
    %1218 = vmatpush1.bf16.msra.mxu0 0
    %1219 = vmatprep.subr.bf16.mxu0 0
    %1220 = vmatpush1.bf16.msra.mxu0 0
    %1221 = vmatprep.mubr.bf16.mxu0 0
    %1222 = vmatmul.mubr.bf16.gmra.mrb[0].mxu0 %v1184
    %v1223 = vpop.f32.mrb[0].mxu0
    %v1224 = vadd.f32 0.0, %v1223
    %v1225 = vpop.f32.mrb[0].mxu0
    %v1226 = vadd.f32 0.0, %v1225
    %v1227 = vpop.f32.mrb[0].mxu0
    %v1228 = vadd.f32 0.0, %v1227
    %v1229 = vpop.f32.mrb[0].mxu0
    %v1230 = vadd.f32 0.0, %v1229
    %1231 = vmatprep.mubr.bf16.mxu0 0
    %1232 = vmatmul.mubr.bf16.gmra.mrb[0].mxu0 %v1187
    %v1233 = vpop.f32.mrb[0].mxu0
    %v1234 = vadd.f32 0.0, %v1233
    %v1235 = vpop.f32.mrb[0].mxu0
    %v1236 = vadd.f32 0.0, %v1235
    %v1237 = vpop.f32.mrb[0].mxu0
    %v1238 = vadd.f32 0.0, %v1237
    %v1239 = vpop.f32.mrb[0].mxu0
    %v1240 = vadd.f32 0.0, %v1239
    %1241 = vdwg.mxu0
    %1242 = vmatprep.subr.bf16.mxu0 %v1122
    %1243 = vmatpush1.bf16.msra.mxu0 %v1121
    %1244 = vmatprep.subr.bf16.mxu0 %v1130
    %1245 = vmatpush1.bf16.msra.mxu0 %v1129
    %1246 = vmatprep.subr.bf16.mxu0 %v1138
    %1247 = vmatpush1.bf16.msra.mxu0 %v1137
    %1248 = vmatprep.subr.bf16.mxu0 %v1146
    %1249 = vmatpush1.bf16.msra.mxu0 %v1145
    %1250 = vmatprep.subr.bf16.mxu0 0
    %1251 = vmatpush1.bf16.msra.mxu0 0
    %1252 = vmatprep.subr.bf16.mxu0 0
    %1253 = vmatpush1.bf16.msra.mxu0 0
    %1254 = vmatprep.subr.bf16.mxu0 0
    %1255 = vmatpush1.bf16.msra.mxu0 0
    %1256 = vmatprep.subr.bf16.mxu0 0
    %1257 = vmatpush1.bf16.msra.mxu0 0
    %1258 = vmatprep.subr.bf16.mxu0 0
    %1259 = vmatpush1.bf16.msra.mxu0 0
    %1260 = vmatprep.subr.bf16.mxu0 0
    %1261 = vmatpush1.bf16.msra.mxu0 0
    %1262 = vmatprep.subr.bf16.mxu0 0
    %1263 = vmatpush1.bf16.msra.mxu0 0
    %1264 = vmatprep.subr.bf16.mxu0 0
    %1265 = vmatpush1.bf16.msra.mxu0 0
    %1266 = vmatprep.subr.bf16.mxu0 0
    %1267 = vmatpush1.bf16.msra.mxu0 0
    %1268 = vmatprep.subr.bf16.mxu0 0
    %1269 = vmatpush1.bf16.msra.mxu0 0
    %1270 = vmatprep.subr.bf16.mxu0 0
    %1271 = vmatpush1.bf16.msra.mxu0 0
    %1272 = vmatprep.subr.bf16.mxu0 0
    %1273 = vmatpush1.bf16.msra.mxu0 0
    %1274 = vmatprep.mubr.bf16.mxu0 0
    %1275 = vmatmul.mubr.bf16.gmra.mrb[0].mxu0 %v1184
    %v1276 = vpop.f32.mrb[0].mxu0
    %v1277 = vadd.f32 0.0, %v1276
    %v1278 = vpop.f32.mrb[0].mxu0
    %v1279 = vadd.f32 0.0, %v1278
    %v1280 = vpop.f32.mrb[0].mxu0
    %v1281 = vadd.f32 0.0, %v1280
    %v1282 = vpop.f32.mrb[0].mxu0
    %v1283 = vadd.f32 0.0, %v1282
    %1284 = vmatprep.mubr.bf16.mxu0 0
    %1285 = vmatmul.mubr.bf16.gmra.mrb[0].mxu0 %v1187
    %v1286 = vpop.f32.mrb[0].mxu0
    %v1287 = vadd.f32 0.0, %v1286
    %v1288 = vpop.f32.mrb[0].mxu0
    %v1289 = vadd.f32 0.0, %v1288
    %v1290 = vpop.f32.mrb[0].mxu0
    %v1291 = vadd.f32 0.0, %v1290
    %v1292 = vpop.f32.mrb[0].mxu0
    %v1293 = vadd.f32 0.0, %v1292
    %1294 = vdwg.mxu0
    %1295 = vmatprep.subr.bf16.mxu0 %v1124
    %1296 = vmatpush1.bf16.msra.mxu0 %v1123
    %1297 = vmatprep.subr.bf16.mxu0 %v1132
    %1298 = vmatpush1.bf16.msra.mxu0 %v1131
    %1299 = vmatprep.subr.bf16.mxu0 %v1140
    %1300 = vmatpush1.bf16.msra.mxu0 %v1139
    %1301 = vmatprep.subr.bf16.mxu0 %v1148
    %1302 = vmatpush1.bf16.msra.mxu0 %v1147
    %1303 = vmatprep.subr.bf16.mxu0 0
    %1304 = vmatpush1.bf16.msra.mxu0 0
    %1305 = vmatprep.subr.bf16.mxu0 0
    %1306 = vmatpush1.bf16.msra.mxu0 0
    %1307 = vmatprep.subr.bf16.mxu0 0
    %1308 = vmatpush1.bf16.msra.mxu0 0
    %1309 = vmatprep.subr.bf16.mxu0 0
    %1310 = vmatpush1.bf16.msra.mxu0 0
    %1311 = vmatprep.subr.bf16.mxu0 0
    %1312 = vmatpush1.bf16.msra.mxu0 0
    %1313 = vmatprep.subr.bf16.mxu0 0
    %1314 = vmatpush1.bf16.msra.mxu0 0
    %1315 = vmatprep.subr.bf16.mxu0 0
    %1316 = vmatpush1.bf16.msra.mxu0 0
    %1317 = vmatprep.subr.bf16.mxu0 0
    %1318 = vmatpush1.bf16.msra.mxu0 0
    %1319 = vmatprep.subr.bf16.mxu0 0
    %1320 = vmatpush1.bf16.msra.mxu0 0
    %1321 = vmatprep.subr.bf16.mxu0 0
    %1322 = vmatpush1.bf16.msra.mxu0 0
    %1323 = vmatprep.subr.bf16.mxu0 0
    %1324 = vmatpush1.bf16.msra.mxu0 0
    %1325 = vmatprep.subr.bf16.mxu0 0
    %1326 = vmatpush1.bf16.msra.mxu0 0
    %1327 = vmatprep.mubr.bf16.mxu0 0
    %1328 = vmatmul.mubr.bf16.gmra.mrb[0].mxu0 %v1184
    %v1329 = vpop.f32.mrb[0].mxu0
    %v1330 = vadd.f32 0.0, %v1329
    %v1331 = vpop.f32.mrb[0].mxu0
    %v1332 = vadd.f32 0.0, %v1331
    %v1333 = vpop.f32.mrb[0].mxu0
    %v1334 = vadd.f32 0.0, %v1333
    %v1335 = vpop.f32.mrb[0].mxu0
    %v1336 = vadd.f32 0.0, %v1335
    %1337 = vmatprep.mubr.bf16.mxu0 0
    %1338 = vmatmul.mubr.bf16.gmra.mrb[0].mxu0 %v1187
    %v1339 = vpop.f32.mrb[0].mxu0
    %v1340 = vadd.f32 0.0, %v1339
    %v1341 = vpop.f32.mrb[0].mxu0
    %v1342 = vadd.f32 0.0, %v1341
    %v1343 = vpop.f32.mrb[0].mxu0
    %v1344 = vadd.f32 0.0, %v1343
    %v1345 = vpop.f32.mrb[0].mxu0
    %v1346 = vadd.f32 0.0, %v1345
    %1347 = vdwg.mxu0
    %1348 = vmatprep.subr.bf16.mxu0 %v1126
    %1349 = vmatpush1.bf16.msra.mxu0 %v1125
    %1350 = vmatprep.subr.bf16.mxu0 %v1134
    %1351 = vmatpush1.bf16.msra.mxu0 %v1133
    %1352 = vmatprep.subr.bf16.mxu0 %v1142
    %1353 = vmatpush1.bf16.msra.mxu0 %v1141
    %1354 = vmatprep.subr.bf16.mxu0 %v1150
    %1355 = vmatpush1.bf16.msra.mxu0 %v1149
    %1356 = vmatprep.subr.bf16.mxu0 0
    %1357 = vmatpush1.bf16.msra.mxu0 0
    %1358 = vmatprep.subr.bf16.mxu0 0
    %1359 = vmatpush1.bf16.msra.mxu0 0
    %1360 = vmatprep.subr.bf16.mxu0 0
    %1361 = vmatpush1.bf16.msra.mxu0 0
    %1362 = vmatprep.subr.bf16.mxu0 0
    %1363 = vmatpush1.bf16.msra.mxu0 0
    %1364 = vmatprep.subr.bf16.mxu0 0
    %1365 = vmatpush1.bf16.msra.mxu0 0
    %1366 = vmatprep.subr.bf16.mxu0 0
    %1367 = vmatpush1.bf16.msra.mxu0 0
    %1368 = vmatprep.subr.bf16.mxu0 0
    %1369 = vmatpush1.bf16.msra.mxu0 0
    %1370 = vmatprep.subr.bf16.mxu0 0
    %1371 = vmatpush1.bf16.msra.mxu0 0
    %1372 = vmatprep.subr.bf16.mxu0 0
    %1373 = vmatpush1.bf16.msra.mxu0 0
    %1374 = vmatprep.subr.bf16.mxu0 0
    %1375 = vmatpush1.bf16.msra.mxu0 0
    %1376 = vmatprep.subr.bf16.mxu0 0
    %1377 = vmatpush1.bf16.msra.mxu0 0
    %1378 = vmatprep.subr.bf16.mxu0 0
    %1379 = vmatpush1.bf16.msra.mxu0 0
    %1380 = vmatprep.mubr.bf16.mxu0 0
    %1381 = vmatmul.mubr.bf16.gmra.mrb[0].mxu0 %v1184
    %v1382 = vpop.f32.mrb[0].mxu0
    %v1383 = vadd.f32 0.0, %v1382
    %v1384 = vpop.f32.mrb[0].mxu0
    %v1385 = vadd.f32 0.0, %v1384
    %v1386 = vpop.f32.mrb[0].mxu0
    %v1387 = vadd.f32 0.0, %v1386
    %v1388 = vpop.f32.mrb[0].mxu0
    %v1389 = vadd.f32 0.0, %v1388
    %1390 = vmatprep.mubr.bf16.mxu0 0
    %1391 = vmatmul.mubr.bf16.gmra.mrb[0].mxu0 %v1187
    %v1392 = vpop.f32.mrb[0].mxu0
    %v1393 = vadd.f32 0.0, %v1392
    %v1394 = vpop.f32.mrb[0].mxu0
    %v1395 = vadd.f32 0.0, %v1394
    %v1396 = vpop.f32.mrb[0].mxu0
    %v1397 = vadd.f32 0.0, %v1396
    %v1398 = vpop.f32.mrb[0].mxu0
    %v1399 = vadd.f32 0.0, %v1398
    %1400 = vdwg.mxu0
    %v1401 = vadd.f32 %v802, %v1224
    %v1402 = vadd.f32 %v804, %v1226
    %v1403 = vadd.f32 %v855, %v1277
    %v1404 = vadd.f32 %v857, %v1279
    %v1405 = vadd.f32 %v908, %v1330
    %v1406 = vadd.f32 %v910, %v1332
    %v1407 = vadd.f32 %v961, %v1383
    %v1408 = vadd.f32 %v963, %v1385
    %v1409 = vadd.f32 %v806, %v1228
    %v1410 = vadd.f32 %v808, %v1230
    %v1411 = vadd.f32 %v859, %v1281
    %v1412 = vadd.f32 %v861, %v1283
    %v1413 = vadd.f32 %v912, %v1334
    %v1414 = vadd.f32 %v914, %v1336
    %v1415 = vadd.f32 %v965, %v1387
    %v1416 = vadd.f32 %v967, %v1389
    %v1417 = vadd.f32 %v812, %v1234
    %v1418 = vadd.f32 %v814, %v1236
    %v1419 = vadd.f32 %v865, %v1287
    %v1420 = vadd.f32 %v867, %v1289
    %v1421 = vadd.f32 %v918, %v1340
    %v1422 = vadd.f32 %v920, %v1342
    %v1423 = vadd.f32 %v971, %v1393
    %v1424 = vadd.f32 %v973, %v1395
    %v1425 = vadd.f32 %v816, %v1238
    %v1426 = vadd.f32 %v818, %v1240
    %v1427 = vadd.f32 %v869, %v1291
    %v1428 = vadd.f32 %v871, %v1293
    %v1429 = vadd.f32 %v922, %v1344
    %v1430 = vadd.f32 %v924, %v1346
    %v1431 = vadd.f32 %v975, %v1397
    %v1432 = vadd.f32 %v977, %v1399
    %vm1433 = vsmask.f32 6400
    %v1434 = vrot.slane %v171, 1
    %v1435 = vrot.slane %v173, 2
    %v1436 = vor.u32 %v1434, %v1435
    %v1437 = vshrl.u32 %v136, 16
    %v1439 = vrot.slane %v1437, 1
    %v1440 = vrot.slane %v177, 2
    %v1441 = vor.u32 %v1439, %v1440
    %v1442 = vsel %vm1433, %v1436, %v1441
    %v1443 = vrot.slane %v181, 1
    %v1444 = vrot.slane %v183, 2
    %v1445 = vor.u32 %v1443, %v1444
    %v1446 = vshrl.u32 %v137, 16
    %v1448 = vrot.slane %v1446, 1
    %v1449 = vrot.slane %v187, 2
    %v1450 = vor.u32 %v1448, %v1449
    %v1451 = vsel %vm1433, %v1445, %v1450
    %s1452 = scalar_lea.vmem [#allocation5], 768
    %v1453 = vld [vmem:[%s1452] sm:$0xff]
    %v1454 = vld [vmem:[%s1452 + $0x8] sm:$0xff]
    %v1455 = vld [vmem:[%s1452 + $0x10] sm:$0xff]
    %v1456 = vld [vmem:[%s1452 + $0x18] sm:$0xff]
    %v1457 = vld [vmem:[%s1452 + $0x20] sm:$0xff]
    %v1458 = vld [vmem:[%s1452 + $0x28] sm:$0xff]
    %v1459 = vld [vmem:[%s1452 + $0x30] sm:$0xff]
    %v1460 = vld [vmem:[%s1452 + $0x38] sm:$0xff]
    %v1461 = vld [vmem:[%s1452 + $0x40] sm:$0xff]
    %v1462 = vld [vmem:[%s1452 + $0x48] sm:$0xff]
    %v1463 = vld [vmem:[%s1452 + $0x50] sm:$0xff]
    %v1464 = vld [vmem:[%s1452 + $0x58] sm:$0xff]
    %v1465 = vld [vmem:[%s1452 + $0x60] sm:$0xff]
    %v1466 = vld [vmem:[%s1452 + $0x68] sm:$0xff]
    %v1467 = vld [vmem:[%s1452 + $0x70] sm:$0xff]
    %v1468 = vld [vmem:[%s1452 + $0x78] sm:$0xff]
    %v1469 = vld [vmem:[%s1452 + $0x80] sm:$0xff]
    %v1470 = vld [vmem:[%s1452 + $0x88] sm:$0xff]
    %v1471 = vld [vmem:[%s1452 + $0x90] sm:$0xff]
    %v1472 = vld [vmem:[%s1452 + $0x98] sm:$0xff]
    %v1473 = vld [vmem:[%s1452 + $0xa0] sm:$0xff]
    %v1474 = vld [vmem:[%s1452 + $0xa8] sm:$0xff]
    %v1475 = vld [vmem:[%s1452 + $0xb0] sm:$0xff]
    %v1476 = vld [vmem:[%s1452 + $0xb8] sm:$0xff]
    %v1477 = vld [vmem:[%s1452 + $0xc0] sm:$0xff]
    %v1478 = vld [vmem:[%s1452 + $0xc8] sm:$0xff]
    %v1479 = vld [vmem:[%s1452 + $0xd0] sm:$0xff]
    %v1480 = vld [vmem:[%s1452 + $0xd8] sm:$0xff]
    %v1481 = vld [vmem:[%s1452 + $0xe0] sm:$0xff]
    %v1482 = vld [vmem:[%s1452 + $0xe8] sm:$0xff]
    %v1483 = vld [vmem:[%s1452 + $0xf0] sm:$0xff]
    %v1484 = vld [vmem:[%s1452 + $0xf8] sm:$0xff]
    %v1517 = vunpack.c.l.b16 %v1453
    %v1518 = vunpack.c.h.b16 %v1453
    %v1519 = vunpack.c.l.b16 %v1454
    %v1520 = vunpack.c.h.b16 %v1454
    %v1521 = vunpack.c.l.b16 %v1455
    %v1522 = vunpack.c.h.b16 %v1455
    %v1523 = vunpack.c.l.b16 %v1456
    %v1524 = vunpack.c.h.b16 %v1456
    %v1525 = vunpack.c.l.b16 %v1457
    %v1526 = vunpack.c.h.b16 %v1457
    %v1527 = vunpack.c.l.b16 %v1458
    %v1528 = vunpack.c.h.b16 %v1458
    %v1529 = vunpack.c.l.b16 %v1459
    %v1530 = vunpack.c.h.b16 %v1459
    %v1531 = vunpack.c.l.b16 %v1460
    %v1532 = vunpack.c.h.b16 %v1460
    %v1533 = vunpack.c.l.b16 %v1461
    %v1534 = vunpack.c.h.b16 %v1461
    %v1535 = vunpack.c.l.b16 %v1462
    %v1536 = vunpack.c.h.b16 %v1462
    %v1537 = vunpack.c.l.b16 %v1463
    %v1538 = vunpack.c.h.b16 %v1463
    %v1539 = vunpack.c.l.b16 %v1464
    %v1540 = vunpack.c.h.b16 %v1464
    %v1541 = vunpack.c.l.b16 %v1465
    %v1542 = vunpack.c.h.b16 %v1465
    %v1543 = vunpack.c.l.b16 %v1466
    %v1544 = vunpack.c.h.b16 %v1466
    %v1545 = vunpack.c.l.b16 %v1467
    %v1546 = vunpack.c.h.b16 %v1467
    %v1547 = vunpack.c.l.b16 %v1468
    %v1548 = vunpack.c.h.b16 %v1468
    %v1549 = vunpack.c.l.b16 %v1469
    %v1550 = vunpack.c.h.b16 %v1469
    %v1551 = vunpack.c.l.b16 %v1470
    %v1552 = vunpack.c.h.b16 %v1470
    %v1553 = vunpack.c.l.b16 %v1471
    %v1554 = vunpack.c.h.b16 %v1471
    %v1555 = vunpack.c.l.b16 %v1472
    %v1556 = vunpack.c.h.b16 %v1472
    %v1557 = vunpack.c.l.b16 %v1473
    %v1558 = vunpack.c.h.b16 %v1473
    %v1559 = vunpack.c.l.b16 %v1474
    %v1560 = vunpack.c.h.b16 %v1474
    %v1561 = vunpack.c.l.b16 %v1475
    %v1562 = vunpack.c.h.b16 %v1475
    %v1563 = vunpack.c.l.b16 %v1476
    %v1564 = vunpack.c.h.b16 %v1476
    %v1565 = vunpack.c.l.b16 %v1477
    %v1566 = vunpack.c.h.b16 %v1477
    %v1567 = vunpack.c.l.b16 %v1478
    %v1568 = vunpack.c.h.b16 %v1478
    %v1569 = vunpack.c.l.b16 %v1479
    %v1570 = vunpack.c.h.b16 %v1479
    %v1571 = vunpack.c.l.b16 %v1480
    %v1572 = vunpack.c.h.b16 %v1480
    %v1573 = vunpack.c.l.b16 %v1481
    %v1574 = vunpack.c.h.b16 %v1481
    %v1575 = vunpack.c.l.b16 %v1482
    %v1576 = vunpack.c.h.b16 %v1482
    %v1577 = vunpack.c.l.b16 %v1483
    %v1578 = vunpack.c.h.b16 %v1483
    %v1579 = vunpack.c.l.b16 %v1484
    %v1580 = vunpack.c.h.b16 %v1484
    %v1581 = vpack.c.b16 %v1525, %v1517
    %v1582 = vpack.c.b16 %v1526, %v1518
    %v1583 = vpack.c.b16 %v1527, %v1519
    %v1584 = vpack.c.b16 %v1528, %v1520
    %v1585 = vpack.c.b16 %v1529, %v1521
    %v1586 = vpack.c.b16 %v1530, %v1522
    %v1587 = vpack.c.b16 %v1531, %v1523
    %v1588 = vpack.c.b16 %v1532, %v1524
    %v1589 = vpack.c.b16 %v1541, %v1533
    %v1590 = vpack.c.b16 %v1542, %v1534
    %v1591 = vpack.c.b16 %v1543, %v1535
    %v1592 = vpack.c.b16 %v1544, %v1536
    %v1593 = vpack.c.b16 %v1545, %v1537
    %v1594 = vpack.c.b16 %v1546, %v1538
    %v1595 = vpack.c.b16 %v1547, %v1539
    %v1596 = vpack.c.b16 %v1548, %v1540
    %v1597 = vpack.c.b16 %v1557, %v1549
    %v1598 = vpack.c.b16 %v1558, %v1550
    %v1599 = vpack.c.b16 %v1559, %v1551
    %v1600 = vpack.c.b16 %v1560, %v1552
    %v1601 = vpack.c.b16 %v1561, %v1553
    %v1602 = vpack.c.b16 %v1562, %v1554
    %v1603 = vpack.c.b16 %v1563, %v1555
    %v1604 = vpack.c.b16 %v1564, %v1556
    %v1605 = vpack.c.b16 %v1573, %v1565
    %v1606 = vpack.c.b16 %v1574, %v1566
    %v1607 = vpack.c.b16 %v1575, %v1567
    %v1608 = vpack.c.b16 %v1576, %v1568
    %v1609 = vpack.c.b16 %v1577, %v1569
    %v1610 = vpack.c.b16 %v1578, %v1570
    %v1611 = vpack.c.b16 %v1579, %v1571
    %v1612 = vpack.c.b16 %v1580, %v1572
    %v1646 = vsel %vm384, %v1442, 0
    %v1649 = vsel %vm384, %v1451, 0
    %1651 = vmatprep.subr.bf16.mxu0 %v1582
    %1652 = vmatpush1.bf16.msra.mxu0 %v1581
    %1653 = vmatprep.subr.bf16.mxu0 %v1590
    %1654 = vmatpush1.bf16.msra.mxu0 %v1589
    %1655 = vmatprep.subr.bf16.mxu0 %v1598
    %1656 = vmatpush1.bf16.msra.mxu0 %v1597
    %1657 = vmatprep.subr.bf16.mxu0 %v1606
    %1658 = vmatpush1.bf16.msra.mxu0 %v1605
    %1659 = vmatprep.subr.bf16.mxu0 0
    %1660 = vmatpush1.bf16.msra.mxu0 0
    %1661 = vmatprep.subr.bf16.mxu0 0
    %1662 = vmatpush1.bf16.msra.mxu0 0
    %1663 = vmatprep.subr.bf16.mxu0 0
    %1664 = vmatpush1.bf16.msra.mxu0 0
    %1665 = vmatprep.subr.bf16.mxu0 0
    %1666 = vmatpush1.bf16.msra.mxu0 0
    %1667 = vmatprep.subr.bf16.mxu0 0
    %1668 = vmatpush1.bf16.msra.mxu0 0
    %1669 = vmatprep.subr.bf16.mxu0 0
    %1670 = vmatpush1.bf16.msra.mxu0 0
    %1671 = vmatprep.subr.bf16.mxu0 0
    %1672 = vmatpush1.bf16.msra.mxu0 0
    %1673 = vmatprep.subr.bf16.mxu0 0
    %1674 = vmatpush1.bf16.msra.mxu0 0
    %1675 = vmatprep.subr.bf16.mxu0 0
    %1676 = vmatpush1.bf16.msra.mxu0 0
    %1677 = vmatprep.subr.bf16.mxu0 0
    %1678 = vmatpush1.bf16.msra.mxu0 0
    %1679 = vmatprep.subr.bf16.mxu0 0
    %1680 = vmatpush1.bf16.msra.mxu0 0
    %1681 = vmatprep.subr.bf16.mxu0 0
    %1682 = vmatpush1.bf16.msra.mxu0 0
    %1683 = vmatprep.mubr.bf16.mxu0 0
    %1684 = vmatmul.mubr.bf16.gmra.mrb[0].mxu0 %v1646
    %v1685 = vpop.f32.mrb[0].mxu0
    %v1686 = vadd.f32 0.0, %v1685
    %v1687 = vpop.f32.mrb[0].mxu0
    %v1688 = vadd.f32 0.0, %v1687
    %v1689 = vpop.f32.mrb[0].mxu0
    %v1690 = vadd.f32 0.0, %v1689
    %v1691 = vpop.f32.mrb[0].mxu0
    %v1692 = vadd.f32 0.0, %v1691
    %1693 = vmatprep.mubr.bf16.mxu0 0
    %1694 = vmatmul.mubr.bf16.gmra.mrb[0].mxu0 %v1649
    %v1695 = vpop.f32.mrb[0].mxu0
    %v1696 = vadd.f32 0.0, %v1695
    %v1697 = vpop.f32.mrb[0].mxu0
    %v1698 = vadd.f32 0.0, %v1697
    %v1699 = vpop.f32.mrb[0].mxu0
    %v1700 = vadd.f32 0.0, %v1699
    %v1701 = vpop.f32.mrb[0].mxu0
    %v1702 = vadd.f32 0.0, %v1701
    %1703 = vdwg.mxu0
    %1704 = vmatprep.subr.bf16.mxu0 %v1584
    %1705 = vmatpush1.bf16.msra.mxu0 %v1583
    %1706 = vmatprep.subr.bf16.mxu0 %v1592
    %1707 = vmatpush1.bf16.msra.mxu0 %v1591
    %1708 = vmatprep.subr.bf16.mxu0 %v1600
    %1709 = vmatpush1.bf16.msra.mxu0 %v1599
    %1710 = vmatprep.subr.bf16.mxu0 %v1608
    %1711 = vmatpush1.bf16.msra.mxu0 %v1607
    %1712 = vmatprep.subr.bf16.mxu0 0
    %1713 = vmatpush1.bf16.msra.mxu0 0
    %1714 = vmatprep.subr.bf16.mxu0 0
    %1715 = vmatpush1.bf16.msra.mxu0 0
    %1716 = vmatprep.subr.bf16.mxu0 0
    %1717 = vmatpush1.bf16.msra.mxu0 0
    %1718 = vmatprep.subr.bf16.mxu0 0
    %1719 = vmatpush1.bf16.msra.mxu0 0
    %1720 = vmatprep.subr.bf16.mxu0 0
    %1721 = vmatpush1.bf16.msra.mxu0 0
    %1722 = vmatprep.subr.bf16.mxu0 0
    %1723 = vmatpush1.bf16.msra.mxu0 0
    %1724 = vmatprep.subr.bf16.mxu0 0
    %1725 = vmatpush1.bf16.msra.mxu0 0
    %1726 = vmatprep.subr.bf16.mxu0 0
    %1727 = vmatpush1.bf16.msra.mxu0 0
    %1728 = vmatprep.subr.bf16.mxu0 0
    %1729 = vmatpush1.bf16.msra.mxu0 0
    %1730 = vmatprep.subr.bf16.mxu0 0
    %1731 = vmatpush1.bf16.msra.mxu0 0
    %1732 = vmatprep.subr.bf16.mxu0 0
    %1733 = vmatpush1.bf16.msra.mxu0 0
    %1734 = vmatprep.subr.bf16.mxu0 0
    %1735 = vmatpush1.bf16.msra.mxu0 0
    %1736 = vmatprep.mubr.bf16.mxu0 0
    %1737 = vmatmul.mubr.bf16.gmra.mrb[0].mxu0 %v1646
    %v1738 = vpop.f32.mrb[0].mxu0
    %v1739 = vadd.f32 0.0, %v1738
    %v1740 = vpop.f32.mrb[0].mxu0
    %v1741 = vadd.f32 0.0, %v1740
    %v1742 = vpop.f32.mrb[0].mxu0
    %v1743 = vadd.f32 0.0, %v1742
    %v1744 = vpop.f32.mrb[0].mxu0
    %v1745 = vadd.f32 0.0, %v1744
    %1746 = vmatprep.mubr.bf16.mxu0 0
    %1747 = vmatmul.mubr.bf16.gmra.mrb[0].mxu0 %v1649
    %v1748 = vpop.f32.mrb[0].mxu0
    %v1749 = vadd.f32 0.0, %v1748
    %v1750 = vpop.f32.mrb[0].mxu0
    %v1751 = vadd.f32 0.0, %v1750
    %v1752 = vpop.f32.mrb[0].mxu0
    %v1753 = vadd.f32 0.0, %v1752
    %v1754 = vpop.f32.mrb[0].mxu0
    %v1755 = vadd.f32 0.0, %v1754
    %1756 = vdwg.mxu0
    %1757 = vmatprep.subr.bf16.mxu0 %v1586
    %1758 = vmatpush1.bf16.msra.mxu0 %v1585
    %1759 = vmatprep.subr.bf16.mxu0 %v1594
    %1760 = vmatpush1.bf16.msra.mxu0 %v1593
    %1761 = vmatprep.subr.bf16.mxu0 %v1602
    %1762 = vmatpush1.bf16.msra.mxu0 %v1601
    %1763 = vmatprep.subr.bf16.mxu0 %v1610
    %1764 = vmatpush1.bf16.msra.mxu0 %v1609
    %1765 = vmatprep.subr.bf16.mxu0 0
    %1766 = vmatpush1.bf16.msra.mxu0 0
    %1767 = vmatprep.subr.bf16.mxu0 0
    %1768 = vmatpush1.bf16.msra.mxu0 0
    %1769 = vmatprep.subr.bf16.mxu0 0
    %1770 = vmatpush1.bf16.msra.mxu0 0
    %1771 = vmatprep.subr.bf16.mxu0 0
    %1772 = vmatpush1.bf16.msra.mxu0 0
    %1773 = vmatprep.subr.bf16.mxu0 0
    %1774 = vmatpush1.bf16.msra.mxu0 0
    %1775 = vmatprep.subr.bf16.mxu0 0
    %1776 = vmatpush1.bf16.msra.mxu0 0
    %1777 = vmatprep.subr.bf16.mxu0 0
    %1778 = vmatpush1.bf16.msra.mxu0 0
    %1779 = vmatprep.subr.bf16.mxu0 0
    %1780 = vmatpush1.bf16.msra.mxu0 0
    %1781 = vmatprep.subr.bf16.mxu0 0
    %1782 = vmatpush1.bf16.msra.mxu0 0
    %1783 = vmatprep.subr.bf16.mxu0 0
    %1784 = vmatpush1.bf16.msra.mxu0 0
    %1785 = vmatprep.subr.bf16.mxu0 0
    %1786 = vmatpush1.bf16.msra.mxu0 0
    %1787 = vmatprep.subr.bf16.mxu0 0
    %1788 = vmatpush1.bf16.msra.mxu0 0
    %1789 = vmatprep.mubr.bf16.mxu0 0
    %1790 = vmatmul.mubr.bf16.gmra.mrb[0].mxu0 %v1646
    %v1791 = vpop.f32.mrb[0].mxu0
    %v1792 = vadd.f32 0.0, %v1791
    %v1793 = vpop.f32.mrb[0].mxu0
    %v1794 = vadd.f32 0.0, %v1793
    %v1795 = vpop.f32.mrb[0].mxu0
    %v1796 = vadd.f32 0.0, %v1795
    %v1797 = vpop.f32.mrb[0].mxu0
    %v1798 = vadd.f32 0.0, %v1797
    %1799 = vmatprep.mubr.bf16.mxu0 0
    %1800 = vmatmul.mubr.bf16.gmra.mrb[0].mxu0 %v1649
    %v1801 = vpop.f32.mrb[0].mxu0
    %v1802 = vadd.f32 0.0, %v1801
    %v1803 = vpop.f32.mrb[0].mxu0
    %v1804 = vadd.f32 0.0, %v1803
    %v1805 = vpop.f32.mrb[0].mxu0
    %v1806 = vadd.f32 0.0, %v1805
    %v1807 = vpop.f32.mrb[0].mxu0
    %v1808 = vadd.f32 0.0, %v1807
    %1809 = vdwg.mxu0
    %1810 = vmatprep.subr.bf16.mxu0 %v1588
    %1811 = vmatpush1.bf16.msra.mxu0 %v1587
    %1812 = vmatprep.subr.bf16.mxu0 %v1596
    %1813 = vmatpush1.bf16.msra.mxu0 %v1595
    %1814 = vmatprep.subr.bf16.mxu0 %v1604
    %1815 = vmatpush1.bf16.msra.mxu0 %v1603
    %1816 = vmatprep.subr.bf16.mxu0 %v1612
    %1817 = vmatpush1.bf16.msra.mxu0 %v1611
    %1818 = vmatprep.subr.bf16.mxu0 0
    %1819 = vmatpush1.bf16.msra.mxu0 0
    %1820 = vmatprep.subr.bf16.mxu0 0
    %1821 = vmatpush1.bf16.msra.mxu0 0
    %1822 = vmatprep.subr.bf16.mxu0 0
    %1823 = vmatpush1.bf16.msra.mxu0 0
    %1824 = vmatprep.subr.bf16.mxu0 0
    %1825 = vmatpush1.bf16.msra.mxu0 0
    %1826 = vmatprep.subr.bf16.mxu0 0
    %1827 = vmatpush1.bf16.msra.mxu0 0
    %1828 = vmatprep.subr.bf16.mxu0 0
    %1829 = vmatpush1.bf16.msra.mxu0 0
    %1830 = vmatprep.subr.bf16.mxu0 0
    %1831 = vmatpush1.bf16.msra.mxu0 0
    %1832 = vmatprep.subr.bf16.mxu0 0
    %1833 = vmatpush1.bf16.msra.mxu0 0
    %1834 = vmatprep.subr.bf16.mxu0 0
    %1835 = vmatpush1.bf16.msra.mxu0 0
    %1836 = vmatprep.subr.bf16.mxu0 0
    %1837 = vmatpush1.bf16.msra.mxu0 0
    %1838 = vmatprep.subr.bf16.mxu0 0
    %1839 = vmatpush1.bf16.msra.mxu0 0
    %1840 = vmatprep.subr.bf16.mxu0 0
    %1841 = vmatpush1.bf16.msra.mxu0 0
    %1842 = vmatprep.mubr.bf16.mxu0 0
    %1843 = vmatmul.mubr.bf16.gmra.mrb[0].mxu0 %v1646
    %v1844 = vpop.f32.mrb[0].mxu0
    %v1845 = vadd.f32 0.0, %v1844
    %v1846 = vpop.f32.mrb[0].mxu0
    %v1847 = vadd.f32 0.0, %v1846
    %v1848 = vpop.f32.mrb[0].mxu0
    %v1849 = vadd.f32 0.0, %v1848
    %v1850 = vpop.f32.mrb[0].mxu0
    %v1851 = vadd.f32 0.0, %v1850
    %1852 = vmatprep.mubr.bf16.mxu0 0
    %1853 = vmatmul.mubr.bf16.gmra.mrb[0].mxu0 %v1649
    %v1854 = vpop.f32.mrb[0].mxu0
    %v1855 = vadd.f32 0.0, %v1854
    %v1856 = vpop.f32.mrb[0].mxu0
    %v1857 = vadd.f32 0.0, %v1856
    %v1858 = vpop.f32.mrb[0].mxu0
    %v1859 = vadd.f32 0.0, %v1858
    %v1860 = vpop.f32.mrb[0].mxu0
    %v1861 = vadd.f32 0.0, %v1860
    %1862 = vdwg.mxu0
    %v1863 = vadd.f32 %v1401, %v1686
    %v1864 = vadd.f32 %v1402, %v1688
    %v1865 = vadd.f32 %v1403, %v1739
    %v1866 = vadd.f32 %v1404, %v1741
    %v1867 = vadd.f32 %v1405, %v1792
    %v1868 = vadd.f32 %v1406, %v1794
    %v1869 = vadd.f32 %v1407, %v1845
    %v1870 = vadd.f32 %v1408, %v1847
    %v1871 = vadd.f32 %v1409, %v1690
    %v1872 = vadd.f32 %v1410, %v1692
    %v1873 = vadd.f32 %v1411, %v1743
    %v1874 = vadd.f32 %v1412, %v1745
    %v1875 = vadd.f32 %v1413, %v1796
    %v1876 = vadd.f32 %v1414, %v1798
    %v1877 = vadd.f32 %v1415, %v1849
    %v1878 = vadd.f32 %v1416, %v1851
    %v1879 = vadd.f32 %v1417, %v1696
    %v1880 = vadd.f32 %v1418, %v1698
    %v1881 = vadd.f32 %v1419, %v1749
    %v1882 = vadd.f32 %v1420, %v1751
    %v1883 = vadd.f32 %v1421, %v1802
    %v1884 = vadd.f32 %v1422, %v1804
    %v1885 = vadd.f32 %v1423, %v1855
    %v1886 = vadd.f32 %v1424, %v1857
    %v1887 = vadd.f32 %v1425, %v1700
    %v1888 = vadd.f32 %v1426, %v1702
    %v1889 = vadd.f32 %v1427, %v1753
    %v1890 = vadd.f32 %v1428, %v1755
    %v1891 = vadd.f32 %v1429, %v1806
    %v1892 = vadd.f32 %v1430, %v1808
    %v1893 = vadd.f32 %v1431, %v1859
    %v1894 = vadd.f32 %v1432, %v1861
    %vm1895 = vcmask 1045504
    %v1896 = vrot.slane %v133, 2
    %v1897 = vrot.slane %v136, 2
    %v1898 = vsel %vm1895, %v1896, %v1897
    %v1899 = vrot.slane %v135, 2
    %v1900 = vrot.slane %v137, 2
    %v1901 = vsel %vm1895, %v1899, %v1900
    %s1902 = scalar_lea.vmem [#allocation5], 1024
    %v1903 = vld [vmem:[%s1902] sm:$0xff]
    %v1904 = vld [vmem:[%s1902 + $0x8] sm:$0xff]
    %v1905 = vld [vmem:[%s1902 + $0x10] sm:$0xff]
    %v1906 = vld [vmem:[%s1902 + $0x18] sm:$0xff]
    %v1907 = vld [vmem:[%s1902 + $0x20] sm:$0xff]
    %v1908 = vld [vmem:[%s1902 + $0x28] sm:$0xff]
    %v1909 = vld [vmem:[%s1902 + $0x30] sm:$0xff]
    %v1910 = vld [vmem:[%s1902 + $0x38] sm:$0xff]
    %v1911 = vld [vmem:[%s1902 + $0x40] sm:$0xff]
    %v1912 = vld [vmem:[%s1902 + $0x48] sm:$0xff]
    %v1913 = vld [vmem:[%s1902 + $0x50] sm:$0xff]
    %v1914 = vld [vmem:[%s1902 + $0x58] sm:$0xff]
    %v1915 = vld [vmem:[%s1902 + $0x60] sm:$0xff]
    %v1916 = vld [vmem:[%s1902 + $0x68] sm:$0xff]
    %v1917 = vld [vmem:[%s1902 + $0x70] sm:$0xff]
    %v1918 = vld [vmem:[%s1902 + $0x78] sm:$0xff]
    %v1919 = vld [vmem:[%s1902 + $0x80] sm:$0xff]
    %v1920 = vld [vmem:[%s1902 + $0x88] sm:$0xff]
    %v1921 = vld [vmem:[%s1902 + $0x90] sm:$0xff]
    %v1922 = vld [vmem:[%s1902 + $0x98] sm:$0xff]
    %v1923 = vld [vmem:[%s1902 + $0xa0] sm:$0xff]
    %v1924 = vld [vmem:[%s1902 + $0xa8] sm:$0xff]
    %v1925 = vld [vmem:[%s1902 + $0xb0] sm:$0xff]
    %v1926 = vld [vmem:[%s1902 + $0xb8] sm:$0xff]
    %v1927 = vld [vmem:[%s1902 + $0xc0] sm:$0xff]
    %v1928 = vld [vmem:[%s1902 + $0xc8] sm:$0xff]
    %v1929 = vld [vmem:[%s1902 + $0xd0] sm:$0xff]
    %v1930 = vld [vmem:[%s1902 + $0xd8] sm:$0xff]
    %v1931 = vld [vmem:[%s1902 + $0xe0] sm:$0xff]
    %v1932 = vld [vmem:[%s1902 + $0xe8] sm:$0xff]
    %v1933 = vld [vmem:[%s1902 + $0xf0] sm:$0xff]
    %v1934 = vld [vmem:[%s1902 + $0xf8] sm:$0xff]
    %v1967 = vunpack.c.l.b16 %v1903
    %v1968 = vunpack.c.h.b16 %v1903
    %v1969 = vunpack.c.l.b16 %v1904
    %v1970 = vunpack.c.h.b16 %v1904
    %v1971 = vunpack.c.l.b16 %v1905
    %v1972 = vunpack.c.h.b16 %v1905
    %v1973 = vunpack.c.l.b16 %v1906
    %v1974 = vunpack.c.h.b16 %v1906
    %v1975 = vunpack.c.l.b16 %v1907
    %v1976 = vunpack.c.h.b16 %v1907
    %v1977 = vunpack.c.l.b16 %v1908
    %v1978 = vunpack.c.h.b16 %v1908
    %v1979 = vunpack.c.l.b16 %v1909
    %v1980 = vunpack.c.h.b16 %v1909
    %v1981 = vunpack.c.l.b16 %v1910
    %v1982 = vunpack.c.h.b16 %v1910
    %v1983 = vunpack.c.l.b16 %v1911
    %v1984 = vunpack.c.h.b16 %v1911
    %v1985 = vunpack.c.l.b16 %v1912
    %v1986 = vunpack.c.h.b16 %v1912
    %v1987 = vunpack.c.l.b16 %v1913
    %v1988 = vunpack.c.h.b16 %v1913
    %v1989 = vunpack.c.l.b16 %v1914
    %v1990 = vunpack.c.h.b16 %v1914
    %v1991 = vunpack.c.l.b16 %v1915
    %v1992 = vunpack.c.h.b16 %v1915
    %v1993 = vunpack.c.l.b16 %v1916
    %v1994 = vunpack.c.h.b16 %v1916
    %v1995 = vunpack.c.l.b16 %v1917
    %v1996 = vunpack.c.h.b16 %v1917
    %v1997 = vunpack.c.l.b16 %v1918
    %v1998 = vunpack.c.h.b16 %v1918
    %v1999 = vunpack.c.l.b16 %v1919
    %v2000 = vunpack.c.h.b16 %v1919
    %v2001 = vunpack.c.l.b16 %v1920
    %v2002 = vunpack.c.h.b16 %v1920
    %v2003 = vunpack.c.l.b16 %v1921
    %v2004 = vunpack.c.h.b16 %v1921
    %v2005 = vunpack.c.l.b16 %v1922
    %v2006 = vunpack.c.h.b16 %v1922
    %v2007 = vunpack.c.l.b16 %v1923
    %v2008 = vunpack.c.h.b16 %v1923
    %v2009 = vunpack.c.l.b16 %v1924
    %v2010 = vunpack.c.h.b16 %v1924
    %v2011 = vunpack.c.l.b16 %v1925
    %v2012 = vunpack.c.h.b16 %v1925
    %v2013 = vunpack.c.l.b16 %v1926
    %v2014 = vunpack.c.h.b16 %v1926
    %v2015 = vunpack.c.l.b16 %v1927
    %v2016 = vunpack.c.h.b16 %v1927
    %v2017 = vunpack.c.l.b16 %v1928
    %v2018 = vunpack.c.h.b16 %v1928
    %v2019 = vunpack.c.l.b16 %v1929
    %v2020 = vunpack.c.h.b16 %v1929
    %v2021 = vunpack.c.l.b16 %v1930
    %v2022 = vunpack.c.h.b16 %v1930
    %v2023 = vunpack.c.l.b16 %v1931
    %v2024 = vunpack.c.h.b16 %v1931
    %v2025 = vunpack.c.l.b16 %v1932
    %v2026 = vunpack.c.h.b16 %v1932
    %v2027 = vunpack.c.l.b16 %v1933
    %v2028 = vunpack.c.h.b16 %v1933
    %v2029 = vunpack.c.l.b16 %v1934
    %v2030 = vunpack.c.h.b16 %v1934
    %v2031 = vpack.c.b16 %v1975, %v1967
    %v2032 = vpack.c.b16 %v1976, %v1968
    %v2033 = vpack.c.b16 %v1977, %v1969
    %v2034 = vpack.c.b16 %v1978, %v1970
    %v2035 = vpack.c.b16 %v1979, %v1971
    %v2036 = vpack.c.b16 %v1980, %v1972
    %v2037 = vpack.c.b16 %v1981, %v1973
    %v2038 = vpack.c.b16 %v1982, %v1974
    %v2039 = vpack.c.b16 %v1991, %v1983
    %v2040 = vpack.c.b16 %v1992, %v1984
    %v2041 = vpack.c.b16 %v1993, %v1985
    %v2042 = vpack.c.b16 %v1994, %v1986
    %v2043 = vpack.c.b16 %v1995, %v1987
    %v2044 = vpack.c.b16 %v1996, %v1988
    %v2045 = vpack.c.b16 %v1997, %v1989
    %v2046 = vpack.c.b16 %v1998, %v1990
    %v2047 = vpack.c.b16 %v2007, %v1999
    %v2048 = vpack.c.b16 %v2008, %v2000
    %v2049 = vpack.c.b16 %v2009, %v2001
    %v2050 = vpack.c.b16 %v2010, %v2002
    %v2051 = vpack.c.b16 %v2011, %v2003
    %v2052 = vpack.c.b16 %v2012, %v2004
    %v2053 = vpack.c.b16 %v2013, %v2005
    %v2054 = vpack.c.b16 %v2014, %v2006
    %v2055 = vpack.c.b16 %v2023, %v2015
    %v2056 = vpack.c.b16 %v2024, %v2016
    %v2057 = vpack.c.b16 %v2025, %v2017
    %v2058 = vpack.c.b16 %v2026, %v2018
    %v2059 = vpack.c.b16 %v2027, %v2019
    %v2060 = vpack.c.b16 %v2028, %v2020
    %v2061 = vpack.c.b16 %v2029, %v2021
    %v2062 = vpack.c.b16 %v2030, %v2022
    %v2096 = vsel %vm384, %v1898, 0
    %v2099 = vsel %vm384, %v1901, 0
    %2101 = vmatprep.subr.bf16.mxu0 %v2032
    %2102 = vmatpush1.bf16.msra.mxu0 %v2031
    %2103 = vmatprep.subr.bf16.mxu0 %v2040
    %2104 = vmatpush1.bf16.msra.mxu0 %v2039
    %2105 = vmatprep.subr.bf16.mxu0 %v2048
    %2106 = vmatpush1.bf16.msra.mxu0 %v2047
    %2107 = vmatprep.subr.bf16.mxu0 %v2056
    %2108 = vmatpush1.bf16.msra.mxu0 %v2055
    %2109 = vmatprep.subr.bf16.mxu0 0
    %2110 = vmatpush1.bf16.msra.mxu0 0
    %2111 = vmatprep.subr.bf16.mxu0 0
    %2112 = vmatpush1.bf16.msra.mxu0 0
    %2113 = vmatprep.subr.bf16.mxu0 0
    %2114 = vmatpush1.bf16.msra.mxu0 0
    %2115 = vmatprep.subr.bf16.mxu0 0
    %2116 = vmatpush1.bf16.msra.mxu0 0
    %2117 = vmatprep.subr.bf16.mxu0 0
    %2118 = vmatpush1.bf16.msra.mxu0 0
    %2119 = vmatprep.subr.bf16.mxu0 0
    %2120 = vmatpush1.bf16.msra.mxu0 0
    %2121 = vmatprep.subr.bf16.mxu0 0
    %2122 = vmatpush1.bf16.msra.mxu0 0
    %2123 = vmatprep.subr.bf16.mxu0 0
    %2124 = vmatpush1.bf16.msra.mxu0 0
    %2125 = vmatprep.subr.bf16.mxu0 0
    %2126 = vmatpush1.bf16.msra.mxu0 0
    %2127 = vmatprep.subr.bf16.mxu0 0
    %2128 = vmatpush1.bf16.msra.mxu0 0
    %2129 = vmatprep.subr.bf16.mxu0 0
    %2130 = vmatpush1.bf16.msra.mxu0 0
    %2131 = vmatprep.subr.bf16.mxu0 0
    %2132 = vmatpush1.bf16.msra.mxu0 0
    %2133 = vmatprep.mubr.bf16.mxu0 0
    %2134 = vmatmul.mubr.bf16.gmra.mrb[0].mxu0 %v2096
    %v2135 = vpop.f32.mrb[0].mxu0
    %v2136 = vadd.f32 0.0, %v2135
    %v2137 = vpop.f32.mrb[0].mxu0
    %v2138 = vadd.f32 0.0, %v2137
    %v2139 = vpop.f32.mrb[0].mxu0
    %v2140 = vadd.f32 0.0, %v2139
    %v2141 = vpop.f32.mrb[0].mxu0
    %v2142 = vadd.f32 0.0, %v2141
    %2143 = vmatprep.mubr.bf16.mxu0 0
    %2144 = vmatmul.mubr.bf16.gmra.mrb[0].mxu0 %v2099
    %v2145 = vpop.f32.mrb[0].mxu0
    %v2146 = vadd.f32 0.0, %v2145
    %v2147 = vpop.f32.mrb[0].mxu0
    %v2148 = vadd.f32 0.0, %v2147
    %v2149 = vpop.f32.mrb[0].mxu0
    %v2150 = vadd.f32 0.0, %v2149
    %v2151 = vpop.f32.mrb[0].mxu0
    %v2152 = vadd.f32 0.0, %v2151
    %2153 = vdwg.mxu0
    %2154 = vmatprep.subr.bf16.mxu0 %v2034
    %2155 = vmatpush1.bf16.msra.mxu0 %v2033
    %2156 = vmatprep.subr.bf16.mxu0 %v2042
    %2157 = vmatpush1.bf16.msra.mxu0 %v2041
    %2158 = vmatprep.subr.bf16.mxu0 %v2050
    %2159 = vmatpush1.bf16.msra.mxu0 %v2049
    %2160 = vmatprep.subr.bf16.mxu0 %v2058
    %2161 = vmatpush1.bf16.msra.mxu0 %v2057
    %2162 = vmatprep.subr.bf16.mxu0 0
    %2163 = vmatpush1.bf16.msra.mxu0 0
    %2164 = vmatprep.subr.bf16.mxu0 0
    %2165 = vmatpush1.bf16.msra.mxu0 0
    %2166 = vmatprep.subr.bf16.mxu0 0
    %2167 = vmatpush1.bf16.msra.mxu0 0
    %2168 = vmatprep.subr.bf16.mxu0 0
    %2169 = vmatpush1.bf16.msra.mxu0 0
    %2170 = vmatprep.subr.bf16.mxu0 0
    %2171 = vmatpush1.bf16.msra.mxu0 0
    %2172 = vmatprep.subr.bf16.mxu0 0
    %2173 = vmatpush1.bf16.msra.mxu0 0
    %2174 = vmatprep.subr.bf16.mxu0 0
    %2175 = vmatpush1.bf16.msra.mxu0 0
    %2176 = vmatprep.subr.bf16.mxu0 0
    %2177 = vmatpush1.bf16.msra.mxu0 0
    %2178 = vmatprep.subr.bf16.mxu0 0
    %2179 = vmatpush1.bf16.msra.mxu0 0
    %2180 = vmatprep.subr.bf16.mxu0 0
    %2181 = vmatpush1.bf16.msra.mxu0 0
    %2182 = vmatprep.subr.bf16.mxu0 0
    %2183 = vmatpush1.bf16.msra.mxu0 0
    %2184 = vmatprep.subr.bf16.mxu0 0
    %2185 = vmatpush1.bf16.msra.mxu0 0
    %2186 = vmatprep.mubr.bf16.mxu0 0
    %2187 = vmatmul.mubr.bf16.gmra.mrb[0].mxu0 %v2096
    %v2188 = vpop.f32.mrb[0].mxu0
    %v2189 = vadd.f32 0.0, %v2188
    %v2190 = vpop.f32.mrb[0].mxu0
    %v2191 = vadd.f32 0.0, %v2190
    %v2192 = vpop.f32.mrb[0].mxu0
    %v2193 = vadd.f32 0.0, %v2192
    %v2194 = vpop.f32.mrb[0].mxu0
    %v2195 = vadd.f32 0.0, %v2194
    %2196 = vmatprep.mubr.bf16.mxu0 0
    %2197 = vmatmul.mubr.bf16.gmra.mrb[0].mxu0 %v2099
    %v2198 = vpop.f32.mrb[0].mxu0
    %v2199 = vadd.f32 0.0, %v2198
    %v2200 = vpop.f32.mrb[0].mxu0
    %v2201 = vadd.f32 0.0, %v2200
    %v2202 = vpop.f32.mrb[0].mxu0
    %v2203 = vadd.f32 0.0, %v2202
    %v2204 = vpop.f32.mrb[0].mxu0
    %v2205 = vadd.f32 0.0, %v2204
    %2206 = vdwg.mxu0
    %2207 = vmatprep.subr.bf16.mxu0 %v2036
    %2208 = vmatpush1.bf16.msra.mxu0 %v2035
    %2209 = vmatprep.subr.bf16.mxu0 %v2044
    %2210 = vmatpush1.bf16.msra.mxu0 %v2043
    %2211 = vmatprep.subr.bf16.mxu0 %v2052
    %2212 = vmatpush1.bf16.msra.mxu0 %v2051
    %2213 = vmatprep.subr.bf16.mxu0 %v2060
    %2214 = vmatpush1.bf16.msra.mxu0 %v2059
    %2215 = vmatprep.subr.bf16.mxu0 0
    %2216 = vmatpush1.bf16.msra.mxu0 0
    %2217 = vmatprep.subr.bf16.mxu0 0
    %2218 = vmatpush1.bf16.msra.mxu0 0
    %2219 = vmatprep.subr.bf16.mxu0 0
    %2220 = vmatpush1.bf16.msra.mxu0 0
    %2221 = vmatprep.subr.bf16.mxu0 0
    %2222 = vmatpush1.bf16.msra.mxu0 0
    %2223 = vmatprep.subr.bf16.mxu0 0
    %2224 = vmatpush1.bf16.msra.mxu0 0
    %2225 = vmatprep.subr.bf16.mxu0 0
    %2226 = vmatpush1.bf16.msra.mxu0 0
    %2227 = vmatprep.subr.bf16.mxu0 0
    %2228 = vmatpush1.bf16.msra.mxu0 0
    %2229 = vmatprep.subr.bf16.mxu0 0
    %2230 = vmatpush1.bf16.msra.mxu0 0
    %2231 = vmatprep.subr.bf16.mxu0 0
    %2232 = vmatpush1.bf16.msra.mxu0 0
    %2233 = vmatprep.subr.bf16.mxu0 0
    %2234 = vmatpush1.bf16.msra.mxu0 0
    %2235 = vmatprep.subr.bf16.mxu0 0
    %2236 = vmatpush1.bf16.msra.mxu0 0
    %2237 = vmatprep.subr.bf16.mxu0 0
    %2238 = vmatpush1.bf16.msra.mxu0 0
    %2239 = vmatprep.mubr.bf16.mxu0 0
    %2240 = vmatmul.mubr.bf16.gmra.mrb[0].mxu0 %v2096
    %v2241 = vpop.f32.mrb[0].mxu0
    %v2242 = vadd.f32 0.0, %v2241
    %v2243 = vpop.f32.mrb[0].mxu0
    %v2244 = vadd.f32 0.0, %v2243
    %v2245 = vpop.f32.mrb[0].mxu0
    %v2246 = vadd.f32 0.0, %v2245
    %v2247 = vpop.f32.mrb[0].mxu0
    %v2248 = vadd.f32 0.0, %v2247
    %2249 = vmatprep.mubr.bf16.mxu0 0
    %2250 = vmatmul.mubr.bf16.gmra.mrb[0].mxu0 %v2099
    %v2251 = vpop.f32.mrb[0].mxu0
    %v2252 = vadd.f32 0.0, %v2251
    %v2253 = vpop.f32.mrb[0].mxu0
    %v2254 = vadd.f32 0.0, %v2253
    %v2255 = vpop.f32.mrb[0].mxu0
    %v2256 = vadd.f32 0.0, %v2255
    %v2257 = vpop.f32.mrb[0].mxu0
    %v2258 = vadd.f32 0.0, %v2257
    %2259 = vdwg.mxu0
    %2260 = vmatprep.subr.bf16.mxu0 %v2038
    %2261 = vmatpush1.bf16.msra.mxu0 %v2037
    %2262 = vmatprep.subr.bf16.mxu0 %v2046
    %2263 = vmatpush1.bf16.msra.mxu0 %v2045
    %2264 = vmatprep.subr.bf16.mxu0 %v2054
    %2265 = vmatpush1.bf16.msra.mxu0 %v2053
    %2266 = vmatprep.subr.bf16.mxu0 %v2062
    %2267 = vmatpush1.bf16.msra.mxu0 %v2061
    %2268 = vmatprep.subr.bf16.mxu0 0
    %2269 = vmatpush1.bf16.msra.mxu0 0
    %2270 = vmatprep.subr.bf16.mxu0 0
    %2271 = vmatpush1.bf16.msra.mxu0 0
    %2272 = vmatprep.subr.bf16.mxu0 0
    %2273 = vmatpush1.bf16.msra.mxu0 0
    %2274 = vmatprep.subr.bf16.mxu0 0
    %2275 = vmatpush1.bf16.msra.mxu0 0
    %2276 = vmatprep.subr.bf16.mxu0 0
    %2277 = vmatpush1.bf16.msra.mxu0 0
    %2278 = vmatprep.subr.bf16.mxu0 0
    %2279 = vmatpush1.bf16.msra.mxu0 0
    %2280 = vmatprep.subr.bf16.mxu0 0
    %2281 = vmatpush1.bf16.msra.mxu0 0
    %2282 = vmatprep.subr.bf16.mxu0 0
    %2283 = vmatpush1.bf16.msra.mxu0 0
    %2284 = vmatprep.subr.bf16.mxu0 0
    %2285 = vmatpush1.bf16.msra.mxu0 0
    %2286 = vmatprep.subr.bf16.mxu0 0
    %2287 = vmatpush1.bf16.msra.mxu0 0
    %2288 = vmatprep.subr.bf16.mxu0 0
    %2289 = vmatpush1.bf16.msra.mxu0 0
    %2290 = vmatprep.subr.bf16.mxu0 0
    %2291 = vmatpush1.bf16.msra.mxu0 0
    %2292 = vmatprep.mubr.bf16.mxu0 0
    %2293 = vmatmul.mubr.bf16.gmra.mrb[0].mxu0 %v2096
    %v2294 = vpop.f32.mrb[0].mxu0
    %v2295 = vadd.f32 0.0, %v2294
    %v2296 = vpop.f32.mrb[0].mxu0
    %v2297 = vadd.f32 0.0, %v2296
    %v2298 = vpop.f32.mrb[0].mxu0
    %v2299 = vadd.f32 0.0, %v2298
    %v2300 = vpop.f32.mrb[0].mxu0
    %v2301 = vadd.f32 0.0, %v2300
    %2302 = vmatprep.mubr.bf16.mxu0 0
    %2303 = vmatmul.mubr.bf16.gmra.mrb[0].mxu0 %v2099
    %v2304 = vpop.f32.mrb[0].mxu0
    %v2305 = vadd.f32 0.0, %v2304
    %v2306 = vpop.f32.mrb[0].mxu0
    %v2307 = vadd.f32 0.0, %v2306
    %v2308 = vpop.f32.mrb[0].mxu0
    %v2309 = vadd.f32 0.0, %v2308
    %v2310 = vpop.f32.mrb[0].mxu0
    %v2311 = vadd.f32 0.0, %v2310
    %2312 = vdwg.mxu0
    %v2313 = vadd.f32 %v1863, %v2136
    %v2314 = vadd.f32 %v1864, %v2138
    %v2315 = vadd.f32 %v1865, %v2189
    %v2316 = vadd.f32 %v1866, %v2191
    %v2317 = vadd.f32 %v1867, %v2242
    %v2318 = vadd.f32 %v1868, %v2244
    %v2319 = vadd.f32 %v1869, %v2295
    %v2320 = vadd.f32 %v1870, %v2297
    %v2321 = vadd.f32 %v1871, %v2140
    %v2322 = vadd.f32 %v1872, %v2142
    %v2323 = vadd.f32 %v1873, %v2193
    %v2324 = vadd.f32 %v1874, %v2195
    %v2325 = vadd.f32 %v1875, %v2246
    %v2326 = vadd.f32 %v1876, %v2248
    %v2327 = vadd.f32 %v1877, %v2299
    %v2328 = vadd.f32 %v1878, %v2301
    %v2329 = vadd.f32 %v1879, %v2146
    %v2330 = vadd.f32 %v1880, %v2148
    %v2331 = vadd.f32 %v1881, %v2199
    %v2332 = vadd.f32 %v1882, %v2201
    %v2333 = vadd.f32 %v1883, %v2252
    %v2334 = vadd.f32 %v1884, %v2254
    %v2335 = vadd.f32 %v1885, %v2305
    %v2336 = vadd.f32 %v1886, %v2307
    %v2337 = vadd.f32 %v1887, %v2150
    %v2338 = vadd.f32 %v1888, %v2152
    %v2339 = vadd.f32 %v1889, %v2203
    %v2340 = vadd.f32 %v1890, %v2205
    %v2341 = vadd.f32 %v1891, %v2256
    %v2342 = vadd.f32 %v1892, %v2258
    %v2343 = vadd.f32 %v1893, %v2309
    %v2344 = vadd.f32 %v1894, %v2311
    %v2345 = vld [vmem:[#allocation7] sm:$0xff]
    %v2347 = vlaneseq
    %v2348 = vshrl.u32 %v2347, 7
    %v2349 = vsub.s32 0, %v2348
    %v2350 = vrot.slane %v2345, %v2349
    %v2351 = vlaneseq
    %v2352 = vshrl.u32 %v2351, 7
    %v2353 = vsub.s32 1, %v2352
    %v2354 = vrot.slane %v2345, %v2353
    %v2355 = vlaneseq
    %v2356 = vshrl.u32 %v2355, 7
    %v2357 = vsub.s32 2, %v2356
    %v2358 = vrot.slane %v2345, %v2357
    %v2359 = vlaneseq
    %v2360 = vshrl.u32 %v2359, 7
    %v2361 = vsub.s32 3, %v2360
    %v2362 = vrot.slane %v2345, %v2361
    %v2363 = vlaneseq
    %v2364 = vshrl.u32 %v2363, 7
    %v2365 = vsub.s32 4, %v2364
    %v2366 = vrot.slane %v2345, %v2365
    %v2367 = vlaneseq
    %v2368 = vshrl.u32 %v2367, 7
    %v2369 = vsub.s32 5, %v2368
    %v2370 = vrot.slane %v2345, %v2369
    %v2371 = vlaneseq
    %v2372 = vshrl.u32 %v2371, 7
    %v2373 = vsub.s32 6, %v2372
    %v2374 = vrot.slane %v2345, %v2373
    %v2375 = vlaneseq
    %v2376 = vshrl.u32 %v2375, 7
    %v2377 = vsub.s32 7, %v2376
    %v2378 = vrot.slane %v2345, %v2377
    %v2387 = vadd.f32 %v2313, %v2350
    %v2388 = vadd.f32 %v2314, %v2354
    %v2389 = vadd.f32 %v2315, %v2358
    %v2390 = vadd.f32 %v2316, %v2362
    %v2391 = vadd.f32 %v2317, %v2366
    %v2392 = vadd.f32 %v2318, %v2370
    %v2393 = vadd.f32 %v2319, %v2374
    %v2394 = vadd.f32 %v2320, %v2378
    %v2395 = vadd.f32 %v2321, %v2350
    %v2396 = vadd.f32 %v2322, %v2354
    %v2397 = vadd.f32 %v2323, %v2358
    %v2398 = vadd.f32 %v2324, %v2362
    %v2399 = vadd.f32 %v2325, %v2366
    %v2400 = vadd.f32 %v2326, %v2370
    %v2401 = vadd.f32 %v2327, %v2374
    %v2402 = vadd.f32 %v2328, %v2378
    %v2403 = vadd.f32 %v2329, %v2350
    %v2404 = vadd.f32 %v2330, %v2354
    %v2405 = vadd.f32 %v2331, %v2358
    %v2406 = vadd.f32 %v2332, %v2362
    %v2407 = vadd.f32 %v2333, %v2366
    %v2408 = vadd.f32 %v2334, %v2370
    %v2409 = vadd.f32 %v2335, %v2374
    %v2410 = vadd.f32 %v2336, %v2378
    %v2411 = vadd.f32 %v2337, %v2350
    %v2412 = vadd.f32 %v2338, %v2354
    %v2413 = vadd.f32 %v2339, %v2358
    %v2414 = vadd.f32 %v2340, %v2362
    %v2415 = vadd.f32 %v2341, %v2366
    %v2416 = vadd.f32 %v2342, %v2370
    %v2417 = vadd.f32 %v2343, %v2374
    %v2418 = vadd.f32 %v2344, %v2378
    %v2419 = vmax.f32 %v2387, 0.0
    %v2420 = vmax.f32 %v2388, 0.0
    %v2421 = vmax.f32 %v2389, 0.0
    %v2422 = vmax.f32 %v2390, 0.0
    %v2423 = vmax.f32 %v2391, 0.0
    %v2424 = vmax.f32 %v2392, 0.0
    %v2425 = vmax.f32 %v2393, 0.0
    %v2426 = vmax.f32 %v2394, 0.0
    %v2427 = vmax.f32 %v2395, 0.0
    %v2428 = vmax.f32 %v2396, 0.0
    %v2429 = vmax.f32 %v2397, 0.0
    %v2430 = vmax.f32 %v2398, 0.0
    %v2431 = vmax.f32 %v2399, 0.0
    %v2432 = vmax.f32 %v2400, 0.0
    %v2433 = vmax.f32 %v2401, 0.0
    %v2434 = vmax.f32 %v2402, 0.0
    %v2435 = vmax.f32 %v2403, 0.0
    %v2436 = vmax.f32 %v2404, 0.0
    %v2437 = vmax.f32 %v2405, 0.0
    %v2438 = vmax.f32 %v2406, 0.0
    %v2439 = vmax.f32 %v2407, 0.0
    %v2440 = vmax.f32 %v2408, 0.0
    %v2441 = vmax.f32 %v2409, 0.0
    %v2442 = vmax.f32 %v2410, 0.0
    %v2443 = vmax.f32 %v2411, 0.0
    %v2444 = vmax.f32 %v2412, 0.0
    %v2445 = vmax.f32 %v2413, 0.0
    %v2446 = vmax.f32 %v2414, 0.0
    %v2447 = vmax.f32 %v2415, 0.0
    %v2448 = vmax.f32 %v2416, 0.0
    %v2449 = vmax.f32 %v2417, 0.0
    %v2450 = vmax.f32 %v2418, 0.0
    %v2451 = vpack.c.bf16 %v2427, %v2419
    %v2452 = vpack.c.bf16 %v2428, %v2420
    %v2453 = vpack.c.bf16 %v2429, %v2421
    %v2454 = vpack.c.bf16 %v2430, %v2422
    %v2455 = vpack.c.bf16 %v2443, %v2435
    %v2456 = vpack.c.bf16 %v2444, %v2436
    %v2457 = vpack.c.bf16 %v2445, %v2437
    %v2458 = vpack.c.bf16 %v2446, %v2438
    %v2459 = vpack.c.bf16 %v2431, %v2423
    %v2460 = vpack.c.bf16 %v2432, %v2424
    %v2461 = vpack.c.bf16 %v2433, %v2425
    %v2462 = vpack.c.bf16 %v2434, %v2426
    %v2463 = vpack.c.bf16 %v2447, %v2439
    %v2464 = vpack.c.bf16 %v2448, %v2440
    %v2465 = vpack.c.bf16 %v2449, %v2441
    %v2466 = vpack.c.bf16 %v2450, %v2442
    %v2467 = vld [vmem:[#allocation8] sm:$0xff]
    %v2468 = vld [vmem:[#allocation8 + $0x8] sm:$0xff]
    %v2469 = vld [vmem:[#allocation8 + $0x10] sm:$0xff]
    %v2470 = vld [vmem:[#allocation8 + $0x18] sm:$0xff]
    %v2471 = vld [vmem:[#allocation8 + $0x20] sm:$0xff]
    %v2472 = vld [vmem:[#allocation8 + $0x28] sm:$0xff]
    %v2473 = vld [vmem:[#allocation8 + $0x30] sm:$0xff]
    %v2474 = vld [vmem:[#allocation8 + $0x38] sm:$0xff]
    %v2475 = vld [vmem:[#allocation8 + $0x40] sm:$0xff]
    %v2476 = vld [vmem:[#allocation8 + $0x48] sm:$0xff]
    %v2477 = vld [vmem:[#allocation8 + $0x50] sm:$0xff]
    %v2478 = vld [vmem:[#allocation8 + $0x58] sm:$0xff]
    %v2479 = vld [vmem:[#allocation8 + $0x60] sm:$0xff]
    %v2480 = vld [vmem:[#allocation8 + $0x68] sm:$0xff]
    %v2481 = vld [vmem:[#allocation8 + $0x70] sm:$0xff]
    %v2482 = vld [vmem:[#allocation8 + $0x78] sm:$0xff]
    %v2483 = vld [vmem:[#allocation8 + $0x80] sm:$0xff]
    %v2484 = vld [vmem:[#allocation8 + $0x88] sm:$0xff]
    %v2485 = vld [vmem:[#allocation8 + $0x90] sm:$0xff]
    %v2486 = vld [vmem:[#allocation8 + $0x98] sm:$0xff]
    %v2487 = vld [vmem:[#allocation8 + $0xa0] sm:$0xff]
    %v2488 = vld [vmem:[#allocation8 + $0xa8] sm:$0xff]
    %v2489 = vld [vmem:[#allocation8 + $0xb0] sm:$0xff]
    %v2490 = vld [vmem:[#allocation8 + $0xb8] sm:$0xff]
    %v2491 = vld [vmem:[#allocation8 + $0xc0] sm:$0xff]
    %v2492 = vld [vmem:[#allocation8 + $0xc8] sm:$0xff]
    %v2493 = vld [vmem:[#allocation8 + $0xd0] sm:$0xff]
    %v2494 = vld [vmem:[#allocation8 + $0xd8] sm:$0xff]
    %v2495 = vld [vmem:[#allocation8 + $0xe0] sm:$0xff]
    %v2496 = vld [vmem:[#allocation8 + $0xe8] sm:$0xff]
    %v2497 = vld [vmem:[#allocation8 + $0xf0] sm:$0xff]
    %v2498 = vld [vmem:[#allocation8 + $0xf8] sm:$0xff]
    %v2499 = vld [vmem:[#allocation8 + $0x100] sm:$0xff]
    %v2500 = vld [vmem:[#allocation8 + $0x108] sm:$0xff]
    %v2501 = vld [vmem:[#allocation8 + $0x110] sm:$0xff]
    %v2502 = vld [vmem:[#allocation8 + $0x118] sm:$0xff]
    %v2503 = vld [vmem:[#allocation8 + $0x120] sm:$0xff]
    %v2504 = vld [vmem:[#allocation8 + $0x128] sm:$0xff]
    %v2505 = vld [vmem:[#allocation8 + $0x130] sm:$0xff]
    %v2506 = vld [vmem:[#allocation8 + $0x138] sm:$0xff]
    %v2507 = vld [vmem:[#allocation8 + $0x140] sm:$0xff]
    %v2508 = vld [vmem:[#allocation8 + $0x148] sm:$0xff]
    %v2509 = vld [vmem:[#allocation8 + $0x150] sm:$0xff]
    %v2510 = vld [vmem:[#allocation8 + $0x158] sm:$0xff]
    %v2511 = vld [vmem:[#allocation8 + $0x160] sm:$0xff]
    %v2512 = vld [vmem:[#allocation8 + $0x168] sm:$0xff]
    %v2513 = vld [vmem:[#allocation8 + $0x170] sm:$0xff]
    %v2514 = vld [vmem:[#allocation8 + $0x178] sm:$0xff]
    %v2515 = vld [vmem:[#allocation8 + $0x180] sm:$0xff]
    %v2516 = vld [vmem:[#allocation8 + $0x188] sm:$0xff]
    %v2517 = vld [vmem:[#allocation8 + $0x190] sm:$0xff]
    %v2518 = vld [vmem:[#allocation8 + $0x198] sm:$0xff]
    %v2519 = vld [vmem:[#allocation8 + $0x1a0] sm:$0xff]
    %v2520 = vld [vmem:[#allocation8 + $0x1a8] sm:$0xff]
    %v2521 = vld [vmem:[#allocation8 + $0x1b0] sm:$0xff]
    %v2522 = vld [vmem:[#allocation8 + $0x1b8] sm:$0xff]
    %v2523 = vld [vmem:[#allocation8 + $0x1c0] sm:$0xff]
    %v2524 = vld [vmem:[#allocation8 + $0x1c8] sm:$0xff]
    %v2525 = vld [vmem:[#allocation8 + $0x1d0] sm:$0xff]
    %v2526 = vld [vmem:[#allocation8 + $0x1d8] sm:$0xff]
    %v2527 = vld [vmem:[#allocation8 + $0x1e0] sm:$0xff]
    %v2528 = vld [vmem:[#allocation8 + $0x1e8] sm:$0xff]
    %v2529 = vld [vmem:[#allocation8 + $0x1f0] sm:$0xff]
    %v2530 = vld [vmem:[#allocation8 + $0x1f8] sm:$0xff]
    %v2531 = vld [vmem:[#allocation8 + $0x200] sm:$0xff]
    %v2532 = vld [vmem:[#allocation8 + $0x208] sm:$0xff]
    %v2533 = vld [vmem:[#allocation8 + $0x210] sm:$0xff]
    %v2534 = vld [vmem:[#allocation8 + $0x218] sm:$0xff]
    %v2535 = vld [vmem:[#allocation8 + $0x220] sm:$0xff]
    %v2536 = vld [vmem:[#allocation8 + $0x228] sm:$0xff]
    %v2537 = vld [vmem:[#allocation8 + $0x230] sm:$0xff]
    %v2538 = vld [vmem:[#allocation8 + $0x238] sm:$0xff]
    %v2539 = vld [vmem:[#allocation8 + $0x240] sm:$0xff]
    %v2540 = vld [vmem:[#allocation8 + $0x248] sm:$0xff]
    %v2541 = vld [vmem:[#allocation8 + $0x250] sm:$0xff]
    %v2542 = vld [vmem:[#allocation8 + $0x258] sm:$0xff]
    %v2543 = vld [vmem:[#allocation8 + $0x260] sm:$0xff]
    %v2544 = vld [vmem:[#allocation8 + $0x268] sm:$0xff]
    %v2545 = vld [vmem:[#allocation8 + $0x270] sm:$0xff]
    %v2546 = vld [vmem:[#allocation8 + $0x278] sm:$0xff]
    %v2547 = vld [vmem:[#allocation8 + $0x280] sm:$0xff]
    %v2548 = vld [vmem:[#allocation8 + $0x288] sm:$0xff]
    %v2549 = vld [vmem:[#allocation8 + $0x290] sm:$0xff]
    %v2550 = vld [vmem:[#allocation8 + $0x298] sm:$0xff]
    %v2551 = vld [vmem:[#allocation8 + $0x2a0] sm:$0xff]
    %v2552 = vld [vmem:[#allocation8 + $0x2a8] sm:$0xff]
    %v2553 = vld [vmem:[#allocation8 + $0x2b0] sm:$0xff]
    %v2554 = vld [vmem:[#allocation8 + $0x2b8] sm:$0xff]
    %v2555 = vld [vmem:[#allocation8 + $0x2c0] sm:$0xff]
    %v2556 = vld [vmem:[#allocation8 + $0x2c8] sm:$0xff]
    %v2557 = vld [vmem:[#allocation8 + $0x2d0] sm:$0xff]
    %v2558 = vld [vmem:[#allocation8 + $0x2d8] sm:$0xff]
    %v2559 = vld [vmem:[#allocation8 + $0x2e0] sm:$0xff]
    %v2560 = vld [vmem:[#allocation8 + $0x2e8] sm:$0xff]
    %v2561 = vld [vmem:[#allocation8 + $0x2f0] sm:$0xff]
    %v2562 = vld [vmem:[#allocation8 + $0x2f8] sm:$0xff]
    %v2563 = vld [vmem:[#allocation8 + $0x300] sm:$0xff]
    %v2564 = vld [vmem:[#allocation8 + $0x308] sm:$0xff]
    %v2565 = vld [vmem:[#allocation8 + $0x310] sm:$0xff]
    %v2566 = vld [vmem:[#allocation8 + $0x318] sm:$0xff]
    %v2567 = vld [vmem:[#allocation8 + $0x320] sm:$0xff]
    %v2568 = vld [vmem:[#allocation8 + $0x328] sm:$0xff]
    %v2569 = vld [vmem:[#allocation8 + $0x330] sm:$0xff]
    %v2570 = vld [vmem:[#allocation8 + $0x338] sm:$0xff]
    %v2571 = vld [vmem:[#allocation8 + $0x340] sm:$0xff]
    %v2572 = vld [vmem:[#allocation8 + $0x348] sm:$0xff]
    %v2573 = vld [vmem:[#allocation8 + $0x350] sm:$0xff]
    %v2574 = vld [vmem:[#allocation8 + $0x358] sm:$0xff]
    %v2575 = vld [vmem:[#allocation8 + $0x360] sm:$0xff]
    %v2576 = vld [vmem:[#allocation8 + $0x368] sm:$0xff]
    %v2577 = vld [vmem:[#allocation8 + $0x370] sm:$0xff]
    %v2578 = vld [vmem:[#allocation8 + $0x378] sm:$0xff]
    %v2579 = vld [vmem:[#allocation8 + $0x380] sm:$0xff]
    %v2580 = vld [vmem:[#allocation8 + $0x388] sm:$0xff]
    %v2581 = vld [vmem:[#allocation8 + $0x390] sm:$0xff]
    %v2582 = vld [vmem:[#allocation8 + $0x398] sm:$0xff]
    %v2583 = vld [vmem:[#allocation8 + $0x3a0] sm:$0xff]
    %v2584 = vld [vmem:[#allocation8 + $0x3a8] sm:$0xff]
    %v2585 = vld [vmem:[#allocation8 + $0x3b0] sm:$0xff]
    %v2586 = vld [vmem:[#allocation8 + $0x3b8] sm:$0xff]
    %v2587 = vld [vmem:[#allocation8 + $0x3c0] sm:$0xff]
    %v2588 = vld [vmem:[#allocation8 + $0x3c8] sm:$0xff]
    %v2589 = vld [vmem:[#allocation8 + $0x3d0] sm:$0xff]
    %v2590 = vld [vmem:[#allocation8 + $0x3d8] sm:$0xff]
    %v2591 = vld [vmem:[#allocation8 + $0x3e0] sm:$0xff]
    %v2592 = vld [vmem:[#allocation8 + $0x3e8] sm:$0xff]
    %v2593 = vld [vmem:[#allocation8 + $0x3f0] sm:$0xff]
    %v2594 = vld [vmem:[#allocation8 + $0x3f8] sm:$0xff]
    %v2595 = vld [vmem:[%s4] sm:$0xf]
    %v2597 = vlaneseq
    %v2598 = vshrl.u32 %v2597, 7
    %v2599 = vsub.s32 0, %v2598
    %v2600 = vrot.slane %v2595, %v2599
    %v2601 = vlaneseq
    %v2602 = vshrl.u32 %v2601, 7
    %v2603 = vsub.s32 1, %v2602
    %v2604 = vrot.slane %v2595, %v2603
    %v2605 = vlaneseq
    %v2606 = vshrl.u32 %v2605, 7
    %v2607 = vsub.s32 2, %v2606
    %v2608 = vrot.slane %v2595, %v2607
    %v2609 = vlaneseq
    %v2610 = vshrl.u32 %v2609, 7
    %v2611 = vsub.s32 3, %v2610
    %v2612 = vrot.slane %v2595, %v2611
    %v2745 = vunpack.c.l.b16 %v2467
    %v2746 = vunpack.c.h.b16 %v2467
    %v2747 = vunpack.c.l.b16 %v2468
    %v2748 = vunpack.c.h.b16 %v2468
    %v2749 = vunpack.c.l.b16 %v2469
    %v2750 = vunpack.c.h.b16 %v2469
    %v2751 = vunpack.c.l.b16 %v2470
    %v2752 = vunpack.c.h.b16 %v2470
    %v2753 = vunpack.c.l.b16 %v2471
    %v2754 = vunpack.c.h.b16 %v2471
    %v2755 = vunpack.c.l.b16 %v2472
    %v2756 = vunpack.c.h.b16 %v2472
    %v2757 = vunpack.c.l.b16 %v2473
    %v2758 = vunpack.c.h.b16 %v2473
    %v2759 = vunpack.c.l.b16 %v2474
    %v2760 = vunpack.c.h.b16 %v2474
    %v2761 = vunpack.c.l.b16 %v2475
    %v2762 = vunpack.c.h.b16 %v2475
    %v2763 = vunpack.c.l.b16 %v2476
    %v2764 = vunpack.c.h.b16 %v2476
    %v2765 = vunpack.c.l.b16 %v2477
    %v2766 = vunpack.c.h.b16 %v2477
    %v2767 = vunpack.c.l.b16 %v2478
    %v2768 = vunpack.c.h.b16 %v2478
    %v2769 = vunpack.c.l.b16 %v2479
    %v2770 = vunpack.c.h.b16 %v2479
    %v2771 = vunpack.c.l.b16 %v2480
    %v2772 = vunpack.c.h.b16 %v2480
    %v2773 = vunpack.c.l.b16 %v2481
    %v2774 = vunpack.c.h.b16 %v2481
    %v2775 = vunpack.c.l.b16 %v2482
    %v2776 = vunpack.c.h.b16 %v2482
    %v2777 = vunpack.c.l.b16 %v2483
    %v2778 = vunpack.c.h.b16 %v2483
    %v2779 = vunpack.c.l.b16 %v2484
    %v2780 = vunpack.c.h.b16 %v2484
    %v2781 = vunpack.c.l.b16 %v2485
    %v2782 = vunpack.c.h.b16 %v2485
    %v2783 = vunpack.c.l.b16 %v2486
    %v2784 = vunpack.c.h.b16 %v2486
    %v2785 = vunpack.c.l.b16 %v2487
    %v2786 = vunpack.c.h.b16 %v2487
    %v2787 = vunpack.c.l.b16 %v2488
    %v2788 = vunpack.c.h.b16 %v2488
    %v2789 = vunpack.c.l.b16 %v2489
    %v2790 = vunpack.c.h.b16 %v2489
    %v2791 = vunpack.c.l.b16 %v2490
    %v2792 = vunpack.c.h.b16 %v2490
    %v2793 = vunpack.c.l.b16 %v2491
    %v2794 = vunpack.c.h.b16 %v2491
    %v2795 = vunpack.c.l.b16 %v2492
    %v2796 = vunpack.c.h.b16 %v2492
    %v2797 = vunpack.c.l.b16 %v2493
    %v2798 = vunpack.c.h.b16 %v2493
    %v2799 = vunpack.c.l.b16 %v2494
    %v2800 = vunpack.c.h.b16 %v2494
    %v2801 = vunpack.c.l.b16 %v2495
    %v2802 = vunpack.c.h.b16 %v2495
    %v2803 = vunpack.c.l.b16 %v2496
    %v2804 = vunpack.c.h.b16 %v2496
    %v2805 = vunpack.c.l.b16 %v2497
    %v2806 = vunpack.c.h.b16 %v2497
    %v2807 = vunpack.c.l.b16 %v2498
    %v2808 = vunpack.c.h.b16 %v2498
    %v2809 = vunpack.c.l.b16 %v2499
    %v2810 = vunpack.c.h.b16 %v2499
    %v2811 = vunpack.c.l.b16 %v2500
    %v2812 = vunpack.c.h.b16 %v2500
    %v2813 = vunpack.c.l.b16 %v2501
    %v2814 = vunpack.c.h.b16 %v2501
    %v2815 = vunpack.c.l.b16 %v2502
    %v2816 = vunpack.c.h.b16 %v2502
    %v2817 = vunpack.c.l.b16 %v2503
    %v2818 = vunpack.c.h.b16 %v2503
    %v2819 = vunpack.c.l.b16 %v2504
    %v2820 = vunpack.c.h.b16 %v2504
    %v2821 = vunpack.c.l.b16 %v2505
    %v2822 = vunpack.c.h.b16 %v2505
    %v2823 = vunpack.c.l.b16 %v2506
    %v2824 = vunpack.c.h.b16 %v2506
    %v2825 = vunpack.c.l.b16 %v2507
    %v2826 = vunpack.c.h.b16 %v2507
    %v2827 = vunpack.c.l.b16 %v2508
    %v2828 = vunpack.c.h.b16 %v2508
    %v2829 = vunpack.c.l.b16 %v2509
    %v2830 = vunpack.c.h.b16 %v2509
    %v2831 = vunpack.c.l.b16 %v2510
    %v2832 = vunpack.c.h.b16 %v2510
    %v2833 = vunpack.c.l.b16 %v2511
    %v2834 = vunpack.c.h.b16 %v2511
    %v2835 = vunpack.c.l.b16 %v2512
    %v2836 = vunpack.c.h.b16 %v2512
    %v2837 = vunpack.c.l.b16 %v2513
    %v2838 = vunpack.c.h.b16 %v2513
    %v2839 = vunpack.c.l.b16 %v2514
    %v2840 = vunpack.c.h.b16 %v2514
    %v2841 = vunpack.c.l.b16 %v2515
    %v2842 = vunpack.c.h.b16 %v2515
    %v2843 = vunpack.c.l.b16 %v2516
    %v2844 = vunpack.c.h.b16 %v2516
    %v2845 = vunpack.c.l.b16 %v2517
    %v2846 = vunpack.c.h.b16 %v2517
    %v2847 = vunpack.c.l.b16 %v2518
    %v2848 = vunpack.c.h.b16 %v2518
    %v2849 = vunpack.c.l.b16 %v2519
    %v2850 = vunpack.c.h.b16 %v2519
    %v2851 = vunpack.c.l.b16 %v2520
    %v2852 = vunpack.c.h.b16 %v2520
    %v2853 = vunpack.c.l.b16 %v2521
    %v2854 = vunpack.c.h.b16 %v2521
    %v2855 = vunpack.c.l.b16 %v2522
    %v2856 = vunpack.c.h.b16 %v2522
    %v2857 = vunpack.c.l.b16 %v2523
    %v2858 = vunpack.c.h.b16 %v2523
    %v2859 = vunpack.c.l.b16 %v2524
    %v2860 = vunpack.c.h.b16 %v2524
    %v2861 = vunpack.c.l.b16 %v2525
    %v2862 = vunpack.c.h.b16 %v2525
    %v2863 = vunpack.c.l.b16 %v2526
    %v2864 = vunpack.c.h.b16 %v2526
    %v2865 = vunpack.c.l.b16 %v2527
    %v2866 = vunpack.c.h.b16 %v2527
    %v2867 = vunpack.c.l.b16 %v2528
    %v2868 = vunpack.c.h.b16 %v2528
    %v2869 = vunpack.c.l.b16 %v2529
    %v2870 = vunpack.c.h.b16 %v2529
    %v2871 = vunpack.c.l.b16 %v2530
    %v2872 = vunpack.c.h.b16 %v2530
    %v2873 = vunpack.c.l.b16 %v2531
    %v2874 = vunpack.c.h.b16 %v2531
    %v2875 = vunpack.c.l.b16 %v2532
    %v2876 = vunpack.c.h.b16 %v2532
    %v2877 = vunpack.c.l.b16 %v2533
    %v2878 = vunpack.c.h.b16 %v2533
    %v2879 = vunpack.c.l.b16 %v2534
    %v2880 = vunpack.c.h.b16 %v2534
    %v2881 = vunpack.c.l.b16 %v2535
    %v2882 = vunpack.c.h.b16 %v2535
    %v2883 = vunpack.c.l.b16 %v2536
    %v2884 = vunpack.c.h.b16 %v2536
    %v2885 = vunpack.c.l.b16 %v2537
    %v2886 = vunpack.c.h.b16 %v2537
    %v2887 = vunpack.c.l.b16 %v2538
    %v2888 = vunpack.c.h.b16 %v2538
    %v2889 = vunpack.c.l.b16 %v2539
    %v2890 = vunpack.c.h.b16 %v2539
    %v2891 = vunpack.c.l.b16 %v2540
    %v2892 = vunpack.c.h.b16 %v2540
    %v2893 = vunpack.c.l.b16 %v2541
    %v2894 = vunpack.c.h.b16 %v2541
    %v2895 = vunpack.c.l.b16 %v2542
    %v2896 = vunpack.c.h.b16 %v2542
    %v2897 = vunpack.c.l.b16 %v2543
    %v2898 = vunpack.c.h.b16 %v2543
    %v2899 = vunpack.c.l.b16 %v2544
    %v2900 = vunpack.c.h.b16 %v2544
    %v2901 = vunpack.c.l.b16 %v2545
    %v2902 = vunpack.c.h.b16 %v2545
    %v2903 = vunpack.c.l.b16 %v2546
    %v2904 = vunpack.c.h.b16 %v2546
    %v2905 = vunpack.c.l.b16 %v2547
    %v2906 = vunpack.c.h.b16 %v2547
    %v2907 = vunpack.c.l.b16 %v2548
    %v2908 = vunpack.c.h.b16 %v2548
    %v2909 = vunpack.c.l.b16 %v2549
    %v2910 = vunpack.c.h.b16 %v2549
    %v2911 = vunpack.c.l.b16 %v2550
    %v2912 = vunpack.c.h.b16 %v2550
    %v2913 = vunpack.c.l.b16 %v2551
    %v2914 = vunpack.c.h.b16 %v2551
    %v2915 = vunpack.c.l.b16 %v2552
    %v2916 = vunpack.c.h.b16 %v2552
    %v2917 = vunpack.c.l.b16 %v2553
    %v2918 = vunpack.c.h.b16 %v2553
    %v2919 = vunpack.c.l.b16 %v2554
    %v2920 = vunpack.c.h.b16 %v2554
    %v2921 = vunpack.c.l.b16 %v2555
    %v2922 = vunpack.c.h.b16 %v2555
    %v2923 = vunpack.c.l.b16 %v2556
    %v2924 = vunpack.c.h.b16 %v2556
    %v2925 = vunpack.c.l.b16 %v2557
    %v2926 = vunpack.c.h.b16 %v2557
    %v2927 = vunpack.c.l.b16 %v2558
    %v2928 = vunpack.c.h.b16 %v2558
    %v2929 = vunpack.c.l.b16 %v2559
    %v2930 = vunpack.c.h.b16 %v2559
    %v2931 = vunpack.c.l.b16 %v2560
    %v2932 = vunpack.c.h.b16 %v2560
    %v2933 = vunpack.c.l.b16 %v2561
    %v2934 = vunpack.c.h.b16 %v2561
    %v2935 = vunpack.c.l.b16 %v2562
    %v2936 = vunpack.c.h.b16 %v2562
    %v2937 = vunpack.c.l.b16 %v2563
    %v2938 = vunpack.c.h.b16 %v2563
    %v2939 = vunpack.c.l.b16 %v2564
    %v2940 = vunpack.c.h.b16 %v2564
    %v2941 = vunpack.c.l.b16 %v2565
    %v2942 = vunpack.c.h.b16 %v2565
    %v2943 = vunpack.c.l.b16 %v2566
    %v2944 = vunpack.c.h.b16 %v2566
    %v2945 = vunpack.c.l.b16 %v2567
    %v2946 = vunpack.c.h.b16 %v2567
    %v2947 = vunpack.c.l.b16 %v2568
    %v2948 = vunpack.c.h.b16 %v2568
    %v2949 = vunpack.c.l.b16 %v2569
    %v2950 = vunpack.c.h.b16 %v2569
    %v2951 = vunpack.c.l.b16 %v2570
    %v2952 = vunpack.c.h.b16 %v2570
    %v2953 = vunpack.c.l.b16 %v2571
    %v2954 = vunpack.c.h.b16 %v2571
    %v2955 = vunpack.c.l.b16 %v2572
    %v2956 = vunpack.c.h.b16 %v2572
    %v2957 = vunpack.c.l.b16 %v2573
    %v2958 = vunpack.c.h.b16 %v2573
    %v2959 = vunpack.c.l.b16 %v2574
    %v2960 = vunpack.c.h.b16 %v2574
    %v2961 = vunpack.c.l.b16 %v2575
    %v2962 = vunpack.c.h.b16 %v2575
    %v2963 = vunpack.c.l.b16 %v2576
    %v2964 = vunpack.c.h.b16 %v2576
    %v2965 = vunpack.c.l.b16 %v2577
    %v2966 = vunpack.c.h.b16 %v2577
    %v2967 = vunpack.c.l.b16 %v2578
    %v2968 = vunpack.c.h.b16 %v2578
    %v2969 = vunpack.c.l.b16 %v2579
    %v2970 = vunpack.c.h.b16 %v2579
    %v2971 = vunpack.c.l.b16 %v2580
    %v2972 = vunpack.c.h.b16 %v2580
    %v2973 = vunpack.c.l.b16 %v2581
    %v2974 = vunpack.c.h.b16 %v2581
    %v2975 = vunpack.c.l.b16 %v2582
    %v2976 = vunpack.c.h.b16 %v2582
    %v2977 = vunpack.c.l.b16 %v2583
    %v2978 = vunpack.c.h.b16 %v2583
    %v2979 = vunpack.c.l.b16 %v2584
    %v2980 = vunpack.c.h.b16 %v2584
    %v2981 = vunpack.c.l.b16 %v2585
    %v2982 = vunpack.c.h.b16 %v2585
    %v2983 = vunpack.c.l.b16 %v2586
    %v2984 = vunpack.c.h.b16 %v2586
    %v2985 = vunpack.c.l.b16 %v2587
    %v2986 = vunpack.c.h.b16 %v2587
    %v2987 = vunpack.c.l.b16 %v2588
    %v2988 = vunpack.c.h.b16 %v2588
    %v2989 = vunpack.c.l.b16 %v2589
    %v2990 = vunpack.c.h.b16 %v2589
    %v2991 = vunpack.c.l.b16 %v2590
    %v2992 = vunpack.c.h.b16 %v2590
    %v2993 = vunpack.c.l.b16 %v2591
    %v2994 = vunpack.c.h.b16 %v2591
    %v2995 = vunpack.c.l.b16 %v2592
    %v2996 = vunpack.c.h.b16 %v2592
    %v2997 = vunpack.c.l.b16 %v2593
    %v2998 = vunpack.c.h.b16 %v2593
    %v2999 = vunpack.c.l.b16 %v2594
    %v3000 = vunpack.c.h.b16 %v2594
    %v3001 = vpack.c.b16 %v2749, %v2745
    %v3002 = vpack.c.b16 %v2750, %v2746
    %v3003 = vpack.c.b16 %v2751, %v2747
    %v3004 = vpack.c.b16 %v2752, %v2748
    %v3005 = vpack.c.b16 %v2757, %v2753
    %v3006 = vpack.c.b16 %v2758, %v2754
    %v3007 = vpack.c.b16 %v2759, %v2755
    %v3008 = vpack.c.b16 %v2760, %v2756
    %v3009 = vpack.c.b16 %v2765, %v2761
    %v3010 = vpack.c.b16 %v2766, %v2762
    %v3011 = vpack.c.b16 %v2767, %v2763
    %v3012 = vpack.c.b16 %v2768, %v2764
    %v3013 = vpack.c.b16 %v2773, %v2769
    %v3014 = vpack.c.b16 %v2774, %v2770
    %v3015 = vpack.c.b16 %v2775, %v2771
    %v3016 = vpack.c.b16 %v2776, %v2772
    %v3017 = vpack.c.b16 %v2781, %v2777
    %v3018 = vpack.c.b16 %v2782, %v2778
    %v3019 = vpack.c.b16 %v2783, %v2779
    %v3020 = vpack.c.b16 %v2784, %v2780
    %v3021 = vpack.c.b16 %v2789, %v2785
    %v3022 = vpack.c.b16 %v2790, %v2786
    %v3023 = vpack.c.b16 %v2791, %v2787
    %v3024 = vpack.c.b16 %v2792, %v2788
    %v3025 = vpack.c.b16 %v2797, %v2793
    %v3026 = vpack.c.b16 %v2798, %v2794
    %v3027 = vpack.c.b16 %v2799, %v2795
    %v3028 = vpack.c.b16 %v2800, %v2796
    %v3029 = vpack.c.b16 %v2805, %v2801
    %v3030 = vpack.c.b16 %v2806, %v2802
    %v3031 = vpack.c.b16 %v2807, %v2803
    %v3032 = vpack.c.b16 %v2808, %v2804
    %v3033 = vpack.c.b16 %v2813, %v2809
    %v3034 = vpack.c.b16 %v2814, %v2810
    %v3035 = vpack.c.b16 %v2815, %v2811
    %v3036 = vpack.c.b16 %v2816, %v2812
    %v3037 = vpack.c.b16 %v2821, %v2817
    %v3038 = vpack.c.b16 %v2822, %v2818
    %v3039 = vpack.c.b16 %v2823, %v2819
    %v3040 = vpack.c.b16 %v2824, %v2820
    %v3041 = vpack.c.b16 %v2829, %v2825
    %v3042 = vpack.c.b16 %v2830, %v2826
    %v3043 = vpack.c.b16 %v2831, %v2827
    %v3044 = vpack.c.b16 %v2832, %v2828
    %v3045 = vpack.c.b16 %v2837, %v2833
    %v3046 = vpack.c.b16 %v2838, %v2834
    %v3047 = vpack.c.b16 %v2839, %v2835
    %v3048 = vpack.c.b16 %v2840, %v2836
    %v3049 = vpack.c.b16 %v2845, %v2841
    %v3050 = vpack.c.b16 %v2846, %v2842
    %v3051 = vpack.c.b16 %v2847, %v2843
    %v3052 = vpack.c.b16 %v2848, %v2844
    %v3053 = vpack.c.b16 %v2853, %v2849
    %v3054 = vpack.c.b16 %v2854, %v2850
    %v3055 = vpack.c.b16 %v2855, %v2851
    %v3056 = vpack.c.b16 %v2856, %v2852
    %v3057 = vpack.c.b16 %v2861, %v2857
    %v3058 = vpack.c.b16 %v2862, %v2858
    %v3059 = vpack.c.b16 %v2863, %v2859
    %v3060 = vpack.c.b16 %v2864, %v2860
    %v3061 = vpack.c.b16 %v2869, %v2865
    %v3062 = vpack.c.b16 %v2870, %v2866
    %v3063 = vpack.c.b16 %v2871, %v2867
    %v3064 = vpack.c.b16 %v2872, %v2868
    %v3065 = vpack.c.b16 %v2877, %v2873
    %v3066 = vpack.c.b16 %v2878, %v2874
    %v3067 = vpack.c.b16 %v2879, %v2875
    %v3068 = vpack.c.b16 %v2880, %v2876
    %v3069 = vpack.c.b16 %v2885, %v2881
    %v3070 = vpack.c.b16 %v2886, %v2882
    %v3071 = vpack.c.b16 %v2887, %v2883
    %v3072 = vpack.c.b16 %v2888, %v2884
    %v3073 = vpack.c.b16 %v2893, %v2889
    %v3074 = vpack.c.b16 %v2894, %v2890
    %v3075 = vpack.c.b16 %v2895, %v2891
    %v3076 = vpack.c.b16 %v2896, %v2892
    %v3077 = vpack.c.b16 %v2901, %v2897
    %v3078 = vpack.c.b16 %v2902, %v2898
    %v3079 = vpack.c.b16 %v2903, %v2899
    %v3080 = vpack.c.b16 %v2904, %v2900
    %v3081 = vpack.c.b16 %v2909, %v2905
    %v3082 = vpack.c.b16 %v2910, %v2906
    %v3083 = vpack.c.b16 %v2911, %v2907
    %v3084 = vpack.c.b16 %v2912, %v2908
    %v3085 = vpack.c.b16 %v2917, %v2913
    %v3086 = vpack.c.b16 %v2918, %v2914
    %v3087 = vpack.c.b16 %v2919, %v2915
    %v3088 = vpack.c.b16 %v2920, %v2916
    %v3089 = vpack.c.b16 %v2925, %v2921
    %v3090 = vpack.c.b16 %v2926, %v2922
    %v3091 = vpack.c.b16 %v2927, %v2923
    %v3092 = vpack.c.b16 %v2928, %v2924
    %v3093 = vpack.c.b16 %v2933, %v2929
    %v3094 = vpack.c.b16 %v2934, %v2930
    %v3095 = vpack.c.b16 %v2935, %v2931
    %v3096 = vpack.c.b16 %v2936, %v2932
    %v3097 = vpack.c.b16 %v2941, %v2937
    %v3098 = vpack.c.b16 %v2942, %v2938
    %v3099 = vpack.c.b16 %v2943, %v2939
    %v3100 = vpack.c.b16 %v2944, %v2940
    %v3101 = vpack.c.b16 %v2949, %v2945
    %v3102 = vpack.c.b16 %v2950, %v2946
    %v3103 = vpack.c.b16 %v2951, %v2947
    %v3104 = vpack.c.b16 %v2952, %v2948
    %v3105 = vpack.c.b16 %v2957, %v2953
    %v3106 = vpack.c.b16 %v2958, %v2954
    %v3107 = vpack.c.b16 %v2959, %v2955
    %v3108 = vpack.c.b16 %v2960, %v2956
    %v3109 = vpack.c.b16 %v2965, %v2961
    %v3110 = vpack.c.b16 %v2966, %v2962
    %v3111 = vpack.c.b16 %v2967, %v2963
    %v3112 = vpack.c.b16 %v2968, %v2964
    %v3113 = vpack.c.b16 %v2973, %v2969
    %v3114 = vpack.c.b16 %v2974, %v2970
    %v3115 = vpack.c.b16 %v2975, %v2971
    %v3116 = vpack.c.b16 %v2976, %v2972
    %v3117 = vpack.c.b16 %v2981, %v2977
    %v3118 = vpack.c.b16 %v2982, %v2978
    %v3119 = vpack.c.b16 %v2983, %v2979
    %v3120 = vpack.c.b16 %v2984, %v2980
    %v3121 = vpack.c.b16 %v2989, %v2985
    %v3122 = vpack.c.b16 %v2990, %v2986
    %v3123 = vpack.c.b16 %v2991, %v2987
    %v3124 = vpack.c.b16 %v2992, %v2988
    %v3125 = vpack.c.b16 %v2997, %v2993
    %v3126 = vpack.c.b16 %v2998, %v2994
    %v3127 = vpack.c.b16 %v2999, %v2995
    %v3128 = vpack.c.b16 %v3000, %v2996
    %3257 = vmatprep.subr.bf16.mxu0 %v3002
    %3258 = vmatpush1.bf16.msra.mxu0 %v3001
    %3259 = vmatprep.subr.bf16.mxu0 %v3006
    %3260 = vmatpush1.bf16.msra.mxu0 %v3005
    %3261 = vmatprep.subr.bf16.mxu0 %v3010
    %3262 = vmatpush1.bf16.msra.mxu0 %v3009
    %3263 = vmatprep.subr.bf16.mxu0 %v3014
    %3264 = vmatpush1.bf16.msra.mxu0 %v3013
    %3265 = vmatprep.subr.bf16.mxu0 %v3018
    %3266 = vmatpush1.bf16.msra.mxu0 %v3017
    %3267 = vmatprep.subr.bf16.mxu0 %v3022
    %3268 = vmatpush1.bf16.msra.mxu0 %v3021
    %3269 = vmatprep.subr.bf16.mxu0 %v3026
    %3270 = vmatpush1.bf16.msra.mxu0 %v3025
    %3271 = vmatprep.subr.bf16.mxu0 %v3030
    %3272 = vmatpush1.bf16.msra.mxu0 %v3029
    %3273 = vmatprep.subr.bf16.mxu0 %v3034
    %3274 = vmatpush1.bf16.msra.mxu0 %v3033
    %3275 = vmatprep.subr.bf16.mxu0 %v3038
    %3276 = vmatpush1.bf16.msra.mxu0 %v3037
    %3277 = vmatprep.subr.bf16.mxu0 %v3042
    %3278 = vmatpush1.bf16.msra.mxu0 %v3041
    %3279 = vmatprep.subr.bf16.mxu0 %v3046
    %3280 = vmatpush1.bf16.msra.mxu0 %v3045
    %3281 = vmatprep.subr.bf16.mxu0 %v3050
    %3282 = vmatpush1.bf16.msra.mxu0 %v3049
    %3283 = vmatprep.subr.bf16.mxu0 %v3054
    %3284 = vmatpush1.bf16.msra.mxu0 %v3053
    %3285 = vmatprep.subr.bf16.mxu0 %v3058
    %3286 = vmatpush1.bf16.msra.mxu0 %v3057
    %3287 = vmatprep.subr.bf16.mxu0 %v3062
    %3288 = vmatpush1.bf16.msra.mxu0 %v3061
    %3289 = vmatprep.mubr.bf16.mxu0 %v2452
    %3290 = vmatmul.mubr.bf16.gmra.mrb[0].mxu0 %v2451
    %v3291 = vpop.f32.mrb[0].mxu0
    %v3292 = vadd.f32 %v2600, %v3291
    %v3293 = vpop.f32.mrb[0].mxu0
    %v3294 = vadd.f32 %v2604, %v3293
    %v3295 = vpop.f32.mrb[0].mxu0
    %v3296 = vadd.f32 %v2600, %v3295
    %v3297 = vpop.f32.mrb[0].mxu0
    %v3298 = vadd.f32 %v2604, %v3297
    %3299 = vmatprep.mubr.bf16.mxu0 %v2456
    %3300 = vmatmul.mubr.bf16.gmra.mrb[0].mxu0 %v2455
    %v3301 = vpop.f32.mrb[0].mxu0
    %v3302 = vadd.f32 %v2600, %v3301
    %v3303 = vpop.f32.mrb[0].mxu0
    %v3304 = vadd.f32 %v2604, %v3303
    %v3305 = vpop.f32.mrb[0].mxu0
    %v3306 = vadd.f32 %v2600, %v3305
    %v3307 = vpop.f32.mrb[0].mxu0
    %v3308 = vadd.f32 %v2604, %v3307
    %3309 = vdwg.mxu0
    %3310 = vmatprep.subr.bf16.mxu0 %v3066
    %3311 = vmatpush1.bf16.msra.mxu0 %v3065
    %3312 = vmatprep.subr.bf16.mxu0 %v3070
    %3313 = vmatpush1.bf16.msra.mxu0 %v3069
    %3314 = vmatprep.subr.bf16.mxu0 %v3074
    %3315 = vmatpush1.bf16.msra.mxu0 %v3073
    %3316 = vmatprep.subr.bf16.mxu0 %v3078
    %3317 = vmatpush1.bf16.msra.mxu0 %v3077
    %3318 = vmatprep.subr.bf16.mxu0 %v3082
    %3319 = vmatpush1.bf16.msra.mxu0 %v3081
    %3320 = vmatprep.subr.bf16.mxu0 %v3086
    %3321 = vmatpush1.bf16.msra.mxu0 %v3085
    %3322 = vmatprep.subr.bf16.mxu0 %v3090
    %3323 = vmatpush1.bf16.msra.mxu0 %v3089
    %3324 = vmatprep.subr.bf16.mxu0 %v3094
    %3325 = vmatpush1.bf16.msra.mxu0 %v3093
    %3326 = vmatprep.subr.bf16.mxu0 %v3098
    %3327 = vmatpush1.bf16.msra.mxu0 %v3097
    %3328 = vmatprep.subr.bf16.mxu0 %v3102
    %3329 = vmatpush1.bf16.msra.mxu0 %v3101
    %3330 = vmatprep.subr.bf16.mxu0 %v3106
    %3331 = vmatpush1.bf16.msra.mxu0 %v3105
    %3332 = vmatprep.subr.bf16.mxu0 %v3110
    %3333 = vmatpush1.bf16.msra.mxu0 %v3109
    %3334 = vmatprep.subr.bf16.mxu0 %v3114
    %3335 = vmatpush1.bf16.msra.mxu0 %v3113
    %3336 = vmatprep.subr.bf16.mxu0 %v3118
    %3337 = vmatpush1.bf16.msra.mxu0 %v3117
    %3338 = vmatprep.subr.bf16.mxu0 %v3122
    %3339 = vmatpush1.bf16.msra.mxu0 %v3121
    %3340 = vmatprep.subr.bf16.mxu0 %v3126
    %3341 = vmatpush1.bf16.msra.mxu0 %v3125
    %3342 = vmatprep.mubr.bf16.mxu0 %v2454
    %3343 = vmatmul.mubr.bf16.gmra.mrb[0].mxu0 %v2453
    %v3344 = vpop.f32.mrb[0].mxu0
    %v3345 = vadd.f32 %v3292, %v3344
    %v3346 = vpop.f32.mrb[0].mxu0
    %v3347 = vadd.f32 %v3294, %v3346
    %v3348 = vpop.f32.mrb[0].mxu0
    %v3349 = vadd.f32 %v3296, %v3348
    %v3350 = vpop.f32.mrb[0].mxu0
    %v3351 = vadd.f32 %v3298, %v3350
    %3352 = vmatprep.mubr.bf16.mxu0 %v2458
    %3353 = vmatmul.mubr.bf16.gmra.mrb[0].mxu0 %v2457
    %v3354 = vpop.f32.mrb[0].mxu0
    %v3355 = vadd.f32 %v3302, %v3354
    %v3356 = vpop.f32.mrb[0].mxu0
    %v3357 = vadd.f32 %v3304, %v3356
    %v3358 = vpop.f32.mrb[0].mxu0
    %v3359 = vadd.f32 %v3306, %v3358
    %v3360 = vpop.f32.mrb[0].mxu0
    %v3361 = vadd.f32 %v3308, %v3360
    %3362 = vdwg.mxu0
    %3363 = vmatprep.subr.bf16.mxu0 %v3004
    %3364 = vmatpush1.bf16.msra.mxu0 %v3003
    %3365 = vmatprep.subr.bf16.mxu0 %v3008
    %3366 = vmatpush1.bf16.msra.mxu0 %v3007
    %3367 = vmatprep.subr.bf16.mxu0 %v3012
    %3368 = vmatpush1.bf16.msra.mxu0 %v3011
    %3369 = vmatprep.subr.bf16.mxu0 %v3016
    %3370 = vmatpush1.bf16.msra.mxu0 %v3015
    %3371 = vmatprep.subr.bf16.mxu0 %v3020
    %3372 = vmatpush1.bf16.msra.mxu0 %v3019
    %3373 = vmatprep.subr.bf16.mxu0 %v3024
    %3374 = vmatpush1.bf16.msra.mxu0 %v3023
    %3375 = vmatprep.subr.bf16.mxu0 %v3028
    %3376 = vmatpush1.bf16.msra.mxu0 %v3027
    %3377 = vmatprep.subr.bf16.mxu0 %v3032
    %3378 = vmatpush1.bf16.msra.mxu0 %v3031
    %3379 = vmatprep.subr.bf16.mxu0 %v3036
    %3380 = vmatpush1.bf16.msra.mxu0 %v3035
    %3381 = vmatprep.subr.bf16.mxu0 %v3040
    %3382 = vmatpush1.bf16.msra.mxu0 %v3039
    %3383 = vmatprep.subr.bf16.mxu0 %v3044
    %3384 = vmatpush1.bf16.msra.mxu0 %v3043
    %3385 = vmatprep.subr.bf16.mxu0 %v3048
    %3386 = vmatpush1.bf16.msra.mxu0 %v3047
    %3387 = vmatprep.subr.bf16.mxu0 %v3052
    %3388 = vmatpush1.bf16.msra.mxu0 %v3051
    %3389 = vmatprep.subr.bf16.mxu0 %v3056
    %3390 = vmatpush1.bf16.msra.mxu0 %v3055
    %3391 = vmatprep.subr.bf16.mxu0 %v3060
    %3392 = vmatpush1.bf16.msra.mxu0 %v3059
    %3393 = vmatprep.subr.bf16.mxu0 %v3064
    %3394 = vmatpush1.bf16.msra.mxu0 %v3063
    %3395 = vmatprep.mubr.bf16.mxu0 %v2452
    %3396 = vmatmul.mubr.bf16.gmra.mrb[0].mxu0 %v2451
    %v3397 = vpop.f32.mrb[0].mxu0
    %v3398 = vadd.f32 %v2608, %v3397
    %v3399 = vpop.f32.mrb[0].mxu0
    %v3400 = vadd.f32 %v2612, %v3399
    %v3401 = vpop.f32.mrb[0].mxu0
    %v3402 = vadd.f32 %v2608, %v3401
    %v3403 = vpop.f32.mrb[0].mxu0
    %v3404 = vadd.f32 %v2612, %v3403
    %3405 = vmatprep.mubr.bf16.mxu0 %v2456
    %3406 = vmatmul.mubr.bf16.gmra.mrb[0].mxu0 %v2455
    %v3407 = vpop.f32.mrb[0].mxu0
    %v3408 = vadd.f32 %v2608, %v3407
    %v3409 = vpop.f32.mrb[0].mxu0
    %v3410 = vadd.f32 %v2612, %v3409
    %v3411 = vpop.f32.mrb[0].mxu0
    %v3412 = vadd.f32 %v2608, %v3411
    %v3413 = vpop.f32.mrb[0].mxu0
    %v3414 = vadd.f32 %v2612, %v3413
    %3415 = vdwg.mxu0
    %3416 = vmatprep.subr.bf16.mxu0 %v3068
    %3417 = vmatpush1.bf16.msra.mxu0 %v3067
    %3418 = vmatprep.subr.bf16.mxu0 %v3072
    %3419 = vmatpush1.bf16.msra.mxu0 %v3071
    %3420 = vmatprep.subr.bf16.mxu0 %v3076
    %3421 = vmatpush1.bf16.msra.mxu0 %v3075
    %3422 = vmatprep.subr.bf16.mxu0 %v3080
    %3423 = vmatpush1.bf16.msra.mxu0 %v3079
    %3424 = vmatprep.subr.bf16.mxu0 %v3084
    %3425 = vmatpush1.bf16.msra.mxu0 %v3083
    %3426 = vmatprep.subr.bf16.mxu0 %v3088
    %3427 = vmatpush1.bf16.msra.mxu0 %v3087
    %3428 = vmatprep.subr.bf16.mxu0 %v3092
    %3429 = vmatpush1.bf16.msra.mxu0 %v3091
    %3430 = vmatprep.subr.bf16.mxu0 %v3096
    %3431 = vmatpush1.bf16.msra.mxu0 %v3095
    %3432 = vmatprep.subr.bf16.mxu0 %v3100
    %3433 = vmatpush1.bf16.msra.mxu0 %v3099
    %3434 = vmatprep.subr.bf16.mxu0 %v3104
    %3435 = vmatpush1.bf16.msra.mxu0 %v3103
    %3436 = vmatprep.subr.bf16.mxu0 %v3108
    %3437 = vmatpush1.bf16.msra.mxu0 %v3107
    %3438 = vmatprep.subr.bf16.mxu0 %v3112
    %3439 = vmatpush1.bf16.msra.mxu0 %v3111
    %3440 = vmatprep.subr.bf16.mxu0 %v3116
    %3441 = vmatpush1.bf16.msra.mxu0 %v3115
    %3442 = vmatprep.subr.bf16.mxu0 %v3120
    %3443 = vmatpush1.bf16.msra.mxu0 %v3119
    %3444 = vmatprep.subr.bf16.mxu0 %v3124
    %3445 = vmatpush1.bf16.msra.mxu0 %v3123
    %3446 = vmatprep.subr.bf16.mxu0 %v3128
    %3447 = vmatpush1.bf16.msra.mxu0 %v3127
    %3448 = vmatprep.mubr.bf16.mxu0 %v2454
    %3449 = vmatmul.mubr.bf16.gmra.mrb[0].mxu0 %v2453
    %v3450 = vpop.f32.mrb[0].mxu0
    %v3451 = vadd.f32 %v3398, %v3450
    %v3452 = vpop.f32.mrb[0].mxu0
    %v3453 = vadd.f32 %v3400, %v3452
    %v3454 = vpop.f32.mrb[0].mxu0
    %v3455 = vadd.f32 %v3402, %v3454
    %v3456 = vpop.f32.mrb[0].mxu0
    %v3457 = vadd.f32 %v3404, %v3456
    %3458 = vmatprep.mubr.bf16.mxu0 %v2458
    %3459 = vmatmul.mubr.bf16.gmra.mrb[0].mxu0 %v2457
    %v3460 = vpop.f32.mrb[0].mxu0
    %v3461 = vadd.f32 %v3408, %v3460
    %v3462 = vpop.f32.mrb[0].mxu0
    %v3463 = vadd.f32 %v3410, %v3462
    %v3464 = vpop.f32.mrb[0].mxu0
    %v3465 = vadd.f32 %v3412, %v3464
    %v3466 = vpop.f32.mrb[0].mxu0
    %v3467 = vadd.f32 %v3414, %v3466
    %3468 = vdwg.mxu0
    %v3469 = vmax.f32 %v3345, 0.0
    %v3470 = vmax.f32 %v3347, 0.0
    %v3471 = vmax.f32 %v3451, 0.0
    %v3472 = vmax.f32 %v3453, 0.0
    %v3473 = vmax.f32 %v3349, 0.0
    %v3474 = vmax.f32 %v3351, 0.0
    %v3475 = vmax.f32 %v3455, 0.0
    %v3476 = vmax.f32 %v3457, 0.0
    %v3477 = vmax.f32 %v3355, 0.0
    %v3478 = vmax.f32 %v3357, 0.0
    %v3479 = vmax.f32 %v3461, 0.0
    %v3480 = vmax.f32 %v3463, 0.0
    %v3481 = vmax.f32 %v3359, 0.0
    %v3482 = vmax.f32 %v3361, 0.0
    %v3483 = vmax.f32 %v3465, 0.0
    %v3484 = vmax.f32 %v3467, 0.0
    %v3485 = vld [vmem:[#allocation10] sm:$0xff]
    %v3486 = vld [vmem:[#allocation10 + $0x8] sm:$0xff]
    %v3487 = vld [vmem:[#allocation10 + $0x10] sm:$0xff]
    %v3488 = vld [vmem:[#allocation10 + $0x18] sm:$0xff]
    %v3489 = vld [vmem:[#allocation10 + $0x20] sm:$0xff]
    %v3490 = vld [vmem:[#allocation10 + $0x28] sm:$0xff]
    %v3491 = vld [vmem:[#allocation10 + $0x30] sm:$0xff]
    %v3492 = vld [vmem:[#allocation10 + $0x38] sm:$0xff]
    %v3493 = vld [vmem:[#allocation10 + $0x40] sm:$0xff]
    %v3494 = vld [vmem:[#allocation10 + $0x48] sm:$0xff]
    %v3495 = vld [vmem:[#allocation10 + $0x50] sm:$0xff]
    %v3496 = vld [vmem:[#allocation10 + $0x58] sm:$0xff]
    %v3497 = vld [vmem:[#allocation10 + $0x60] sm:$0xff]
    %v3498 = vld [vmem:[#allocation10 + $0x68] sm:$0xff]
    %v3499 = vld [vmem:[#allocation10 + $0x70] sm:$0xff]
    %v3500 = vld [vmem:[#allocation10 + $0x78] sm:$0xff]
    %v3501 = vld [vmem:[#allocation10 + $0x80] sm:$0xff]
    %v3502 = vld [vmem:[#allocation10 + $0x88] sm:$0xff]
    %v3503 = vld [vmem:[#allocation10 + $0x90] sm:$0xff]
    %v3504 = vld [vmem:[#allocation10 + $0x98] sm:$0xff]
    %v3505 = vld [vmem:[#allocation10 + $0xa0] sm:$0xff]
    %v3506 = vld [vmem:[#allocation10 + $0xa8] sm:$0xff]
    %v3507 = vld [vmem:[#allocation10 + $0xb0] sm:$0xff]
    %v3508 = vld [vmem:[#allocation10 + $0xb8] sm:$0xff]
    %v3509 = vld [vmem:[#allocation10 + $0xc0] sm:$0xff]
    %v3510 = vld [vmem:[#allocation10 + $0xc8] sm:$0xff]
    %v3511 = vld [vmem:[#allocation10 + $0xd0] sm:$0xff]
    %v3512 = vld [vmem:[#allocation10 + $0xd8] sm:$0xff]
    %v3513 = vld [vmem:[#allocation10 + $0xe0] sm:$0xff]
    %v3514 = vld [vmem:[#allocation10 + $0xe8] sm:$0xff]
    %v3515 = vld [vmem:[#allocation10 + $0xf0] sm:$0xff]
    %v3516 = vld [vmem:[#allocation10 + $0xf8] sm:$0xff]
    %v3517 = vld [vmem:[#allocation10 + $0x100] sm:$0xff]
    %v3518 = vld [vmem:[#allocation10 + $0x108] sm:$0xff]
    %v3519 = vld [vmem:[#allocation10 + $0x110] sm:$0xff]
    %v3520 = vld [vmem:[#allocation10 + $0x118] sm:$0xff]
    %v3521 = vld [vmem:[#allocation10 + $0x120] sm:$0xff]
    %v3522 = vld [vmem:[#allocation10 + $0x128] sm:$0xff]
    %v3523 = vld [vmem:[#allocation10 + $0x130] sm:$0xff]
    %v3524 = vld [vmem:[#allocation10 + $0x138] sm:$0xff]
    %v3525 = vld [vmem:[#allocation10 + $0x140] sm:$0xff]
    %v3526 = vld [vmem:[#allocation10 + $0x148] sm:$0xff]
    %v3527 = vld [vmem:[#allocation10 + $0x150] sm:$0xff]
    %v3528 = vld [vmem:[#allocation10 + $0x158] sm:$0xff]
    %v3529 = vld [vmem:[#allocation10 + $0x160] sm:$0xff]
    %v3530 = vld [vmem:[#allocation10 + $0x168] sm:$0xff]
    %v3531 = vld [vmem:[#allocation10 + $0x170] sm:$0xff]
    %v3532 = vld [vmem:[#allocation10 + $0x178] sm:$0xff]
    %v3533 = vld [vmem:[#allocation10 + $0x180] sm:$0xff]
    %v3534 = vld [vmem:[#allocation10 + $0x188] sm:$0xff]
    %v3535 = vld [vmem:[#allocation10 + $0x190] sm:$0xff]
    %v3536 = vld [vmem:[#allocation10 + $0x198] sm:$0xff]
    %v3537 = vld [vmem:[#allocation10 + $0x1a0] sm:$0xff]
    %v3538 = vld [vmem:[#allocation10 + $0x1a8] sm:$0xff]
    %v3539 = vld [vmem:[#allocation10 + $0x1b0] sm:$0xff]
    %v3540 = vld [vmem:[#allocation10 + $0x1b8] sm:$0xff]
    %v3541 = vld [vmem:[#allocation10 + $0x1c0] sm:$0xff]
    %v3542 = vld [vmem:[#allocation10 + $0x1c8] sm:$0xff]
    %v3543 = vld [vmem:[#allocation10 + $0x1d0] sm:$0xff]
    %v3544 = vld [vmem:[#allocation10 + $0x1d8] sm:$0xff]
    %v3545 = vld [vmem:[#allocation10 + $0x1e0] sm:$0xff]
    %v3546 = vld [vmem:[#allocation10 + $0x1e8] sm:$0xff]
    %v3547 = vld [vmem:[#allocation10 + $0x1f0] sm:$0xff]
    %v3548 = vld [vmem:[#allocation10 + $0x1f8] sm:$0xff]
    %v3549 = vld [vmem:[#allocation10 + $0x200] sm:$0xff]
    %v3550 = vld [vmem:[#allocation10 + $0x208] sm:$0xff]
    %v3551 = vld [vmem:[#allocation10 + $0x210] sm:$0xff]
    %v3552 = vld [vmem:[#allocation10 + $0x218] sm:$0xff]
    %v3553 = vld [vmem:[#allocation10 + $0x220] sm:$0xff]
    %v3554 = vld [vmem:[#allocation10 + $0x228] sm:$0xff]
    %v3555 = vld [vmem:[#allocation10 + $0x230] sm:$0xff]
    %v3556 = vld [vmem:[#allocation10 + $0x238] sm:$0xff]
    %v3557 = vld [vmem:[#allocation10 + $0x240] sm:$0xff]
    %v3558 = vld [vmem:[#allocation10 + $0x248] sm:$0xff]
    %v3559 = vld [vmem:[#allocation10 + $0x250] sm:$0xff]
    %v3560 = vld [vmem:[#allocation10 + $0x258] sm:$0xff]
    %v3561 = vld [vmem:[#allocation10 + $0x260] sm:$0xff]
    %v3562 = vld [vmem:[#allocation10 + $0x268] sm:$0xff]
    %v3563 = vld [vmem:[#allocation10 + $0x270] sm:$0xff]
    %v3564 = vld [vmem:[#allocation10 + $0x278] sm:$0xff]
    %v3565 = vld [vmem:[#allocation10 + $0x280] sm:$0xff]
    %v3566 = vld [vmem:[#allocation10 + $0x288] sm:$0xff]
    %v3567 = vld [vmem:[#allocation10 + $0x290] sm:$0xff]
    %v3568 = vld [vmem:[#allocation10 + $0x298] sm:$0xff]
    %v3569 = vld [vmem:[#allocation10 + $0x2a0] sm:$0xff]
    %v3570 = vld [vmem:[#allocation10 + $0x2a8] sm:$0xff]
    %v3571 = vld [vmem:[#allocation10 + $0x2b0] sm:$0xff]
    %v3572 = vld [vmem:[#allocation10 + $0x2b8] sm:$0xff]
    %v3573 = vld [vmem:[#allocation10 + $0x2c0] sm:$0xff]
    %v3574 = vld [vmem:[#allocation10 + $0x2c8] sm:$0xff]
    %v3575 = vld [vmem:[#allocation10 + $0x2d0] sm:$0xff]
    %v3576 = vld [vmem:[#allocation10 + $0x2d8] sm:$0xff]
    %v3577 = vld [vmem:[#allocation10 + $0x2e0] sm:$0xff]
    %v3578 = vld [vmem:[#allocation10 + $0x2e8] sm:$0xff]
    %v3579 = vld [vmem:[#allocation10 + $0x2f0] sm:$0xff]
    %v3580 = vld [vmem:[#allocation10 + $0x2f8] sm:$0xff]
    %v3581 = vld [vmem:[#allocation10 + $0x300] sm:$0xff]
    %v3582 = vld [vmem:[#allocation10 + $0x308] sm:$0xff]
    %v3583 = vld [vmem:[#allocation10 + $0x310] sm:$0xff]
    %v3584 = vld [vmem:[#allocation10 + $0x318] sm:$0xff]
    %v3585 = vld [vmem:[#allocation10 + $0x320] sm:$0xff]
    %v3586 = vld [vmem:[#allocation10 + $0x328] sm:$0xff]
    %v3587 = vld [vmem:[#allocation10 + $0x330] sm:$0xff]
    %v3588 = vld [vmem:[#allocation10 + $0x338] sm:$0xff]
    %v3589 = vld [vmem:[#allocation10 + $0x340] sm:$0xff]
    %v3590 = vld [vmem:[#allocation10 + $0x348] sm:$0xff]
    %v3591 = vld [vmem:[#allocation10 + $0x350] sm:$0xff]
    %v3592 = vld [vmem:[#allocation10 + $0x358] sm:$0xff]
    %v3593 = vld [vmem:[#allocation10 + $0x360] sm:$0xff]
    %v3594 = vld [vmem:[#allocation10 + $0x368] sm:$0xff]
    %v3595 = vld [vmem:[#allocation10 + $0x370] sm:$0xff]
    %v3596 = vld [vmem:[#allocation10 + $0x378] sm:$0xff]
    %v3597 = vld [vmem:[#allocation10 + $0x380] sm:$0xff]
    %v3598 = vld [vmem:[#allocation10 + $0x388] sm:$0xff]
    %v3599 = vld [vmem:[#allocation10 + $0x390] sm:$0xff]
    %v3600 = vld [vmem:[#allocation10 + $0x398] sm:$0xff]
    %v3601 = vld [vmem:[#allocation10 + $0x3a0] sm:$0xff]
    %v3602 = vld [vmem:[#allocation10 + $0x3a8] sm:$0xff]
    %v3603 = vld [vmem:[#allocation10 + $0x3b0] sm:$0xff]
    %v3604 = vld [vmem:[#allocation10 + $0x3b8] sm:$0xff]
    %v3605 = vld [vmem:[#allocation10 + $0x3c0] sm:$0xff]
    %v3606 = vld [vmem:[#allocation10 + $0x3c8] sm:$0xff]
    %v3607 = vld [vmem:[#allocation10 + $0x3d0] sm:$0xff]
    %v3608 = vld [vmem:[#allocation10 + $0x3d8] sm:$0xff]
    %v3609 = vld [vmem:[#allocation10 + $0x3e0] sm:$0xff]
    %v3610 = vld [vmem:[#allocation10 + $0x3e8] sm:$0xff]
    %v3611 = vld [vmem:[#allocation10 + $0x3f0] sm:$0xff]
    %v3612 = vld [vmem:[#allocation10 + $0x3f8] sm:$0xff]
    %v3613 = vld [vmem:[%s6] sm:$0xf]
    %v3615 = vlaneseq
    %v3616 = vshrl.u32 %v3615, 7
    %v3617 = vsub.s32 0, %v3616
    %v3618 = vrot.slane %v3613, %v3617
    %v3619 = vlaneseq
    %v3620 = vshrl.u32 %v3619, 7
    %v3621 = vsub.s32 1, %v3620
    %v3622 = vrot.slane %v3613, %v3621
    %v3623 = vlaneseq
    %v3624 = vshrl.u32 %v3623, 7
    %v3625 = vsub.s32 2, %v3624
    %v3626 = vrot.slane %v3613, %v3625
    %v3627 = vlaneseq
    %v3628 = vshrl.u32 %v3627, 7
    %v3629 = vsub.s32 3, %v3628
    %v3630 = vrot.slane %v3613, %v3629
    %v3763 = vunpack.c.l.b16 %v3485
    %v3764 = vunpack.c.h.b16 %v3485
    %v3765 = vunpack.c.l.b16 %v3486
    %v3766 = vunpack.c.h.b16 %v3486
    %v3767 = vunpack.c.l.b16 %v3487
    %v3768 = vunpack.c.h.b16 %v3487
    %v3769 = vunpack.c.l.b16 %v3488
    %v3770 = vunpack.c.h.b16 %v3488
    %v3771 = vunpack.c.l.b16 %v3489
    %v3772 = vunpack.c.h.b16 %v3489
    %v3773 = vunpack.c.l.b16 %v3490
    %v3774 = vunpack.c.h.b16 %v3490
    %v3775 = vunpack.c.l.b16 %v3491
    %v3776 = vunpack.c.h.b16 %v3491
    %v3777 = vunpack.c.l.b16 %v3492
    %v3778 = vunpack.c.h.b16 %v3492
    %v3779 = vunpack.c.l.b16 %v3493
    %v3780 = vunpack.c.h.b16 %v3493
    %v3781 = vunpack.c.l.b16 %v3494
    %v3782 = vunpack.c.h.b16 %v3494
    %v3783 = vunpack.c.l.b16 %v3495
    %v3784 = vunpack.c.h.b16 %v3495
    %v3785 = vunpack.c.l.b16 %v3496
    %v3786 = vunpack.c.h.b16 %v3496
    %v3787 = vunpack.c.l.b16 %v3497
    %v3788 = vunpack.c.h.b16 %v3497
    %v3789 = vunpack.c.l.b16 %v3498
    %v3790 = vunpack.c.h.b16 %v3498
    %v3791 = vunpack.c.l.b16 %v3499
    %v3792 = vunpack.c.h.b16 %v3499
    %v3793 = vunpack.c.l.b16 %v3500
    %v3794 = vunpack.c.h.b16 %v3500
    %v3795 = vunpack.c.l.b16 %v3501
    %v3796 = vunpack.c.h.b16 %v3501
    %v3797 = vunpack.c.l.b16 %v3502
    %v3798 = vunpack.c.h.b16 %v3502
    %v3799 = vunpack.c.l.b16 %v3503
    %v3800 = vunpack.c.h.b16 %v3503
    %v3801 = vunpack.c.l.b16 %v3504
    %v3802 = vunpack.c.h.b16 %v3504
    %v3803 = vunpack.c.l.b16 %v3505
    %v3804 = vunpack.c.h.b16 %v3505
    %v3805 = vunpack.c.l.b16 %v3506
    %v3806 = vunpack.c.h.b16 %v3506
    %v3807 = vunpack.c.l.b16 %v3507
    %v3808 = vunpack.c.h.b16 %v3507
    %v3809 = vunpack.c.l.b16 %v3508
    %v3810 = vunpack.c.h.b16 %v3508
    %v3811 = vunpack.c.l.b16 %v3509
    %v3812 = vunpack.c.h.b16 %v3509
    %v3813 = vunpack.c.l.b16 %v3510
    %v3814 = vunpack.c.h.b16 %v3510
    %v3815 = vunpack.c.l.b16 %v3511
    %v3816 = vunpack.c.h.b16 %v3511
    %v3817 = vunpack.c.l.b16 %v3512
    %v3818 = vunpack.c.h.b16 %v3512
    %v3819 = vunpack.c.l.b16 %v3513
    %v3820 = vunpack.c.h.b16 %v3513
    %v3821 = vunpack.c.l.b16 %v3514
    %v3822 = vunpack.c.h.b16 %v3514
    %v3823 = vunpack.c.l.b16 %v3515
    %v3824 = vunpack.c.h.b16 %v3515
    %v3825 = vunpack.c.l.b16 %v3516
    %v3826 = vunpack.c.h.b16 %v3516
    %v3827 = vunpack.c.l.b16 %v3517
    %v3828 = vunpack.c.h.b16 %v3517
    %v3829 = vunpack.c.l.b16 %v3518
    %v3830 = vunpack.c.h.b16 %v3518
    %v3831 = vunpack.c.l.b16 %v3519
    %v3832 = vunpack.c.h.b16 %v3519
    %v3833 = vunpack.c.l.b16 %v3520
    %v3834 = vunpack.c.h.b16 %v3520
    %v3835 = vunpack.c.l.b16 %v3521
    %v3836 = vunpack.c.h.b16 %v3521
    %v3837 = vunpack.c.l.b16 %v3522
    %v3838 = vunpack.c.h.b16 %v3522
    %v3839 = vunpack.c.l.b16 %v3523
    %v3840 = vunpack.c.h.b16 %v3523
    %v3841 = vunpack.c.l.b16 %v3524
    %v3842 = vunpack.c.h.b16 %v3524
    %v3843 = vunpack.c.l.b16 %v3525
    %v3844 = vunpack.c.h.b16 %v3525
    %v3845 = vunpack.c.l.b16 %v3526
    %v3846 = vunpack.c.h.b16 %v3526
    %v3847 = vunpack.c.l.b16 %v3527
    %v3848 = vunpack.c.h.b16 %v3527
    %v3849 = vunpack.c.l.b16 %v3528
    %v3850 = vunpack.c.h.b16 %v3528
    %v3851 = vunpack.c.l.b16 %v3529
    %v3852 = vunpack.c.h.b16 %v3529
    %v3853 = vunpack.c.l.b16 %v3530
    %v3854 = vunpack.c.h.b16 %v3530
    %v3855 = vunpack.c.l.b16 %v3531
    %v3856 = vunpack.c.h.b16 %v3531
    %v3857 = vunpack.c.l.b16 %v3532
    %v3858 = vunpack.c.h.b16 %v3532
    %v3859 = vunpack.c.l.b16 %v3533
    %v3860 = vunpack.c.h.b16 %v3533
    %v3861 = vunpack.c.l.b16 %v3534
    %v3862 = vunpack.c.h.b16 %v3534
    %v3863 = vunpack.c.l.b16 %v3535
    %v3864 = vunpack.c.h.b16 %v3535
    %v3865 = vunpack.c.l.b16 %v3536
    %v3866 = vunpack.c.h.b16 %v3536
    %v3867 = vunpack.c.l.b16 %v3537
    %v3868 = vunpack.c.h.b16 %v3537
    %v3869 = vunpack.c.l.b16 %v3538
    %v3870 = vunpack.c.h.b16 %v3538
    %v3871 = vunpack.c.l.b16 %v3539
    %v3872 = vunpack.c.h.b16 %v3539
    %v3873 = vunpack.c.l.b16 %v3540
    %v3874 = vunpack.c.h.b16 %v3540
    %v3875 = vunpack.c.l.b16 %v3541
    %v3876 = vunpack.c.h.b16 %v3541
    %v3877 = vunpack.c.l.b16 %v3542
    %v3878 = vunpack.c.h.b16 %v3542
    %v3879 = vunpack.c.l.b16 %v3543
    %v3880 = vunpack.c.h.b16 %v3543
    %v3881 = vunpack.c.l.b16 %v3544
    %v3882 = vunpack.c.h.b16 %v3544
    %v3883 = vunpack.c.l.b16 %v3545
    %v3884 = vunpack.c.h.b16 %v3545
    %v3885 = vunpack.c.l.b16 %v3546
    %v3886 = vunpack.c.h.b16 %v3546
    %v3887 = vunpack.c.l.b16 %v3547
    %v3888 = vunpack.c.h.b16 %v3547
    %v3889 = vunpack.c.l.b16 %v3548
    %v3890 = vunpack.c.h.b16 %v3548
    %v3891 = vunpack.c.l.b16 %v3549
    %v3892 = vunpack.c.h.b16 %v3549
    %v3893 = vunpack.c.l.b16 %v3550
    %v3894 = vunpack.c.h.b16 %v3550
    %v3895 = vunpack.c.l.b16 %v3551
    %v3896 = vunpack.c.h.b16 %v3551
    %v3897 = vunpack.c.l.b16 %v3552
    %v3898 = vunpack.c.h.b16 %v3552
    %v3899 = vunpack.c.l.b16 %v3553
    %v3900 = vunpack.c.h.b16 %v3553
    %v3901 = vunpack.c.l.b16 %v3554
    %v3902 = vunpack.c.h.b16 %v3554
    %v3903 = vunpack.c.l.b16 %v3555
    %v3904 = vunpack.c.h.b16 %v3555
    %v3905 = vunpack.c.l.b16 %v3556
    %v3906 = vunpack.c.h.b16 %v3556
    %v3907 = vunpack.c.l.b16 %v3557
    %v3908 = vunpack.c.h.b16 %v3557
    %v3909 = vunpack.c.l.b16 %v3558
    %v3910 = vunpack.c.h.b16 %v3558
    %v3911 = vunpack.c.l.b16 %v3559
    %v3912 = vunpack.c.h.b16 %v3559
    %v3913 = vunpack.c.l.b16 %v3560
    %v3914 = vunpack.c.h.b16 %v3560
    %v3915 = vunpack.c.l.b16 %v3561
    %v3916 = vunpack.c.h.b16 %v3561
    %v3917 = vunpack.c.l.b16 %v3562
    %v3918 = vunpack.c.h.b16 %v3562
    %v3919 = vunpack.c.l.b16 %v3563
    %v3920 = vunpack.c.h.b16 %v3563
    %v3921 = vunpack.c.l.b16 %v3564
    %v3922 = vunpack.c.h.b16 %v3564
    %v3923 = vunpack.c.l.b16 %v3565
    %v3924 = vunpack.c.h.b16 %v3565
    %v3925 = vunpack.c.l.b16 %v3566
    %v3926 = vunpack.c.h.b16 %v3566
    %v3927 = vunpack.c.l.b16 %v3567
    %v3928 = vunpack.c.h.b16 %v3567
    %v3929 = vunpack.c.l.b16 %v3568
    %v3930 = vunpack.c.h.b16 %v3568
    %v3931 = vunpack.c.l.b16 %v3569
    %v3932 = vunpack.c.h.b16 %v3569
    %v3933 = vunpack.c.l.b16 %v3570
    %v3934 = vunpack.c.h.b16 %v3570
    %v3935 = vunpack.c.l.b16 %v3571
    %v3936 = vunpack.c.h.b16 %v3571
    %v3937 = vunpack.c.l.b16 %v3572
    %v3938 = vunpack.c.h.b16 %v3572
    %v3939 = vunpack.c.l.b16 %v3573
    %v3940 = vunpack.c.h.b16 %v3573
    %v3941 = vunpack.c.l.b16 %v3574
    %v3942 = vunpack.c.h.b16 %v3574
    %v3943 = vunpack.c.l.b16 %v3575
    %v3944 = vunpack.c.h.b16 %v3575
    %v3945 = vunpack.c.l.b16 %v3576
    %v3946 = vunpack.c.h.b16 %v3576
    %v3947 = vunpack.c.l.b16 %v3577
    %v3948 = vunpack.c.h.b16 %v3577
    %v3949 = vunpack.c.l.b16 %v3578
    %v3950 = vunpack.c.h.b16 %v3578
    %v3951 = vunpack.c.l.b16 %v3579
    %v3952 = vunpack.c.h.b16 %v3579
    %v3953 = vunpack.c.l.b16 %v3580
    %v3954 = vunpack.c.h.b16 %v3580
    %v3955 = vunpack.c.l.b16 %v3581
    %v3956 = vunpack.c.h.b16 %v3581
    %v3957 = vunpack.c.l.b16 %v3582
    %v3958 = vunpack.c.h.b16 %v3582
    %v3959 = vunpack.c.l.b16 %v3583
    %v3960 = vunpack.c.h.b16 %v3583
    %v3961 = vunpack.c.l.b16 %v3584
    %v3962 = vunpack.c.h.b16 %v3584
    %v3963 = vunpack.c.l.b16 %v3585
    %v3964 = vunpack.c.h.b16 %v3585
    %v3965 = vunpack.c.l.b16 %v3586
    %v3966 = vunpack.c.h.b16 %v3586
    %v3967 = vunpack.c.l.b16 %v3587
    %v3968 = vunpack.c.h.b16 %v3587
    %v3969 = vunpack.c.l.b16 %v3588
    %v3970 = vunpack.c.h.b16 %v3588
    %v3971 = vunpack.c.l.b16 %v3589
    %v3972 = vunpack.c.h.b16 %v3589
    %v3973 = vunpack.c.l.b16 %v3590
    %v3974 = vunpack.c.h.b16 %v3590
    %v3975 = vunpack.c.l.b16 %v3591
    %v3976 = vunpack.c.h.b16 %v3591
    %v3977 = vunpack.c.l.b16 %v3592
    %v3978 = vunpack.c.h.b16 %v3592
    %v3979 = vunpack.c.l.b16 %v3593
    %v3980 = vunpack.c.h.b16 %v3593
    %v3981 = vunpack.c.l.b16 %v3594
    %v3982 = vunpack.c.h.b16 %v3594
    %v3983 = vunpack.c.l.b16 %v3595
    %v3984 = vunpack.c.h.b16 %v3595
    %v3985 = vunpack.c.l.b16 %v3596
    %v3986 = vunpack.c.h.b16 %v3596
    %v3987 = vunpack.c.l.b16 %v3597
    %v3988 = vunpack.c.h.b16 %v3597
    %v3989 = vunpack.c.l.b16 %v3598
    %v3990 = vunpack.c.h.b16 %v3598
    %v3991 = vunpack.c.l.b16 %v3599
    %v3992 = vunpack.c.h.b16 %v3599
    %v3993 = vunpack.c.l.b16 %v3600
    %v3994 = vunpack.c.h.b16 %v3600
    %v3995 = vunpack.c.l.b16 %v3601
    %v3996 = vunpack.c.h.b16 %v3601
    %v3997 = vunpack.c.l.b16 %v3602
    %v3998 = vunpack.c.h.b16 %v3602
    %v3999 = vunpack.c.l.b16 %v3603
    %v4000 = vunpack.c.h.b16 %v3603
    %v4001 = vunpack.c.l.b16 %v3604
    %v4002 = vunpack.c.h.b16 %v3604
    %v4003 = vunpack.c.l.b16 %v3605
    %v4004 = vunpack.c.h.b16 %v3605
    %v4005 = vunpack.c.l.b16 %v3606
    %v4006 = vunpack.c.h.b16 %v3606
    %v4007 = vunpack.c.l.b16 %v3607
    %v4008 = vunpack.c.h.b16 %v3607
    %v4009 = vunpack.c.l.b16 %v3608
    %v4010 = vunpack.c.h.b16 %v3608
    %v4011 = vunpack.c.l.b16 %v3609
    %v4012 = vunpack.c.h.b16 %v3609
    %v4013 = vunpack.c.l.b16 %v3610
    %v4014 = vunpack.c.h.b16 %v3610
    %v4015 = vunpack.c.l.b16 %v3611
    %v4016 = vunpack.c.h.b16 %v3611
    %v4017 = vunpack.c.l.b16 %v3612
    %v4018 = vunpack.c.h.b16 %v3612
    %v4019 = vpack.c.b16 %v3767, %v3763
    %v4020 = vpack.c.b16 %v3768, %v3764
    %v4021 = vpack.c.b16 %v3769, %v3765
    %v4022 = vpack.c.b16 %v3770, %v3766
    %v4023 = vpack.c.b16 %v3775, %v3771
    %v4024 = vpack.c.b16 %v3776, %v3772
    %v4025 = vpack.c.b16 %v3777, %v3773
    %v4026 = vpack.c.b16 %v3778, %v3774
    %v4027 = vpack.c.b16 %v3783, %v3779
    %v4028 = vpack.c.b16 %v3784, %v3780
    %v4029 = vpack.c.b16 %v3785, %v3781
    %v4030 = vpack.c.b16 %v3786, %v3782
    %v4031 = vpack.c.b16 %v3791, %v3787
    %v4032 = vpack.c.b16 %v3792, %v3788
    %v4033 = vpack.c.b16 %v3793, %v3789
    %v4034 = vpack.c.b16 %v3794, %v3790
    %v4035 = vpack.c.b16 %v3799, %v3795
    %v4036 = vpack.c.b16 %v3800, %v3796
    %v4037 = vpack.c.b16 %v3801, %v3797
    %v4038 = vpack.c.b16 %v3802, %v3798
    %v4039 = vpack.c.b16 %v3807, %v3803
    %v4040 = vpack.c.b16 %v3808, %v3804
    %v4041 = vpack.c.b16 %v3809, %v3805
    %v4042 = vpack.c.b16 %v3810, %v3806
    %v4043 = vpack.c.b16 %v3815, %v3811
    %v4044 = vpack.c.b16 %v3816, %v3812
    %v4045 = vpack.c.b16 %v3817, %v3813
    %v4046 = vpack.c.b16 %v3818, %v3814
    %v4047 = vpack.c.b16 %v3823, %v3819
    %v4048 = vpack.c.b16 %v3824, %v3820
    %v4049 = vpack.c.b16 %v3825, %v3821
    %v4050 = vpack.c.b16 %v3826, %v3822
    %v4051 = vpack.c.b16 %v3831, %v3827
    %v4052 = vpack.c.b16 %v3832, %v3828
    %v4053 = vpack.c.b16 %v3833, %v3829
    %v4054 = vpack.c.b16 %v3834, %v3830
    %v4055 = vpack.c.b16 %v3839, %v3835
    %v4056 = vpack.c.b16 %v3840, %v3836
    %v4057 = vpack.c.b16 %v3841, %v3837
    %v4058 = vpack.c.b16 %v3842, %v3838
    %v4059 = vpack.c.b16 %v3847, %v3843
    %v4060 = vpack.c.b16 %v3848, %v3844
    %v4061 = vpack.c.b16 %v3849, %v3845
    %v4062 = vpack.c.b16 %v3850, %v3846
    %v4063 = vpack.c.b16 %v3855, %v3851
    %v4064 = vpack.c.b16 %v3856, %v3852
    %v4065 = vpack.c.b16 %v3857, %v3853
    %v4066 = vpack.c.b16 %v3858, %v3854
    %v4067 = vpack.c.b16 %v3863, %v3859
    %v4068 = vpack.c.b16 %v3864, %v3860
    %v4069 = vpack.c.b16 %v3865, %v3861
    %v4070 = vpack.c.b16 %v3866, %v3862
    %v4071 = vpack.c.b16 %v3871, %v3867
    %v4072 = vpack.c.b16 %v3872, %v3868
    %v4073 = vpack.c.b16 %v3873, %v3869
    %v4074 = vpack.c.b16 %v3874, %v3870
    %v4075 = vpack.c.b16 %v3879, %v3875
    %v4076 = vpack.c.b16 %v3880, %v3876
    %v4077 = vpack.c.b16 %v3881, %v3877
    %v4078 = vpack.c.b16 %v3882, %v3878
    %v4079 = vpack.c.b16 %v3887, %v3883
    %v4080 = vpack.c.b16 %v3888, %v3884
    %v4081 = vpack.c.b16 %v3889, %v3885
    %v4082 = vpack.c.b16 %v3890, %v3886
    %v4083 = vpack.c.b16 %v3895, %v3891
    %v4084 = vpack.c.b16 %v3896, %v3892
    %v4085 = vpack.c.b16 %v3897, %v3893
    %v4086 = vpack.c.b16 %v3898, %v3894
    %v4087 = vpack.c.b16 %v3903, %v3899
    %v4088 = vpack.c.b16 %v3904, %v3900
    %v4089 = vpack.c.b16 %v3905, %v3901
    %v4090 = vpack.c.b16 %v3906, %v3902
    %v4091 = vpack.c.b16 %v3911, %v3907
    %v4092 = vpack.c.b16 %v3912, %v3908
    %v4093 = vpack.c.b16 %v3913, %v3909
    %v4094 = vpack.c.b16 %v3914, %v3910
    %v4095 = vpack.c.b16 %v3919, %v3915
    %v4096 = vpack.c.b16 %v3920, %v3916
    %v4097 = vpack.c.b16 %v3921, %v3917
    %v4098 = vpack.c.b16 %v3922, %v3918
    %v4099 = vpack.c.b16 %v3927, %v3923
    %v4100 = vpack.c.b16 %v3928, %v3924
    %v4101 = vpack.c.b16 %v3929, %v3925
    %v4102 = vpack.c.b16 %v3930, %v3926
    %v4103 = vpack.c.b16 %v3935, %v3931
    %v4104 = vpack.c.b16 %v3936, %v3932
    %v4105 = vpack.c.b16 %v3937, %v3933
    %v4106 = vpack.c.b16 %v3938, %v3934
    %v4107 = vpack.c.b16 %v3943, %v3939
    %v4108 = vpack.c.b16 %v3944, %v3940
    %v4109 = vpack.c.b16 %v3945, %v3941
    %v4110 = vpack.c.b16 %v3946, %v3942
    %v4111 = vpack.c.b16 %v3951, %v3947
    %v4112 = vpack.c.b16 %v3952, %v3948
    %v4113 = vpack.c.b16 %v3953, %v3949
    %v4114 = vpack.c.b16 %v3954, %v3950
    %v4115 = vpack.c.b16 %v3959, %v3955
    %v4116 = vpack.c.b16 %v3960, %v3956
    %v4117 = vpack.c.b16 %v3961, %v3957
    %v4118 = vpack.c.b16 %v3962, %v3958
    %v4119 = vpack.c.b16 %v3967, %v3963
    %v4120 = vpack.c.b16 %v3968, %v3964
    %v4121 = vpack.c.b16 %v3969, %v3965
    %v4122 = vpack.c.b16 %v3970, %v3966
    %v4123 = vpack.c.b16 %v3975, %v3971
    %v4124 = vpack.c.b16 %v3976, %v3972
    %v4125 = vpack.c.b16 %v3977, %v3973
    %v4126 = vpack.c.b16 %v3978, %v3974
    %v4127 = vpack.c.b16 %v3983, %v3979
    %v4128 = vpack.c.b16 %v3984, %v3980
    %v4129 = vpack.c.b16 %v3985, %v3981
    %v4130 = vpack.c.b16 %v3986, %v3982
    %v4131 = vpack.c.b16 %v3991, %v3987
    %v4132 = vpack.c.b16 %v3992, %v3988
    %v4133 = vpack.c.b16 %v3993, %v3989
    %v4134 = vpack.c.b16 %v3994, %v3990
    %v4135 = vpack.c.b16 %v3999, %v3995
    %v4136 = vpack.c.b16 %v4000, %v3996
    %v4137 = vpack.c.b16 %v4001, %v3997
    %v4138 = vpack.c.b16 %v4002, %v3998
    %v4139 = vpack.c.b16 %v4007, %v4003
    %v4140 = vpack.c.b16 %v4008, %v4004
    %v4141 = vpack.c.b16 %v4009, %v4005
    %v4142 = vpack.c.b16 %v4010, %v4006
    %v4143 = vpack.c.b16 %v4015, %v4011
    %v4144 = vpack.c.b16 %v4016, %v4012
    %v4145 = vpack.c.b16 %v4017, %v4013
    %v4146 = vpack.c.b16 %v4018, %v4014
    %4275 = vmatprep.subr.bf16.mxu0 %v4020
    %4276 = vmatpush1.bf16.msra.mxu0 %v4019
    %4277 = vmatprep.subr.bf16.mxu0 %v4024
    %4278 = vmatpush1.bf16.msra.mxu0 %v4023
    %4279 = vmatprep.subr.bf16.mxu0 %v4028
    %4280 = vmatpush1.bf16.msra.mxu0 %v4027
    %4281 = vmatprep.subr.bf16.mxu0 %v4032
    %4282 = vmatpush1.bf16.msra.mxu0 %v4031
    %4283 = vmatprep.subr.bf16.mxu0 %v4036
    %4284 = vmatpush1.bf16.msra.mxu0 %v4035
    %4285 = vmatprep.subr.bf16.mxu0 %v4040
    %4286 = vmatpush1.bf16.msra.mxu0 %v4039
    %4287 = vmatprep.subr.bf16.mxu0 %v4044
    %4288 = vmatpush1.bf16.msra.mxu0 %v4043
    %4289 = vmatprep.subr.bf16.mxu0 %v4048
    %4290 = vmatpush1.bf16.msra.mxu0 %v4047
    %4291 = vmatprep.subr.bf16.mxu0 %v4052
    %4292 = vmatpush1.bf16.msra.mxu0 %v4051
    %4293 = vmatprep.subr.bf16.mxu0 %v4056
    %4294 = vmatpush1.bf16.msra.mxu0 %v4055
    %4295 = vmatprep.subr.bf16.mxu0 %v4060
    %4296 = vmatpush1.bf16.msra.mxu0 %v4059
    %4297 = vmatprep.subr.bf16.mxu0 %v4064
    %4298 = vmatpush1.bf16.msra.mxu0 %v4063
    %4299 = vmatprep.subr.bf16.mxu0 %v4068
    %4300 = vmatpush1.bf16.msra.mxu0 %v4067
    %4301 = vmatprep.subr.bf16.mxu0 %v4072
    %4302 = vmatpush1.bf16.msra.mxu0 %v4071
    %4303 = vmatprep.subr.bf16.mxu0 %v4076
    %4304 = vmatpush1.bf16.msra.mxu0 %v4075
    %4305 = vmatprep.subr.bf16.mxu0 %v4080
    %4306 = vmatpush1.bf16.msra.mxu0 %v4079
    %4307 = vmatprep.mubr.bf16.mxu0 %v2460
    %4308 = vmatmul.mubr.bf16.gmra.mrb[0].mxu0 %v2459
    %v4309 = vpop.f32.mrb[0].mxu0
    %v4310 = vadd.f32 %v3618, %v4309
    %v4311 = vpop.f32.mrb[0].mxu0
    %v4312 = vadd.f32 %v3622, %v4311
    %v4313 = vpop.f32.mrb[0].mxu0
    %v4314 = vadd.f32 %v3618, %v4313
    %v4315 = vpop.f32.mrb[0].mxu0
    %v4316 = vadd.f32 %v3622, %v4315
    %4317 = vmatprep.mubr.bf16.mxu0 %v2464
    %4318 = vmatmul.mubr.bf16.gmra.mrb[0].mxu0 %v2463
    %v4319 = vpop.f32.mrb[0].mxu0
    %v4320 = vadd.f32 %v3618, %v4319
    %v4321 = vpop.f32.mrb[0].mxu0
    %v4322 = vadd.f32 %v3622, %v4321
    %v4323 = vpop.f32.mrb[0].mxu0
    %v4324 = vadd.f32 %v3618, %v4323
    %v4325 = vpop.f32.mrb[0].mxu0
    %v4326 = vadd.f32 %v3622, %v4325
    %4327 = vdwg.mxu0
    %4328 = vmatprep.subr.bf16.mxu0 %v4084
    %4329 = vmatpush1.bf16.msra.mxu0 %v4083
    %4330 = vmatprep.subr.bf16.mxu0 %v4088
    %4331 = vmatpush1.bf16.msra.mxu0 %v4087
    %4332 = vmatprep.subr.bf16.mxu0 %v4092
    %4333 = vmatpush1.bf16.msra.mxu0 %v4091
    %4334 = vmatprep.subr.bf16.mxu0 %v4096
    %4335 = vmatpush1.bf16.msra.mxu0 %v4095
    %4336 = vmatprep.subr.bf16.mxu0 %v4100
    %4337 = vmatpush1.bf16.msra.mxu0 %v4099
    %4338 = vmatprep.subr.bf16.mxu0 %v4104
    %4339 = vmatpush1.bf16.msra.mxu0 %v4103
    %4340 = vmatprep.subr.bf16.mxu0 %v4108
    %4341 = vmatpush1.bf16.msra.mxu0 %v4107
    %4342 = vmatprep.subr.bf16.mxu0 %v4112
    %4343 = vmatpush1.bf16.msra.mxu0 %v4111
    %4344 = vmatprep.subr.bf16.mxu0 %v4116
    %4345 = vmatpush1.bf16.msra.mxu0 %v4115
    %4346 = vmatprep.subr.bf16.mxu0 %v4120
    %4347 = vmatpush1.bf16.msra.mxu0 %v4119
    %4348 = vmatprep.subr.bf16.mxu0 %v4124
    %4349 = vmatpush1.bf16.msra.mxu0 %v4123
    %4350 = vmatprep.subr.bf16.mxu0 %v4128
    %4351 = vmatpush1.bf16.msra.mxu0 %v4127
    %4352 = vmatprep.subr.bf16.mxu0 %v4132
    %4353 = vmatpush1.bf16.msra.mxu0 %v4131
    %4354 = vmatprep.subr.bf16.mxu0 %v4136
    %4355 = vmatpush1.bf16.msra.mxu0 %v4135
    %4356 = vmatprep.subr.bf16.mxu0 %v4140
    %4357 = vmatpush1.bf16.msra.mxu0 %v4139
    %4358 = vmatprep.subr.bf16.mxu0 %v4144
    %4359 = vmatpush1.bf16.msra.mxu0 %v4143
    %4360 = vmatprep.mubr.bf16.mxu0 %v2462
    %4361 = vmatmul.mubr.bf16.gmra.mrb[0].mxu0 %v2461
    %v4362 = vpop.f32.mrb[0].mxu0
    %v4363 = vadd.f32 %v4310, %v4362
    %v4364 = vpop.f32.mrb[0].mxu0
    %v4365 = vadd.f32 %v4312, %v4364
    %v4366 = vpop.f32.mrb[0].mxu0
    %v4367 = vadd.f32 %v4314, %v4366
    %v4368 = vpop.f32.mrb[0].mxu0
    %v4369 = vadd.f32 %v4316, %v4368
    %4370 = vmatprep.mubr.bf16.mxu0 %v2466
    %4371 = vmatmul.mubr.bf16.gmra.mrb[0].mxu0 %v2465
    %v4372 = vpop.f32.mrb[0].mxu0
    %v4373 = vadd.f32 %v4320, %v4372
    %v4374 = vpop.f32.mrb[0].mxu0
    %v4375 = vadd.f32 %v4322, %v4374
    %v4376 = vpop.f32.mrb[0].mxu0
    %v4377 = vadd.f32 %v4324, %v4376
    %v4378 = vpop.f32.mrb[0].mxu0
    %v4379 = vadd.f32 %v4326, %v4378
    %4380 = vdwg.mxu0
    %4381 = vmatprep.subr.bf16.mxu0 %v4022
    %4382 = vmatpush1.bf16.msra.mxu0 %v4021
    %4383 = vmatprep.subr.bf16.mxu0 %v4026
    %4384 = vmatpush1.bf16.msra.mxu0 %v4025
    %4385 = vmatprep.subr.bf16.mxu0 %v4030
    %4386 = vmatpush1.bf16.msra.mxu0 %v4029
    %4387 = vmatprep.subr.bf16.mxu0 %v4034
    %4388 = vmatpush1.bf16.msra.mxu0 %v4033
    %4389 = vmatprep.subr.bf16.mxu0 %v4038
    %4390 = vmatpush1.bf16.msra.mxu0 %v4037
    %4391 = vmatprep.subr.bf16.mxu0 %v4042
    %4392 = vmatpush1.bf16.msra.mxu0 %v4041
    %4393 = vmatprep.subr.bf16.mxu0 %v4046
    %4394 = vmatpush1.bf16.msra.mxu0 %v4045
    %4395 = vmatprep.subr.bf16.mxu0 %v4050
    %4396 = vmatpush1.bf16.msra.mxu0 %v4049
    %4397 = vmatprep.subr.bf16.mxu0 %v4054
    %4398 = vmatpush1.bf16.msra.mxu0 %v4053
    %4399 = vmatprep.subr.bf16.mxu0 %v4058
    %4400 = vmatpush1.bf16.msra.mxu0 %v4057
    %4401 = vmatprep.subr.bf16.mxu0 %v4062
    %4402 = vmatpush1.bf16.msra.mxu0 %v4061
    %4403 = vmatprep.subr.bf16.mxu0 %v4066
    %4404 = vmatpush1.bf16.msra.mxu0 %v4065
    %4405 = vmatprep.subr.bf16.mxu0 %v4070
    %4406 = vmatpush1.bf16.msra.mxu0 %v4069
    %4407 = vmatprep.subr.bf16.mxu0 %v4074
    %4408 = vmatpush1.bf16.msra.mxu0 %v4073
    %4409 = vmatprep.subr.bf16.mxu0 %v4078
    %4410 = vmatpush1.bf16.msra.mxu0 %v4077
    %4411 = vmatprep.subr.bf16.mxu0 %v4082
    %4412 = vmatpush1.bf16.msra.mxu0 %v4081
    %4413 = vmatprep.mubr.bf16.mxu0 %v2460
    %4414 = vmatmul.mubr.bf16.gmra.mrb[0].mxu0 %v2459
    %v4415 = vpop.f32.mrb[0].mxu0
    %v4416 = vadd.f32 %v3626, %v4415
    %v4417 = vpop.f32.mrb[0].mxu0
    %v4418 = vadd.f32 %v3630, %v4417
    %v4419 = vpop.f32.mrb[0].mxu0
    %v4420 = vadd.f32 %v3626, %v4419
    %v4421 = vpop.f32.mrb[0].mxu0
    %v4422 = vadd.f32 %v3630, %v4421
    %4423 = vmatprep.mubr.bf16.mxu0 %v2464
    %4424 = vmatmul.mubr.bf16.gmra.mrb[0].mxu0 %v2463
    %v4425 = vpop.f32.mrb[0].mxu0
    %v4426 = vadd.f32 %v3626, %v4425
    %v4427 = vpop.f32.mrb[0].mxu0
    %v4428 = vadd.f32 %v3630, %v4427
    %v4429 = vpop.f32.mrb[0].mxu0
    %v4430 = vadd.f32 %v3626, %v4429
    %v4431 = vpop.f32.mrb[0].mxu0
    %v4432 = vadd.f32 %v3630, %v4431
    %4433 = vdwg.mxu0
    %4434 = vmatprep.subr.bf16.mxu0 %v4086
    %4435 = vmatpush1.bf16.msra.mxu0 %v4085
    %4436 = vmatprep.subr.bf16.mxu0 %v4090
    %4437 = vmatpush1.bf16.msra.mxu0 %v4089
    %4438 = vmatprep.subr.bf16.mxu0 %v4094
    %4439 = vmatpush1.bf16.msra.mxu0 %v4093
    %4440 = vmatprep.subr.bf16.mxu0 %v4098
    %4441 = vmatpush1.bf16.msra.mxu0 %v4097
    %4442 = vmatprep.subr.bf16.mxu0 %v4102
    %4443 = vmatpush1.bf16.msra.mxu0 %v4101
    %4444 = vmatprep.subr.bf16.mxu0 %v4106
    %4445 = vmatpush1.bf16.msra.mxu0 %v4105
    %4446 = vmatprep.subr.bf16.mxu0 %v4110
    %4447 = vmatpush1.bf16.msra.mxu0 %v4109
    %4448 = vmatprep.subr.bf16.mxu0 %v4114
    %4449 = vmatpush1.bf16.msra.mxu0 %v4113
    %4450 = vmatprep.subr.bf16.mxu0 %v4118
    %4451 = vmatpush1.bf16.msra.mxu0 %v4117
    %4452 = vmatprep.subr.bf16.mxu0 %v4122
    %4453 = vmatpush1.bf16.msra.mxu0 %v4121
    %4454 = vmatprep.subr.bf16.mxu0 %v4126
    %4455 = vmatpush1.bf16.msra.mxu0 %v4125
    %4456 = vmatprep.subr.bf16.mxu0 %v4130
    %4457 = vmatpush1.bf16.msra.mxu0 %v4129
    %4458 = vmatprep.subr.bf16.mxu0 %v4134
    %4459 = vmatpush1.bf16.msra.mxu0 %v4133
    %4460 = vmatprep.subr.bf16.mxu0 %v4138
    %4461 = vmatpush1.bf16.msra.mxu0 %v4137
    %4462 = vmatprep.subr.bf16.mxu0 %v4142
    %4463 = vmatpush1.bf16.msra.mxu0 %v4141
    %4464 = vmatprep.subr.bf16.mxu0 %v4146
    %4465 = vmatpush1.bf16.msra.mxu0 %v4145
    %4466 = vmatprep.mubr.bf16.mxu0 %v2462
    %4467 = vmatmul.mubr.bf16.gmra.mrb[0].mxu0 %v2461
    %v4468 = vpop.f32.mrb[0].mxu0
    %v4469 = vadd.f32 %v4416, %v4468
    %v4470 = vpop.f32.mrb[0].mxu0
    %v4471 = vadd.f32 %v4418, %v4470
    %v4472 = vpop.f32.mrb[0].mxu0
    %v4473 = vadd.f32 %v4420, %v4472
    %v4474 = vpop.f32.mrb[0].mxu0
    %v4475 = vadd.f32 %v4422, %v4474
    %4476 = vmatprep.mubr.bf16.mxu0 %v2466
    %4477 = vmatmul.mubr.bf16.gmra.mrb[0].mxu0 %v2465
    %v4478 = vpop.f32.mrb[0].mxu0
    %v4479 = vadd.f32 %v4426, %v4478
    %v4480 = vpop.f32.mrb[0].mxu0
    %v4481 = vadd.f32 %v4428, %v4480
    %v4482 = vpop.f32.mrb[0].mxu0
    %v4483 = vadd.f32 %v4430, %v4482
    %v4484 = vpop.f32.mrb[0].mxu0
    %v4485 = vadd.f32 %v4432, %v4484
    %4486 = vdwg.mxu0
    %v4487 = vmax.f32 %v4363, 0.0
    %v4488 = vmax.f32 %v4365, 0.0
    %v4489 = vmax.f32 %v4469, 0.0
    %v4490 = vmax.f32 %v4471, 0.0
    %v4491 = vmax.f32 %v4367, 0.0
    %v4492 = vmax.f32 %v4369, 0.0
    %v4493 = vmax.f32 %v4473, 0.0
    %v4494 = vmax.f32 %v4475, 0.0
    %v4495 = vmax.f32 %v4373, 0.0
    %v4496 = vmax.f32 %v4375, 0.0
    %v4497 = vmax.f32 %v4479, 0.0
    %v4498 = vmax.f32 %v4481, 0.0
    %v4499 = vmax.f32 %v4377, 0.0
    %v4500 = vmax.f32 %v4379, 0.0
    %v4501 = vmax.f32 %v4483, 0.0
    %v4502 = vmax.f32 %v4485, 0.0
    %v4503 = vadd.f32 %v3469, %v4487
    %v4504 = vadd.f32 %v3470, %v4488
    %v4505 = vadd.f32 %v3471, %v4489
    %v4506 = vadd.f32 %v3472, %v4490
    %v4507 = vadd.f32 %v3473, %v4491
    %v4508 = vadd.f32 %v3474, %v4492
    %v4509 = vadd.f32 %v3475, %v4493
    %v4510 = vadd.f32 %v3476, %v4494
    %v4511 = vadd.f32 %v3477, %v4495
    %v4512 = vadd.f32 %v3478, %v4496
    %v4513 = vadd.f32 %v3479, %v4497
    %v4514 = vadd.f32 %v3480, %v4498
    %v4515 = vadd.f32 %v3481, %v4499
    %v4516 = vadd.f32 %v3482, %v4500
    %v4517 = vadd.f32 %v3483, %v4501
    %v4518 = vadd.f32 %v3484, %v4502
    %v4519 = vpack.c.bf16 %v4507, %v4503
    %v4520 = vpack.c.bf16 %v4508, %v4504
    %v4521 = vpack.c.bf16 %v4509, %v4505
    %v4522 = vpack.c.bf16 %v4510, %v4506
    %v4523 = vpack.c.bf16 %v4515, %v4511
    %v4524 = vpack.c.bf16 %v4516, %v4512
    %v4525 = vpack.c.bf16 %v4517, %v4513
    %v4526 = vpack.c.bf16 %v4518, %v4514
    %v4527 = vld [vmem:[#allocation11] sm:$0xff]
    %v4528 = vld [vmem:[#allocation11 + $0x8] sm:$0xff]
    %v4529 = vld [vmem:[#allocation11 + $0x10] sm:$0xff]
    %v4530 = vld [vmem:[#allocation11 + $0x18] sm:$0xff]
    %v4531 = vld [vmem:[#allocation11 + $0x20] sm:$0xff]
    %v4532 = vld [vmem:[#allocation11 + $0x28] sm:$0xff]
    %v4533 = vld [vmem:[#allocation11 + $0x30] sm:$0xff]
    %v4534 = vld [vmem:[#allocation11 + $0x38] sm:$0xff]
    %v4535 = vld [vmem:[#allocation11 + $0x40] sm:$0xff]
    %v4536 = vld [vmem:[#allocation11 + $0x48] sm:$0xff]
    %v4537 = vld [vmem:[#allocation11 + $0x50] sm:$0xff]
    %v4538 = vld [vmem:[#allocation11 + $0x58] sm:$0xff]
    %v4539 = vld [vmem:[#allocation11 + $0x60] sm:$0xff]
    %v4540 = vld [vmem:[#allocation11 + $0x68] sm:$0xff]
    %v4541 = vld [vmem:[#allocation11 + $0x70] sm:$0xff]
    %v4542 = vld [vmem:[#allocation11 + $0x78] sm:$0xff]
    %v4543 = vld [vmem:[#allocation11 + $0x80] sm:$0xff]
    %v4544 = vld [vmem:[#allocation11 + $0x88] sm:$0xff]
    %v4545 = vld [vmem:[#allocation11 + $0x90] sm:$0xff]
    %v4546 = vld [vmem:[#allocation11 + $0x98] sm:$0xff]
    %v4547 = vld [vmem:[#allocation11 + $0xa0] sm:$0xff]
    %v4548 = vld [vmem:[#allocation11 + $0xa8] sm:$0xff]
    %v4549 = vld [vmem:[#allocation11 + $0xb0] sm:$0xff]
    %v4550 = vld [vmem:[#allocation11 + $0xb8] sm:$0xff]
    %v4551 = vld [vmem:[#allocation11 + $0xc0] sm:$0xff]
    %v4552 = vld [vmem:[#allocation11 + $0xc8] sm:$0xff]
    %v4553 = vld [vmem:[#allocation11 + $0xd0] sm:$0xff]
    %v4554 = vld [vmem:[#allocation11 + $0xd8] sm:$0xff]
    %v4555 = vld [vmem:[#allocation11 + $0xe0] sm:$0xff]
    %v4556 = vld [vmem:[#allocation11 + $0xe8] sm:$0xff]
    %v4557 = vld [vmem:[#allocation11 + $0xf0] sm:$0xff]
    %v4558 = vld [vmem:[#allocation11 + $0xf8] sm:$0xff]
    %v4559 = vld [vmem:[#allocation11 + $0x100] sm:$0xff]
    %v4560 = vld [vmem:[#allocation11 + $0x108] sm:$0xff]
    %v4561 = vld [vmem:[#allocation11 + $0x110] sm:$0xff]
    %v4562 = vld [vmem:[#allocation11 + $0x118] sm:$0xff]
    %v4563 = vld [vmem:[#allocation11 + $0x120] sm:$0xff]
    %v4564 = vld [vmem:[#allocation11 + $0x128] sm:$0xff]
    %v4565 = vld [vmem:[#allocation11 + $0x130] sm:$0xff]
    %v4566 = vld [vmem:[#allocation11 + $0x138] sm:$0xff]
    %v4567 = vld [vmem:[#allocation11 + $0x140] sm:$0xff]
    %v4568 = vld [vmem:[#allocation11 + $0x148] sm:$0xff]
    %v4569 = vld [vmem:[#allocation11 + $0x150] sm:$0xff]
    %v4570 = vld [vmem:[#allocation11 + $0x158] sm:$0xff]
    %v4571 = vld [vmem:[#allocation11 + $0x160] sm:$0xff]
    %v4572 = vld [vmem:[#allocation11 + $0x168] sm:$0xff]
    %v4573 = vld [vmem:[#allocation11 + $0x170] sm:$0xff]
    %v4574 = vld [vmem:[#allocation11 + $0x178] sm:$0xff]
    %v4575 = vld [vmem:[#allocation11 + $0x180] sm:$0xff]
    %v4576 = vld [vmem:[#allocation11 + $0x188] sm:$0xff]
    %v4577 = vld [vmem:[#allocation11 + $0x190] sm:$0xff]
    %v4578 = vld [vmem:[#allocation11 + $0x198] sm:$0xff]
    %v4579 = vld [vmem:[#allocation11 + $0x1a0] sm:$0xff]
    %v4580 = vld [vmem:[#allocation11 + $0x1a8] sm:$0xff]
    %v4581 = vld [vmem:[#allocation11 + $0x1b0] sm:$0xff]
    %v4582 = vld [vmem:[#allocation11 + $0x1b8] sm:$0xff]
    %v4583 = vld [vmem:[#allocation11 + $0x1c0] sm:$0xff]
    %v4584 = vld [vmem:[#allocation11 + $0x1c8] sm:$0xff]
    %v4585 = vld [vmem:[#allocation11 + $0x1d0] sm:$0xff]
    %v4586 = vld [vmem:[#allocation11 + $0x1d8] sm:$0xff]
    %v4587 = vld [vmem:[#allocation11 + $0x1e0] sm:$0xff]
    %v4588 = vld [vmem:[#allocation11 + $0x1e8] sm:$0xff]
    %v4589 = vld [vmem:[#allocation11 + $0x1f0] sm:$0xff]
    %v4590 = vld [vmem:[#allocation11 + $0x1f8] sm:$0xff]
    %v4591 = vld [vmem:[#allocation11 + $0x200] sm:$0xff]
    %v4592 = vld [vmem:[#allocation11 + $0x208] sm:$0xff]
    %v4593 = vld [vmem:[#allocation11 + $0x210] sm:$0xff]
    %v4594 = vld [vmem:[#allocation11 + $0x218] sm:$0xff]
    %v4595 = vld [vmem:[#allocation11 + $0x220] sm:$0xff]
    %v4596 = vld [vmem:[#allocation11 + $0x228] sm:$0xff]
    %v4597 = vld [vmem:[#allocation11 + $0x230] sm:$0xff]
    %v4598 = vld [vmem:[#allocation11 + $0x238] sm:$0xff]
    %v4599 = vld [vmem:[#allocation11 + $0x240] sm:$0xff]
    %v4600 = vld [vmem:[#allocation11 + $0x248] sm:$0xff]
    %v4601 = vld [vmem:[#allocation11 + $0x250] sm:$0xff]
    %v4602 = vld [vmem:[#allocation11 + $0x258] sm:$0xff]
    %v4603 = vld [vmem:[#allocation11 + $0x260] sm:$0xff]
    %v4604 = vld [vmem:[#allocation11 + $0x268] sm:$0xff]
    %v4605 = vld [vmem:[#allocation11 + $0x270] sm:$0xff]
    %v4606 = vld [vmem:[#allocation11 + $0x278] sm:$0xff]
    %v4607 = vld [vmem:[#allocation11 + $0x280] sm:$0xff]
    %v4608 = vld [vmem:[#allocation11 + $0x288] sm:$0xff]
    %v4609 = vld [vmem:[#allocation11 + $0x290] sm:$0xff]
    %v4610 = vld [vmem:[#allocation11 + $0x298] sm:$0xff]
    %v4611 = vld [vmem:[#allocation11 + $0x2a0] sm:$0xff]
    %v4612 = vld [vmem:[#allocation11 + $0x2a8] sm:$0xff]
    %v4613 = vld [vmem:[#allocation11 + $0x2b0] sm:$0xff]
    %v4614 = vld [vmem:[#allocation11 + $0x2b8] sm:$0xff]
    %v4615 = vld [vmem:[#allocation11 + $0x2c0] sm:$0xff]
    %v4616 = vld [vmem:[#allocation11 + $0x2c8] sm:$0xff]
    %v4617 = vld [vmem:[#allocation11 + $0x2d0] sm:$0xff]
    %v4618 = vld [vmem:[#allocation11 + $0x2d8] sm:$0xff]
    %v4619 = vld [vmem:[#allocation11 + $0x2e0] sm:$0xff]
    %v4620 = vld [vmem:[#allocation11 + $0x2e8] sm:$0xff]
    %v4621 = vld [vmem:[#allocation11 + $0x2f0] sm:$0xff]
    %v4622 = vld [vmem:[#allocation11 + $0x2f8] sm:$0xff]
    %v4623 = vld [vmem:[#allocation11 + $0x300] sm:$0xff]
    %v4624 = vld [vmem:[#allocation11 + $0x308] sm:$0xff]
    %v4625 = vld [vmem:[#allocation11 + $0x310] sm:$0xff]
    %v4626 = vld [vmem:[#allocation11 + $0x318] sm:$0xff]
    %v4627 = vld [vmem:[#allocation11 + $0x320] sm:$0xff]
    %v4628 = vld [vmem:[#allocation11 + $0x328] sm:$0xff]
    %v4629 = vld [vmem:[#allocation11 + $0x330] sm:$0xff]
    %v4630 = vld [vmem:[#allocation11 + $0x338] sm:$0xff]
    %v4631 = vld [vmem:[#allocation11 + $0x340] sm:$0xff]
    %v4632 = vld [vmem:[#allocation11 + $0x348] sm:$0xff]
    %v4633 = vld [vmem:[#allocation11 + $0x350] sm:$0xff]
    %v4634 = vld [vmem:[#allocation11 + $0x358] sm:$0xff]
    %v4635 = vld [vmem:[#allocation11 + $0x360] sm:$0xff]
    %v4636 = vld [vmem:[#allocation11 + $0x368] sm:$0xff]
    %v4637 = vld [vmem:[#allocation11 + $0x370] sm:$0xff]
    %v4638 = vld [vmem:[#allocation11 + $0x378] sm:$0xff]
    %v4639 = vld [vmem:[#allocation11 + $0x380] sm:$0xff]
    %v4640 = vld [vmem:[#allocation11 + $0x388] sm:$0xff]
    %v4641 = vld [vmem:[#allocation11 + $0x390] sm:$0xff]
    %v4642 = vld [vmem:[#allocation11 + $0x398] sm:$0xff]
    %v4643 = vld [vmem:[#allocation11 + $0x3a0] sm:$0xff]
    %v4644 = vld [vmem:[#allocation11 + $0x3a8] sm:$0xff]
    %v4645 = vld [vmem:[#allocation11 + $0x3b0] sm:$0xff]
    %v4646 = vld [vmem:[#allocation11 + $0x3b8] sm:$0xff]
    %v4647 = vld [vmem:[#allocation11 + $0x3c0] sm:$0xff]
    %v4648 = vld [vmem:[#allocation11 + $0x3c8] sm:$0xff]
    %v4649 = vld [vmem:[#allocation11 + $0x3d0] sm:$0xff]
    %v4650 = vld [vmem:[#allocation11 + $0x3d8] sm:$0xff]
    %v4651 = vld [vmem:[#allocation11 + $0x3e0] sm:$0xff]
    %v4652 = vld [vmem:[#allocation11 + $0x3e8] sm:$0xff]
    %v4653 = vld [vmem:[#allocation11 + $0x3f0] sm:$0xff]
    %v4654 = vld [vmem:[#allocation11 + $0x3f8] sm:$0xff]
    %v4655 = vld [vmem:[%s8] sm:$0xf]
    %v4657 = vlaneseq
    %v4658 = vshrl.u32 %v4657, 7
    %v4659 = vsub.s32 0, %v4658
    %v4660 = vrot.slane %v4655, %v4659
    %v4661 = vlaneseq
    %v4662 = vshrl.u32 %v4661, 7
    %v4663 = vsub.s32 1, %v4662
    %v4664 = vrot.slane %v4655, %v4663
    %v4665 = vlaneseq
    %v4666 = vshrl.u32 %v4665, 7
    %v4667 = vsub.s32 2, %v4666
    %v4668 = vrot.slane %v4655, %v4667
    %v4669 = vlaneseq
    %v4670 = vshrl.u32 %v4669, 7
    %v4671 = vsub.s32 3, %v4670
    %v4672 = vrot.slane %v4655, %v4671
    %v4805 = vunpack.c.l.b16 %v4527
    %v4806 = vunpack.c.h.b16 %v4527
    %v4807 = vunpack.c.l.b16 %v4528
    %v4808 = vunpack.c.h.b16 %v4528
    %v4809 = vunpack.c.l.b16 %v4529
    %v4810 = vunpack.c.h.b16 %v4529
    %v4811 = vunpack.c.l.b16 %v4530
    %v4812 = vunpack.c.h.b16 %v4530
    %v4813 = vunpack.c.l.b16 %v4531
    %v4814 = vunpack.c.h.b16 %v4531
    %v4815 = vunpack.c.l.b16 %v4532
    %v4816 = vunpack.c.h.b16 %v4532
    %v4817 = vunpack.c.l.b16 %v4533
    %v4818 = vunpack.c.h.b16 %v4533
    %v4819 = vunpack.c.l.b16 %v4534
    %v4820 = vunpack.c.h.b16 %v4534
    %v4821 = vunpack.c.l.b16 %v4535
    %v4822 = vunpack.c.h.b16 %v4535
    %v4823 = vunpack.c.l.b16 %v4536
    %v4824 = vunpack.c.h.b16 %v4536
    %v4825 = vunpack.c.l.b16 %v4537
    %v4826 = vunpack.c.h.b16 %v4537
    %v4827 = vunpack.c.l.b16 %v4538
    %v4828 = vunpack.c.h.b16 %v4538
    %v4829 = vunpack.c.l.b16 %v4539
    %v4830 = vunpack.c.h.b16 %v4539
    %v4831 = vunpack.c.l.b16 %v4540
    %v4832 = vunpack.c.h.b16 %v4540
    %v4833 = vunpack.c.l.b16 %v4541
    %v4834 = vunpack.c.h.b16 %v4541
    %v4835 = vunpack.c.l.b16 %v4542
    %v4836 = vunpack.c.h.b16 %v4542
    %v4837 = vunpack.c.l.b16 %v4543
    %v4838 = vunpack.c.h.b16 %v4543
    %v4839 = vunpack.c.l.b16 %v4544
    %v4840 = vunpack.c.h.b16 %v4544
    %v4841 = vunpack.c.l.b16 %v4545
    %v4842 = vunpack.c.h.b16 %v4545
    %v4843 = vunpack.c.l.b16 %v4546
    %v4844 = vunpack.c.h.b16 %v4546
    %v4845 = vunpack.c.l.b16 %v4547
    %v4846 = vunpack.c.h.b16 %v4547
    %v4847 = vunpack.c.l.b16 %v4548
    %v4848 = vunpack.c.h.b16 %v4548
    %v4849 = vunpack.c.l.b16 %v4549
    %v4850 = vunpack.c.h.b16 %v4549
    %v4851 = vunpack.c.l.b16 %v4550
    %v4852 = vunpack.c.h.b16 %v4550
    %v4853 = vunpack.c.l.b16 %v4551
    %v4854 = vunpack.c.h.b16 %v4551
    %v4855 = vunpack.c.l.b16 %v4552
    %v4856 = vunpack.c.h.b16 %v4552
    %v4857 = vunpack.c.l.b16 %v4553
    %v4858 = vunpack.c.h.b16 %v4553
    %v4859 = vunpack.c.l.b16 %v4554
    %v4860 = vunpack.c.h.b16 %v4554
    %v4861 = vunpack.c.l.b16 %v4555
    %v4862 = vunpack.c.h.b16 %v4555
    %v4863 = vunpack.c.l.b16 %v4556
    %v4864 = vunpack.c.h.b16 %v4556
    %v4865 = vunpack.c.l.b16 %v4557
    %v4866 = vunpack.c.h.b16 %v4557
    %v4867 = vunpack.c.l.b16 %v4558
    %v4868 = vunpack.c.h.b16 %v4558
    %v4869 = vunpack.c.l.b16 %v4559
    %v4870 = vunpack.c.h.b16 %v4559
    %v4871 = vunpack.c.l.b16 %v4560
    %v4872 = vunpack.c.h.b16 %v4560
    %v4873 = vunpack.c.l.b16 %v4561
    %v4874 = vunpack.c.h.b16 %v4561
    %v4875 = vunpack.c.l.b16 %v4562
    %v4876 = vunpack.c.h.b16 %v4562
    %v4877 = vunpack.c.l.b16 %v4563
    %v4878 = vunpack.c.h.b16 %v4563
    %v4879 = vunpack.c.l.b16 %v4564
    %v4880 = vunpack.c.h.b16 %v4564
    %v4881 = vunpack.c.l.b16 %v4565
    %v4882 = vunpack.c.h.b16 %v4565
    %v4883 = vunpack.c.l.b16 %v4566
    %v4884 = vunpack.c.h.b16 %v4566
    %v4885 = vunpack.c.l.b16 %v4567
    %v4886 = vunpack.c.h.b16 %v4567
    %v4887 = vunpack.c.l.b16 %v4568
    %v4888 = vunpack.c.h.b16 %v4568
    %v4889 = vunpack.c.l.b16 %v4569
    %v4890 = vunpack.c.h.b16 %v4569
    %v4891 = vunpack.c.l.b16 %v4570
    %v4892 = vunpack.c.h.b16 %v4570
    %v4893 = vunpack.c.l.b16 %v4571
    %v4894 = vunpack.c.h.b16 %v4571
    %v4895 = vunpack.c.l.b16 %v4572
    %v4896 = vunpack.c.h.b16 %v4572
    %v4897 = vunpack.c.l.b16 %v4573
    %v4898 = vunpack.c.h.b16 %v4573
    %v4899 = vunpack.c.l.b16 %v4574
    %v4900 = vunpack.c.h.b16 %v4574
    %v4901 = vunpack.c.l.b16 %v4575
    %v4902 = vunpack.c.h.b16 %v4575
    %v4903 = vunpack.c.l.b16 %v4576
    %v4904 = vunpack.c.h.b16 %v4576
    %v4905 = vunpack.c.l.b16 %v4577
    %v4906 = vunpack.c.h.b16 %v4577
    %v4907 = vunpack.c.l.b16 %v4578
    %v4908 = vunpack.c.h.b16 %v4578
    %v4909 = vunpack.c.l.b16 %v4579
    %v4910 = vunpack.c.h.b16 %v4579
    %v4911 = vunpack.c.l.b16 %v4580
    %v4912 = vunpack.c.h.b16 %v4580
    %v4913 = vunpack.c.l.b16 %v4581
    %v4914 = vunpack.c.h.b16 %v4581
    %v4915 = vunpack.c.l.b16 %v4582
    %v4916 = vunpack.c.h.b16 %v4582
    %v4917 = vunpack.c.l.b16 %v4583
    %v4918 = vunpack.c.h.b16 %v4583
    %v4919 = vunpack.c.l.b16 %v4584
    %v4920 = vunpack.c.h.b16 %v4584
    %v4921 = vunpack.c.l.b16 %v4585
    %v4922 = vunpack.c.h.b16 %v4585
    %v4923 = vunpack.c.l.b16 %v4586
    %v4924 = vunpack.c.h.b16 %v4586
    %v4925 = vunpack.c.l.b16 %v4587
    %v4926 = vunpack.c.h.b16 %v4587
    %v4927 = vunpack.c.l.b16 %v4588
    %v4928 = vunpack.c.h.b16 %v4588
    %v4929 = vunpack.c.l.b16 %v4589
    %v4930 = vunpack.c.h.b16 %v4589
    %v4931 = vunpack.c.l.b16 %v4590
    %v4932 = vunpack.c.h.b16 %v4590
    %v4933 = vunpack.c.l.b16 %v4591
    %v4934 = vunpack.c.h.b16 %v4591
    %v4935 = vunpack.c.l.b16 %v4592
    %v4936 = vunpack.c.h.b16 %v4592
    %v4937 = vunpack.c.l.b16 %v4593
    %v4938 = vunpack.c.h.b16 %v4593
    %v4939 = vunpack.c.l.b16 %v4594
    %v4940 = vunpack.c.h.b16 %v4594
    %v4941 = vunpack.c.l.b16 %v4595
    %v4942 = vunpack.c.h.b16 %v4595
    %v4943 = vunpack.c.l.b16 %v4596
    %v4944 = vunpack.c.h.b16 %v4596
    %v4945 = vunpack.c.l.b16 %v4597
    %v4946 = vunpack.c.h.b16 %v4597
    %v4947 = vunpack.c.l.b16 %v4598
    %v4948 = vunpack.c.h.b16 %v4598
    %v4949 = vunpack.c.l.b16 %v4599
    %v4950 = vunpack.c.h.b16 %v4599
    %v4951 = vunpack.c.l.b16 %v4600
    %v4952 = vunpack.c.h.b16 %v4600
    %v4953 = vunpack.c.l.b16 %v4601
    %v4954 = vunpack.c.h.b16 %v4601
    %v4955 = vunpack.c.l.b16 %v4602
    %v4956 = vunpack.c.h.b16 %v4602
    %v4957 = vunpack.c.l.b16 %v4603
    %v4958 = vunpack.c.h.b16 %v4603
    %v4959 = vunpack.c.l.b16 %v4604
    %v4960 = vunpack.c.h.b16 %v4604
    %v4961 = vunpack.c.l.b16 %v4605
    %v4962 = vunpack.c.h.b16 %v4605
    %v4963 = vunpack.c.l.b16 %v4606
    %v4964 = vunpack.c.h.b16 %v4606
    %v4965 = vunpack.c.l.b16 %v4607
    %v4966 = vunpack.c.h.b16 %v4607
    %v4967 = vunpack.c.l.b16 %v4608
    %v4968 = vunpack.c.h.b16 %v4608
    %v4969 = vunpack.c.l.b16 %v4609
    %v4970 = vunpack.c.h.b16 %v4609
    %v4971 = vunpack.c.l.b16 %v4610
    %v4972 = vunpack.c.h.b16 %v4610
    %v4973 = vunpack.c.l.b16 %v4611
    %v4974 = vunpack.c.h.b16 %v4611
    %v4975 = vunpack.c.l.b16 %v4612
    %v4976 = vunpack.c.h.b16 %v4612
    %v4977 = vunpack.c.l.b16 %v4613
    %v4978 = vunpack.c.h.b16 %v4613
    %v4979 = vunpack.c.l.b16 %v4614
    %v4980 = vunpack.c.h.b16 %v4614
    %v4981 = vunpack.c.l.b16 %v4615
    %v4982 = vunpack.c.h.b16 %v4615
    %v4983 = vunpack.c.l.b16 %v4616
    %v4984 = vunpack.c.h.b16 %v4616
    %v4985 = vunpack.c.l.b16 %v4617
    %v4986 = vunpack.c.h.b16 %v4617
    %v4987 = vunpack.c.l.b16 %v4618
    %v4988 = vunpack.c.h.b16 %v4618
    %v4989 = vunpack.c.l.b16 %v4619
    %v4990 = vunpack.c.h.b16 %v4619
    %v4991 = vunpack.c.l.b16 %v4620
    %v4992 = vunpack.c.h.b16 %v4620
    %v4993 = vunpack.c.l.b16 %v4621
    %v4994 = vunpack.c.h.b16 %v4621
    %v4995 = vunpack.c.l.b16 %v4622
    %v4996 = vunpack.c.h.b16 %v4622
    %v4997 = vunpack.c.l.b16 %v4623
    %v4998 = vunpack.c.h.b16 %v4623
    %v4999 = vunpack.c.l.b16 %v4624
    %v5000 = vunpack.c.h.b16 %v4624
    %v5001 = vunpack.c.l.b16 %v4625
    %v5002 = vunpack.c.h.b16 %v4625
    %v5003 = vunpack.c.l.b16 %v4626
    %v5004 = vunpack.c.h.b16 %v4626
    %v5005 = vunpack.c.l.b16 %v4627
    %v5006 = vunpack.c.h.b16 %v4627
    %v5007 = vunpack.c.l.b16 %v4628
    %v5008 = vunpack.c.h.b16 %v4628
    %v5009 = vunpack.c.l.b16 %v4629
    %v5010 = vunpack.c.h.b16 %v4629
    %v5011 = vunpack.c.l.b16 %v4630
    %v5012 = vunpack.c.h.b16 %v4630
    %v5013 = vunpack.c.l.b16 %v4631
    %v5014 = vunpack.c.h.b16 %v4631
    %v5015 = vunpack.c.l.b16 %v4632
    %v5016 = vunpack.c.h.b16 %v4632
    %v5017 = vunpack.c.l.b16 %v4633
    %v5018 = vunpack.c.h.b16 %v4633
    %v5019 = vunpack.c.l.b16 %v4634
    %v5020 = vunpack.c.h.b16 %v4634
    %v5021 = vunpack.c.l.b16 %v4635
    %v5022 = vunpack.c.h.b16 %v4635
    %v5023 = vunpack.c.l.b16 %v4636
    %v5024 = vunpack.c.h.b16 %v4636
    %v5025 = vunpack.c.l.b16 %v4637
    %v5026 = vunpack.c.h.b16 %v4637
    %v5027 = vunpack.c.l.b16 %v4638
    %v5028 = vunpack.c.h.b16 %v4638
    %v5029 = vunpack.c.l.b16 %v4639
    %v5030 = vunpack.c.h.b16 %v4639
    %v5031 = vunpack.c.l.b16 %v4640
    %v5032 = vunpack.c.h.b16 %v4640
    %v5033 = vunpack.c.l.b16 %v4641
    %v5034 = vunpack.c.h.b16 %v4641
    %v5035 = vunpack.c.l.b16 %v4642
    %v5036 = vunpack.c.h.b16 %v4642
    %v5037 = vunpack.c.l.b16 %v4643
    %v5038 = vunpack.c.h.b16 %v4643
    %v5039 = vunpack.c.l.b16 %v4644
    %v5040 = vunpack.c.h.b16 %v4644
    %v5041 = vunpack.c.l.b16 %v4645
    %v5042 = vunpack.c.h.b16 %v4645
    %v5043 = vunpack.c.l.b16 %v4646
    %v5044 = vunpack.c.h.b16 %v4646
    %v5045 = vunpack.c.l.b16 %v4647
    %v5046 = vunpack.c.h.b16 %v4647
    %v5047 = vunpack.c.l.b16 %v4648
    %v5048 = vunpack.c.h.b16 %v4648
    %v5049 = vunpack.c.l.b16 %v4649
    %v5050 = vunpack.c.h.b16 %v4649
    %v5051 = vunpack.c.l.b16 %v4650
    %v5052 = vunpack.c.h.b16 %v4650
    %v5053 = vunpack.c.l.b16 %v4651
    %v5054 = vunpack.c.h.b16 %v4651
    %v5055 = vunpack.c.l.b16 %v4652
    %v5056 = vunpack.c.h.b16 %v4652
    %v5057 = vunpack.c.l.b16 %v4653
    %v5058 = vunpack.c.h.b16 %v4653
    %v5059 = vunpack.c.l.b16 %v4654
    %v5060 = vunpack.c.h.b16 %v4654
    %v5061 = vpack.c.b16 %v4809, %v4805
    %v5062 = vpack.c.b16 %v4810, %v4806
    %v5063 = vpack.c.b16 %v4811, %v4807
    %v5064 = vpack.c.b16 %v4812, %v4808
    %v5065 = vpack.c.b16 %v4817, %v4813
    %v5066 = vpack.c.b16 %v4818, %v4814
    %v5067 = vpack.c.b16 %v4819, %v4815
    %v5068 = vpack.c.b16 %v4820, %v4816
    %v5069 = vpack.c.b16 %v4825, %v4821
    %v5070 = vpack.c.b16 %v4826, %v4822
    %v5071 = vpack.c.b16 %v4827, %v4823
    %v5072 = vpack.c.b16 %v4828, %v4824
    %v5073 = vpack.c.b16 %v4833, %v4829
    %v5074 = vpack.c.b16 %v4834, %v4830
    %v5075 = vpack.c.b16 %v4835, %v4831
    %v5076 = vpack.c.b16 %v4836, %v4832
    %v5077 = vpack.c.b16 %v4841, %v4837
    %v5078 = vpack.c.b16 %v4842, %v4838
    %v5079 = vpack.c.b16 %v4843, %v4839
    %v5080 = vpack.c.b16 %v4844, %v4840
    %v5081 = vpack.c.b16 %v4849, %v4845
    %v5082 = vpack.c.b16 %v4850, %v4846
    %v5083 = vpack.c.b16 %v4851, %v4847
    %v5084 = vpack.c.b16 %v4852, %v4848
    %v5085 = vpack.c.b16 %v4857, %v4853
    %v5086 = vpack.c.b16 %v4858, %v4854
    %v5087 = vpack.c.b16 %v4859, %v4855
    %v5088 = vpack.c.b16 %v4860, %v4856
    %v5089 = vpack.c.b16 %v4865, %v4861
    %v5090 = vpack.c.b16 %v4866, %v4862
    %v5091 = vpack.c.b16 %v4867, %v4863
    %v5092 = vpack.c.b16 %v4868, %v4864
    %v5093 = vpack.c.b16 %v4873, %v4869
    %v5094 = vpack.c.b16 %v4874, %v4870
    %v5095 = vpack.c.b16 %v4875, %v4871
    %v5096 = vpack.c.b16 %v4876, %v4872
    %v5097 = vpack.c.b16 %v4881, %v4877
    %v5098 = vpack.c.b16 %v4882, %v4878
    %v5099 = vpack.c.b16 %v4883, %v4879
    %v5100 = vpack.c.b16 %v4884, %v4880
    %v5101 = vpack.c.b16 %v4889, %v4885
    %v5102 = vpack.c.b16 %v4890, %v4886
    %v5103 = vpack.c.b16 %v4891, %v4887
    %v5104 = vpack.c.b16 %v4892, %v4888
    %v5105 = vpack.c.b16 %v4897, %v4893
    %v5106 = vpack.c.b16 %v4898, %v4894
    %v5107 = vpack.c.b16 %v4899, %v4895
    %v5108 = vpack.c.b16 %v4900, %v4896
    %v5109 = vpack.c.b16 %v4905, %v4901
    %v5110 = vpack.c.b16 %v4906, %v4902
    %v5111 = vpack.c.b16 %v4907, %v4903
    %v5112 = vpack.c.b16 %v4908, %v4904
    %v5113 = vpack.c.b16 %v4913, %v4909
    %v5114 = vpack.c.b16 %v4914, %v4910
    %v5115 = vpack.c.b16 %v4915, %v4911
    %v5116 = vpack.c.b16 %v4916, %v4912
    %v5117 = vpack.c.b16 %v4921, %v4917
    %v5118 = vpack.c.b16 %v4922, %v4918
    %v5119 = vpack.c.b16 %v4923, %v4919
    %v5120 = vpack.c.b16 %v4924, %v4920
    %v5121 = vpack.c.b16 %v4929, %v4925
    %v5122 = vpack.c.b16 %v4930, %v4926
    %v5123 = vpack.c.b16 %v4931, %v4927
    %v5124 = vpack.c.b16 %v4932, %v4928
    %v5125 = vpack.c.b16 %v4937, %v4933
    %v5126 = vpack.c.b16 %v4938, %v4934
    %v5127 = vpack.c.b16 %v4939, %v4935
    %v5128 = vpack.c.b16 %v4940, %v4936
    %v5129 = vpack.c.b16 %v4945, %v4941
    %v5130 = vpack.c.b16 %v4946, %v4942
    %v5131 = vpack.c.b16 %v4947, %v4943
    %v5132 = vpack.c.b16 %v4948, %v4944
    %v5133 = vpack.c.b16 %v4953, %v4949
    %v5134 = vpack.c.b16 %v4954, %v4950
    %v5135 = vpack.c.b16 %v4955, %v4951
    %v5136 = vpack.c.b16 %v4956, %v4952
    %v5137 = vpack.c.b16 %v4961, %v4957
    %v5138 = vpack.c.b16 %v4962, %v4958
    %v5139 = vpack.c.b16 %v4963, %v4959
    %v5140 = vpack.c.b16 %v4964, %v4960
    %v5141 = vpack.c.b16 %v4969, %v4965
    %v5142 = vpack.c.b16 %v4970, %v4966
    %v5143 = vpack.c.b16 %v4971, %v4967
    %v5144 = vpack.c.b16 %v4972, %v4968
    %v5145 = vpack.c.b16 %v4977, %v4973
    %v5146 = vpack.c.b16 %v4978, %v4974
    %v5147 = vpack.c.b16 %v4979, %v4975
    %v5148 = vpack.c.b16 %v4980, %v4976
    %v5149 = vpack.c.b16 %v4985, %v4981
    %v5150 = vpack.c.b16 %v4986, %v4982
    %v5151 = vpack.c.b16 %v4987, %v4983
    %v5152 = vpack.c.b16 %v4988, %v4984
    %v5153 = vpack.c.b16 %v4993, %v4989
    %v5154 = vpack.c.b16 %v4994, %v4990
    %v5155 = vpack.c.b16 %v4995, %v4991
    %v5156 = vpack.c.b16 %v4996, %v4992
    %v5157 = vpack.c.b16 %v5001, %v4997
    %v5158 = vpack.c.b16 %v5002, %v4998
    %v5159 = vpack.c.b16 %v5003, %v4999
    %v5160 = vpack.c.b16 %v5004, %v5000
    %v5161 = vpack.c.b16 %v5009, %v5005
    %v5162 = vpack.c.b16 %v5010, %v5006
    %v5163 = vpack.c.b16 %v5011, %v5007
    %v5164 = vpack.c.b16 %v5012, %v5008
    %v5165 = vpack.c.b16 %v5017, %v5013
    %v5166 = vpack.c.b16 %v5018, %v5014
    %v5167 = vpack.c.b16 %v5019, %v5015
    %v5168 = vpack.c.b16 %v5020, %v5016
    %v5169 = vpack.c.b16 %v5025, %v5021
    %v5170 = vpack.c.b16 %v5026, %v5022
    %v5171 = vpack.c.b16 %v5027, %v5023
    %v5172 = vpack.c.b16 %v5028, %v5024
    %v5173 = vpack.c.b16 %v5033, %v5029
    %v5174 = vpack.c.b16 %v5034, %v5030
    %v5175 = vpack.c.b16 %v5035, %v5031
    %v5176 = vpack.c.b16 %v5036, %v5032
    %v5177 = vpack.c.b16 %v5041, %v5037
    %v5178 = vpack.c.b16 %v5042, %v5038
    %v5179 = vpack.c.b16 %v5043, %v5039
    %v5180 = vpack.c.b16 %v5044, %v5040
    %v5181 = vpack.c.b16 %v5049, %v5045
    %v5182 = vpack.c.b16 %v5050, %v5046
    %v5183 = vpack.c.b16 %v5051, %v5047
    %v5184 = vpack.c.b16 %v5052, %v5048
    %v5185 = vpack.c.b16 %v5057, %v5053
    %v5186 = vpack.c.b16 %v5058, %v5054
    %v5187 = vpack.c.b16 %v5059, %v5055
    %v5188 = vpack.c.b16 %v5060, %v5056
    %5317 = vmatprep.subr.bf16.mxu0 %v5062
    %5318 = vmatpush1.bf16.msra.mxu0 %v5061
    %5319 = vmatprep.subr.bf16.mxu0 %v5066
    %5320 = vmatpush1.bf16.msra.mxu0 %v5065
    %5321 = vmatprep.subr.bf16.mxu0 %v5070
    %5322 = vmatpush1.bf16.msra.mxu0 %v5069
    %5323 = vmatprep.subr.bf16.mxu0 %v5074
    %5324 = vmatpush1.bf16.msra.mxu0 %v5073
    %5325 = vmatprep.subr.bf16.mxu0 %v5078
    %5326 = vmatpush1.bf16.msra.mxu0 %v5077
    %5327 = vmatprep.subr.bf16.mxu0 %v5082
    %5328 = vmatpush1.bf16.msra.mxu0 %v5081
    %5329 = vmatprep.subr.bf16.mxu0 %v5086
    %5330 = vmatpush1.bf16.msra.mxu0 %v5085
    %5331 = vmatprep.subr.bf16.mxu0 %v5090
    %5332 = vmatpush1.bf16.msra.mxu0 %v5089
    %5333 = vmatprep.subr.bf16.mxu0 %v5094
    %5334 = vmatpush1.bf16.msra.mxu0 %v5093
    %5335 = vmatprep.subr.bf16.mxu0 %v5098
    %5336 = vmatpush1.bf16.msra.mxu0 %v5097
    %5337 = vmatprep.subr.bf16.mxu0 %v5102
    %5338 = vmatpush1.bf16.msra.mxu0 %v5101
    %5339 = vmatprep.subr.bf16.mxu0 %v5106
    %5340 = vmatpush1.bf16.msra.mxu0 %v5105
    %5341 = vmatprep.subr.bf16.mxu0 %v5110
    %5342 = vmatpush1.bf16.msra.mxu0 %v5109
    %5343 = vmatprep.subr.bf16.mxu0 %v5114
    %5344 = vmatpush1.bf16.msra.mxu0 %v5113
    %5345 = vmatprep.subr.bf16.mxu0 %v5118
    %5346 = vmatpush1.bf16.msra.mxu0 %v5117
    %5347 = vmatprep.subr.bf16.mxu0 %v5122
    %5348 = vmatpush1.bf16.msra.mxu0 %v5121
    %5349 = vmatprep.mubr.bf16.mxu0 %v4520
    %5350 = vmatmul.mubr.bf16.gmra.mrb[0].mxu0 %v4519
    %v5351 = vpop.f32.mrb[0].mxu0
    %v5352 = vadd.f32 %v4660, %v5351
    %v5353 = vpop.f32.mrb[0].mxu0
    %v5354 = vadd.f32 %v4664, %v5353
    %v5355 = vpop.f32.mrb[0].mxu0
    %v5356 = vadd.f32 %v4660, %v5355
    %v5357 = vpop.f32.mrb[0].mxu0
    %v5358 = vadd.f32 %v4664, %v5357
    %5359 = vmatprep.mubr.bf16.mxu0 %v4524
    %5360 = vmatmul.mubr.bf16.gmra.mrb[0].mxu0 %v4523
    %v5361 = vpop.f32.mrb[0].mxu0
    %v5362 = vadd.f32 %v4660, %v5361
    %v5363 = vpop.f32.mrb[0].mxu0
    %v5364 = vadd.f32 %v4664, %v5363
    %v5365 = vpop.f32.mrb[0].mxu0
    %v5366 = vadd.f32 %v4660, %v5365
    %v5367 = vpop.f32.mrb[0].mxu0
    %v5368 = vadd.f32 %v4664, %v5367
    %5369 = vdwg.mxu0
    %5370 = vmatprep.subr.bf16.mxu0 %v5126
    %5371 = vmatpush1.bf16.msra.mxu0 %v5125
    %5372 = vmatprep.subr.bf16.mxu0 %v5130
    %5373 = vmatpush1.bf16.msra.mxu0 %v5129
    %5374 = vmatprep.subr.bf16.mxu0 %v5134
    %5375 = vmatpush1.bf16.msra.mxu0 %v5133
    %5376 = vmatprep.subr.bf16.mxu0 %v5138
    %5377 = vmatpush1.bf16.msra.mxu0 %v5137
    %5378 = vmatprep.subr.bf16.mxu0 %v5142
    %5379 = vmatpush1.bf16.msra.mxu0 %v5141
    %5380 = vmatprep.subr.bf16.mxu0 %v5146
    %5381 = vmatpush1.bf16.msra.mxu0 %v5145
    %5382 = vmatprep.subr.bf16.mxu0 %v5150
    %5383 = vmatpush1.bf16.msra.mxu0 %v5149
    %5384 = vmatprep.subr.bf16.mxu0 %v5154
    %5385 = vmatpush1.bf16.msra.mxu0 %v5153
    %5386 = vmatprep.subr.bf16.mxu0 %v5158
    %5387 = vmatpush1.bf16.msra.mxu0 %v5157
    %5388 = vmatprep.subr.bf16.mxu0 %v5162
    %5389 = vmatpush1.bf16.msra.mxu0 %v5161
    %5390 = vmatprep.subr.bf16.mxu0 %v5166
    %5391 = vmatpush1.bf16.msra.mxu0 %v5165
    %5392 = vmatprep.subr.bf16.mxu0 %v5170
    %5393 = vmatpush1.bf16.msra.mxu0 %v5169
    %5394 = vmatprep.subr.bf16.mxu0 %v5174
    %5395 = vmatpush1.bf16.msra.mxu0 %v5173
    %5396 = vmatprep.subr.bf16.mxu0 %v5178
    %5397 = vmatpush1.bf16.msra.mxu0 %v5177
    %5398 = vmatprep.subr.bf16.mxu0 %v5182
    %5399 = vmatpush1.bf16.msra.mxu0 %v5181
    %5400 = vmatprep.subr.bf16.mxu0 %v5186
    %5401 = vmatpush1.bf16.msra.mxu0 %v5185
    %5402 = vmatprep.mubr.bf16.mxu0 %v4522
    %5403 = vmatmul.mubr.bf16.gmra.mrb[0].mxu0 %v4521
    %v5404 = vpop.f32.mrb[0].mxu0
    %v5405 = vadd.f32 %v5352, %v5404
    %v5406 = vpop.f32.mrb[0].mxu0
    %v5407 = vadd.f32 %v5354, %v5406
    %v5408 = vpop.f32.mrb[0].mxu0
    %v5409 = vadd.f32 %v5356, %v5408
    %v5410 = vpop.f32.mrb[0].mxu0
    %v5411 = vadd.f32 %v5358, %v5410
    %5412 = vmatprep.mubr.bf16.mxu0 %v4526
    %5413 = vmatmul.mubr.bf16.gmra.mrb[0].mxu0 %v4525
    %v5414 = vpop.f32.mrb[0].mxu0
    %v5415 = vadd.f32 %v5362, %v5414
    %v5416 = vpop.f32.mrb[0].mxu0
    %v5417 = vadd.f32 %v5364, %v5416
    %v5418 = vpop.f32.mrb[0].mxu0
    %v5419 = vadd.f32 %v5366, %v5418
    %v5420 = vpop.f32.mrb[0].mxu0
    %v5421 = vadd.f32 %v5368, %v5420
    %5422 = vdwg.mxu0
    %5423 = vmatprep.subr.bf16.mxu0 %v5064
    %5424 = vmatpush1.bf16.msra.mxu0 %v5063
    %5425 = vmatprep.subr.bf16.mxu0 %v5068
    %5426 = vmatpush1.bf16.msra.mxu0 %v5067
    %5427 = vmatprep.subr.bf16.mxu0 %v5072
    %5428 = vmatpush1.bf16.msra.mxu0 %v5071
    %5429 = vmatprep.subr.bf16.mxu0 %v5076
    %5430 = vmatpush1.bf16.msra.mxu0 %v5075
    %5431 = vmatprep.subr.bf16.mxu0 %v5080
    %5432 = vmatpush1.bf16.msra.mxu0 %v5079
    %5433 = vmatprep.subr.bf16.mxu0 %v5084
    %5434 = vmatpush1.bf16.msra.mxu0 %v5083
    %5435 = vmatprep.subr.bf16.mxu0 %v5088
    %5436 = vmatpush1.bf16.msra.mxu0 %v5087
    %5437 = vmatprep.subr.bf16.mxu0 %v5092
    %5438 = vmatpush1.bf16.msra.mxu0 %v5091
    %5439 = vmatprep.subr.bf16.mxu0 %v5096
    %5440 = vmatpush1.bf16.msra.mxu0 %v5095
    %5441 = vmatprep.subr.bf16.mxu0 %v5100
    %5442 = vmatpush1.bf16.msra.mxu0 %v5099
    %5443 = vmatprep.subr.bf16.mxu0 %v5104
    %5444 = vmatpush1.bf16.msra.mxu0 %v5103
    %5445 = vmatprep.subr.bf16.mxu0 %v5108
    %5446 = vmatpush1.bf16.msra.mxu0 %v5107
    %5447 = vmatprep.subr.bf16.mxu0 %v5112
    %5448 = vmatpush1.bf16.msra.mxu0 %v5111
    %5449 = vmatprep.subr.bf16.mxu0 %v5116
    %5450 = vmatpush1.bf16.msra.mxu0 %v5115
    %5451 = vmatprep.subr.bf16.mxu0 %v5120
    %5452 = vmatpush1.bf16.msra.mxu0 %v5119
    %5453 = vmatprep.subr.bf16.mxu0 %v5124
    %5454 = vmatpush1.bf16.msra.mxu0 %v5123
    %5455 = vmatprep.mubr.bf16.mxu0 %v4520
    %5456 = vmatmul.mubr.bf16.gmra.mrb[0].mxu0 %v4519
    %v5457 = vpop.f32.mrb[0].mxu0
    %v5458 = vadd.f32 %v4668, %v5457
    %v5459 = vpop.f32.mrb[0].mxu0
    %v5460 = vadd.f32 %v4672, %v5459
    %v5461 = vpop.f32.mrb[0].mxu0
    %v5462 = vadd.f32 %v4668, %v5461
    %v5463 = vpop.f32.mrb[0].mxu0
    %v5464 = vadd.f32 %v4672, %v5463
    %5465 = vmatprep.mubr.bf16.mxu0 %v4524
    %5466 = vmatmul.mubr.bf16.gmra.mrb[0].mxu0 %v4523
    %v5467 = vpop.f32.mrb[0].mxu0
    %v5468 = vadd.f32 %v4668, %v5467
    %v5469 = vpop.f32.mrb[0].mxu0
    %v5470 = vadd.f32 %v4672, %v5469
    %v5471 = vpop.f32.mrb[0].mxu0
    %v5472 = vadd.f32 %v4668, %v5471
    %v5473 = vpop.f32.mrb[0].mxu0
    %v5474 = vadd.f32 %v4672, %v5473
    %5475 = vdwg.mxu0
    %5476 = vmatprep.subr.bf16.mxu0 %v5128
    %5477 = vmatpush1.bf16.msra.mxu0 %v5127
    %5478 = vmatprep.subr.bf16.mxu0 %v5132
    %5479 = vmatpush1.bf16.msra.mxu0 %v5131
    %5480 = vmatprep.subr.bf16.mxu0 %v5136
    %5481 = vmatpush1.bf16.msra.mxu0 %v5135
    %5482 = vmatprep.subr.bf16.mxu0 %v5140
    %5483 = vmatpush1.bf16.msra.mxu0 %v5139
    %5484 = vmatprep.subr.bf16.mxu0 %v5144
    %5485 = vmatpush1.bf16.msra.mxu0 %v5143
    %5486 = vmatprep.subr.bf16.mxu0 %v5148
    %5487 = vmatpush1.bf16.msra.mxu0 %v5147
    %5488 = vmatprep.subr.bf16.mxu0 %v5152
    %5489 = vmatpush1.bf16.msra.mxu0 %v5151
    %5490 = vmatprep.subr.bf16.mxu0 %v5156
    %5491 = vmatpush1.bf16.msra.mxu0 %v5155
    %5492 = vmatprep.subr.bf16.mxu0 %v5160
    %5493 = vmatpush1.bf16.msra.mxu0 %v5159
    %5494 = vmatprep.subr.bf16.mxu0 %v5164
    %5495 = vmatpush1.bf16.msra.mxu0 %v5163
    %5496 = vmatprep.subr.bf16.mxu0 %v5168
    %5497 = vmatpush1.bf16.msra.mxu0 %v5167
    %5498 = vmatprep.subr.bf16.mxu0 %v5172
    %5499 = vmatpush1.bf16.msra.mxu0 %v5171
    %5500 = vmatprep.subr.bf16.mxu0 %v5176
    %5501 = vmatpush1.bf16.msra.mxu0 %v5175
    %5502 = vmatprep.subr.bf16.mxu0 %v5180
    %5503 = vmatpush1.bf16.msra.mxu0 %v5179
    %5504 = vmatprep.subr.bf16.mxu0 %v5184
    %5505 = vmatpush1.bf16.msra.mxu0 %v5183
    %5506 = vmatprep.subr.bf16.mxu0 %v5188
    %5507 = vmatpush1.bf16.msra.mxu0 %v5187
    %5508 = vmatprep.mubr.bf16.mxu0 %v4522
    %5509 = vmatmul.mubr.bf16.gmra.mrb[0].mxu0 %v4521
    %v5510 = vpop.f32.mrb[0].mxu0
    %v5511 = vadd.f32 %v5458, %v5510
    %v5512 = vpop.f32.mrb[0].mxu0
    %v5513 = vadd.f32 %v5460, %v5512
    %v5514 = vpop.f32.mrb[0].mxu0
    %v5515 = vadd.f32 %v5462, %v5514
    %v5516 = vpop.f32.mrb[0].mxu0
    %v5517 = vadd.f32 %v5464, %v5516
    %5518 = vmatprep.mubr.bf16.mxu0 %v4526
    %5519 = vmatmul.mubr.bf16.gmra.mrb[0].mxu0 %v4525
    %v5520 = vpop.f32.mrb[0].mxu0
    %v5521 = vadd.f32 %v5468, %v5520
    %v5522 = vpop.f32.mrb[0].mxu0
    %v5523 = vadd.f32 %v5470, %v5522
    %v5524 = vpop.f32.mrb[0].mxu0
    %v5525 = vadd.f32 %v5472, %v5524
    %v5526 = vpop.f32.mrb[0].mxu0
    %v5527 = vadd.f32 %v5474, %v5526
    %5528 = vdwg.mxu0
    %v5529 = vmax.f32 %v5405, 0.0
    %v5530 = vmax.f32 %v5407, 0.0
    %v5531 = vmax.f32 %v5511, 0.0
    %v5532 = vmax.f32 %v5513, 0.0
    %v5533 = vmax.f32 %v5409, 0.0
    %v5534 = vmax.f32 %v5411, 0.0
    %v5535 = vmax.f32 %v5515, 0.0
    %v5536 = vmax.f32 %v5517, 0.0
    %v5537 = vmax.f32 %v5415, 0.0
    %v5538 = vmax.f32 %v5417, 0.0
    %v5539 = vmax.f32 %v5521, 0.0
    %v5540 = vmax.f32 %v5523, 0.0
    %v5541 = vmax.f32 %v5419, 0.0
    %v5542 = vmax.f32 %v5421, 0.0
    %v5543 = vmax.f32 %v5525, 0.0
    %v5544 = vmax.f32 %v5527, 0.0
    %v5545 = vpack.c.bf16 %v5533, %v5529
    %v5546 = vpack.c.bf16 %v5534, %v5530
    %v5547 = vpack.c.bf16 %v5535, %v5531
    %v5548 = vpack.c.bf16 %v5536, %v5532
    %v5549 = vpack.c.bf16 %v5541, %v5537
    %v5550 = vpack.c.bf16 %v5542, %v5538
    %v5551 = vpack.c.bf16 %v5543, %v5539
    %v5552 = vpack.c.bf16 %v5544, %v5540
    %v5561 = vunpack.c.l.b16 %v5545
    %v5562 = vunpack.c.l.b16 %v5546
    %v5563 = vunpack.c.l.b16 %v5547
    %v5564 = vunpack.c.l.b16 %v5548
    %v5565 = vunpack.c.h.b16 %v5545
    %v5566 = vunpack.c.h.b16 %v5546
    %v5567 = vunpack.c.h.b16 %v5547
    %v5568 = vunpack.c.h.b16 %v5548
    %v5569 = vunpack.c.l.b16 %v5549
    %v5570 = vunpack.c.l.b16 %v5550
    %v5571 = vunpack.c.l.b16 %v5551
    %v5572 = vunpack.c.l.b16 %v5552
    %v5573 = vunpack.c.h.b16 %v5549
    %v5574 = vunpack.c.h.b16 %v5550
    %v5575 = vunpack.c.h.b16 %v5551
    %v5576 = vunpack.c.h.b16 %v5552
    %v5577 = vpack.c.b16 %v5562, %v5561
    %v5578 = vpack.c.b16 %v5564, %v5563
    %v5579 = vpack.c.b16 %v5566, %v5565
    %v5580 = vpack.c.b16 %v5568, %v5567
    %v5581 = vpack.c.b16 %v5570, %v5569
    %v5582 = vpack.c.b16 %v5572, %v5571
    %v5583 = vpack.c.b16 %v5574, %v5573
    %v5584 = vpack.c.b16 %v5576, %v5575
    %5593 = vst [vmem:[#allocation13] sm:$0xff] %v5577
    %5594 = vst [vmem:[#allocation13 + $0x8] sm:$0xff] %v5578
    %5595 = vst [vmem:[#allocation13 + $0x10] sm:$0xff] %v5579
    %5596 = vst [vmem:[#allocation13 + $0x18] sm:$0xff] %v5580
    %5597 = vst [vmem:[#allocation13 + $0x20] sm:$0xff] %v5581
    %5598 = vst [vmem:[#allocation13 + $0x28] sm:$0xff] %v5582
    %5599 = vst [vmem:[#allocation13 + $0x30] sm:$0xff] %v5583
    %5600 = vst [vmem:[#allocation13 + $0x38] sm:$0xff] %v5584
    // Predicated region
    $region62: #{tpu_custom_call.1} parent=1 // pred_check
      _
    $region63: #{tpu_custom_call.1} parent=1 // pred_check_branch
      %5602 = sbr.rel (0) target = $region65
    $region64: #{tpu_custom_call.1} parent=1 // pred_region
      %s5604 = ssub.s32 1024, 1024
      %5605 = vsyncadd [#allocation4], %s5604
      %s5606 = sshll.u32 [#allocation13], 4
      %s5607 = int_to_ptr.vmem [resolvable:$true] %s5606
      %5612 = dma.vmem_to_hbm [thread:$0]  %s5607, 1024, %s9, [#allocation4], 256, 256, 16
    $region65: #{tpu_custom_call.1} parent=1 // pred_fallthru
      _
    // Predicated region
    $region66: #{tpu_custom_call.1} parent=1 // pred_check
      _
    $region67: #{tpu_custom_call.1} parent=1 // pred_check_branch
      %5614 = sbr.rel (0) target = $region69
    $region68: #{tpu_custom_call.1} parent=1 // pred_region
      %5615 = dma.done [#allocation4], 1024
    $region69: #{tpu_custom_call.1} parent=1 // pred_fallthru
      _
    %5616 = vsyncpa [#allocation3], 1
    %5617 = vsyncpa [#allocation6], 1
    %5618 = vsyncpa [#allocation9], 1
    %5619 = vsyncpa [#allocation12], 1
    %5620 = vsyncpa [#allocation4], 1

// kernel: tpu_custom_call.1
$region0: #{tpu_custom_call.1}
  #allocation0 [shape = 'u32[]', space=smem, size = 0x4, offset = 0x4, fixed_abs, tag = 'smem constant byte address 0x4 - core index']
  #allocation1 [shape = 'u32[144,128]{1,0:T(1,128)}', space=vmem, size = 0x12000, scoped, tag = 'internal scratch']
  %s0 = inlined_call_operand.hbm [shape: bf16[2,16,64], index: 0, kind: input, shape index: {}]
  %s1 = inlined_call_operand.hbm [shape: bf16[5,64,1024], index: 1, kind: input, shape index: {}]
  %s2 = inlined_call_operand.hbm [shape: f32[1,1024], index: 2, kind: input, shape index: {}]
  %s3 = inlined_call_operand.hbm [shape: bf16[512,512], index: 3, kind: input, shape index: {}]
  %s4 = inlined_call_operand.vmem [shape: f32[1,512], index: 4, kind: input, shape index: {}]
  %s5 = inlined_call_operand.hbm [shape: bf16[512,512], index: 5, kind: input, shape index: {}]
  %s6 = inlined_call_operand.vmem [shape: f32[1,512], index: 6, kind: input, shape index: {}]
  %s7 = inlined_call_operand.hbm [shape: bf16[512,512], index: 7, kind: input, shape index: {}]
  %s8 = inlined_call_operand.vmem [shape: f32[1,512], index: 8, kind: input, shape index: {}]
  %s9 = inlined_call_operand.hbm [shape: bf16[2,16,512], index: 9, kind: output, shape index: {}]
  %s10 = sld [smem:[#allocation0]]
  $region70: #{tpu_custom_call.1} parent=0
    _
  %s12 = ssub.s32 1, %s10
  %s13 = scalar_select 0, %s12, %s10
  $region1: #{tpu_custom_call.1} parent=0
    #allocation2 [shape = 'u8[8192]{0}', space=vmem, size = 0x2000, scoped, tag = 'input window, operand 0, single buffered']
    #allocation3 [shape = 's32[1]{0}', space=sflag, size = 0x4, scoped, tag = 'scoped memory for tpu_custom_call.1']
    #allocation4 [shape = 's32[1]{0}', space=sflag, size = 0x4, scoped, tag = 'scoped memory for tpu_custom_call.1']
    #allocation5 [shape = 'u8[655360]{0}', space=vmem, size = 0xa0000, scoped, tag = 'input window, operand 1, single buffered']
    #allocation6 [shape = 's32[1]{0}', space=sflag, size = 0x4, scoped, tag = 'scoped memory for tpu_custom_call.1']
    #allocation7 [shape = 'u8[4096]{0}', space=vmem, size = 0x1000, scoped, tag = 'input window, operand 2, single buffered']
    #allocation8 [shape = 'u8[524288]{0}', space=vmem, size = 0x80000, scoped, tag = 'input window, operand 3, single buffered']
    #allocation9 [shape = 's32[1]{0}', space=sflag, size = 0x4, scoped, tag = 'scoped memory for tpu_custom_call.1']
    #allocation10 [shape = 'u8[524288]{0}', space=vmem, size = 0x80000, scoped, tag = 'input window, operand 5, single buffered']
    #allocation11 [shape = 'u8[524288]{0}', space=vmem, size = 0x80000, scoped, tag = 'input window, operand 7, single buffered']
    #allocation12 [shape = 's32[1]{0}', space=sflag, size = 0x4, scoped, tag = 'scoped memory for tpu_custom_call.1']
    #allocation13 [shape = 'u8[32768]{0}', space=vmem, size = 0x8000, scoped, tag = 'output window, operand 0, single buffered']
    %14 = vsyncpa [#allocation3], 0
    %15 = vsyncpa [#allocation6], 0
    %16 = vsyncpa [#allocation9], 0
    %17 = vsyncpa [#allocation12], 0
    %18 = vsyncpa [#allocation4], 0
    // Predicated region
    $region2: #{tpu_custom_call.1} parent=1 // pred_check
      _
    $region3: #{tpu_custom_call.1} parent=1 // pred_check_branch
      %20 = sbr.rel (0) target = $region5
    $region4: #{tpu_custom_call.1} parent=1 // pred_region
      %s22 = ssub.s32 256, 256
      %23 = vsyncadd [#allocation3], %s22
      %s24 = sshll.u32 [#allocation2], 4
      %s25 = int_to_ptr.vmem [resolvable:$true] %s24
      %30 = dma.hbm_to_vmem [thread:$0]  %s0, 256, %s25, [#allocation3], 64, 64, 4
    $region5: #{tpu_custom_call.1} parent=1 // pred_fallthru
      _
    // Predicated region
    $region6: #{tpu_custom_call.1} parent=1 // pred_check
      _
    $region7: #{tpu_custom_call.1} parent=1 // pred_check_branch
      %32 = sbr.rel (0) target = $region9
    $region8: #{tpu_custom_call.1} parent=1 // pred_region
      %s34 = ssub.s32 20480, 20480
      %35 = vsyncadd [#allocation6], %s34
      %s36 = sshll.u32 [#allocation5], 4
      %s37 = int_to_ptr.vmem [resolvable:$true] %s36
      %42 = dma.hbm_to_vmem [thread:$0]  %s1, 20480, %s37, [#allocation6], 512, 512, 32
    $region9: #{tpu_custom_call.1} parent=1 // pred_fallthru
      _
    // Predicated region
    $region10: #{tpu_custom_call.1} parent=1 // pred_check
      _
    $region11: #{tpu_custom_call.1} parent=1 // pred_check_branch
      %44 = sbr.rel (0) target = $region13
    $region12: #{tpu_custom_call.1} parent=1 // pred_region
      %s46 = ssub.s32 128, 128
      %47 = vsyncadd [#allocation6], %s46
      %s49 = sshll.u32 [#allocation7], 4
      %s50 = int_to_ptr.vmem [resolvable:$true] %s49
      %52 = dma.hbm_to_vmem [thread:$0]  %s2, 128, %s50, [#allocation6]
    $region13: #{tpu_custom_call.1} parent=1 // pred_fallthru
      _
    // Predicated region
    $region14: #{tpu_custom_call.1} parent=1 // pred_check
      _
    $region15: #{tpu_custom_call.1} parent=1 // pred_check_branch
      %54 = sbr.rel (0) target = $region17
    $region16: #{tpu_custom_call.1} parent=1 // pred_region
      %s56 = ssub.s32 16384, 16384
      %57 = vsyncadd [#allocation9], %s56
      %s58 = sshll.u32 [#allocation8], 4
      %s59 = int_to_ptr.vmem [resolvable:$true] %s58
      %64 = dma.hbm_to_vmem [thread:$0]  %s3, 16384, %s59, [#allocation9], 256, 256, 16
    $region17: #{tpu_custom_call.1} parent=1 // pred_fallthru
      _
    // Predicated region
    $region18: #{tpu_custom_call.1} parent=1 // pred_check
      _
    $region19: #{tpu_custom_call.1} parent=1 // pred_check_branch
      %66 = sbr.rel (0) target = $region21
    $region20: #{tpu_custom_call.1} parent=1 // pred_region
      _
    $region21: #{tpu_custom_call.1} parent=1 // pred_fallthru
      _
    // Predicated region
    $region22: #{tpu_custom_call.1} parent=1 // pred_check
      _
    $region23: #{tpu_custom_call.1} parent=1 // pred_check_branch
      %68 = sbr.rel (0) target = $region25
    $region24: #{tpu_custom_call.1} parent=1 // pred_region
      %s70 = ssub.s32 16384, 16384
      %71 = vsyncadd [#allocation9], %s70
      %s72 = sshll.u32 [#allocation10], 4
      %s73 = int_to_ptr.vmem [resolvable:$true] %s72
      %78 = dma.hbm_to_vmem [thread:$0]  %s5, 16384, %s73, [#allocation9], 256, 256, 16
    $region25: #{tpu_custom_call.1} parent=1 // pred_fallthru
      _
    // Predicated region
    $region26: #{tpu_custom_call.1} parent=1 // pred_check
      _
    $region27: #{tpu_custom_call.1} parent=1 // pred_check_branch
      %80 = sbr.rel (0) target = $region29
    $region28: #{tpu_custom_call.1} parent=1 // pred_region
      _
    $region29: #{tpu_custom_call.1} parent=1 // pred_fallthru
      _
    // Predicated region
    $region30: #{tpu_custom_call.1} parent=1 // pred_check
      _
    $region31: #{tpu_custom_call.1} parent=1 // pred_check_branch
      %82 = sbr.rel (0) target = $region33
    $region32: #{tpu_custom_call.1} parent=1 // pred_region
      %s84 = ssub.s32 16384, 16384
      %85 = vsyncadd [#allocation12], %s84
      %s86 = sshll.u32 [#allocation11], 4
      %s87 = int_to_ptr.vmem [resolvable:$true] %s86
      %92 = dma.hbm_to_vmem [thread:$0]  %s7, 16384, %s87, [#allocation12], 256, 256, 16
    $region33: #{tpu_custom_call.1} parent=1 // pred_fallthru
      _
    // Predicated region
    $region34: #{tpu_custom_call.1} parent=1 // pred_check
      _
    $region35: #{tpu_custom_call.1} parent=1 // pred_check_branch
      %94 = sbr.rel (0) target = $region37
    $region36: #{tpu_custom_call.1} parent=1 // pred_region
      _
    $region37: #{tpu_custom_call.1} parent=1 // pred_fallthru
      _
    // Predicated region
    $region38: #{tpu_custom_call.1} parent=1 // pred_check
      _
    $region39: #{tpu_custom_call.1} parent=1 // pred_check_branch
      %96 = sbr.rel (0) target = $region41
    $region40: #{tpu_custom_call.1} parent=1 // pred_region
      %97 = dma.done [#allocation3], 256
    $region41: #{tpu_custom_call.1} parent=1 // pred_fallthru
      _
    // Predicated region
    $region42: #{tpu_custom_call.1} parent=1 // pred_check
      _
    $region43: #{tpu_custom_call.1} parent=1 // pred_check_branch
      %99 = sbr.rel (0) target = $region45
    $region44: #{tpu_custom_call.1} parent=1 // pred_region
      %100 = dma.done [#allocation6], 20480
    $region45: #{tpu_custom_call.1} parent=1 // pred_fallthru
      _
    // Predicated region
    $region46: #{tpu_custom_call.1} parent=1 // pred_check
      _
    $region47: #{tpu_custom_call.1} parent=1 // pred_check_branch
      %102 = sbr.rel (0) target = $region49
    $region48: #{tpu_custom_call.1} parent=1 // pred_region
      %103 = dma.done [#allocation6], 128
    $region49: #{tpu_custom_call.1} parent=1 // pred_fallthru
      _
    // Predicated region
    $region50: #{tpu_custom_call.1} parent=1 // pred_check
      _
    $region51: #{tpu_custom_call.1} parent=1 // pred_check_branch
      %105 = sbr.rel (0) target = $region53
    $region52: #{tpu_custom_call.1} parent=1 // pred_region
      %106 = dma.done [#allocation9], 16384
    $region53: #{tpu_custom_call.1} parent=1 // pred_fallthru
      _
    // Predicated region
    $region54: #{tpu_custom_call.1} parent=1 // pred_check
      _
    $region55: #{tpu_custom_call.1} parent=1 // pred_check_branch
      %108 = sbr.rel (0) target = $region57
    $region56: #{tpu_custom_call.1} parent=1 // pred_region
      %109 = dma.done [#allocation9], 16384
    $region57: #{tpu_custom_call.1} parent=1 // pred_fallthru
      _
    // Predicated region
    $region58: #{tpu_custom_call.1} parent=1 // pred_check
      _
    $region59: #{tpu_custom_call.1} parent=1 // pred_check_branch
      %111 = sbr.rel (0) target = $region61
    $region60: #{tpu_custom_call.1} parent=1 // pred_region
      %112 = dma.done [#allocation12], 16384
    $region61: #{tpu_custom_call.1} parent=1 // pred_fallthru
      _
    %v114 = vld [vmem:[#allocation2] sm:$0xf]
    %v115 = vld [vmem:[#allocation2 + $0x4] sm:$0xf]
    %v116 = vld [vmem:[#allocation2 + $0x8] sm:$0xf]
    %v117 = vld [vmem:[#allocation2 + $0xc] sm:$0xf]
    %v122 = vunpack.c.l.b16 %v114
    %v123 = vunpack.c.l.b16 %v115
    %v124 = vunpack.c.l.b16 %v116
    %v125 = vunpack.c.l.b16 %v117
    %v126 = vpack.c.b16 %v123, %v122
    %v127 = vpack.c.b16 %v125, %v124
    %v128 = vrot.slane %v126, 7
    %v129 = vrot.slane %v127, 7
    %vm130 = vcmask 1040384
    %v133 = vsel %vm130, 0, %v128
    %v135 = vsel %vm130, 0, %v129
    %v136 = vsel %vm130, %v128, 0
    %v137 = vsel %vm130, %v129, 0
    %v138 = vld [vmem:[#allocation5] sm:$0xff]
    %v139 = vld [vmem:[#allocation5 + $0x8] sm:$0xff]
    %v140 = vld [vmem:[#allocation5 + $0x10] sm:$0xff]
    %v141 = vld [vmem:[#allocation5 + $0x18] sm:$0xff]
    %v142 = vld [vmem:[#allocation5 + $0x20] sm:$0xff]
    %v143 = vld [vmem:[#allocation5 + $0x28] sm:$0xff]
    %v144 = vld [vmem:[#allocation5 + $0x30] sm:$0xff]
    %v145 = vld [vmem:[#allocation5 + $0x38] sm:$0xff]
    %v146 = vld [vmem:[#allocation5 + $0x40] sm:$0xff]
    %v147 = vld [vmem:[#allocation5 + $0x48] sm:$0xff]
    %v148 = vld [vmem:[#allocation5 + $0x50] sm:$0xff]
    %v149 = vld [vmem:[#allocation5 + $0x58] sm:$0xff]
    %v150 = vld [vmem:[#allocation5 + $0x60] sm:$0xff]
    %v151 = vld [vmem:[#allocation5 + $0x68] sm:$0xff]
    %v152 = vld [vmem:[#allocation5 + $0x70] sm:$0xff]
    %v153 = vld [vmem:[#allocation5 + $0x78] sm:$0xff]
    %v154 = vld [vmem:[#allocation5 + $0x80] sm:$0xff]
    %v155 = vld [vmem:[#allocation5 + $0x88] sm:$0xff]
    %v156 = vld [vmem:[#allocation5 + $0x90] sm:$0xff]
    %v157 = vld [vmem:[#allocation5 + $0x98] sm:$0xff]
    %v158 = vld [vmem:[#allocation5 + $0xa0] sm:$0xff]
    %v159 = vld [vmem:[#allocation5 + $0xa8] sm:$0xff]
    %v160 = vld [vmem:[#allocation5 + $0xb0] sm:$0xff]
    %v161 = vld [vmem:[#allocation5 + $0xb8] sm:$0xff]
    %v162 = vld [vmem:[#allocation5 + $0xc0] sm:$0xff]
    %v163 = vld [vmem:[#allocation5 + $0xc8] sm:$0xff]
    %v164 = vld [vmem:[#allocation5 + $0xd0] sm:$0xff]
    %v165 = vld [vmem:[#allocation5 + $0xd8] sm:$0xff]
    %v166 = vld [vmem:[#allocation5 + $0xe0] sm:$0xff]
    %v167 = vld [vmem:[#allocation5 + $0xe8] sm:$0xff]
    %v168 = vld [vmem:[#allocation5 + $0xf0] sm:$0xff]
    %v169 = vld [vmem:[#allocation5 + $0xf8] sm:$0xff]
    %vm170 = vsmask.f32 7424
    %v171 = vshrl.u32 %v133, 16
    %v173 = vshll.u32 %v133, 16
    %v175 = vrot.slane %v173, 1
    %v176 = vor.u32 %v171, %v175
    %v177 = vshll.u32 %v136, 16
    %v179 = vrot.slane %v177, 1
    %v180 = vsel %vm170, %v176, %v179
    %v181 = vshrl.u32 %v135, 16
    %v183 = vshll.u32 %v135, 16
    %v185 = vrot.slane %v183, 1
    %v186 = vor.u32 %v181, %v185
    %v187 = vshll.u32 %v137, 16
    %v189 = vrot.slane %v187, 1
    %v190 = vsel %vm170, %v186, %v189
    %s191 = scalar_lea.vmem [#allocation5], 256
    %v192 = vld [vmem:[%s191] sm:$0xff]
    %v193 = vld [vmem:[%s191 + $0x8] sm:$0xff]
    %v194 = vld [vmem:[%s191 + $0x10] sm:$0xff]
    %v195 = vld [vmem:[%s191 + $0x18] sm:$0xff]
    %v196 = vld [vmem:[%s191 + $0x20] sm:$0xff]
    %v197 = vld [vmem:[%s191 + $0x28] sm:$0xff]
    %v198 = vld [vmem:[%s191 + $0x30] sm:$0xff]
    %v199 = vld [vmem:[%s191 + $0x38] sm:$0xff]
    %v200 = vld [vmem:[%s191 + $0x40] sm:$0xff]
    %v201 = vld [vmem:[%s191 + $0x48] sm:$0xff]
    %v202 = vld [vmem:[%s191 + $0x50] sm:$0xff]
    %v203 = vld [vmem:[%s191 + $0x58] sm:$0xff]
    %v204 = vld [vmem:[%s191 + $0x60] sm:$0xff]
    %v205 = vld [vmem:[%s191 + $0x68] sm:$0xff]
    %v206 = vld [vmem:[%s191 + $0x70] sm:$0xff]
    %v207 = vld [vmem:[%s191 + $0x78] sm:$0xff]
    %v208 = vld [vmem:[%s191 + $0x80] sm:$0xff]
    %v209 = vld [vmem:[%s191 + $0x88] sm:$0xff]
    %v210 = vld [vmem:[%s191 + $0x90] sm:$0xff]
    %v211 = vld [vmem:[%s191 + $0x98] sm:$0xff]
    %v212 = vld [vmem:[%s191 + $0xa0] sm:$0xff]
    %v213 = vld [vmem:[%s191 + $0xa8] sm:$0xff]
    %v214 = vld [vmem:[%s191 + $0xb0] sm:$0xff]
    %v215 = vld [vmem:[%s191 + $0xb8] sm:$0xff]
    %v216 = vld [vmem:[%s191 + $0xc0] sm:$0xff]
    %v217 = vld [vmem:[%s191 + $0xc8] sm:$0xff]
    %v218 = vld [vmem:[%s191 + $0xd0] sm:$0xff]
    %v219 = vld [vmem:[%s191 + $0xd8] sm:$0xff]
    %v220 = vld [vmem:[%s191 + $0xe0] sm:$0xff]
    %v221 = vld [vmem:[%s191 + $0xe8] sm:$0xff]
    %v222 = vld [vmem:[%s191 + $0xf0] sm:$0xff]
    %v223 = vld [vmem:[%s191 + $0xf8] sm:$0xff]
    %v256 = vunpack.c.l.b16 %v192
    %v257 = vunpack.c.h.b16 %v192
    %v258 = vunpack.c.l.b16 %v193
    %v259 = vunpack.c.h.b16 %v193
    %v260 = vunpack.c.l.b16 %v194
    %v261 = vunpack.c.h.b16 %v194
    %v262 = vunpack.c.l.b16 %v195
    %v263 = vunpack.c.h.b16 %v195
    %v264 = vunpack.c.l.b16 %v196
    %v265 = vunpack.c.h.b16 %v196
    %v266 = vunpack.c.l.b16 %v197
    %v267 = vunpack.c.h.b16 %v197
    %v268 = vunpack.c.l.b16 %v198
    %v269 = vunpack.c.h.b16 %v198
    %v270 = vunpack.c.l.b16 %v199
    %v271 = vunpack.c.h.b16 %v199
    %v272 = vunpack.c.l.b16 %v200
    %v273 = vunpack.c.h.b16 %v200
    %v274 = vunpack.c.l.b16 %v201
    %v275 = vunpack.c.h.b16 %v201
    %v276 = vunpack.c.l.b16 %v202
    %v277 = vunpack.c.h.b16 %v202
    %v278 = vunpack.c.l.b16 %v203
    %v279 = vunpack.c.h.b16 %v203
    %v280 = vunpack.c.l.b16 %v204
    %v281 = vunpack.c.h.b16 %v204
    %v282 = vunpack.c.l.b16 %v205
    %v283 = vunpack.c.h.b16 %v205
    %v284 = vunpack.c.l.b16 %v206
    %v285 = vunpack.c.h.b16 %v206
    %v286 = vunpack.c.l.b16 %v207
    %v287 = vunpack.c.h.b16 %v207
    %v288 = vunpack.c.l.b16 %v208
    %v289 = vunpack.c.h.b16 %v208
    %v290 = vunpack.c.l.b16 %v209
    %v291 = vunpack.c.h.b16 %v209
    %v292 = vunpack.c.l.b16 %v210
    %v293 = vunpack.c.h.b16 %v210
    %v294 = vunpack.c.l.b16 %v211
    %v295 = vunpack.c.h.b16 %v211
    %v296 = vunpack.c.l.b16 %v212
    %v297 = vunpack.c.h.b16 %v212
    %v298 = vunpack.c.l.b16 %v213
    %v299 = vunpack.c.h.b16 %v213
    %v300 = vunpack.c.l.b16 %v214
    %v301 = vunpack.c.h.b16 %v214
    %v302 = vunpack.c.l.b16 %v215
    %v303 = vunpack.c.h.b16 %v215
    %v304 = vunpack.c.l.b16 %v216
    %v305 = vunpack.c.h.b16 %v216
    %v306 = vunpack.c.l.b16 %v217
    %v307 = vunpack.c.h.b16 %v217
    %v308 = vunpack.c.l.b16 %v218
    %v309 = vunpack.c.h.b16 %v218
    %v310 = vunpack.c.l.b16 %v219
    %v311 = vunpack.c.h.b16 %v219
    %v312 = vunpack.c.l.b16 %v220
    %v313 = vunpack.c.h.b16 %v220
    %v314 = vunpack.c.l.b16 %v221
    %v315 = vunpack.c.h.b16 %v221
    %v316 = vunpack.c.l.b16 %v222
    %v317 = vunpack.c.h.b16 %v222
    %v318 = vunpack.c.l.b16 %v223
    %v319 = vunpack.c.h.b16 %v223
    %v320 = vpack.c.b16 %v264, %v256
    %v321 = vpack.c.b16 %v265, %v257
    %v322 = vpack.c.b16 %v266, %v258
    %v323 = vpack.c.b16 %v267, %v259
    %v324 = vpack.c.b16 %v268, %v260
    %v325 = vpack.c.b16 %v269, %v261
    %v326 = vpack.c.b16 %v270, %v262
    %v327 = vpack.c.b16 %v271, %v263
    %v328 = vpack.c.b16 %v280, %v272
    %v329 = vpack.c.b16 %v281, %v273
    %v330 = vpack.c.b16 %v282, %v274
    %v331 = vpack.c.b16 %v283, %v275
    %v332 = vpack.c.b16 %v284, %v276
    %v333 = vpack.c.b16 %v285, %v277
    %v334 = vpack.c.b16 %v286, %v278
    %v335 = vpack.c.b16 %v287, %v279
    %v336 = vpack.c.b16 %v296, %v288
    %v337 = vpack.c.b16 %v297, %v289
    %v338 = vpack.c.b16 %v298, %v290
    %v339 = vpack.c.b16 %v299, %v291
    %v340 = vpack.c.b16 %v300, %v292
    %v341 = vpack.c.b16 %v301, %v293
    %v342 = vpack.c.b16 %v302, %v294
    %v343 = vpack.c.b16 %v303, %v295
    %v344 = vpack.c.b16 %v312, %v304
    %v345 = vpack.c.b16 %v313, %v305
    %v346 = vpack.c.b16 %v314, %v306
    %v347 = vpack.c.b16 %v315, %v307
    %v348 = vpack.c.b16 %v316, %v308
    %v349 = vpack.c.b16 %v317, %v309
    %v350 = vpack.c.b16 %v318, %v310
    %v351 = vpack.c.b16 %v319, %v311
    %vm384 = vcmask 523264
    %v386 = vsel %vm384, %v180, 0
    %v389 = vsel %vm384, %v190, 0
    %391 = vmatprep.subr.bf16.mxu0 %v321
    %392 = vmatpush1.bf16.msra.mxu0 %v320
    %393 = vmatprep.subr.bf16.mxu0 %v329
    %394 = vmatpush1.bf16.msra.mxu0 %v328
    %395 = vmatprep.subr.bf16.mxu0 %v337
    %396 = vmatpush1.bf16.msra.mxu0 %v336
    %397 = vmatprep.subr.bf16.mxu0 %v345
    %398 = vmatpush1.bf16.msra.mxu0 %v344
    %399 = vmatprep.subr.bf16.mxu0 0
    %400 = vmatpush1.bf16.msra.mxu0 0
    %401 = vmatprep.subr.bf16.mxu0 0
    %402 = vmatpush1.bf16.msra.mxu0 0
    %403 = vmatprep.subr.bf16.mxu0 0
    %404 = vmatpush1.bf16.msra.mxu0 0
    %405 = vmatprep.subr.bf16.mxu0 0
    %406 = vmatpush1.bf16.msra.mxu0 0
    %407 = vmatprep.subr.bf16.mxu0 0
    %408 = vmatpush1.bf16.msra.mxu0 0
    %409 = vmatprep.subr.bf16.mxu0 0
    %410 = vmatpush1.bf16.msra.mxu0 0
    %411 = vmatprep.subr.bf16.mxu0 0
    %412 = vmatpush1.bf16.msra.mxu0 0
    %413 = vmatprep.subr.bf16.mxu0 0
    %414 = vmatpush1.bf16.msra.mxu0 0
    %415 = vmatprep.subr.bf16.mxu0 0
    %416 = vmatpush1.bf16.msra.mxu0 0
    %417 = vmatprep.subr.bf16.mxu0 0
    %418 = vmatpush1.bf16.msra.mxu0 0
    %419 = vmatprep.subr.bf16.mxu0 0
    %420 = vmatpush1.bf16.msra.mxu0 0
    %421 = vmatprep.subr.bf16.mxu0 0
    %422 = vmatpush1.bf16.msra.mxu0 0
    %423 = vmatprep.mubr.bf16.mxu0 0
    %424 = vmatmul.mubr.bf16.gmra.mrb[0].mxu0 %v386
    %v425 = vpop.f32.mrb[0].mxu0
    %v426 = vadd.f32 0.0, %v425
    %v427 = vpop.f32.mrb[0].mxu0
    %v428 = vadd.f32 0.0, %v427
    %v429 = vpop.f32.mrb[0].mxu0
    %v430 = vadd.f32 0.0, %v429
    %v431 = vpop.f32.mrb[0].mxu0
    %v432 = vadd.f32 0.0, %v431
    %433 = vmatprep.mubr.bf16.mxu0 0
    %434 = vmatmul.mubr.bf16.gmra.mrb[0].mxu0 %v389
    %v435 = vpop.f32.mrb[0].mxu0
    %v436 = vadd.f32 0.0, %v435
    %v437 = vpop.f32.mrb[0].mxu0
    %v438 = vadd.f32 0.0, %v437
    %v439 = vpop.f32.mrb[0].mxu0
    %v440 = vadd.f32 0.0, %v439
    %v441 = vpop.f32.mrb[0].mxu0
    %v442 = vadd.f32 0.0, %v441
    %443 = vdwg.mxu0
    %444 = vmatprep.subr.bf16.mxu0 %v323
    %445 = vmatpush1.bf16.msra.mxu0 %v322
    %446 = vmatprep.subr.bf16.mxu0 %v331
    %447 = vmatpush1.bf16.msra.mxu0 %v330
    %448 = vmatprep.subr.bf16.mxu0 %v339
    %449 = vmatpush1.bf16.msra.mxu0 %v338
    %450 = vmatprep.subr.bf16.mxu0 %v347
    %451 = vmatpush1.bf16.msra.mxu0 %v346
    %452 = vmatprep.subr.bf16.mxu0 0
    %453 = vmatpush1.bf16.msra.mxu0 0
    %454 = vmatprep.subr.bf16.mxu0 0
    %455 = vmatpush1.bf16.msra.mxu0 0
    %456 = vmatprep.subr.bf16.mxu0 0
    %457 = vmatpush1.bf16.msra.mxu0 0
    %458 = vmatprep.subr.bf16.mxu0 0
    %459 = vmatpush1.bf16.msra.mxu0 0
    %460 = vmatprep.subr.bf16.mxu0 0
    %461 = vmatpush1.bf16.msra.mxu0 0
    %462 = vmatprep.subr.bf16.mxu0 0
    %463 = vmatpush1.bf16.msra.mxu0 0
    %464 = vmatprep.subr.bf16.mxu0 0
    %465 = vmatpush1.bf16.msra.mxu0 0
    %466 = vmatprep.subr.bf16.mxu0 0
    %467 = vmatpush1.bf16.msra.mxu0 0
    %468 = vmatprep.subr.bf16.mxu0 0
    %469 = vmatpush1.bf16.msra.mxu0 0
    %470 = vmatprep.subr.bf16.mxu0 0
    %471 = vmatpush1.bf16.msra.mxu0 0
    %472 = vmatprep.subr.bf16.mxu0 0
    %473 = vmatpush1.bf16.msra.mxu0 0
    %474 = vmatprep.subr.bf16.mxu0 0
    %475 = vmatpush1.bf16.msra.mxu0 0
    %476 = vmatprep.mubr.bf16.mxu0 0
    %477 = vmatmul.mubr.bf16.gmra.mrb[0].mxu0 %v386
    %v478 = vpop.f32.mrb[0].mxu0
    %v479 = vadd.f32 0.0, %v478
    %v480 = vpop.f32.mrb[0].mxu0
    %v481 = vadd.f32 0.0, %v480
    %v482 = vpop.f32.mrb[0].mxu0
    %v483 = vadd.f32 0.0, %v482
    %v484 = vpop.f32.mrb[0].mxu0
    %v485 = vadd.f32 0.0, %v484
    %486 = vmatprep.mubr.bf16.mxu0 0
    %487 = vmatmul.mubr.bf16.gmra.mrb[0].mxu0 %v389
    %v488 = vpop.f32.mrb[0].mxu0
    %v489 = vadd.f32 0.0, %v488
    %v490 = vpop.f32.mrb[0].mxu0
    %v491 = vadd.f32 0.0, %v490
    %v492 = vpop.f32.mrb[0].mxu0
    %v493 = vadd.f32 0.0, %v492
    %v494 = vpop.f32.mrb[0].mxu0
    %v495 = vadd.f32 0.0, %v494
    %496 = vdwg.mxu0
    %497 = vmatprep.subr.bf16.mxu0 %v325
    %498 = vmatpush1.bf16.msra.mxu0 %v324
    %499 = vmatprep.subr.bf16.mxu0 %v333
    %500 = vmatpush1.bf16.msra.mxu0 %v332
    %501 = vmatprep.subr.bf16.mxu0 %v341
    %502 = vmatpush1.bf16.msra.mxu0 %v340
    %503 = vmatprep.subr.bf16.mxu0 %v349
    %504 = vmatpush1.bf16.msra.mxu0 %v348
    %505 = vmatprep.subr.bf16.mxu0 0
    %506 = vmatpush1.bf16.msra.mxu0 0
    %507 = vmatprep.subr.bf16.mxu0 0
    %508 = vmatpush1.bf16.msra.mxu0 0
    %509 = vmatprep.subr.bf16.mxu0 0
    %510 = vmatpush1.bf16.msra.mxu0 0
    %511 = vmatprep.subr.bf16.mxu0 0
    %512 = vmatpush1.bf16.msra.mxu0 0
    %513 = vmatprep.subr.bf16.mxu0 0
    %514 = vmatpush1.bf16.msra.mxu0 0
    %515 = vmatprep.subr.bf16.mxu0 0
    %516 = vmatpush1.bf16.msra.mxu0 0
    %517 = vmatprep.subr.bf16.mxu0 0
    %518 = vmatpush1.bf16.msra.mxu0 0
    %519 = vmatprep.subr.bf16.mxu0 0
    %520 = vmatpush1.bf16.msra.mxu0 0
    %521 = vmatprep.subr.bf16.mxu0 0
    %522 = vmatpush1.bf16.msra.mxu0 0
    %523 = vmatprep.subr.bf16.mxu0 0
    %524 = vmatpush1.bf16.msra.mxu0 0
    %525 = vmatprep.subr.bf16.mxu0 0
    %526 = vmatpush1.bf16.msra.mxu0 0
    %527 = vmatprep.subr.bf16.mxu0 0
    %528 = vmatpush1.bf16.msra.mxu0 0
    %529 = vmatprep.mubr.bf16.mxu0 0
    %530 = vmatmul.mubr.bf16.gmra.mrb[0].mxu0 %v386
    %v531 = vpop.f32.mrb[0].mxu0
    %v532 = vadd.f32 0.0, %v531
    %v533 = vpop.f32.mrb[0].mxu0
    %v534 = vadd.f32 0.0, %v533
    %v535 = vpop.f32.mrb[0].mxu0
    %v536 = vadd.f32 0.0, %v535
    %v537 = vpop.f32.mrb[0].mxu0
    %v538 = vadd.f32 0.0, %v537
    %539 = vmatprep.mubr.bf16.mxu0 0
    %540 = vmatmul.mubr.bf16.gmra.mrb[0].mxu0 %v389
    %v541 = vpop.f32.mrb[0].mxu0
    %v542 = vadd.f32 0.0, %v541
    %v543 = vpop.f32.mrb[0].mxu0
    %v544 = vadd.f32 0.0, %v543
    %v545 = vpop.f32.mrb[0].mxu0
    %v546 = vadd.f32 0.0, %v545
    %v547 = vpop.f32.mrb[0].mxu0
    %v548 = vadd.f32 0.0, %v547
    %549 = vdwg.mxu0
    %550 = vmatprep.subr.bf16.mxu0 %v327
    %551 = vmatpush1.bf16.msra.mxu0 %v326
    %552 = vmatprep.subr.bf16.mxu0 %v335
    %553 = vmatpush1.bf16.msra.mxu0 %v334
    %554 = vmatprep.subr.bf16.mxu0 %v343
    %555 = vmatpush1.bf16.msra.mxu0 %v342
    %556 = vmatprep.subr.bf16.mxu0 %v351
    %557 = vmatpush1.bf16.msra.mxu0 %v350
    %558 = vmatprep.subr.bf16.mxu0 0
    %559 = vmatpush1.bf16.msra.mxu0 0
    %560 = vmatprep.subr.bf16.mxu0 0
    %561 = vmatpush1.bf16.msra.mxu0 0
    %562 = vmatprep.subr.bf16.mxu0 0
    %563 = vmatpush1.bf16.msra.mxu0 0
    %564 = vmatprep.subr.bf16.mxu0 0
    %565 = vmatpush1.bf16.msra.mxu0 0
    %566 = vmatprep.subr.bf16.mxu0 0
    %567 = vmatpush1.bf16.msra.mxu0 0
    %568 = vmatprep.subr.bf16.mxu0 0
    %569 = vmatpush1.bf16.msra.mxu0 0
    %570 = vmatprep.subr.bf16.mxu0 0
    %571 = vmatpush1.bf16.msra.mxu0 0
    %572 = vmatprep.subr.bf16.mxu0 0
    %573 = vmatpush1.bf16.msra.mxu0 0
    %574 = vmatprep.subr.bf16.mxu0 0
    %575 = vmatpush1.bf16.msra.mxu0 0
    %576 = vmatprep.subr.bf16.mxu0 0
    %577 = vmatpush1.bf16.msra.mxu0 0
    %578 = vmatprep.subr.bf16.mxu0 0
    %579 = vmatpush1.bf16.msra.mxu0 0
    %580 = vmatprep.subr.bf16.mxu0 0
    %581 = vmatpush1.bf16.msra.mxu0 0
    %582 = vmatprep.mubr.bf16.mxu0 0
    %583 = vmatmul.mubr.bf16.gmra.mrb[0].mxu0 %v386
    %v584 = vpop.f32.mrb[0].mxu0
    %v585 = vadd.f32 0.0, %v584
    %v586 = vpop.f32.mrb[0].mxu0
    %v587 = vadd.f32 0.0, %v586
    %v588 = vpop.f32.mrb[0].mxu0
    %v589 = vadd.f32 0.0, %v588
    %v590 = vpop.f32.mrb[0].mxu0
    %v591 = vadd.f32 0.0, %v590
    %592 = vmatprep.mubr.bf16.mxu0 0
    %593 = vmatmul.mubr.bf16.gmra.mrb[0].mxu0 %v389
    %v594 = vpop.f32.mrb[0].mxu0
    %v595 = vadd.f32 0.0, %v594
    %v596 = vpop.f32.mrb[0].mxu0
    %v597 = vadd.f32 0.0, %v596
    %v598 = vpop.f32.mrb[0].mxu0
    %v599 = vadd.f32 0.0, %v598
    %v600 = vpop.f32.mrb[0].mxu0
    %v601 = vadd.f32 0.0, %v600
    %602 = vdwg.mxu0
    %v635 = vunpack.c.l.b16 %v138
    %v636 = vunpack.c.h.b16 %v138
    %v637 = vunpack.c.l.b16 %v139
    %v638 = vunpack.c.h.b16 %v139
    %v639 = vunpack.c.l.b16 %v140
    %v640 = vunpack.c.h.b16 %v140
    %v641 = vunpack.c.l.b16 %v141
    %v642 = vunpack.c.h.b16 %v141
    %v643 = vunpack.c.l.b16 %v142
    %v644 = vunpack.c.h.b16 %v142
    %v645 = vunpack.c.l.b16 %v143
    %v646 = vunpack.c.h.b16 %v143
    %v647 = vunpack.c.l.b16 %v144
    %v648 = vunpack.c.h.b16 %v144
    %v649 = vunpack.c.l.b16 %v145
    %v650 = vunpack.c.h.b16 %v145
    %v651 = vunpack.c.l.b16 %v146
    %v652 = vunpack.c.h.b16 %v146
    %v653 = vunpack.c.l.b16 %v147
    %v654 = vunpack.c.h.b16 %v147
    %v655 = vunpack.c.l.b16 %v148
    %v656 = vunpack.c.h.b16 %v148
    %v657 = vunpack.c.l.b16 %v149
    %v658 = vunpack.c.h.b16 %v149
    %v659 = vunpack.c.l.b16 %v150
    %v660 = vunpack.c.h.b16 %v150
    %v661 = vunpack.c.l.b16 %v151
    %v662 = vunpack.c.h.b16 %v151
    %v663 = vunpack.c.l.b16 %v152
    %v664 = vunpack.c.h.b16 %v152
    %v665 = vunpack.c.l.b16 %v153
    %v666 = vunpack.c.h.b16 %v153
    %v667 = vunpack.c.l.b16 %v154
    %v668 = vunpack.c.h.b16 %v154
    %v669 = vunpack.c.l.b16 %v155
    %v670 = vunpack.c.h.b16 %v155
    %v671 = vunpack.c.l.b16 %v156
    %v672 = vunpack.c.h.b16 %v156
    %v673 = vunpack.c.l.b16 %v157
    %v674 = vunpack.c.h.b16 %v157
    %v675 = vunpack.c.l.b16 %v158
    %v676 = vunpack.c.h.b16 %v158
    %v677 = vunpack.c.l.b16 %v159
    %v678 = vunpack.c.h.b16 %v159
    %v679 = vunpack.c.l.b16 %v160
    %v680 = vunpack.c.h.b16 %v160
    %v681 = vunpack.c.l.b16 %v161
    %v682 = vunpack.c.h.b16 %v161
    %v683 = vunpack.c.l.b16 %v162
    %v684 = vunpack.c.h.b16 %v162
    %v685 = vunpack.c.l.b16 %v163
    %v686 = vunpack.c.h.b16 %v163
    %v687 = vunpack.c.l.b16 %v164
    %v688 = vunpack.c.h.b16 %v164
    %v689 = vunpack.c.l.b16 %v165
    %v690 = vunpack.c.h.b16 %v165
    %v691 = vunpack.c.l.b16 %v166
    %v692 = vunpack.c.h.b16 %v166
    %v693 = vunpack.c.l.b16 %v167
    %v694 = vunpack.c.h.b16 %v167
    %v695 = vunpack.c.l.b16 %v168
    %v696 = vunpack.c.h.b16 %v168
    %v697 = vunpack.c.l.b16 %v169
    %v698 = vunpack.c.h.b16 %v169
    %v699 = vpack.c.b16 %v643, %v635
    %v700 = vpack.c.b16 %v644, %v636
    %v701 = vpack.c.b16 %v645, %v637
    %v702 = vpack.c.b16 %v646, %v638
    %v703 = vpack.c.b16 %v647, %v639
    %v704 = vpack.c.b16 %v648, %v640
    %v705 = vpack.c.b16 %v649, %v641
    %v706 = vpack.c.b16 %v650, %v642
    %v707 = vpack.c.b16 %v659, %v651
    %v708 = vpack.c.b16 %v660, %v652
    %v709 = vpack.c.b16 %v661, %v653
    %v710 = vpack.c.b16 %v662, %v654
    %v711 = vpack.c.b16 %v663, %v655
    %v712 = vpack.c.b16 %v664, %v656
    %v713 = vpack.c.b16 %v665, %v657
    %v714 = vpack.c.b16 %v666, %v658
    %v715 = vpack.c.b16 %v675, %v667
    %v716 = vpack.c.b16 %v676, %v668
    %v717 = vpack.c.b16 %v677, %v669
    %v718 = vpack.c.b16 %v678, %v670
    %v719 = vpack.c.b16 %v679, %v671
    %v720 = vpack.c.b16 %v680, %v672
    %v721 = vpack.c.b16 %v681, %v673
    %v722 = vpack.c.b16 %v682, %v674
    %v723 = vpack.c.b16 %v691, %v683
    %v724 = vpack.c.b16 %v692, %v684
    %v725 = vpack.c.b16 %v693, %v685
    %v726 = vpack.c.b16 %v694, %v686
    %v727 = vpack.c.b16 %v695, %v687
    %v728 = vpack.c.b16 %v696, %v688
    %v729 = vpack.c.b16 %v697, %v689
    %v730 = vpack.c.b16 %v698, %v690
    %v763 = vsel %vm384, %v133, 0
    %v765 = vsel %vm384, %v135, 0
    %767 = vmatprep.subr.bf16.mxu0 %v700
    %768 = vmatpush1.bf16.msra.mxu0 %v699
    %769 = vmatprep.subr.bf16.mxu0 %v708
    %770 = vmatpush1.bf16.msra.mxu0 %v707
    %771 = vmatprep.subr.bf16.mxu0 %v716
    %772 = vmatpush1.bf16.msra.mxu0 %v715
    %773 = vmatprep.subr.bf16.mxu0 %v724
    %774 = vmatpush1.bf16.msra.mxu0 %v723
    %775 = vmatprep.subr.bf16.mxu0 0
    %776 = vmatpush1.bf16.msra.mxu0 0
    %777 = vmatprep.subr.bf16.mxu0 0
    %778 = vmatpush1.bf16.msra.mxu0 0
    %779 = vmatprep.subr.bf16.mxu0 0
    %780 = vmatpush1.bf16.msra.mxu0 0
    %781 = vmatprep.subr.bf16.mxu0 0
    %782 = vmatpush1.bf16.msra.mxu0 0
    %783 = vmatprep.subr.bf16.mxu0 0
    %784 = vmatpush1.bf16.msra.mxu0 0
    %785 = vmatprep.subr.bf16.mxu0 0
    %786 = vmatpush1.bf16.msra.mxu0 0
    %787 = vmatprep.subr.bf16.mxu0 0
    %788 = vmatpush1.bf16.msra.mxu0 0
    %789 = vmatprep.subr.bf16.mxu0 0
    %790 = vmatpush1.bf16.msra.mxu0 0
    %791 = vmatprep.subr.bf16.mxu0 0
    %792 = vmatpush1.bf16.msra.mxu0 0
    %793 = vmatprep.subr.bf16.mxu0 0
    %794 = vmatpush1.bf16.msra.mxu0 0
    %795 = vmatprep.subr.bf16.mxu0 0
    %796 = vmatpush1.bf16.msra.mxu0 0
    %797 = vmatprep.subr.bf16.mxu0 0
    %798 = vmatpush1.bf16.msra.mxu0 0
    %799 = vmatprep.mubr.bf16.mxu0 0
    %800 = vmatmul.mubr.bf16.gmra.mrb[0].mxu0 %v763
    %v801 = vpop.f32.mrb[0].mxu0
    %v802 = vadd.f32 %v426, %v801
    %v803 = vpop.f32.mrb[0].mxu0
    %v804 = vadd.f32 %v428, %v803
    %v805 = vpop.f32.mrb[0].mxu0
    %v806 = vadd.f32 %v430, %v805
    %v807 = vpop.f32.mrb[0].mxu0
    %v808 = vadd.f32 %v432, %v807
    %809 = vmatprep.mubr.bf16.mxu0 0
    %810 = vmatmul.mubr.bf16.gmra.mrb[0].mxu0 %v765
    %v811 = vpop.f32.mrb[0].mxu0
    %v812 = vadd.f32 %v436, %v811
    %v813 = vpop.f32.mrb[0].mxu0
    %v814 = vadd.f32 %v438, %v813
    %v815 = vpop.f32.mrb[0].mxu0
    %v816 = vadd.f32 %v440, %v815
    %v817 = vpop.f32.mrb[0].mxu0
    %v818 = vadd.f32 %v442, %v817
    %819 = vdwg.mxu0
    %820 = vmatprep.subr.bf16.mxu0 %v702
    %821 = vmatpush1.bf16.msra.mxu0 %v701
    %822 = vmatprep.subr.bf16.mxu0 %v710
    %823 = vmatpush1.bf16.msra.mxu0 %v709
    %824 = vmatprep.subr.bf16.mxu0 %v718
    %825 = vmatpush1.bf16.msra.mxu0 %v717
    %826 = vmatprep.subr.bf16.mxu0 %v726
    %827 = vmatpush1.bf16.msra.mxu0 %v725
    %828 = vmatprep.subr.bf16.mxu0 0
    %829 = vmatpush1.bf16.msra.mxu0 0
    %830 = vmatprep.subr.bf16.mxu0 0
    %831 = vmatpush1.bf16.msra.mxu0 0
    %832 = vmatprep.subr.bf16.mxu0 0
    %833 = vmatpush1.bf16.msra.mxu0 0
    %834 = vmatprep.subr.bf16.mxu0 0
    %835 = vmatpush1.bf16.msra.mxu0 0
    %836 = vmatprep.subr.bf16.mxu0 0
    %837 = vmatpush1.bf16.msra.mxu0 0
    %838 = vmatprep.subr.bf16.mxu0 0
    %839 = vmatpush1.bf16.msra.mxu0 0
    %840 = vmatprep.subr.bf16.mxu0 0
    %841 = vmatpush1.bf16.msra.mxu0 0
    %842 = vmatprep.subr.bf16.mxu0 0
    %843 = vmatpush1.bf16.msra.mxu0 0
    %844 = vmatprep.subr.bf16.mxu0 0
    %845 = vmatpush1.bf16.msra.mxu0 0
    %846 = vmatprep.subr.bf16.mxu0 0
    %847 = vmatpush1.bf16.msra.mxu0 0
    %848 = vmatprep.subr.bf16.mxu0 0
    %849 = vmatpush1.bf16.msra.mxu0 0
    %850 = vmatprep.subr.bf16.mxu0 0
    %851 = vmatpush1.bf16.msra.mxu0 0
    %852 = vmatprep.mubr.bf16.mxu0 0
    %853 = vmatmul.mubr.bf16.gmra.mrb[0].mxu0 %v763
    %v854 = vpop.f32.mrb[0].mxu0
    %v855 = vadd.f32 %v479, %v854
    %v856 = vpop.f32.mrb[0].mxu0
    %v857 = vadd.f32 %v481, %v856
    %v858 = vpop.f32.mrb[0].mxu0
    %v859 = vadd.f32 %v483, %v858
    %v860 = vpop.f32.mrb[0].mxu0
    %v861 = vadd.f32 %v485, %v860
    %862 = vmatprep.mubr.bf16.mxu0 0
    %863 = vmatmul.mubr.bf16.gmra.mrb[0].mxu0 %v765
    %v864 = vpop.f32.mrb[0].mxu0
    %v865 = vadd.f32 %v489, %v864
    %v866 = vpop.f32.mrb[0].mxu0
    %v867 = vadd.f32 %v491, %v866
    %v868 = vpop.f32.mrb[0].mxu0
    %v869 = vadd.f32 %v493, %v868
    %v870 = vpop.f32.mrb[0].mxu0
    %v871 = vadd.f32 %v495, %v870
    %872 = vdwg.mxu0
    %873 = vmatprep.subr.bf16.mxu0 %v704
    %874 = vmatpush1.bf16.msra.mxu0 %v703
    %875 = vmatprep.subr.bf16.mxu0 %v712
    %876 = vmatpush1.bf16.msra.mxu0 %v711
    %877 = vmatprep.subr.bf16.mxu0 %v720
    %878 = vmatpush1.bf16.msra.mxu0 %v719
    %879 = vmatprep.subr.bf16.mxu0 %v728
    %880 = vmatpush1.bf16.msra.mxu0 %v727
    %881 = vmatprep.subr.bf16.mxu0 0
    %882 = vmatpush1.bf16.msra.mxu0 0
    %883 = vmatprep.subr.bf16.mxu0 0
    %884 = vmatpush1.bf16.msra.mxu0 0
    %885 = vmatprep.subr.bf16.mxu0 0
    %886 = vmatpush1.bf16.msra.mxu0 0
    %887 = vmatprep.subr.bf16.mxu0 0
    %888 = vmatpush1.bf16.msra.mxu0 0
    %889 = vmatprep.subr.bf16.mxu0 0
    %890 = vmatpush1.bf16.msra.mxu0 0
    %891 = vmatprep.subr.bf16.mxu0 0
    %892 = vmatpush1.bf16.msra.mxu0 0
    %893 = vmatprep.subr.bf16.mxu0 0
    %894 = vmatpush1.bf16.msra.mxu0 0
    %895 = vmatprep.subr.bf16.mxu0 0
    %896 = vmatpush1.bf16.msra.mxu0 0
    %897 = vmatprep.subr.bf16.mxu0 0
    %898 = vmatpush1.bf16.msra.mxu0 0
    %899 = vmatprep.subr.bf16.mxu0 0
    %900 = vmatpush1.bf16.msra.mxu0 0
    %901 = vmatprep.subr.bf16.mxu0 0
    %902 = vmatpush1.bf16.msra.mxu0 0
    %903 = vmatprep.subr.bf16.mxu0 0
    %904 = vmatpush1.bf16.msra.mxu0 0
    %905 = vmatprep.mubr.bf16.mxu0 0
    %906 = vmatmul.mubr.bf16.gmra.mrb[0].mxu0 %v763
    %v907 = vpop.f32.mrb[0].mxu0
    %v908 = vadd.f32 %v532, %v907
    %v909 = vpop.f32.mrb[0].mxu0
    %v910 = vadd.f32 %v534, %v909
    %v911 = vpop.f32.mrb[0].mxu0
    %v912 = vadd.f32 %v536, %v911
    %v913 = vpop.f32.mrb[0].mxu0
    %v914 = vadd.f32 %v538, %v913
    %915 = vmatprep.mubr.bf16.mxu0 0
    %916 = vmatmul.mubr.bf16.gmra.mrb[0].mxu0 %v765
    %v917 = vpop.f32.mrb[0].mxu0
    %v918 = vadd.f32 %v542, %v917
    %v919 = vpop.f32.mrb[0].mxu0
    %v920 = vadd.f32 %v544, %v919
    %v921 = vpop.f32.mrb[0].mxu0
    %v922 = vadd.f32 %v546, %v921
    %v923 = vpop.f32.mrb[0].mxu0
    %v924 = vadd.f32 %v548, %v923
    %925 = vdwg.mxu0
    %926 = vmatprep.subr.bf16.mxu0 %v706
    %927 = vmatpush1.bf16.msra.mxu0 %v705
    %928 = vmatprep.subr.bf16.mxu0 %v714
    %929 = vmatpush1.bf16.msra.mxu0 %v713
    %930 = vmatprep.subr.bf16.mxu0 %v722
    %931 = vmatpush1.bf16.msra.mxu0 %v721
    %932 = vmatprep.subr.bf16.mxu0 %v730
    %933 = vmatpush1.bf16.msra.mxu0 %v729
    %934 = vmatprep.subr.bf16.mxu0 0
    %935 = vmatpush1.bf16.msra.mxu0 0
    %936 = vmatprep.subr.bf16.mxu0 0
    %937 = vmatpush1.bf16.msra.mxu0 0
    %938 = vmatprep.subr.bf16.mxu0 0
    %939 = vmatpush1.bf16.msra.mxu0 0
    %940 = vmatprep.subr.bf16.mxu0 0
    %941 = vmatpush1.bf16.msra.mxu0 0
    %942 = vmatprep.subr.bf16.mxu0 0
    %943 = vmatpush1.bf16.msra.mxu0 0
    %944 = vmatprep.subr.bf16.mxu0 0
    %945 = vmatpush1.bf16.msra.mxu0 0
    %946 = vmatprep.subr.bf16.mxu0 0
    %947 = vmatpush1.bf16.msra.mxu0 0
    %948 = vmatprep.subr.bf16.mxu0 0
    %949 = vmatpush1.bf16.msra.mxu0 0
    %950 = vmatprep.subr.bf16.mxu0 0
    %951 = vmatpush1.bf16.msra.mxu0 0
    %952 = vmatprep.subr.bf16.mxu0 0
    %953 = vmatpush1.bf16.msra.mxu0 0
    %954 = vmatprep.subr.bf16.mxu0 0
    %955 = vmatpush1.bf16.msra.mxu0 0
    %956 = vmatprep.subr.bf16.mxu0 0
    %957 = vmatpush1.bf16.msra.mxu0 0
    %958 = vmatprep.mubr.bf16.mxu0 0
    %959 = vmatmul.mubr.bf16.gmra.mrb[0].mxu0 %v763
    %v960 = vpop.f32.mrb[0].mxu0
    %v961 = vadd.f32 %v585, %v960
    %v962 = vpop.f32.mrb[0].mxu0
    %v963 = vadd.f32 %v587, %v962
    %v964 = vpop.f32.mrb[0].mxu0
    %v965 = vadd.f32 %v589, %v964
    %v966 = vpop.f32.mrb[0].mxu0
    %v967 = vadd.f32 %v591, %v966
    %968 = vmatprep.mubr.bf16.mxu0 0
    %969 = vmatmul.mubr.bf16.gmra.mrb[0].mxu0 %v765
    %v970 = vpop.f32.mrb[0].mxu0
    %v971 = vadd.f32 %v595, %v970
    %v972 = vpop.f32.mrb[0].mxu0
    %v973 = vadd.f32 %v597, %v972
    %v974 = vpop.f32.mrb[0].mxu0
    %v975 = vadd.f32 %v599, %v974
    %v976 = vpop.f32.mrb[0].mxu0
    %v977 = vadd.f32 %v601, %v976
    %978 = vdwg.mxu0
    %vm983 = vcmask 1046528
    %v984 = vrot.slane %v133, 1
    %v985 = vrot.slane %v136, 1
    %v986 = vsel %vm983, %v984, %v985
    %v987 = vrot.slane %v135, 1
    %v988 = vrot.slane %v137, 1
    %v989 = vsel %vm983, %v987, %v988
    %s990 = scalar_lea.vmem [#allocation5], 512
    %v991 = vld [vmem:[%s990] sm:$0xff]
    %v992 = vld [vmem:[%s990 + $0x8] sm:$0xff]
    %v993 = vld [vmem:[%s990 + $0x10] sm:$0xff]
    %v994 = vld [vmem:[%s990 + $0x18] sm:$0xff]
    %v995 = vld [vmem:[%s990 + $0x20] sm:$0xff]
    %v996 = vld [vmem:[%s990 + $0x28] sm:$0xff]
    %v997 = vld [vmem:[%s990 + $0x30] sm:$0xff]
    %v998 = vld [vmem:[%s990 + $0x38] sm:$0xff]
    %v999 = vld [vmem:[%s990 + $0x40] sm:$0xff]
    %v1000 = vld [vmem:[%s990 + $0x48] sm:$0xff]
    %v1001 = vld [vmem:[%s990 + $0x50] sm:$0xff]
    %v1002 = vld [vmem:[%s990 + $0x58] sm:$0xff]
    %v1003 = vld [vmem:[%s990 + $0x60] sm:$0xff]
    %v1004 = vld [vmem:[%s990 + $0x68] sm:$0xff]
    %v1005 = vld [vmem:[%s990 + $0x70] sm:$0xff]
    %v1006 = vld [vmem:[%s990 + $0x78] sm:$0xff]
    %v1007 = vld [vmem:[%s990 + $0x80] sm:$0xff]
    %v1008 = vld [vmem:[%s990 + $0x88] sm:$0xff]
    %v1009 = vld [vmem:[%s990 + $0x90] sm:$0xff]
    %v1010 = vld [vmem:[%s990 + $0x98] sm:$0xff]
    %v1011 = vld [vmem:[%s990 + $0xa0] sm:$0xff]
    %v1012 = vld [vmem:[%s990 + $0xa8] sm:$0xff]
    %v1013 = vld [vmem:[%s990 + $0xb0] sm:$0xff]
    %v1014 = vld [vmem:[%s990 + $0xb8] sm:$0xff]
    %v1015 = vld [vmem:[%s990 + $0xc0] sm:$0xff]
    %v1016 = vld [vmem:[%s990 + $0xc8] sm:$0xff]
    %v1017 = vld [vmem:[%s990 + $0xd0] sm:$0xff]
    %v1018 = vld [vmem:[%s990 + $0xd8] sm:$0xff]
    %v1019 = vld [vmem:[%s990 + $0xe0] sm:$0xff]
    %v1020 = vld [vmem:[%s990 + $0xe8] sm:$0xff]
    %v1021 = vld [vmem:[%s990 + $0xf0] sm:$0xff]
    %v1022 = vld [vmem:[%s990 + $0xf8] sm:$0xff]
    %v1055 = vunpack.c.l.b16 %v991
    %v1056 = vunpack.c.h.b16 %v991
    %v1057 = vunpack.c.l.b16 %v992
    %v1058 = vunpack.c.h.b16 %v992
    %v1059 = vunpack.c.l.b16 %v993
    %v1060 = vunpack.c.h.b16 %v993
    %v1061 = vunpack.c.l.b16 %v994
    %v1062 = vunpack.c.h.b16 %v994
    %v1063 = vunpack.c.l.b16 %v995
    %v1064 = vunpack.c.h.b16 %v995
    %v1065 = vunpack.c.l.b16 %v996
    %v1066 = vunpack.c.h.b16 %v996
    %v1067 = vunpack.c.l.b16 %v997
    %v1068 = vunpack.c.h.b16 %v997
    %v1069 = vunpack.c.l.b16 %v998
    %v1070 = vunpack.c.h.b16 %v998
    %v1071 = vunpack.c.l.b16 %v999
    %v1072 = vunpack.c.h.b16 %v999
    %v1073 = vunpack.c.l.b16 %v1000
    %v1074 = vunpack.c.h.b16 %v1000
    %v1075 = vunpack.c.l.b16 %v1001
    %v1076 = vunpack.c.h.b16 %v1001
    %v1077 = vunpack.c.l.b16 %v1002
    %v1078 = vunpack.c.h.b16 %v1002
    %v1079 = vunpack.c.l.b16 %v1003
    %v1080 = vunpack.c.h.b16 %v1003
    %v1081 = vunpack.c.l.b16 %v1004
    %v1082 = vunpack.c.h.b16 %v1004
    %v1083 = vunpack.c.l.b16 %v1005
    %v1084 = vunpack.c.h.b16 %v1005
    %v1085 = vunpack.c.l.b16 %v1006
    %v1086 = vunpack.c.h.b16 %v1006
    %v1087 = vunpack.c.l.b16 %v1007
    %v1088 = vunpack.c.h.b16 %v1007
    %v1089 = vunpack.c.l.b16 %v1008
    %v1090 = vunpack.c.h.b16 %v1008
    %v1091 = vunpack.c.l.b16 %v1009
    %v1092 = vunpack.c.h.b16 %v1009
    %v1093 = vunpack.c.l.b16 %v1010
    %v1094 = vunpack.c.h.b16 %v1010
    %v1095 = vunpack.c.l.b16 %v1011
    %v1096 = vunpack.c.h.b16 %v1011
    %v1097 = vunpack.c.l.b16 %v1012
    %v1098 = vunpack.c.h.b16 %v1012
    %v1099 = vunpack.c.l.b16 %v1013
    %v1100 = vunpack.c.h.b16 %v1013
    %v1101 = vunpack.c.l.b16 %v1014
    %v1102 = vunpack.c.h.b16 %v1014
    %v1103 = vunpack.c.l.b16 %v1015
    %v1104 = vunpack.c.h.b16 %v1015
    %v1105 = vunpack.c.l.b16 %v1016
    %v1106 = vunpack.c.h.b16 %v1016
    %v1107 = vunpack.c.l.b16 %v1017
    %v1108 = vunpack.c.h.b16 %v1017
    %v1109 = vunpack.c.l.b16 %v1018
    %v1110 = vunpack.c.h.b16 %v1018
    %v1111 = vunpack.c.l.b16 %v1019
    %v1112 = vunpack.c.h.b16 %v1019
    %v1113 = vunpack.c.l.b16 %v1020
    %v1114 = vunpack.c.h.b16 %v1020
    %v1115 = vunpack.c.l.b16 %v1021
    %v1116 = vunpack.c.h.b16 %v1021
    %v1117 = vunpack.c.l.b16 %v1022
    %v1118 = vunpack.c.h.b16 %v1022
    %v1119 = vpack.c.b16 %v1063, %v1055
    %v1120 = vpack.c.b16 %v1064, %v1056
    %v1121 = vpack.c.b16 %v1065, %v1057
    %v1122 = vpack.c.b16 %v1066, %v1058
    %v1123 = vpack.c.b16 %v1067, %v1059
    %v1124 = vpack.c.b16 %v1068, %v1060
    %v1125 = vpack.c.b16 %v1069, %v1061
    %v1126 = vpack.c.b16 %v1070, %v1062
    %v1127 = vpack.c.b16 %v1079, %v1071
    %v1128 = vpack.c.b16 %v1080, %v1072
    %v1129 = vpack.c.b16 %v1081, %v1073
    %v1130 = vpack.c.b16 %v1082, %v1074
    %v1131 = vpack.c.b16 %v1083, %v1075
    %v1132 = vpack.c.b16 %v1084, %v1076
    %v1133 = vpack.c.b16 %v1085, %v1077
    %v1134 = vpack.c.b16 %v1086, %v1078
    %v1135 = vpack.c.b16 %v1095, %v1087
    %v1136 = vpack.c.b16 %v1096, %v1088
    %v1137 = vpack.c.b16 %v1097, %v1089
    %v1138 = vpack.c.b16 %v1098, %v1090
    %v1139 = vpack.c.b16 %v1099, %v1091
    %v1140 = vpack.c.b16 %v1100, %v1092
    %v1141 = vpack.c.b16 %v1101, %v1093
    %v1142 = vpack.c.b16 %v1102, %v1094
    %v1143 = vpack.c.b16 %v1111, %v1103
    %v1144 = vpack.c.b16 %v1112, %v1104
    %v1145 = vpack.c.b16 %v1113, %v1105
    %v1146 = vpack.c.b16 %v1114, %v1106
    %v1147 = vpack.c.b16 %v1115, %v1107
    %v1148 = vpack.c.b16 %v1116, %v1108
    %v1149 = vpack.c.b16 %v1117, %v1109
    %v1150 = vpack.c.b16 %v1118, %v1110
    %v1184 = vsel %vm384, %v986, 0
    %v1187 = vsel %vm384, %v989, 0
    %1189 = vmatprep.subr.bf16.mxu0 %v1120
    %1190 = vmatpush1.bf16.msra.mxu0 %v1119
    %1191 = vmatprep.subr.bf16.mxu0 %v1128
    %1192 = vmatpush1.bf16.msra.mxu0 %v1127
    %1193 = vmatprep.subr.bf16.mxu0 %v1136
    %1194 = vmatpush1.bf16.msra.mxu0 %v1135
    %1195 = vmatprep.subr.bf16.mxu0 %v1144
    %1196 = vmatpush1.bf16.msra.mxu0 %v1143
    %1197 = vmatprep.subr.bf16.mxu0 0
    %1198 = vmatpush1.bf16.msra.mxu0 0
    %1199 = vmatprep.subr.bf16.mxu0 0
    %1200 = vmatpush1.bf16.msra.mxu0 0
    %1201 = vmatprep.subr.bf16.mxu0 0
    %1202 = vmatpush1.bf16.msra.mxu0 0
    %1203 = vmatprep.subr.bf16.mxu0 0
    %1204 = vmatpush1.bf16.msra.mxu0 0
    %1205 = vmatprep.subr.bf16.mxu0 0
    %1206 = vmatpush1.bf16.msra.mxu0 0
    %1207 = vmatprep.subr.bf16.mxu0 0
    %1208 = vmatpush1.bf16.msra.mxu0 0
    %1209 = vmatprep.subr.bf16.mxu0 0
    %1210 = vmatpush1.bf16.msra.mxu0 0
    %1211 = vmatprep.subr.bf16.mxu0 0
    %1212 = vmatpush1.bf16.msra.mxu0 0
    %1213 = vmatprep.subr.bf16.mxu0 0
    %1214 = vmatpush1.bf16.msra.mxu0 0
    %1215 = vmatprep.subr.bf16.mxu0 0
    %1216 = vmatpush1.bf16.msra.mxu0 0
    %1217 = vmatprep.subr.bf16.mxu0 0
    %1218 = vmatpush1.bf16.msra.mxu0 0
    %1219 = vmatprep.subr.bf16.mxu0 0
    %1220 = vmatpush1.bf16.msra.mxu0 0
    %1221 = vmatprep.mubr.bf16.mxu0 0
    %1222 = vmatmul.mubr.bf16.gmra.mrb[0].mxu0 %v1184
    %v1223 = vpop.f32.mrb[0].mxu0
    %v1224 = vadd.f32 0.0, %v1223
    %v1225 = vpop.f32.mrb[0].mxu0
    %v1226 = vadd.f32 0.0, %v1225
    %v1227 = vpop.f32.mrb[0].mxu0
    %v1228 = vadd.f32 0.0, %v1227
    %v1229 = vpop.f32.mrb[0].mxu0
    %v1230 = vadd.f32 0.0, %v1229
    %1231 = vmatprep.mubr.bf16.mxu0 0
    %1232 = vmatmul.mubr.bf16.gmra.mrb[0].mxu0 %v1187
    %v1233 = vpop.f32.mrb[0].mxu0
    %v1234 = vadd.f32 0.0, %v1233
    %v1235 = vpop.f32.mrb[0].mxu0
    %v1236 = vadd.f32 0.0, %v1235
    %v1237 = vpop.f32.mrb[0].mxu0
    %v1238 = vadd.f32 0.0, %v1237
    %v1239 = vpop.f32.mrb[0].mxu0
    %v1240 = vadd.f32 0.0, %v1239
    %1241 = vdwg.mxu0
    %1242 = vmatprep.subr.bf16.mxu0 %v1122
    %1243 = vmatpush1.bf16.msra.mxu0 %v1121
    %1244 = vmatprep.subr.bf16.mxu0 %v1130
    %1245 = vmatpush1.bf16.msra.mxu0 %v1129
    %1246 = vmatprep.subr.bf16.mxu0 %v1138
    %1247 = vmatpush1.bf16.msra.mxu0 %v1137
    %1248 = vmatprep.subr.bf16.mxu0 %v1146
    %1249 = vmatpush1.bf16.msra.mxu0 %v1145
    %1250 = vmatprep.subr.bf16.mxu0 0
    %1251 = vmatpush1.bf16.msra.mxu0 0
    %1252 = vmatprep.subr.bf16.mxu0 0
    %1253 = vmatpush1.bf16.msra.mxu0 0
    %1254 = vmatprep.subr.bf16.mxu0 0
    %1255 = vmatpush1.bf16.msra.mxu0 0
    %1256 = vmatprep.subr.bf16.mxu0 0
    %1257 = vmatpush1.bf16.msra.mxu0 0
    %1258 = vmatprep.subr.bf16.mxu0 0
    %1259 = vmatpush1.bf16.msra.mxu0 0
    %1260 = vmatprep.subr.bf16.mxu0 0
    %1261 = vmatpush1.bf16.msra.mxu0 0
    %1262 = vmatprep.subr.bf16.mxu0 0
    %1263 = vmatpush1.bf16.msra.mxu0 0
    %1264 = vmatprep.subr.bf16.mxu0 0
    %1265 = vmatpush1.bf16.msra.mxu0 0
    %1266 = vmatprep.subr.bf16.mxu0 0
    %1267 = vmatpush1.bf16.msra.mxu0 0
    %1268 = vmatprep.subr.bf16.mxu0 0
    %1269 = vmatpush1.bf16.msra.mxu0 0
    %1270 = vmatprep.subr.bf16.mxu0 0
    %1271 = vmatpush1.bf16.msra.mxu0 0
    %1272 = vmatprep.subr.bf16.mxu0 0
    %1273 = vmatpush1.bf16.msra.mxu0 0
    %1274 = vmatprep.mubr.bf16.mxu0 0
    %1275 = vmatmul.mubr.bf16.gmra.mrb[0].mxu0 %v1184
    %v1276 = vpop.f32.mrb[0].mxu0
    %v1277 = vadd.f32 0.0, %v1276
    %v1278 = vpop.f32.mrb[0].mxu0
    %v1279 = vadd.f32 0.0, %v1278
    %v1280 = vpop.f32.mrb[0].mxu0
    %v1281 = vadd.f32 0.0, %v1280
    %v1282 = vpop.f32.mrb[0].mxu0
    %v1283 = vadd.f32 0.0, %v1282
    %1284 = vmatprep.mubr.bf16.mxu0 0
    %1285 = vmatmul.mubr.bf16.gmra.mrb[0].mxu0 %v1187
    %v1286 = vpop.f32.mrb[0].mxu0
    %v1287 = vadd.f32 0.0, %v1286
    %v1288 = vpop.f32.mrb[0].mxu0
    %v1289 = vadd.f32 0.0, %v1288
    %v1290 = vpop.f32.mrb[0].mxu0
    %v1291 = vadd.f32 0.0, %v1290
    %v1292 = vpop.f32.mrb[0].mxu0
    %v1293 = vadd.f32 0.0, %v1292
    %1294 = vdwg.mxu0
    %1295 = vmatprep.subr.bf16.mxu0 %v1124
    %1296 = vmatpush1.bf16.msra.mxu0 %v1123
    %1297 = vmatprep.subr.bf16.mxu0 %v1132
    %1298 = vmatpush1.bf16.msra.mxu0 %v1131
    %1299 = vmatprep.subr.bf16.mxu0 %v1140
    %1300 = vmatpush1.bf16.msra.mxu0 %v1139
    %1301 = vmatprep.subr.bf16.mxu0 %v1148
    %1302 = vmatpush1.bf16.msra.mxu0 %v1147
    %1303 = vmatprep.subr.bf16.mxu0 0
    %1304 = vmatpush1.bf16.msra.mxu0 0
    %1305 = vmatprep.subr.bf16.mxu0 0
    %1306 = vmatpush1.bf16.msra.mxu0 0
    %1307 = vmatprep.subr.bf16.mxu0 0
    %1308 = vmatpush1.bf16.msra.mxu0 0
    %1309 = vmatprep.subr.bf16.mxu0 0
    %1310 = vmatpush1.bf16.msra.mxu0 0
    %1311 = vmatprep.subr.bf16.mxu0 0
    %1312 = vmatpush1.bf16.msra.mxu0 0
    %1313 = vmatprep.subr.bf16.mxu0 0
    %1314 = vmatpush1.bf16.msra.mxu0 0
    %1315 = vmatprep.subr.bf16.mxu0 0
    %1316 = vmatpush1.bf16.msra.mxu0 0
    %1317 = vmatprep.subr.bf16.mxu0 0
    %1318 = vmatpush1.bf16.msra.mxu0 0
    %1319 = vmatprep.subr.bf16.mxu0 0
    %1320 = vmatpush1.bf16.msra.mxu0 0
    %1321 = vmatprep.subr.bf16.mxu0 0
    %1322 = vmatpush1.bf16.msra.mxu0 0
    %1323 = vmatprep.subr.bf16.mxu0 0
    %1324 = vmatpush1.bf16.msra.mxu0 0
    %1325 = vmatprep.subr.bf16.mxu0 0
    %1326 = vmatpush1.bf16.msra.mxu0 0
    %1327 = vmatprep.mubr.bf16.mxu0 0
    %1328 = vmatmul.mubr.bf16.gmra.mrb[0].mxu0 %v1184
    %v1329 = vpop.f32.mrb[0].mxu0
    %v1330 = vadd.f32 0.0, %v1329
    %v1331 = vpop.f32.mrb[0].mxu0
    %v1332 = vadd.f32 0.0, %v1331
    %v1333 = vpop.f32.mrb[0].mxu0
    %v1334 = vadd.f32 0.0, %v1333
    %v1335 = vpop.f32.mrb[0].mxu0
    %v1336 = vadd.f32 0.0, %v1335
    %1337 = vmatprep.mubr.bf16.mxu0 0
    %1338 = vmatmul.mubr.bf16.gmra.mrb[0].mxu0 %v1187
    %v1339 = vpop.f32.mrb[0].mxu0
    %v1340 = vadd.f32 0.0, %v1339
    %v1341 = vpop.f32.mrb[0].mxu0
    %v1342 = vadd.f32 0.0, %v1341
    %v1343 = vpop.f32.mrb[0].mxu0
    %v1344 = vadd.f32 0.0, %v1343
    %v1345 = vpop.f32.mrb[0].mxu0
    %v1346 = vadd.f32 0.0, %v1345
    %1347 = vdwg.mxu0
    %1348 = vmatprep.subr.bf16.mxu0 %v1126
    %1349 = vmatpush1.bf16.msra.mxu0 %v1125
    %1350 = vmatprep.subr.bf16.mxu0 %v1134
    %1351 = vmatpush1.bf16.msra.mxu0 %v1133
    %1352 = vmatprep.subr.bf16.mxu0 %v1142
    %1353 = vmatpush1.bf16.msra.mxu0 %v1141
    %1354 = vmatprep.subr.bf16.mxu0 %v1150
    %1355 = vmatpush1.bf16.msra.mxu0 %v1149
    %1356 = vmatprep.subr.bf16.mxu0 0
    %1357 = vmatpush1.bf16.msra.mxu0 0
    %1358 = vmatprep.subr.bf16.mxu0 0
    %1359 = vmatpush1.bf16.msra.mxu0 0
    %1360 = vmatprep.subr.bf16.mxu0 0
    %1361 = vmatpush1.bf16.msra.mxu0 0
    %1362 = vmatprep.subr.bf16.mxu0 0
    %1363 = vmatpush1.bf16.msra.mxu0 0
    %1364 = vmatprep.subr.bf16.mxu0 0
    %1365 = vmatpush1.bf16.msra.mxu0 0
    %1366 = vmatprep.subr.bf16.mxu0 0
    %1367 = vmatpush1.bf16.msra.mxu0 0
    %1368 = vmatprep.subr.bf16.mxu0 0
    %1369 = vmatpush1.bf16.msra.mxu0 0
    %1370 = vmatprep.subr.bf16.mxu0 0
    %1371 = vmatpush1.bf16.msra.mxu0 0
    %1372 = vmatprep.subr.bf16.mxu0 0
    %1373 = vmatpush1.bf16.msra.mxu0 0
    %1374 = vmatprep.subr.bf16.mxu0 0
    %1375 = vmatpush1.bf16.msra.mxu0 0
    %1376 = vmatprep.subr.bf16.mxu0 0
    %1377 = vmatpush1.bf16.msra.mxu0 0
    %1378 = vmatprep.subr.bf16.mxu0 0
    %1379 = vmatpush1.bf16.msra.mxu0 0
    %1380 = vmatprep.mubr.bf16.mxu0 0
    %1381 = vmatmul.mubr.bf16.gmra.mrb[0].mxu0 %v1184
    %v1382 = vpop.f32.mrb[0].mxu0
    %v1383 = vadd.f32 0.0, %v1382
    %v1384 = vpop.f32.mrb[0].mxu0
    %v1385 = vadd.f32 0.0, %v1384
    %v1386 = vpop.f32.mrb[0].mxu0
    %v1387 = vadd.f32 0.0, %v1386
    %v1388 = vpop.f32.mrb[0].mxu0
    %v1389 = vadd.f32 0.0, %v1388
    %1390 = vmatprep.mubr.bf16.mxu0 0
    %1391 = vmatmul.mubr.bf16.gmra.mrb[0].mxu0 %v1187
    %v1392 = vpop.f32.mrb[0].mxu0
    %v1393 = vadd.f32 0.0, %v1392
    %v1394 = vpop.f32.mrb[0].mxu0
    %v1395 = vadd.f32 0.0, %v1394
    %v1396 = vpop.f32.mrb[0].mxu0
    %v1397 = vadd.f32 0.0, %v1396
    %v1398 = vpop.f32.mrb[0].mxu0
    %v1399 = vadd.f32 0.0, %v1398
    %1400 = vdwg.mxu0
    %v1401 = vadd.f32 %v802, %v1224
    %v1402 = vadd.f32 %v804, %v1226
    %v1403 = vadd.f32 %v855, %v1277
    %v1404 = vadd.f32 %v857, %v1279
    %v1405 = vadd.f32 %v908, %v1330
    %v1406 = vadd.f32 %v910, %v1332
    %v1407 = vadd.f32 %v961, %v1383
    %v1408 = vadd.f32 %v963, %v1385
    %v1409 = vadd.f32 %v806, %v1228
    %v1410 = vadd.f32 %v808, %v1230
    %v1411 = vadd.f32 %v859, %v1281
    %v1412 = vadd.f32 %v861, %v1283
    %v1413 = vadd.f32 %v912, %v1334
    %v1414 = vadd.f32 %v914, %v1336
    %v1415 = vadd.f32 %v965, %v1387
    %v1416 = vadd.f32 %v967, %v1389
    %v1417 = vadd.f32 %v812, %v1234
    %v1418 = vadd.f32 %v814, %v1236
    %v1419 = vadd.f32 %v865, %v1287
    %v1420 = vadd.f32 %v867, %v1289
    %v1421 = vadd.f32 %v918, %v1340
    %v1422 = vadd.f32 %v920, %v1342
    %v1423 = vadd.f32 %v971, %v1393
    %v1424 = vadd.f32 %v973, %v1395
    %v1425 = vadd.f32 %v816, %v1238
    %v1426 = vadd.f32 %v818, %v1240
    %v1427 = vadd.f32 %v869, %v1291
    %v1428 = vadd.f32 %v871, %v1293
    %v1429 = vadd.f32 %v922, %v1344
    %v1430 = vadd.f32 %v924, %v1346
    %v1431 = vadd.f32 %v975, %v1397
    %v1432 = vadd.f32 %v977, %v1399
    %vm1433 = vsmask.f32 6400
    %v1434 = vrot.slane %v171, 1
    %v1435 = vrot.slane %v173, 2
    %v1436 = vor.u32 %v1434, %v1435
    %v1437 = vshrl.u32 %v136, 16
    %v1439 = vrot.slane %v1437, 1
    %v1440 = vrot.slane %v177, 2
    %v1441 = vor.u32 %v1439, %v1440
    %v1442 = vsel %vm1433, %v1436, %v1441
    %v1443 = vrot.slane %v181, 1
    %v1444 = vrot.slane %v183, 2
    %v1445 = vor.u32 %v1443, %v1444
    %v1446 = vshrl.u32 %v137, 16
    %v1448 = vrot.slane %v1446, 1
    %v1449 = vrot.slane %v187, 2
    %v1450 = vor.u32 %v1448, %v1449
    %v1451 = vsel %vm1433, %v1445, %v1450
    %s1452 = scalar_lea.vmem [#allocation5], 768
    %v1453 = vld [vmem:[%s1452] sm:$0xff]
    %v1454 = vld [vmem:[%s1452 + $0x8] sm:$0xff]
    %v1455 = vld [vmem:[%s1452 + $0x10] sm:$0xff]
    %v1456 = vld [vmem:[%s1452 + $0x18] sm:$0xff]
    %v1457 = vld [vmem:[%s1452 + $0x20] sm:$0xff]
    %v1458 = vld [vmem:[%s1452 + $0x28] sm:$0xff]
    %v1459 = vld [vmem:[%s1452 + $0x30] sm:$0xff]
    %v1460 = vld [vmem:[%s1452 + $0x38] sm:$0xff]
    %v1461 = vld [vmem:[%s1452 + $0x40] sm:$0xff]
    %v1462 = vld [vmem:[%s1452 + $0x48] sm:$0xff]
    %v1463 = vld [vmem:[%s1452 + $0x50] sm:$0xff]
    %v1464 = vld [vmem:[%s1452 + $0x58] sm:$0xff]
    %v1465 = vld [vmem:[%s1452 + $0x60] sm:$0xff]
    %v1466 = vld [vmem:[%s1452 + $0x68] sm:$0xff]
    %v1467 = vld [vmem:[%s1452 + $0x70] sm:$0xff]
    %v1468 = vld [vmem:[%s1452 + $0x78] sm:$0xff]
    %v1469 = vld [vmem:[%s1452 + $0x80] sm:$0xff]
    %v1470 = vld [vmem:[%s1452 + $0x88] sm:$0xff]
    %v1471 = vld [vmem:[%s1452 + $0x90] sm:$0xff]
    %v1472 = vld [vmem:[%s1452 + $0x98] sm:$0xff]
    %v1473 = vld [vmem:[%s1452 + $0xa0] sm:$0xff]
    %v1474 = vld [vmem:[%s1452 + $0xa8] sm:$0xff]
    %v1475 = vld [vmem:[%s1452 + $0xb0] sm:$0xff]
    %v1476 = vld [vmem:[%s1452 + $0xb8] sm:$0xff]
    %v1477 = vld [vmem:[%s1452 + $0xc0] sm:$0xff]
    %v1478 = vld [vmem:[%s1452 + $0xc8] sm:$0xff]
    %v1479 = vld [vmem:[%s1452 + $0xd0] sm:$0xff]
    %v1480 = vld [vmem:[%s1452 + $0xd8] sm:$0xff]
    %v1481 = vld [vmem:[%s1452 + $0xe0] sm:$0xff]
    %v1482 = vld [vmem:[%s1452 + $0xe8] sm:$0xff]
    %v1483 = vld [vmem:[%s1452 + $0xf0] sm:$0xff]
    %v1484 = vld [vmem:[%s1452 + $0xf8] sm:$0xff]
    %v1517 = vunpack.c.l.b16 %v1453
    %v1518 = vunpack.c.h.b16 %v1453
    %v1519 = vunpack.c.l.b16 %v1454
    %v1520 = vunpack.c.h.b16 %v1454
    %v1521 = vunpack.c.l.b16 %v1455
    %v1522 = vunpack.c.h.b16 %v1455
    %v1523 = vunpack.c.l.b16 %v1456
    %v1524 = vunpack.c.h.b16 %v1456
    %v1525 = vunpack.c.l.b16 %v1457
    %v1526 = vunpack.c.h.b16 %v1457
    %v1527 = vunpack.c.l.b16 %v1458
    %v1528 = vunpack.c.h.b16 %v1458
    %v1529 = vunpack.c.l.b16 %v1459
    %v1530 = vunpack.c.h.b16 %v1459
    %v1531 = vunpack.c.l.b16 %v1460
    %v1532 = vunpack.c.h.b16 %v1460
    %v1533 = vunpack.c.l.b16 %v1461
    %v1534 = vunpack.c.h.b16 %v1461
    %v1535 = vunpack.c.l.b16 %v1462
    %v1536 = vunpack.c.h.b16 %v1462
    %v1537 = vunpack.c.l.b16 %v1463
    %v1538 = vunpack.c.h.b16 %v1463
    %v1539 = vunpack.c.l.b16 %v1464
    %v1540 = vunpack.c.h.b16 %v1464
    %v1541 = vunpack.c.l.b16 %v1465
    %v1542 = vunpack.c.h.b16 %v1465
    %v1543 = vunpack.c.l.b16 %v1466
    %v1544 = vunpack.c.h.b16 %v1466
    %v1545 = vunpack.c.l.b16 %v1467
    %v1546 = vunpack.c.h.b16 %v1467
    %v1547 = vunpack.c.l.b16 %v1468
    %v1548 = vunpack.c.h.b16 %v1468
    %v1549 = vunpack.c.l.b16 %v1469
    %v1550 = vunpack.c.h.b16 %v1469
    %v1551 = vunpack.c.l.b16 %v1470
    %v1552 = vunpack.c.h.b16 %v1470
    %v1553 = vunpack.c.l.b16 %v1471
    %v1554 = vunpack.c.h.b16 %v1471
    %v1555 = vunpack.c.l.b16 %v1472
    %v1556 = vunpack.c.h.b16 %v1472
    %v1557 = vunpack.c.l.b16 %v1473
    %v1558 = vunpack.c.h.b16 %v1473
    %v1559 = vunpack.c.l.b16 %v1474
    %v1560 = vunpack.c.h.b16 %v1474
    %v1561 = vunpack.c.l.b16 %v1475
    %v1562 = vunpack.c.h.b16 %v1475
    %v1563 = vunpack.c.l.b16 %v1476
    %v1564 = vunpack.c.h.b16 %v1476
    %v1565 = vunpack.c.l.b16 %v1477
    %v1566 = vunpack.c.h.b16 %v1477
    %v1567 = vunpack.c.l.b16 %v1478
    %v1568 = vunpack.c.h.b16 %v1478
    %v1569 = vunpack.c.l.b16 %v1479
    %v1570 = vunpack.c.h.b16 %v1479
    %v1571 = vunpack.c.l.b16 %v1480
    %v1572 = vunpack.c.h.b16 %v1480
    %v1573 = vunpack.c.l.b16 %v1481
    %v1574 = vunpack.c.h.b16 %v1481
    %v1575 = vunpack.c.l.b16 %v1482
    %v1576 = vunpack.c.h.b16 %v1482
    %v1577 = vunpack.c.l.b16 %v1483
    %v1578 = vunpack.c.h.b16 %v1483
    %v1579 = vunpack.c.l.b16 %v1484
    %v1580 = vunpack.c.h.b16 %v1484
    %v1581 = vpack.c.b16 %v1525, %v1517
    %v1582 = vpack.c.b16 %v1526, %v1518
    %v1583 = vpack.c.b16 %v1527, %v1519
    %v1584 = vpack.c.b16 %v1528, %v1520
    %v1585 = vpack.c.b16 %v1529, %v1521
    %v1586 = vpack.c.b16 %v1530, %v1522
    %v1587 = vpack.c.b16 %v1531, %v1523
    %v1588 = vpack.c.b16 %v1532, %v1524
    %v1589 = vpack.c.b16 %v1541, %v1533
    %v1590 = vpack.c.b16 %v1542, %v1534
    %v1591 = vpack.c.b16 %v1543, %v1535
    %v1592 = vpack.c.b16 %v1544, %v1536
    %v1593 = vpack.c.b16 %v1545, %v1537
    %v1594 = vpack.c.b16 %v1546, %v1538
    %v1595 = vpack.c.b16 %v1547, %v1539
    %v1596 = vpack.c.b16 %v1548, %v1540
    %v1597 = vpack.c.b16 %v1557, %v1549
    %v1598 = vpack.c.b16 %v1558, %v1550
    %v1599 = vpack.c.b16 %v1559, %v1551
    %v1600 = vpack.c.b16 %v1560, %v1552
    %v1601 = vpack.c.b16 %v1561, %v1553
    %v1602 = vpack.c.b16 %v1562, %v1554
    %v1603 = vpack.c.b16 %v1563, %v1555
    %v1604 = vpack.c.b16 %v1564, %v1556
    %v1605 = vpack.c.b16 %v1573, %v1565
    %v1606 = vpack.c.b16 %v1574, %v1566
    %v1607 = vpack.c.b16 %v1575, %v1567
    %v1608 = vpack.c.b16 %v1576, %v1568
    %v1609 = vpack.c.b16 %v1577, %v1569
    %v1610 = vpack.c.b16 %v1578, %v1570
    %v1611 = vpack.c.b16 %v1579, %v1571
    %v1612 = vpack.c.b16 %v1580, %v1572
    %v1646 = vsel %vm384, %v1442, 0
    %v1649 = vsel %vm384, %v1451, 0
    %1651 = vmatprep.subr.bf16.mxu0 %v1582
    %1652 = vmatpush1.bf16.msra.mxu0 %v1581
    %1653 = vmatprep.subr.bf16.mxu0 %v1590
    %1654 = vmatpush1.bf16.msra.mxu0 %v1589
    %1655 = vmatprep.subr.bf16.mxu0 %v1598
    %1656 = vmatpush1.bf16.msra.mxu0 %v1597
    %1657 = vmatprep.subr.bf16.mxu0 %v1606
    %1658 = vmatpush1.bf16.msra.mxu0 %v1605
    %1659 = vmatprep.subr.bf16.mxu0 0
    %1660 = vmatpush1.bf16.msra.mxu0 0
    %1661 = vmatprep.subr.bf16.mxu0 0
    %1662 = vmatpush1.bf16.msra.mxu0 0
    %1663 = vmatprep.subr.bf16.mxu0 0
    %1664 = vmatpush1.bf16.msra.mxu0 0
    %1665 = vmatprep.subr.bf16.mxu0 0
    %1666 = vmatpush1.bf16.msra.mxu0 0
    %1667 = vmatprep.subr.bf16.mxu0 0
    %1668 = vmatpush1.bf16.msra.mxu0 0
    %1669 = vmatprep.subr.bf16.mxu0 0
    %1670 = vmatpush1.bf16.msra.mxu0 0
    %1671 = vmatprep.subr.bf16.mxu0 0
    %1672 = vmatpush1.bf16.msra.mxu0 0
    %1673 = vmatprep.subr.bf16.mxu0 0
    %1674 = vmatpush1.bf16.msra.mxu0 0
    %1675 = vmatprep.subr.bf16.mxu0 0
    %1676 = vmatpush1.bf16.msra.mxu0 0
    %1677 = vmatprep.subr.bf16.mxu0 0
    %1678 = vmatpush1.bf16.msra.mxu0 0
    %1679 = vmatprep.subr.bf16.mxu0 0
    %1680 = vmatpush1.bf16.msra.mxu0 0
    %1681 = vmatprep.subr.bf16.mxu0 0
    %1682 = vmatpush1.bf16.msra.mxu0 0
    %1683 = vmatprep.mubr.bf16.mxu0 0
    %1684 = vmatmul.mubr.bf16.gmra.mrb[0].mxu0 %v1646
    %v1685 = vpop.f32.mrb[0].mxu0
    %v1686 = vadd.f32 0.0, %v1685
    %v1687 = vpop.f32.mrb[0].mxu0
    %v1688 = vadd.f32 0.0, %v1687
    %v1689 = vpop.f32.mrb[0].mxu0
    %v1690 = vadd.f32 0.0, %v1689
    %v1691 = vpop.f32.mrb[0].mxu0
    %v1692 = vadd.f32 0.0, %v1691
    %1693 = vmatprep.mubr.bf16.mxu0 0
    %1694 = vmatmul.mubr.bf16.gmra.mrb[0].mxu0 %v1649
    %v1695 = vpop.f32.mrb[0].mxu0
    %v1696 = vadd.f32 0.0, %v1695
    %v1697 = vpop.f32.mrb[0].mxu0
    %v1698 = vadd.f32 0.0, %v1697
    %v1699 = vpop.f32.mrb[0].mxu0
    %v1700 = vadd.f32 0.0, %v1699
    %v1701 = vpop.f32.mrb[0].mxu0
    %v1702 = vadd.f32 0.0, %v1701
    %1703 = vdwg.mxu0
    %1704 = vmatprep.subr.bf16.mxu0 %v1584
    %1705 = vmatpush1.bf16.msra.mxu0 %v1583
    %1706 = vmatprep.subr.bf16.mxu0 %v1592
    %1707 = vmatpush1.bf16.msra.mxu0 %v1591
    %1708 = vmatprep.subr.bf16.mxu0 %v1600
    %1709 = vmatpush1.bf16.msra.mxu0 %v1599
    %1710 = vmatprep.subr.bf16.mxu0 %v1608
    %1711 = vmatpush1.bf16.msra.mxu0 %v1607
    %1712 = vmatprep.subr.bf16.mxu0 0
    %1713 = vmatpush1.bf16.msra.mxu0 0
    %1714 = vmatprep.subr.bf16.mxu0 0
    %1715 = vmatpush1.bf16.msra.mxu0 0
    %1716 = vmatprep.subr.bf16.mxu0 0
    %1717 = vmatpush1.bf16.msra.mxu0 0
    %1718 = vmatprep.subr.bf16.mxu0 0
    %1719 = vmatpush1.bf16.msra.mxu0 0
    %1720 = vmatprep.subr.bf16.mxu0 0
    %1721 = vmatpush1.bf16.msra.mxu0 0
    %1722 = vmatprep.subr.bf16.mxu0 0
    %1723 = vmatpush1.bf16.msra.mxu0 0
    %1724 = vmatprep.subr.bf16.mxu0 0
    %1725 = vmatpush1.bf16.msra.mxu0 0
    %1726 = vmatprep.subr.bf16.mxu0 0
    %1727 = vmatpush1.bf16.msra.mxu0 0
    %1728 = vmatprep.subr.bf16.mxu0 0
    %1729 = vmatpush1.bf16.msra.mxu0 0
    %1730 = vmatprep.subr.bf16.mxu0 0
    %1731 = vmatpush1.bf16.msra.mxu0 0
    %1732 = vmatprep.subr.bf16.mxu0 0
    %1733 = vmatpush1.bf16.msra.mxu0 0
    %1734 = vmatprep.subr.bf16.mxu0 0
    %1735 = vmatpush1.bf16.msra.mxu0 0
    %1736 = vmatprep.mubr.bf16.mxu0 0
    %1737 = vmatmul.mubr.bf16.gmra.mrb[0].mxu0 %v1646
    %v1738 = vpop.f32.mrb[0].mxu0
    %v1739 = vadd.f32 0.0, %v1738
    %v1740 = vpop.f32.mrb[0].mxu0
    %v1741 = vadd.f32 0.0, %v1740
    %v1742 = vpop.f32.mrb[0].mxu0
    %v1743 = vadd.f32 0.0, %v1742
    %v1744 = vpop.f32.mrb[0].mxu0
    %v1745 = vadd.f32 0.0, %v1744
    %1746 = vmatprep.mubr.bf16.mxu0 0
    %1747 = vmatmul.mubr.bf16.gmra.mrb[0].mxu0 %v1649
    %v1748 = vpop.f32.mrb[0].mxu0
    %v1749 = vadd.f32 0.0, %v1748
    %v1750 = vpop.f32.mrb[0].mxu0
    %v1751 = vadd.f32 0.0, %v1750
    %v1752 = vpop.f32.mrb[0].mxu0
    %v1753 = vadd.f32 0.0, %v1752
    %v1754 = vpop.f32.mrb[0].mxu0
    %v1755 = vadd.f32 0.0, %v1754
    %1756 = vdwg.mxu0
    %1757 = vmatprep.subr.bf16.mxu0 %v1586
    %1758 = vmatpush1.bf16.msra.mxu0 %v1585
    %1759 = vmatprep.subr.bf16.mxu0 %v1594
    %1760 = vmatpush1.bf16.msra.mxu0 %v1593
    %1761 = vmatprep.subr.bf16.mxu0 %v1602
    %1762 = vmatpush1.bf16.msra.mxu0 %v1601
    %1763 = vmatprep.subr.bf16.mxu0 %v1610
    %1764 = vmatpush1.bf16.msra.mxu0 %v1609
    %1765 = vmatprep.subr.bf16.mxu0 0
    %1766 = vmatpush1.bf16.msra.mxu0 0
    %1767 = vmatprep.subr.bf16.mxu0 0
    %1768 = vmatpush1.bf16.msra.mxu0 0
    %1769 = vmatprep.subr.bf16.mxu0 0
    %1770 = vmatpush1.bf16.msra.mxu0 0
    %1771 = vmatprep.subr.bf16.mxu0 0
    %1772 = vmatpush1.bf16.msra.mxu0 0
    %1773 = vmatprep.subr.bf16.mxu0 0
    %1774 = vmatpush1.bf16.msra.mxu0 0
    %1775 = vmatprep.subr.bf16.mxu0 0
    %1776 = vmatpush1.bf16.msra.mxu0 0
    %1777 = vmatprep.subr.bf16.mxu0 0
    %1778 = vmatpush1.bf16.msra.mxu0 0
    %1779 = vmatprep.subr.bf16.mxu0 0
    %1780 = vmatpush1.bf16.msra.mxu0 0
    %1781 = vmatprep.subr.bf16.mxu0 0
    %1782 = vmatpush1.bf16.msra.mxu0 0
    %1783 = vmatprep.subr.bf16.mxu0 0
    %1784 = vmatpush1.bf16.msra.mxu0 0
    %1785 = vmatprep.subr.bf16.mxu0 0
    %1786 = vmatpush1.bf16.msra.mxu0 0
    %1787 = vmatprep.subr.bf16.mxu0 0
    %1788 = vmatpush1.bf16.msra.mxu0 0
    %1789 = vmatprep.mubr.bf16.mxu0 0
    %1790 = vmatmul.mubr.bf16.gmra.mrb[0].mxu0 %v1646
    %v1791 = vpop.f32.mrb[0].mxu0
    %v1792 = vadd.f32 0.0, %v1791
    %v1793 = vpop.f32.mrb[0].mxu0
    %v1794 = vadd.f32 0.0, %v1793
    %v1795 = vpop.f32.mrb[0].mxu0
    %v1796 = vadd.f32 0.0, %v1795
    %v1797 = vpop.f32.mrb[0].mxu0
    %v1798 = vadd.f32 0.0, %v1797
    %1799 = vmatprep.mubr.bf16.mxu0 0
    %1800 = vmatmul.mubr.bf16.gmra.mrb[0].mxu0 %v1649
    %v1801 = vpop.f32.mrb[0].mxu0
    %v1802 = vadd.f32 0.0, %v1801
    %v1803 = vpop.f32.mrb[0].mxu0
    %v1804 = vadd.f32 0.0, %v1803
    %v1805 = vpop.f32.mrb[0].mxu0
    %v1806 = vadd.f32 0.0, %v1805
    %v1807 = vpop.f32.mrb[0].mxu0
    %v1808 = vadd.f32 0.0, %v1807
    %1809 = vdwg.mxu0
    %1810 = vmatprep.subr.bf16.mxu0 %v1588
    %1811 = vmatpush1.bf16.msra.mxu0 %v1587
    %1812 = vmatprep.subr.bf16.mxu0 %v1596
    %1813 = vmatpush1.bf16.msra.mxu0 %v1595
    %1814 = vmatprep.subr.bf16.mxu0 %v1604
    %1815 = vmatpush1.bf16.msra.mxu0 %v1603
    %1816 = vmatprep.subr.bf16.mxu0 %v1612
    %1817 = vmatpush1.bf16.msra.mxu0 %v1611
    %1818 = vmatprep.subr.bf16.mxu0 0
    %1819 = vmatpush1.bf16.msra.mxu0 0
    %1820 = vmatprep.subr.bf16.mxu0 0
    %1821 = vmatpush1.bf16.msra.mxu0 0
    %1822 = vmatprep.subr.bf16.mxu0 0
    %1823 = vmatpush1.bf16.msra.mxu0 0
    %1824 = vmatprep.subr.bf16.mxu0 0
    %1825 = vmatpush1.bf16.msra.mxu0 0
    %1826 = vmatprep.subr.bf16.mxu0 0
    %1827 = vmatpush1.bf16.msra.mxu0 0
    %1828 = vmatprep.subr.bf16.mxu0 0
    %1829 = vmatpush1.bf16.msra.mxu0 0
    %1830 = vmatprep.subr.bf16.mxu0 0
    %1831 = vmatpush1.bf16.msra.mxu0 0
    %1832 = vmatprep.subr.bf16.mxu0 0
    %1833 = vmatpush1.bf16.msra.mxu0 0
    %1834 = vmatprep.subr.bf16.mxu0 0
    %1835 = vmatpush1.bf16.msra.mxu0 0
    %1836 = vmatprep.subr.bf16.mxu0 0
    %1837 = vmatpush1.bf16.msra.mxu0 0
    %1838 = vmatprep.subr.bf16.mxu0 0
    %1839 = vmatpush1.bf16.msra.mxu0 0
    %1840 = vmatprep.subr.bf16.mxu0 0
    %1841 = vmatpush1.bf16.msra.mxu0 0
    %1842 = vmatprep.mubr.bf16.mxu0 0
    %1843 = vmatmul.mubr.bf16.gmra.mrb[0].mxu0 %v1646
    %v1844 = vpop.f32.mrb[0].mxu0
    %v1845 = vadd.f32 0.0, %v1844
    %v1846 = vpop.f32.mrb[0].mxu0
    %v1847 = vadd.f32 0.0, %v1846
    %v1848 = vpop.f32.mrb[0].mxu0
    %v1849 = vadd.f32 0.0, %v1848
    %v1850 = vpop.f32.mrb[0].mxu0
    %v1851 = vadd.f32 0.0, %v1850
    %1852 = vmatprep.mubr.bf16.mxu0 0
    %1853 = vmatmul.mubr.bf16.gmra.mrb[0].mxu0 %v1649
    %v1854 = vpop.f32.mrb[0].mxu0
    %v1855 = vadd.f32 0.0, %v1854
    %v1856 = vpop.f32.mrb[0].mxu0
    %v1857 = vadd.f32 0.0, %v1856
    %v1858 = vpop.f32.mrb[0].mxu0
    %v1859 = vadd.f32 0.0, %v1858
    %v1860 = vpop.f32.mrb[0].mxu0
    %v1861 = vadd.f32 0.0, %v1860
    %1862 = vdwg.mxu0
    %v1863 = vadd.f32 %v1401, %v1686
    %v1864 = vadd.f32 %v1402, %v1688
    %v1865 = vadd.f32 %v1403, %v1739
    %v1866 = vadd.f32 %v1404, %v1741
    %v1867 = vadd.f32 %v1405, %v1792
    %v1868 = vadd.f32 %v1406, %v1794
    %v1869 = vadd.f32 %v1407, %v1845
    %v1870 = vadd.f32 %v1408, %v1847
    %v1871 = vadd.f32 %v1409, %v1690
    %v1872 = vadd.f32 %v1410, %v1692
    %v1873 = vadd.f32 %v1411, %v1743
    %v1874 = vadd.f32 %v1412, %v1745
    %v1875 = vadd.f32 %v1413, %v1796
    %v1876 = vadd.f32 %v1414, %v1798
    %v1877 = vadd.f32 %v1415, %v1849
    %v1878 = vadd.f32 %v1416, %v1851
    %v1879 = vadd.f32 %v1417, %v1696
    %v1880 = vadd.f32 %v1418, %v1698
    %v1881 = vadd.f32 %v1419, %v1749
    %v1882 = vadd.f32 %v1420, %v1751
    %v1883 = vadd.f32 %v1421, %v1802
    %v1884 = vadd.f32 %v1422, %v1804
    %v1885 = vadd.f32 %v1423, %v1855
    %v1886 = vadd.f32 %v1424, %v1857
    %v1887 = vadd.f32 %v1425, %v1700
    %v1888 = vadd.f32 %v1426, %v1702
    %v1889 = vadd.f32 %v1427, %v1753
    %v1890 = vadd.f32 %v1428, %v1755
    %v1891 = vadd.f32 %v1429, %v1806
    %v1892 = vadd.f32 %v1430, %v1808
    %v1893 = vadd.f32 %v1431, %v1859
    %v1894 = vadd.f32 %v1432, %v1861
    %vm1895 = vcmask 1045504
    %v1896 = vrot.slane %v133, 2
    %v1897 = vrot.slane %v136, 2
    %v1898 = vsel %vm1895, %v1896, %v1897
    %v1899 = vrot.slane %v135, 2
    %v1900 = vrot.slane %v137, 2
    %v1901 = vsel %vm1895, %v1899, %v1900
    %s1902 = scalar_lea.vmem [#allocation5], 1024
    %v1903 = vld [vmem:[%s1902] sm:$0xff]
    %v1904 = vld [vmem:[%s1902 + $0x8] sm:$0xff]
    %v1905 = vld [vmem:[%s1902 + $0x10] sm:$0xff]
    %v1906 = vld [vmem:[%s1902 + $0x18] sm:$0xff]
    %v1907 = vld [vmem:[%s1902 + $0x20] sm:$0xff]
    %v1908 = vld [vmem:[%s1902 + $0x28] sm:$0xff]
    %v1909 = vld [vmem:[%s1902 + $0x30] sm:$0xff]
    %v1910 = vld [vmem:[%s1902 + $0x38] sm:$0xff]
    %v1911 = vld [vmem:[%s1902 + $0x40] sm:$0xff]
    %v1912 = vld [vmem:[%s1902 + $0x48] sm:$0xff]
    %v1913 = vld [vmem:[%s1902 + $0x50] sm:$0xff]
    %v1914 = vld [vmem:[%s1902 + $0x58] sm:$0xff]
    %v1915 = vld [vmem:[%s1902 + $0x60] sm:$0xff]
    %v1916 = vld [vmem:[%s1902 + $0x68] sm:$0xff]
    %v1917 = vld [vmem:[%s1902 + $0x70] sm:$0xff]
    %v1918 = vld [vmem:[%s1902 + $0x78] sm:$0xff]
    %v1919 = vld [vmem:[%s1902 + $0x80] sm:$0xff]
    %v1920 = vld [vmem:[%s1902 + $0x88] sm:$0xff]
    %v1921 = vld [vmem:[%s1902 + $0x90] sm:$0xff]
    %v1922 = vld [vmem:[%s1902 + $0x98] sm:$0xff]
    %v1923 = vld [vmem:[%s1902 + $0xa0] sm:$0xff]
    %v1924 = vld [vmem:[%s1902 + $0xa8] sm:$0xff]
    %v1925 = vld [vmem:[%s1902 + $0xb0] sm:$0xff]
    %v1926 = vld [vmem:[%s1902 + $0xb8] sm:$0xff]
    %v1927 = vld [vmem:[%s1902 + $0xc0] sm:$0xff]
    %v1928 = vld [vmem:[%s1902 + $0xc8] sm:$0xff]
    %v1929 = vld [vmem:[%s1902 + $0xd0] sm:$0xff]
    %v1930 = vld [vmem:[%s1902 + $0xd8] sm:$0xff]
    %v1931 = vld [vmem:[%s1902 + $0xe0] sm:$0xff]
    %v1932 = vld [vmem:[%s1902 + $0xe8] sm:$0xff]
    %v1933 = vld [vmem:[%s1902 + $0xf0] sm:$0xff]
    %v1934 = vld [vmem:[%s1902 + $0xf8] sm:$0xff]
    %v1967 = vunpack.c.l.b16 %v1903
    %v1968 = vunpack.c.h.b16 %v1903
    %v1969 = vunpack.c.l.b16 %v1904
    %v1970 = vunpack.c.h.b16 %v1904
    %v1971 = vunpack.c.l.b16 %v1905
    %v1972 = vunpack.c.h.b16 %v1905
    %v1973 = vunpack.c.l.b16 %v1906
    %v1974 = vunpack.c.h.b16 %v1906
    %v1975 = vunpack.c.l.b16 %v1907
    %v1976 = vunpack.c.h.b16 %v1907
    %v1977 = vunpack.c.l.b16 %v1908
    %v1978 = vunpack.c.h.b16 %v1908
    %v1979 = vunpack.c.l.b16 %v1909
    %v1980 = vunpack.c.h.b16 %v1909
    %v1981 = vunpack.c.l.b16 %v1910
    %v1982 = vunpack.c.h.b16 %v1910
    %v1983 = vunpack.c.l.b16 %v1911
    %v1984 = vunpack.c.h.b16 %v1911
    %v1985 = vunpack.c.l.b16 %v1912
    %v1986 = vunpack.c.h.b16 %v1912
    %v1987 = vunpack.c.l.b16 %v1913
    %v1988 = vunpack.c.h.b16 %v1913
    %v1989 = vunpack.c.l.b16 %v1914
    %v1990 = vunpack.c.h.b16 %v1914
    %v1991 = vunpack.c.l.b16 %v1915
    %v1992 = vunpack.c.h.b16 %v1915
    %v1993 = vunpack.c.l.b16 %v1916
    %v1994 = vunpack.c.h.b16 %v1916
    %v1995 = vunpack.c.l.b16 %v1917
    %v1996 = vunpack.c.h.b16 %v1917
    %v1997 = vunpack.c.l.b16 %v1918
    %v1998 = vunpack.c.h.b16 %v1918
    %v1999 = vunpack.c.l.b16 %v1919
    %v2000 = vunpack.c.h.b16 %v1919
    %v2001 = vunpack.c.l.b16 %v1920
    %v2002 = vunpack.c.h.b16 %v1920
    %v2003 = vunpack.c.l.b16 %v1921
    %v2004 = vunpack.c.h.b16 %v1921
    %v2005 = vunpack.c.l.b16 %v1922
    %v2006 = vunpack.c.h.b16 %v1922
    %v2007 = vunpack.c.l.b16 %v1923
    %v2008 = vunpack.c.h.b16 %v1923
    %v2009 = vunpack.c.l.b16 %v1924
    %v2010 = vunpack.c.h.b16 %v1924
    %v2011 = vunpack.c.l.b16 %v1925
    %v2012 = vunpack.c.h.b16 %v1925
    %v2013 = vunpack.c.l.b16 %v1926
    %v2014 = vunpack.c.h.b16 %v1926
    %v2015 = vunpack.c.l.b16 %v1927
    %v2016 = vunpack.c.h.b16 %v1927
    %v2017 = vunpack.c.l.b16 %v1928
    %v2018 = vunpack.c.h.b16 %v1928
    %v2019 = vunpack.c.l.b16 %v1929
    %v2020 = vunpack.c.h.b16 %v1929
    %v2021 = vunpack.c.l.b16 %v1930
    %v2022 = vunpack.c.h.b16 %v1930
    %v2023 = vunpack.c.l.b16 %v1931
    %v2024 = vunpack.c.h.b16 %v1931
    %v2025 = vunpack.c.l.b16 %v1932
    %v2026 = vunpack.c.h.b16 %v1932
    %v2027 = vunpack.c.l.b16 %v1933
    %v2028 = vunpack.c.h.b16 %v1933
    %v2029 = vunpack.c.l.b16 %v1934
    %v2030 = vunpack.c.h.b16 %v1934
    %v2031 = vpack.c.b16 %v1975, %v1967
    %v2032 = vpack.c.b16 %v1976, %v1968
    %v2033 = vpack.c.b16 %v1977, %v1969
    %v2034 = vpack.c.b16 %v1978, %v1970
    %v2035 = vpack.c.b16 %v1979, %v1971
    %v2036 = vpack.c.b16 %v1980, %v1972
    %v2037 = vpack.c.b16 %v1981, %v1973
    %v2038 = vpack.c.b16 %v1982, %v1974
    %v2039 = vpack.c.b16 %v1991, %v1983
    %v2040 = vpack.c.b16 %v1992, %v1984
    %v2041 = vpack.c.b16 %v1993, %v1985
    %v2042 = vpack.c.b16 %v1994, %v1986
    %v2043 = vpack.c.b16 %v1995, %v1987
    %v2044 = vpack.c.b16 %v1996, %v1988
    %v2045 = vpack.c.b16 %v1997, %v1989
    %v2046 = vpack.c.b16 %v1998, %v1990
    %v2047 = vpack.c.b16 %v2007, %v1999
    %v2048 = vpack.c.b16 %v2008, %v2000
    %v2049 = vpack.c.b16 %v2009, %v2001
    %v2050 = vpack.c.b16 %v2010, %v2002
    %v2051 = vpack.c.b16 %v2011, %v2003
    %v2052 = vpack.c.b16 %v2012, %v2004
    %v2053 = vpack.c.b16 %v2013, %v2005
    %v2054 = vpack.c.b16 %v2014, %v2006
    %v2055 = vpack.c.b16 %v2023, %v2015
    %v2056 = vpack.c.b16 %v2024, %v2016
    %v2057 = vpack.c.b16 %v2025, %v2017
    %v2058 = vpack.c.b16 %v2026, %v2018
    %v2059 = vpack.c.b16 %v2027, %v2019
    %v2060 = vpack.c.b16 %v2028, %v2020
    %v2061 = vpack.c.b16 %v2029, %v2021
    %v2062 = vpack.c.b16 %v2030, %v2022
    %v2096 = vsel %vm384, %v1898, 0
    %v2099 = vsel %vm384, %v1901, 0
    %2101 = vmatprep.subr.bf16.mxu0 %v2032
    %2102 = vmatpush1.bf16.msra.mxu0 %v2031
    %2103 = vmatprep.subr.bf16.mxu0 %v2040
    %2104 = vmatpush1.bf16.msra.mxu0 %v2039
    %2105 = vmatprep.subr.bf16.mxu0 %v2048
    %2106 = vmatpush1.bf16.msra.mxu0 %v2047
    %2107 = vmatprep.subr.bf16.mxu0 %v2056
    %2108 = vmatpush1.bf16.msra.mxu0 %v2055
    %2109 = vmatprep.subr.bf16.mxu0 0
    %2110 = vmatpush1.bf16.msra.mxu0 0
    %2111 = vmatprep.subr.bf16.mxu0 0
    %2112 = vmatpush1.bf16.msra.mxu0 0
    %2113 = vmatprep.subr.bf16.mxu0 0
    %2114 = vmatpush1.bf16.msra.mxu0 0
    %2115 = vmatprep.subr.bf16.mxu0 0
    %2116 = vmatpush1.bf16.msra.mxu0 0
    %2117 = vmatprep.subr.bf16.mxu0 0
    %2118 = vmatpush1.bf16.msra.mxu0 0
    %2119 = vmatprep.subr.bf16.mxu0 0
    %2120 = vmatpush1.bf16.msra.mxu0 0
    %2121 = vmatprep.subr.bf16.mxu0 0
    %2122 = vmatpush1.bf16.msra.mxu0 0
    %2123 = vmatprep.subr.bf16.mxu0 0
    %2124 = vmatpush1.bf16.msra.mxu0 0
    %2125 = vmatprep.subr.bf16.mxu0 0
    %2126 = vmatpush1.bf16.msra.mxu0 0
    %2127 = vmatprep.subr.bf16.mxu0 0
    %2128 = vmatpush1.bf16.msra.mxu0 0
    %2129 = vmatprep.subr.bf16.mxu0 0
    %2130 = vmatpush1.bf16.msra.mxu0 0
    %2131 = vmatprep.subr.bf16.mxu0 0
    %2132 = vmatpush1.bf16.msra.mxu0 0
    %2133 = vmatprep.mubr.bf16.mxu0 0
    %2134 = vmatmul.mubr.bf16.gmra.mrb[0].mxu0 %v2096
    %v2135 = vpop.f32.mrb[0].mxu0
    %v2136 = vadd.f32 0.0, %v2135
    %v2137 = vpop.f32.mrb[0].mxu0
    %v2138 = vadd.f32 0.0, %v2137
    %v2139 = vpop.f32.mrb[0].mxu0
    %v2140 = vadd.f32 0.0, %v2139
    %v2141 = vpop.f32.mrb[0].mxu0
    %v2142 = vadd.f32 0.0, %v2141
    %2143 = vmatprep.mubr.bf16.mxu0 0
    %2144 = vmatmul.mubr.bf16.gmra.mrb[0].mxu0 %v2099
    %v2145 = vpop.f32.mrb[0].mxu0
    %v2146 = vadd.f32 0.0, %v2145
    %v2147 = vpop.f32.mrb[0].mxu0
    %v2148 = vadd.f32 0.0, %v2147
    %v2149 = vpop.f32.mrb[0].mxu0
    %v2150 = vadd.f32 0.0, %v2149
    %v2151 = vpop.f32.mrb[0].mxu0
    %v2152 = vadd.f32 0.0, %v2151
    %2153 = vdwg.mxu0
    %2154 = vmatprep.subr.bf16.mxu0 %v2034
    %2155 = vmatpush1.bf16.msra.mxu0 %v2033
    %2156 = vmatprep.subr.bf16.mxu0 %v2042
    %2157 = vmatpush1.bf16.msra.mxu0 %v2041
    %2158 = vmatprep.subr.bf16.mxu0 %v2050
    %2159 = vmatpush1.bf16.msra.mxu0 %v2049
    %2160 = vmatprep.subr.bf16.mxu0 %v2058
    %2161 = vmatpush1.bf16.msra.mxu0 %v2057
    %2162 = vmatprep.subr.bf16.mxu0 0
    %2163 = vmatpush1.bf16.msra.mxu0 0
    %2164 = vmatprep.subr.bf16.mxu0 0
    %2165 = vmatpush1.bf16.msra.mxu0 0
    %2166 = vmatprep.subr.bf16.mxu0 0
    %2167 = vmatpush1.bf16.msra.mxu0 0
    %2168 = vmatprep.subr.bf16.mxu0 0
    %2169 = vmatpush1.bf16.msra.mxu0 0
    %2170 = vmatprep.subr.bf16.mxu0 0
    %2171 = vmatpush1.bf16.msra.mxu0 0
    %2172 = vmatprep.subr.bf16.mxu0 0
    %2173 = vmatpush1.bf16.msra.mxu0 0
    %2174 = vmatprep.subr.bf16.mxu0 0
    %2175 = vmatpush1.bf16.msra.mxu0 0
    %2176 = vmatprep.subr.bf16.mxu0 0
    %2177 = vmatpush1.bf16.msra.mxu0 0
    %2178 = vmatprep.subr.bf16.mxu0 0
    %2179 = vmatpush1.bf16.msra.mxu0 0
    %2180 = vmatprep.subr.bf16.mxu0 0
    %2181 = vmatpush1.bf16.msra.mxu0 0
    %2182 = vmatprep.subr.bf16.mxu0 0
    %2183 = vmatpush1.bf16.msra.mxu0 0
    %2184 = vmatprep.subr.bf16.mxu0 0
    %2185 = vmatpush1.bf16.msra.mxu0 0
    %2186 = vmatprep.mubr.bf16.mxu0 0
    %2187 = vmatmul.mubr.bf16.gmra.mrb[0].mxu0 %v2096
    %v2188 = vpop.f32.mrb[0].mxu0
    %v2189 = vadd.f32 0.0, %v2188
    %v2190 = vpop.f32.mrb[0].mxu0
    %v2191 = vadd.f32 0.0, %v2190
    %v2192 = vpop.f32.mrb[0].mxu0
    %v2193 = vadd.f32 0.0, %v2192
    %v2194 = vpop.f32.mrb[0].mxu0
    %v2195 = vadd.f32 0.0, %v2194
    %2196 = vmatprep.mubr.bf16.mxu0 0
    %2197 = vmatmul.mubr.bf16.gmra.mrb[0].mxu0 %v2099
    %v2198 = vpop.f32.mrb[0].mxu0
    %v2199 = vadd.f32 0.0, %v2198
    %v2200 = vpop.f32.mrb[0].mxu0
    %v2201 = vadd.f32 0.0, %v2200
    %v2202 = vpop.f32.mrb[0].mxu0
    %v2203 = vadd.f32 0.0, %v2202
    %v2204 = vpop.f32.mrb[0].mxu0
    %v2205 = vadd.f32 0.0, %v2204
    %2206 = vdwg.mxu0
    %2207 = vmatprep.subr.bf16.mxu0 %v2036
    %2208 = vmatpush1.bf16.msra.mxu0 %v2035
    %2209 = vmatprep.subr.bf16.mxu0 %v2044
    %2210 = vmatpush1.bf16.msra.mxu0 %v2043
    %2211 = vmatprep.subr.bf16.mxu0 %v2052
    %2212 = vmatpush1.bf16.msra.mxu0 %v2051
    %2213 = vmatprep.subr.bf16.mxu0 %v2060
    %2214 = vmatpush1.bf16.msra.mxu0 %v2059
    %2215 = vmatprep.subr.bf16.mxu0 0
    %2216 = vmatpush1.bf16.msra.mxu0 0
    %2217 = vmatprep.subr.bf16.mxu0 0
    %2218 = vmatpush1.bf16.msra.mxu0 0
    %2219 = vmatprep.subr.bf16.mxu0 0
    %2220 = vmatpush1.bf16.msra.mxu0 0
    %2221 = vmatprep.subr.bf16.mxu0 0
    %2222 = vmatpush1.bf16.msra.mxu0 0
    %2223 = vmatprep.subr.bf16.mxu0 0
    %2224 = vmatpush1.bf16.msra.mxu0 0
    %2225 = vmatprep.subr.bf16.mxu0 0
    %2226 = vmatpush1.bf16.msra.mxu0 0
    %2227 = vmatprep.subr.bf16.mxu0 0
    %2228 = vmatpush1.bf16.msra.mxu0 0
    %2229 = vmatprep.subr.bf16.mxu0 0
    %2230 = vmatpush1.bf16.msra.mxu0 0
    %2231 = vmatprep.subr.bf16.mxu0 0
    %2232 = vmatpush1.bf16.msra.mxu0 0
    %2233 = vmatprep.subr.bf16.mxu0 0
    %2234 = vmatpush1.bf16.msra.mxu0 0
    %2235 = vmatprep.subr.bf16.mxu0 0
    %2236 = vmatpush1.bf16.msra.mxu0 0
    %2237 = vmatprep.subr.bf16.mxu0 0
    %2238 = vmatpush1.bf16.msra.mxu0 0
    %2239 = vmatprep.mubr.bf16.mxu0 0
    %2240 = vmatmul.mubr.bf16.gmra.mrb[0].mxu0 %v2096
    %v2241 = vpop.f32.mrb[0].mxu0
    %v2242 = vadd.f32 0.0, %v2241
    %v2243 = vpop.f32.mrb[0].mxu0
    %v2244 = vadd.f32 0.0, %v2243
    %v2245 = vpop.f32.mrb[0].mxu0
    %v2246 = vadd.f32 0.0, %v2245
    %v2247 = vpop.f32.mrb[0].mxu0
    %v2248 = vadd.f32 0.0, %v2247
    %2249 = vmatprep.mubr.bf16.mxu0 0
    %2250 = vmatmul.mubr.bf16.gmra.mrb[0].mxu0 %v2099
    %v2251 = vpop.f32.mrb[0].mxu0
    %v2252 = vadd.f32 0.0, %v2251
    %v2253 = vpop.f32.mrb[0].mxu0
    %v2254 = vadd.f32 0.0, %v2253
    %v2255 = vpop.f32.mrb[0].mxu0
    %v2256 = vadd.f32 0.0, %v2255
    %v2257 = vpop.f32.mrb[0].mxu0
    %v2258 = vadd.f32 0.0, %v2257
    %2259 = vdwg.mxu0
    %2260 = vmatprep.subr.bf16.mxu0 %v2038
    %2261 = vmatpush1.bf16.msra.mxu0 %v2037
    %2262 = vmatprep.subr.bf16.mxu0 %v2046
    %2263 = vmatpush1.bf16.msra.mxu0 %v2045
    %2264 = vmatprep.subr.bf16.mxu0 %v2054
    %2265 = vmatpush1.bf16.msra.mxu0 %v2053
    %2266 = vmatprep.subr.bf16.mxu0 %v2062
    %2267 = vmatpush1.bf16.msra.mxu0 %v2061
    %2268 = vmatprep.subr.bf16.mxu0 0
    %2269 = vmatpush1.bf16.msra.mxu0 0
    %2270 = vmatprep.subr.bf16.mxu0 0
    %2271 = vmatpush1.bf16.msra.mxu0 0
    %2272 = vmatprep.subr.bf16.mxu0 0
    %2273 = vmatpush1.bf16.msra.mxu0 0
    %2274 = vmatprep.subr.bf16.mxu0 0
    %2275 = vmatpush1.bf16.msra.mxu0 0
    %2276 = vmatprep.subr.bf16.mxu0 0
    %2277 = vmatpush1.bf16.msra.mxu0 0
    %2278 = vmatprep.subr.bf16.mxu0 0
    %2279 = vmatpush1.bf16.msra.mxu0 0
    %2280 = vmatprep.subr.bf16.mxu0 0
    %2281 = vmatpush1.bf16.msra.mxu0 0
    %2282 = vmatprep.subr.bf16.mxu0 0
    %2283 = vmatpush1.bf16.msra.mxu0 0
    %2284 = vmatprep.subr.bf16.mxu0 0
    %2285 = vmatpush1.bf16.msra.mxu0 0
    %2286 = vmatprep.subr.bf16.mxu0 0
    %2287 = vmatpush1.bf16.msra.mxu0 0
    %2288 = vmatprep.subr.bf16.mxu0 0
    %2289 = vmatpush1.bf16.msra.mxu0 0
    %2290 = vmatprep.subr.bf16.mxu0 0
    %2291 = vmatpush1.bf16.msra.mxu0 0
    %2292 = vmatprep.mubr.bf16.mxu0 0
    %2293 = vmatmul.mubr.bf16.gmra.mrb[0].mxu0 %v2096
    %v2294 = vpop.f32.mrb[0].mxu0
    %v2295 = vadd.f32 0.0, %v2294
    %v2296 = vpop.f32.mrb[0].mxu0
    %v2297 = vadd.f32 0.0, %v2296
    %v2298 = vpop.f32.mrb[0].mxu0
    %v2299 = vadd.f32 0.0, %v2298
    %v2300 = vpop.f32.mrb[0].mxu0
    %v2301 = vadd.f32 0.0, %v2300
    %2302 = vmatprep.mubr.bf16.mxu0 0
    %2303 = vmatmul.mubr.bf16.gmra.mrb[0].mxu0 %v2099
    %v2304 = vpop.f32.mrb[0].mxu0
    %v2305 = vadd.f32 0.0, %v2304
    %v2306 = vpop.f32.mrb[0].mxu0
    %v2307 = vadd.f32 0.0, %v2306
    %v2308 = vpop.f32.mrb[0].mxu0
    %v2309 = vadd.f32 0.0, %v2308
    %v2310 = vpop.f32.mrb[0].mxu0
    %v2311 = vadd.f32 0.0, %v2310
    %2312 = vdwg.mxu0
    %v2313 = vadd.f32 %v1863, %v2136
    %v2314 = vadd.f32 %v1864, %v2138
    %v2315 = vadd.f32 %v1865, %v2189
    %v2316 = vadd.f32 %v1866, %v2191
    %v2317 = vadd.f32 %v1867, %v2242
    %v2318 = vadd.f32 %v1868, %v2244
    %v2319 = vadd.f32 %v1869, %v2295
    %v2320 = vadd.f32 %v1870, %v2297
    %v2321 = vadd.f32 %v1871, %v2140
    %v2322 = vadd.f32 %v1872, %v2142
    %v2323 = vadd.f32 %v1873, %v2193
    %v2324 = vadd.f32 %v1874, %v2195
    %v2325 = vadd.f32 %v1875, %v2246
    %v2326 = vadd.f32 %v1876, %v2248
    %v2327 = vadd.f32 %v1877, %v2299
    %v2328 = vadd.f32 %v1878, %v2301
    %v2329 = vadd.f32 %v1879, %v2146
    %v2330 = vadd.f32 %v1880, %v2148
    %v2331 = vadd.f32 %v1881, %v2199
    %v2332 = vadd.f32 %v1882, %v2201
    %v2333 = vadd.f32 %v1883, %v2252
    %v2334 = vadd.f32 %v1884, %v2254
    %v2335 = vadd.f32 %v1885, %v2305
    %v2336 = vadd.f32 %v1886, %v2307
    %v2337 = vadd.f32 %v1887, %v2150
    %v2338 = vadd.f32 %v1888, %v2152
    %v2339 = vadd.f32 %v1889, %v2203
    %v2340 = vadd.f32 %v1890, %v2205
    %v2341 = vadd.f32 %v1891, %v2256
    %v2342 = vadd.f32 %v1892, %v2258
    %v2343 = vadd.f32 %v1893, %v2309
    %v2344 = vadd.f32 %v1894, %v2311
    %v2345 = vld [vmem:[#allocation7] sm:$0xff]
    %v2347 = vlaneseq
    %v2348 = vshrl.u32 %v2347, 7
    %v2349 = vsub.s32 0, %v2348
    %v2350 = vrot.slane %v2345, %v2349
    %v2351 = vlaneseq
    %v2352 = vshrl.u32 %v2351, 7
    %v2353 = vsub.s32 1, %v2352
    %v2354 = vrot.slane %v2345, %v2353
    %v2355 = vlaneseq
    %v2356 = vshrl.u32 %v2355, 7
    %v2357 = vsub.s32 2, %v2356
    %v2358 = vrot.slane %v2345, %v2357
    %v2359 = vlaneseq
    %v2360 = vshrl.u32 %v2359, 7
    %v2361 = vsub.s32 3, %v2360
    %v2362 = vrot.slane %v2345, %v2361
    %v2363 = vlaneseq
    %v2364 = vshrl.u32 %v2363, 7
    %v2365 = vsub.s32 4, %v2364
    %v2366 = vrot.slane %v2345, %v2365
    %v2367 = vlaneseq
    %v2368 = vshrl.u32 %v2367, 7
    %v2369 = vsub.s32 5, %v2368
    %v2370 = vrot.slane %v2345, %v2369
    %v2371 = vlaneseq
    %v2372 = vshrl.u32 %v2371, 7
    %v2373 = vsub.s32 6, %v2372
    %v2374 = vrot.slane %v2345, %v2373
    %v2375 = vlaneseq
    %v2376 = vshrl.u32 %v2375, 7
    %v2377 = vsub.s32 7, %v2376
    %v2378 = vrot.slane %v2345, %v2377
    %v2387 = vadd.f32 %v2313, %v2350
    %v2388 = vadd.f32 %v2314, %v2354
    %v2389 = vadd.f32 %v2315, %v2358
    %v2390 = vadd.f32 %v2316, %v2362
    %v2391 = vadd.f32 %v2317, %v2366
    %v2392 = vadd.f32 %v2318, %v2370
    %v2393 = vadd.f32 %v2319, %v2374
    %v2394 = vadd.f32 %v2320, %v2378
    %v2395 = vadd.f32 %v2321, %v2350
    %v2396 = vadd.f32 %v2322, %v2354
    %v2397 = vadd.f32 %v2323, %v2358
    %v2398 = vadd.f32 %v2324, %v2362
    %v2399 = vadd.f32 %v2325, %v2366
    %v2400 = vadd.f32 %v2326, %v2370
    %v2401 = vadd.f32 %v2327, %v2374
    %v2402 = vadd.f32 %v2328, %v2378
    %v2403 = vadd.f32 %v2329, %v2350
    %v2404 = vadd.f32 %v2330, %v2354
    %v2405 = vadd.f32 %v2331, %v2358
    %v2406 = vadd.f32 %v2332, %v2362
    %v2407 = vadd.f32 %v2333, %v2366
    %v2408 = vadd.f32 %v2334, %v2370
    %v2409 = vadd.f32 %v2335, %v2374
    %v2410 = vadd.f32 %v2336, %v2378
    %v2411 = vadd.f32 %v2337, %v2350
    %v2412 = vadd.f32 %v2338, %v2354
    %v2413 = vadd.f32 %v2339, %v2358
    %v2414 = vadd.f32 %v2340, %v2362
    %v2415 = vadd.f32 %v2341, %v2366
    %v2416 = vadd.f32 %v2342, %v2370
    %v2417 = vadd.f32 %v2343, %v2374
    %v2418 = vadd.f32 %v2344, %v2378
    %v2419 = vmax.f32 %v2387, 0.0
    %v2420 = vmax.f32 %v2388, 0.0
    %v2421 = vmax.f32 %v2389, 0.0
    %v2422 = vmax.f32 %v2390, 0.0
    %v2423 = vmax.f32 %v2391, 0.0
    %v2424 = vmax.f32 %v2392, 0.0
    %v2425 = vmax.f32 %v2393, 0.0
    %v2426 = vmax.f32 %v2394, 0.0
    %v2427 = vmax.f32 %v2395, 0.0
    %v2428 = vmax.f32 %v2396, 0.0
    %v2429 = vmax.f32 %v2397, 0.0
    %v2430 = vmax.f32 %v2398, 0.0
    %v2431 = vmax.f32 %v2399, 0.0
    %v2432 = vmax.f32 %v2400, 0.0
    %v2433 = vmax.f32 %v2401, 0.0
    %v2434 = vmax.f32 %v2402, 0.0
    %v2435 = vmax.f32 %v2403, 0.0
    %v2436 = vmax.f32 %v2404, 0.0
    %v2437 = vmax.f32 %v2405, 0.0
    %v2438 = vmax.f32 %v2406, 0.0
    %v2439 = vmax.f32 %v2407, 0.0
    %v2440 = vmax.f32 %v2408, 0.0
    %v2441 = vmax.f32 %v2409, 0.0
    %v2442 = vmax.f32 %v2410, 0.0
    %v2443 = vmax.f32 %v2411, 0.0
    %v2444 = vmax.f32 %v2412, 0.0
    %v2445 = vmax.f32 %v2413, 0.0
    %v2446 = vmax.f32 %v2414, 0.0
    %v2447 = vmax.f32 %v2415, 0.0
    %v2448 = vmax.f32 %v2416, 0.0
    %v2449 = vmax.f32 %v2417, 0.0
    %v2450 = vmax.f32 %v2418, 0.0
    %v2451 = vpack.c.bf16 %v2427, %v2419
    %v2452 = vpack.c.bf16 %v2428, %v2420
    %v2453 = vpack.c.bf16 %v2429, %v2421
    %v2454 = vpack.c.bf16 %v2430, %v2422
    %v2455 = vpack.c.bf16 %v2443, %v2435
    %v2456 = vpack.c.bf16 %v2444, %v2436
    %v2457 = vpack.c.bf16 %v2445, %v2437
    %v2458 = vpack.c.bf16 %v2446, %v2438
    %v2459 = vpack.c.bf16 %v2431, %v2423
    %v2460 = vpack.c.bf16 %v2432, %v2424
    %v2461 = vpack.c.bf16 %v2433, %v2425
    %v2462 = vpack.c.bf16 %v2434, %v2426
    %v2463 = vpack.c.bf16 %v2447, %v2439
    %v2464 = vpack.c.bf16 %v2448, %v2440
    %v2465 = vpack.c.bf16 %v2449, %v2441
    %v2466 = vpack.c.bf16 %v2450, %v2442
    %v2467 = vld [vmem:[#allocation8] sm:$0xff]
    %v2468 = vld [vmem:[#allocation8 + $0x8] sm:$0xff]
    %v2469 = vld [vmem:[#allocation8 + $0x10] sm:$0xff]
    %v2470 = vld [vmem:[#allocation8 + $0x18] sm:$0xff]
    %v2471 = vld [vmem:[#allocation8 + $0x20] sm:$0xff]
    %v2472 = vld [vmem:[#allocation8 + $0x28] sm:$0xff]
    %v2473 = vld [vmem:[#allocation8 + $0x30] sm:$0xff]
    %v2474 = vld [vmem:[#allocation8 + $0x38] sm:$0xff]
    %v2475 = vld [vmem:[#allocation8 + $0x40] sm:$0xff]
    %v2476 = vld [vmem:[#allocation8 + $0x48] sm:$0xff]
    %v2477 = vld [vmem:[#allocation8 + $0x50] sm:$0xff]
    %v2478 = vld [vmem:[#allocation8 + $0x58] sm:$0xff]
    %v2479 = vld [vmem:[#allocation8 + $0x60] sm:$0xff]
    %v2480 = vld [vmem:[#allocation8 + $0x68] sm:$0xff]
    %v2481 = vld [vmem:[#allocation8 + $0x70] sm:$0xff]
    %v2482 = vld [vmem:[#allocation8 + $0x78] sm:$0xff]
    %v2483 = vld [vmem:[#allocation8 + $0x80] sm:$0xff]
    %v2484 = vld [vmem:[#allocation8 + $0x88] sm:$0xff]
    %v2485 = vld [vmem:[#allocation8 + $0x90] sm:$0xff]
    %v2486 = vld [vmem:[#allocation8 + $0x98] sm:$0xff]
    %v2487 = vld [vmem:[#allocation8 + $0xa0] sm:$0xff]
    %v2488 = vld [vmem:[#allocation8 + $0xa8] sm:$0xff]
    %v2489 = vld [vmem:[#allocation8 + $0xb0] sm:$0xff]
    %v2490 = vld [vmem:[#allocation8 + $0xb8] sm:$0xff]
    %v2491 = vld [vmem:[#allocation8 + $0xc0] sm:$0xff]
    %v2492 = vld [vmem:[#allocation8 + $0xc8] sm:$0xff]
    %v2493 = vld [vmem:[#allocation8 + $0xd0] sm:$0xff]
    %v2494 = vld [vmem:[#allocation8 + $0xd8] sm:$0xff]
    %v2495 = vld [vmem:[#allocation8 + $0xe0] sm:$0xff]
    %v2496 = vld [vmem:[#allocation8 + $0xe8] sm:$0xff]
    %v2497 = vld [vmem:[#allocation8 + $0xf0] sm:$0xff]
    %v2498 = vld [vmem:[#allocation8 + $0xf8] sm:$0xff]
    %v2499 = vld [vmem:[#allocation8 + $0x100] sm:$0xff]
    %v2500 = vld [vmem:[#allocation8 + $0x108] sm:$0xff]
    %v2501 = vld [vmem:[#allocation8 + $0x110] sm:$0xff]
    %v2502 = vld [vmem:[#allocation8 + $0x118] sm:$0xff]
    %v2503 = vld [vmem:[#allocation8 + $0x120] sm:$0xff]
    %v2504 = vld [vmem:[#allocation8 + $0x128] sm:$0xff]
    %v2505 = vld [vmem:[#allocation8 + $0x130] sm:$0xff]
    %v2506 = vld [vmem:[#allocation8 + $0x138] sm:$0xff]
    %v2507 = vld [vmem:[#allocation8 + $0x140] sm:$0xff]
    %v2508 = vld [vmem:[#allocation8 + $0x148] sm:$0xff]
    %v2509 = vld [vmem:[#allocation8 + $0x150] sm:$0xff]
    %v2510 = vld [vmem:[#allocation8 + $0x158] sm:$0xff]
    %v2511 = vld [vmem:[#allocation8 + $0x160] sm:$0xff]
    %v2512 = vld [vmem:[#allocation8 + $0x168] sm:$0xff]
    %v2513 = vld [vmem:[#allocation8 + $0x170] sm:$0xff]
    %v2514 = vld [vmem:[#allocation8 + $0x178] sm:$0xff]
    %v2515 = vld [vmem:[#allocation8 + $0x180] sm:$0xff]
    %v2516 = vld [vmem:[#allocation8 + $0x188] sm:$0xff]
    %v2517 = vld [vmem:[#allocation8 + $0x190] sm:$0xff]
    %v2518 = vld [vmem:[#allocation8 + $0x198] sm:$0xff]
    %v2519 = vld [vmem:[#allocation8 + $0x1a0] sm:$0xff]
    %v2520 = vld [vmem:[#allocation8 + $0x1a8] sm:$0xff]
    %v2521 = vld [vmem:[#allocation8 + $0x1b0] sm:$0xff]
    %v2522 = vld [vmem:[#allocation8 + $0x1b8] sm:$0xff]
    %v2523 = vld [vmem:[#allocation8 + $0x1c0] sm:$0xff]
    %v2524 = vld [vmem:[#allocation8 + $0x1c8] sm:$0xff]
    %v2525 = vld [vmem:[#allocation8 + $0x1d0] sm:$0xff]
    %v2526 = vld [vmem:[#allocation8 + $0x1d8] sm:$0xff]
    %v2527 = vld [vmem:[#allocation8 + $0x1e0] sm:$0xff]
    %v2528 = vld [vmem:[#allocation8 + $0x1e8] sm:$0xff]
    %v2529 = vld [vmem:[#allocation8 + $0x1f0] sm:$0xff]
    %v2530 = vld [vmem:[#allocation8 + $0x1f8] sm:$0xff]
    %v2531 = vld [vmem:[#allocation8 + $0x200] sm:$0xff]
    %v2532 = vld [vmem:[#allocation8 + $0x208] sm:$0xff]
    %v2533 = vld [vmem:[#allocation8 + $0x210] sm:$0xff]
    %v2534 = vld [vmem:[#allocation8 + $0x218] sm:$0xff]
    %v2535 = vld [vmem:[#allocation8 + $0x220] sm:$0xff]
    %v2536 = vld [vmem:[#allocation8 + $0x228] sm:$0xff]
    %v2537 = vld [vmem:[#allocation8 + $0x230] sm:$0xff]
    %v2538 = vld [vmem:[#allocation8 + $0x238] sm:$0xff]
    %v2539 = vld [vmem:[#allocation8 + $0x240] sm:$0xff]
    %v2540 = vld [vmem:[#allocation8 + $0x248] sm:$0xff]
    %v2541 = vld [vmem:[#allocation8 + $0x250] sm:$0xff]
    %v2542 = vld [vmem:[#allocation8 + $0x258] sm:$0xff]
    %v2543 = vld [vmem:[#allocation8 + $0x260] sm:$0xff]
    %v2544 = vld [vmem:[#allocation8 + $0x268] sm:$0xff]
    %v2545 = vld [vmem:[#allocation8 + $0x270] sm:$0xff]
    %v2546 = vld [vmem:[#allocation8 + $0x278] sm:$0xff]
    %v2547 = vld [vmem:[#allocation8 + $0x280] sm:$0xff]
    %v2548 = vld [vmem:[#allocation8 + $0x288] sm:$0xff]
    %v2549 = vld [vmem:[#allocation8 + $0x290] sm:$0xff]
    %v2550 = vld [vmem:[#allocation8 + $0x298] sm:$0xff]
    %v2551 = vld [vmem:[#allocation8 + $0x2a0] sm:$0xff]
    %v2552 = vld [vmem:[#allocation8 + $0x2a8] sm:$0xff]
    %v2553 = vld [vmem:[#allocation8 + $0x2b0] sm:$0xff]
    %v2554 = vld [vmem:[#allocation8 + $0x2b8] sm:$0xff]
    %v2555 = vld [vmem:[#allocation8 + $0x2c0] sm:$0xff]
    %v2556 = vld [vmem:[#allocation8 + $0x2c8] sm:$0xff]
    %v2557 = vld [vmem:[#allocation8 + $0x2d0] sm:$0xff]
    %v2558 = vld [vmem:[#allocation8 + $0x2d8] sm:$0xff]
    %v2559 = vld [vmem:[#allocation8 + $0x2e0] sm:$0xff]
    %v2560 = vld [vmem:[#allocation8 + $0x2e8] sm:$0xff]
    %v2561 = vld [vmem:[#allocation8 + $0x2f0] sm:$0xff]
    %v2562 = vld [vmem:[#allocation8 + $0x2f8] sm:$0xff]
    %v2563 = vld [vmem:[#allocation8 + $0x300] sm:$0xff]
    %v2564 = vld [vmem:[#allocation8 + $0x308] sm:$0xff]
    %v2565 = vld [vmem:[#allocation8 + $0x310] sm:$0xff]
    %v2566 = vld [vmem:[#allocation8 + $0x318] sm:$0xff]
    %v2567 = vld [vmem:[#allocation8 + $0x320] sm:$0xff]
    %v2568 = vld [vmem:[#allocation8 + $0x328] sm:$0xff]
    %v2569 = vld [vmem:[#allocation8 + $0x330] sm:$0xff]
    %v2570 = vld [vmem:[#allocation8 + $0x338] sm:$0xff]
    %v2571 = vld [vmem:[#allocation8 + $0x340] sm:$0xff]
    %v2572 = vld [vmem:[#allocation8 + $0x348] sm:$0xff]
    %v2573 = vld [vmem:[#allocation8 + $0x350] sm:$0xff]
    %v2574 = vld [vmem:[#allocation8 + $0x358] sm:$0xff]
    %v2575 = vld [vmem:[#allocation8 + $0x360] sm:$0xff]
    %v2576 = vld [vmem:[#allocation8 + $0x368] sm:$0xff]
    %v2577 = vld [vmem:[#allocation8 + $0x370] sm:$0xff]
    %v2578 = vld [vmem:[#allocation8 + $0x378] sm:$0xff]
    %v2579 = vld [vmem:[#allocation8 + $0x380] sm:$0xff]
    %v2580 = vld [vmem:[#allocation8 + $0x388] sm:$0xff]
    %v2581 = vld [vmem:[#allocation8 + $0x390] sm:$0xff]
    %v2582 = vld [vmem:[#allocation8 + $0x398] sm:$0xff]
    %v2583 = vld [vmem:[#allocation8 + $0x3a0] sm:$0xff]
    %v2584 = vld [vmem:[#allocation8 + $0x3a8] sm:$0xff]
    %v2585 = vld [vmem:[#allocation8 + $0x3b0] sm:$0xff]
    %v2586 = vld [vmem:[#allocation8 + $0x3b8] sm:$0xff]
    %v2587 = vld [vmem:[#allocation8 + $0x3c0] sm:$0xff]
    %v2588 = vld [vmem:[#allocation8 + $0x3c8] sm:$0xff]
    %v2589 = vld [vmem:[#allocation8 + $0x3d0] sm:$0xff]
    %v2590 = vld [vmem:[#allocation8 + $0x3d8] sm:$0xff]
    %v2591 = vld [vmem:[#allocation8 + $0x3e0] sm:$0xff]
    %v2592 = vld [vmem:[#allocation8 + $0x3e8] sm:$0xff]
    %v2593 = vld [vmem:[#allocation8 + $0x3f0] sm:$0xff]
    %v2594 = vld [vmem:[#allocation8 + $0x3f8] sm:$0xff]
    %v2595 = vld [vmem:[%s4] sm:$0xf]
    %v2597 = vlaneseq
    %v2598 = vshrl.u32 %v2597, 7
    %v2599 = vsub.s32 0, %v2598
    %v2600 = vrot.slane %v2595, %v2599
    %v2601 = vlaneseq
    %v2602 = vshrl.u32 %v2601, 7
    %v2603 = vsub.s32 1, %v2602
    %v2604 = vrot.slane %v2595, %v2603
    %v2605 = vlaneseq
    %v2606 = vshrl.u32 %v2605, 7
    %v2607 = vsub.s32 2, %v2606
    %v2608 = vrot.slane %v2595, %v2607
    %v2609 = vlaneseq
    %v2610 = vshrl.u32 %v2609, 7
    %v2611 = vsub.s32 3, %v2610
    %v2612 = vrot.slane %v2595, %v2611
    %v2745 = vunpack.c.l.b16 %v2467
    %v2746 = vunpack.c.h.b16 %v2467
    %v2747 = vunpack.c.l.b16 %v2468
    %v2748 = vunpack.c.h.b16 %v2468
    %v2749 = vunpack.c.l.b16 %v2469
    %v2750 = vunpack.c.h.b16 %v2469
    %v2751 = vunpack.c.l.b16 %v2470
    %v2752 = vunpack.c.h.b16 %v2470
    %v2753 = vunpack.c.l.b16 %v2471
    %v2754 = vunpack.c.h.b16 %v2471
    %v2755 = vunpack.c.l.b16 %v2472
    %v2756 = vunpack.c.h.b16 %v2472
    %v2757 = vunpack.c.l.b16 %v2473
    %v2758 = vunpack.c.h.b16 %v2473
    %v2759 = vunpack.c.l.b16 %v2474
    %v2760 = vunpack.c.h.b16 %v2474
    %v2761 = vunpack.c.l.b16 %v2475
    %v2762 = vunpack.c.h.b16 %v2475
    %v2763 = vunpack.c.l.b16 %v2476
    %v2764 = vunpack.c.h.b16 %v2476
    %v2765 = vunpack.c.l.b16 %v2477
    %v2766 = vunpack.c.h.b16 %v2477
    %v2767 = vunpack.c.l.b16 %v2478
    %v2768 = vunpack.c.h.b16 %v2478
    %v2769 = vunpack.c.l.b16 %v2479
    %v2770 = vunpack.c.h.b16 %v2479
    %v2771 = vunpack.c.l.b16 %v2480
    %v2772 = vunpack.c.h.b16 %v2480
    %v2773 = vunpack.c.l.b16 %v2481
    %v2774 = vunpack.c.h.b16 %v2481
    %v2775 = vunpack.c.l.b16 %v2482
    %v2776 = vunpack.c.h.b16 %v2482
    %v2777 = vunpack.c.l.b16 %v2483
    %v2778 = vunpack.c.h.b16 %v2483
    %v2779 = vunpack.c.l.b16 %v2484
    %v2780 = vunpack.c.h.b16 %v2484
    %v2781 = vunpack.c.l.b16 %v2485
    %v2782 = vunpack.c.h.b16 %v2485
    %v2783 = vunpack.c.l.b16 %v2486
    %v2784 = vunpack.c.h.b16 %v2486
    %v2785 = vunpack.c.l.b16 %v2487
    %v2786 = vunpack.c.h.b16 %v2487
    %v2787 = vunpack.c.l.b16 %v2488
    %v2788 = vunpack.c.h.b16 %v2488
    %v2789 = vunpack.c.l.b16 %v2489
    %v2790 = vunpack.c.h.b16 %v2489
    %v2791 = vunpack.c.l.b16 %v2490
    %v2792 = vunpack.c.h.b16 %v2490
    %v2793 = vunpack.c.l.b16 %v2491
    %v2794 = vunpack.c.h.b16 %v2491
    %v2795 = vunpack.c.l.b16 %v2492
    %v2796 = vunpack.c.h.b16 %v2492
    %v2797 = vunpack.c.l.b16 %v2493
    %v2798 = vunpack.c.h.b16 %v2493
    %v2799 = vunpack.c.l.b16 %v2494
    %v2800 = vunpack.c.h.b16 %v2494
    %v2801 = vunpack.c.l.b16 %v2495
    %v2802 = vunpack.c.h.b16 %v2495
    %v2803 = vunpack.c.l.b16 %v2496
    %v2804 = vunpack.c.h.b16 %v2496
    %v2805 = vunpack.c.l.b16 %v2497
    %v2806 = vunpack.c.h.b16 %v2497
    %v2807 = vunpack.c.l.b16 %v2498
    %v2808 = vunpack.c.h.b16 %v2498
    %v2809 = vunpack.c.l.b16 %v2499
    %v2810 = vunpack.c.h.b16 %v2499
    %v2811 = vunpack.c.l.b16 %v2500
    %v2812 = vunpack.c.h.b16 %v2500
    %v2813 = vunpack.c.l.b16 %v2501
    %v2814 = vunpack.c.h.b16 %v2501
    %v2815 = vunpack.c.l.b16 %v2502
    %v2816 = vunpack.c.h.b16 %v2502
    %v2817 = vunpack.c.l.b16 %v2503
    %v2818 = vunpack.c.h.b16 %v2503
    %v2819 = vunpack.c.l.b16 %v2504
    %v2820 = vunpack.c.h.b16 %v2504
    %v2821 = vunpack.c.l.b16 %v2505
    %v2822 = vunpack.c.h.b16 %v2505
    %v2823 = vunpack.c.l.b16 %v2506
    %v2824 = vunpack.c.h.b16 %v2506
    %v2825 = vunpack.c.l.b16 %v2507
    %v2826 = vunpack.c.h.b16 %v2507
    %v2827 = vunpack.c.l.b16 %v2508
    %v2828 = vunpack.c.h.b16 %v2508
    %v2829 = vunpack.c.l.b16 %v2509
    %v2830 = vunpack.c.h.b16 %v2509
    %v2831 = vunpack.c.l.b16 %v2510
    %v2832 = vunpack.c.h.b16 %v2510
    %v2833 = vunpack.c.l.b16 %v2511
    %v2834 = vunpack.c.h.b16 %v2511
    %v2835 = vunpack.c.l.b16 %v2512
    %v2836 = vunpack.c.h.b16 %v2512
    %v2837 = vunpack.c.l.b16 %v2513
    %v2838 = vunpack.c.h.b16 %v2513
    %v2839 = vunpack.c.l.b16 %v2514
    %v2840 = vunpack.c.h.b16 %v2514
    %v2841 = vunpack.c.l.b16 %v2515
    %v2842 = vunpack.c.h.b16 %v2515
    %v2843 = vunpack.c.l.b16 %v2516
    %v2844 = vunpack.c.h.b16 %v2516
    %v2845 = vunpack.c.l.b16 %v2517
    %v2846 = vunpack.c.h.b16 %v2517
    %v2847 = vunpack.c.l.b16 %v2518
    %v2848 = vunpack.c.h.b16 %v2518
    %v2849 = vunpack.c.l.b16 %v2519
    %v2850 = vunpack.c.h.b16 %v2519
    %v2851 = vunpack.c.l.b16 %v2520
    %v2852 = vunpack.c.h.b16 %v2520
    %v2853 = vunpack.c.l.b16 %v2521
    %v2854 = vunpack.c.h.b16 %v2521
    %v2855 = vunpack.c.l.b16 %v2522
    %v2856 = vunpack.c.h.b16 %v2522
    %v2857 = vunpack.c.l.b16 %v2523
    %v2858 = vunpack.c.h.b16 %v2523
    %v2859 = vunpack.c.l.b16 %v2524
    %v2860 = vunpack.c.h.b16 %v2524
    %v2861 = vunpack.c.l.b16 %v2525
    %v2862 = vunpack.c.h.b16 %v2525
    %v2863 = vunpack.c.l.b16 %v2526
    %v2864 = vunpack.c.h.b16 %v2526
    %v2865 = vunpack.c.l.b16 %v2527
    %v2866 = vunpack.c.h.b16 %v2527
    %v2867 = vunpack.c.l.b16 %v2528
    %v2868 = vunpack.c.h.b16 %v2528
    %v2869 = vunpack.c.l.b16 %v2529
    %v2870 = vunpack.c.h.b16 %v2529
    %v2871 = vunpack.c.l.b16 %v2530
    %v2872 = vunpack.c.h.b16 %v2530
    %v2873 = vunpack.c.l.b16 %v2531
    %v2874 = vunpack.c.h.b16 %v2531
    %v2875 = vunpack.c.l.b16 %v2532
    %v2876 = vunpack.c.h.b16 %v2532
    %v2877 = vunpack.c.l.b16 %v2533
    %v2878 = vunpack.c.h.b16 %v2533
    %v2879 = vunpack.c.l.b16 %v2534
    %v2880 = vunpack.c.h.b16 %v2534
    %v2881 = vunpack.c.l.b16 %v2535
    %v2882 = vunpack.c.h.b16 %v2535
    %v2883 = vunpack.c.l.b16 %v2536
    %v2884 = vunpack.c.h.b16 %v2536
    %v2885 = vunpack.c.l.b16 %v2537
    %v2886 = vunpack.c.h.b16 %v2537
    %v2887 = vunpack.c.l.b16 %v2538
    %v2888 = vunpack.c.h.b16 %v2538
    %v2889 = vunpack.c.l.b16 %v2539
    %v2890 = vunpack.c.h.b16 %v2539
    %v2891 = vunpack.c.l.b16 %v2540
    %v2892 = vunpack.c.h.b16 %v2540
    %v2893 = vunpack.c.l.b16 %v2541
    %v2894 = vunpack.c.h.b16 %v2541
    %v2895 = vunpack.c.l.b16 %v2542
    %v2896 = vunpack.c.h.b16 %v2542
    %v2897 = vunpack.c.l.b16 %v2543
    %v2898 = vunpack.c.h.b16 %v2543
    %v2899 = vunpack.c.l.b16 %v2544
    %v2900 = vunpack.c.h.b16 %v2544
    %v2901 = vunpack.c.l.b16 %v2545
    %v2902 = vunpack.c.h.b16 %v2545
    %v2903 = vunpack.c.l.b16 %v2546
    %v2904 = vunpack.c.h.b16 %v2546
    %v2905 = vunpack.c.l.b16 %v2547
    %v2906 = vunpack.c.h.b16 %v2547
    %v2907 = vunpack.c.l.b16 %v2548
    %v2908 = vunpack.c.h.b16 %v2548
    %v2909 = vunpack.c.l.b16 %v2549
    %v2910 = vunpack.c.h.b16 %v2549
    %v2911 = vunpack.c.l.b16 %v2550
    %v2912 = vunpack.c.h.b16 %v2550
    %v2913 = vunpack.c.l.b16 %v2551
    %v2914 = vunpack.c.h.b16 %v2551
    %v2915 = vunpack.c.l.b16 %v2552
    %v2916 = vunpack.c.h.b16 %v2552
    %v2917 = vunpack.c.l.b16 %v2553
    %v2918 = vunpack.c.h.b16 %v2553
    %v2919 = vunpack.c.l.b16 %v2554
    %v2920 = vunpack.c.h.b16 %v2554
    %v2921 = vunpack.c.l.b16 %v2555
    %v2922 = vunpack.c.h.b16 %v2555
    %v2923 = vunpack.c.l.b16 %v2556
    %v2924 = vunpack.c.h.b16 %v2556
    %v2925 = vunpack.c.l.b16 %v2557
    %v2926 = vunpack.c.h.b16 %v2557
    %v2927 = vunpack.c.l.b16 %v2558
    %v2928 = vunpack.c.h.b16 %v2558
    %v2929 = vunpack.c.l.b16 %v2559
    %v2930 = vunpack.c.h.b16 %v2559
    %v2931 = vunpack.c.l.b16 %v2560
    %v2932 = vunpack.c.h.b16 %v2560
    %v2933 = vunpack.c.l.b16 %v2561
    %v2934 = vunpack.c.h.b16 %v2561
    %v2935 = vunpack.c.l.b16 %v2562
    %v2936 = vunpack.c.h.b16 %v2562
    %v2937 = vunpack.c.l.b16 %v2563
    %v2938 = vunpack.c.h.b16 %v2563
    %v2939 = vunpack.c.l.b16 %v2564
    %v2940 = vunpack.c.h.b16 %v2564
    %v2941 = vunpack.c.l.b16 %v2565
    %v2942 = vunpack.c.h.b16 %v2565
    %v2943 = vunpack.c.l.b16 %v2566
    %v2944 = vunpack.c.h.b16 %v2566
    %v2945 = vunpack.c.l.b16 %v2567
    %v2946 = vunpack.c.h.b16 %v2567
    %v2947 = vunpack.c.l.b16 %v2568
    %v2948 = vunpack.c.h.b16 %v2568
    %v2949 = vunpack.c.l.b16 %v2569
    %v2950 = vunpack.c.h.b16 %v2569
    %v2951 = vunpack.c.l.b16 %v2570
    %v2952 = vunpack.c.h.b16 %v2570
    %v2953 = vunpack.c.l.b16 %v2571
    %v2954 = vunpack.c.h.b16 %v2571
    %v2955 = vunpack.c.l.b16 %v2572
    %v2956 = vunpack.c.h.b16 %v2572
    %v2957 = vunpack.c.l.b16 %v2573
    %v2958 = vunpack.c.h.b16 %v2573
    %v2959 = vunpack.c.l.b16 %v2574
    %v2960 = vunpack.c.h.b16 %v2574
    %v2961 = vunpack.c.l.b16 %v2575
    %v2962 = vunpack.c.h.b16 %v2575
    %v2963 = vunpack.c.l.b16 %v2576
    %v2964 = vunpack.c.h.b16 %v2576
    %v2965 = vunpack.c.l.b16 %v2577
    %v2966 = vunpack.c.h.b16 %v2577
    %v2967 = vunpack.c.l.b16 %v2578
    %v2968 = vunpack.c.h.b16 %v2578
    %v2969 = vunpack.c.l.b16 %v2579
    %v2970 = vunpack.c.h.b16 %v2579
    %v2971 = vunpack.c.l.b16 %v2580
    %v2972 = vunpack.c.h.b16 %v2580
    %v2973 = vunpack.c.l.b16 %v2581
    %v2974 = vunpack.c.h.b16 %v2581
    %v2975 = vunpack.c.l.b16 %v2582
    %v2976 = vunpack.c.h.b16 %v2582
    %v2977 = vunpack.c.l.b16 %v2583
    %v2978 = vunpack.c.h.b16 %v2583
    %v2979 = vunpack.c.l.b16 %v2584
    %v2980 = vunpack.c.h.b16 %v2584
    %v2981 = vunpack.c.l.b16 %v2585
    %v2982 = vunpack.c.h.b16 %v2585
    %v2983 = vunpack.c.l.b16 %v2586
    %v2984 = vunpack.c.h.b16 %v2586
    %v2985 = vunpack.c.l.b16 %v2587
    %v2986 = vunpack.c.h.b16 %v2587
    %v2987 = vunpack.c.l.b16 %v2588
    %v2988 = vunpack.c.h.b16 %v2588
    %v2989 = vunpack.c.l.b16 %v2589
    %v2990 = vunpack.c.h.b16 %v2589
    %v2991 = vunpack.c.l.b16 %v2590
    %v2992 = vunpack.c.h.b16 %v2590
    %v2993 = vunpack.c.l.b16 %v2591
    %v2994 = vunpack.c.h.b16 %v2591
    %v2995 = vunpack.c.l.b16 %v2592
    %v2996 = vunpack.c.h.b16 %v2592
    %v2997 = vunpack.c.l.b16 %v2593
    %v2998 = vunpack.c.h.b16 %v2593
    %v2999 = vunpack.c.l.b16 %v2594
    %v3000 = vunpack.c.h.b16 %v2594
    %v3001 = vpack.c.b16 %v2749, %v2745
    %v3002 = vpack.c.b16 %v2750, %v2746
    %v3003 = vpack.c.b16 %v2751, %v2747
    %v3004 = vpack.c.b16 %v2752, %v2748
    %v3005 = vpack.c.b16 %v2757, %v2753
    %v3006 = vpack.c.b16 %v2758, %v2754
    %v3007 = vpack.c.b16 %v2759, %v2755
    %v3008 = vpack.c.b16 %v2760, %v2756
    %v3009 = vpack.c.b16 %v2765, %v2761
    %v3010 = vpack.c.b16 %v2766, %v2762
    %v3011 = vpack.c.b16 %v2767, %v2763
    %v3012 = vpack.c.b16 %v2768, %v2764
    %v3013 = vpack.c.b16 %v2773, %v2769
    %v3014 = vpack.c.b16 %v2774, %v2770
    %v3015 = vpack.c.b16 %v2775, %v2771
    %v3016 = vpack.c.b16 %v2776, %v2772
    %v3017 = vpack.c.b16 %v2781, %v2777
    %v3018 = vpack.c.b16 %v2782, %v2778
    %v3019 = vpack.c.b16 %v2783, %v2779
    %v3020 = vpack.c.b16 %v2784, %v2780
    %v3021 = vpack.c.b16 %v2789, %v2785
    %v3022 = vpack.c.b16 %v2790, %v2786
    %v3023 = vpack.c.b16 %v2791, %v2787
    %v3024 = vpack.c.b16 %v2792, %v2788
    %v3025 = vpack.c.b16 %v2797, %v2793
    %v3026 = vpack.c.b16 %v2798, %v2794
    %v3027 = vpack.c.b16 %v2799, %v2795
    %v3028 = vpack.c.b16 %v2800, %v2796
    %v3029 = vpack.c.b16 %v2805, %v2801
    %v3030 = vpack.c.b16 %v2806, %v2802
    %v3031 = vpack.c.b16 %v2807, %v2803
    %v3032 = vpack.c.b16 %v2808, %v2804
    %v3033 = vpack.c.b16 %v2813, %v2809
    %v3034 = vpack.c.b16 %v2814, %v2810
    %v3035 = vpack.c.b16 %v2815, %v2811
    %v3036 = vpack.c.b16 %v2816, %v2812
    %v3037 = vpack.c.b16 %v2821, %v2817
    %v3038 = vpack.c.b16 %v2822, %v2818
    %v3039 = vpack.c.b16 %v2823, %v2819
    %v3040 = vpack.c.b16 %v2824, %v2820
    %v3041 = vpack.c.b16 %v2829, %v2825
    %v3042 = vpack.c.b16 %v2830, %v2826
    %v3043 = vpack.c.b16 %v2831, %v2827
    %v3044 = vpack.c.b16 %v2832, %v2828
    %v3045 = vpack.c.b16 %v2837, %v2833
    %v3046 = vpack.c.b16 %v2838, %v2834
    %v3047 = vpack.c.b16 %v2839, %v2835
    %v3048 = vpack.c.b16 %v2840, %v2836
    %v3049 = vpack.c.b16 %v2845, %v2841
    %v3050 = vpack.c.b16 %v2846, %v2842
    %v3051 = vpack.c.b16 %v2847, %v2843
    %v3052 = vpack.c.b16 %v2848, %v2844
    %v3053 = vpack.c.b16 %v2853, %v2849
    %v3054 = vpack.c.b16 %v2854, %v2850
    %v3055 = vpack.c.b16 %v2855, %v2851
    %v3056 = vpack.c.b16 %v2856, %v2852
    %v3057 = vpack.c.b16 %v2861, %v2857
    %v3058 = vpack.c.b16 %v2862, %v2858
    %v3059 = vpack.c.b16 %v2863, %v2859
    %v3060 = vpack.c.b16 %v2864, %v2860
    %v3061 = vpack.c.b16 %v2869, %v2865
    %v3062 = vpack.c.b16 %v2870, %v2866
    %v3063 = vpack.c.b16 %v2871, %v2867
    %v3064 = vpack.c.b16 %v2872, %v2868
    %v3065 = vpack.c.b16 %v2877, %v2873
    %v3066 = vpack.c.b16 %v2878, %v2874
    %v3067 = vpack.c.b16 %v2879, %v2875
    %v3068 = vpack.c.b16 %v2880, %v2876
    %v3069 = vpack.c.b16 %v2885, %v2881
    %v3070 = vpack.c.b16 %v2886, %v2882
    %v3071 = vpack.c.b16 %v2887, %v2883
    %v3072 = vpack.c.b16 %v2888, %v2884
    %v3073 = vpack.c.b16 %v2893, %v2889
    %v3074 = vpack.c.b16 %v2894, %v2890
    %v3075 = vpack.c.b16 %v2895, %v2891
    %v3076 = vpack.c.b16 %v2896, %v2892
    %v3077 = vpack.c.b16 %v2901, %v2897
    %v3078 = vpack.c.b16 %v2902, %v2898
    %v3079 = vpack.c.b16 %v2903, %v2899
    %v3080 = vpack.c.b16 %v2904, %v2900
    %v3081 = vpack.c.b16 %v2909, %v2905
    %v3082 = vpack.c.b16 %v2910, %v2906
    %v3083 = vpack.c.b16 %v2911, %v2907
    %v3084 = vpack.c.b16 %v2912, %v2908
    %v3085 = vpack.c.b16 %v2917, %v2913
    %v3086 = vpack.c.b16 %v2918, %v2914
    %v3087 = vpack.c.b16 %v2919, %v2915
    %v3088 = vpack.c.b16 %v2920, %v2916
    %v3089 = vpack.c.b16 %v2925, %v2921
    %v3090 = vpack.c.b16 %v2926, %v2922
    %v3091 = vpack.c.b16 %v2927, %v2923
    %v3092 = vpack.c.b16 %v2928, %v2924
    %v3093 = vpack.c.b16 %v2933, %v2929
    %v3094 = vpack.c.b16 %v2934, %v2930
    %v3095 = vpack.c.b16 %v2935, %v2931
    %v3096 = vpack.c.b16 %v2936, %v2932
    %v3097 = vpack.c.b16 %v2941, %v2937
    %v3098 = vpack.c.b16 %v2942, %v2938
    %v3099 = vpack.c.b16 %v2943, %v2939
    %v3100 = vpack.c.b16 %v2944, %v2940
    %v3101 = vpack.c.b16 %v2949, %v2945
    %v3102 = vpack.c.b16 %v2950, %v2946
    %v3103 = vpack.c.b16 %v2951, %v2947
    %v3104 = vpack.c.b16 %v2952, %v2948
    %v3105 = vpack.c.b16 %v2957, %v2953
    %v3106 = vpack.c.b16 %v2958, %v2954
    %v3107 = vpack.c.b16 %v2959, %v2955
    %v3108 = vpack.c.b16 %v2960, %v2956
    %v3109 = vpack.c.b16 %v2965, %v2961
    %v3110 = vpack.c.b16 %v2966, %v2962
    %v3111 = vpack.c.b16 %v2967, %v2963
    %v3112 = vpack.c.b16 %v2968, %v2964
    %v3113 = vpack.c.b16 %v2973, %v2969
    %v3114 = vpack.c.b16 %v2974, %v2970
    %v3115 = vpack.c.b16 %v2975, %v2971
    %v3116 = vpack.c.b16 %v2976, %v2972
    %v3117 = vpack.c.b16 %v2981, %v2977
    %v3118 = vpack.c.b16 %v2982, %v2978
    %v3119 = vpack.c.b16 %v2983, %v2979
    %v3120 = vpack.c.b16 %v2984, %v2980
    %v3121 = vpack.c.b16 %v2989, %v2985
    %v3122 = vpack.c.b16 %v2990, %v2986
    %v3123 = vpack.c.b16 %v2991, %v2987
    %v3124 = vpack.c.b16 %v2992, %v2988
    %v3125 = vpack.c.b16 %v2997, %v2993
    %v3126 = vpack.c.b16 %v2998, %v2994
    %v3127 = vpack.c.b16 %v2999, %v2995
    %v3128 = vpack.c.b16 %v3000, %v2996
    %3257 = vmatprep.subr.bf16.mxu0 %v3002
    %3258 = vmatpush1.bf16.msra.mxu0 %v3001
    %3259 = vmatprep.subr.bf16.mxu0 %v3006
    %3260 = vmatpush1.bf16.msra.mxu0 %v3005
    %3261 = vmatprep.subr.bf16.mxu0 %v3010
    %3262 = vmatpush1.bf16.msra.mxu0 %v3009
    %3263 = vmatprep.subr.bf16.mxu0 %v3014
    %3264 = vmatpush1.bf16.msra.mxu0 %v3013
    %3265 = vmatprep.subr.bf16.mxu0 %v3018
    %3266 = vmatpush1.bf16.msra.mxu0 %v3017
    %3267 = vmatprep.subr.bf16.mxu0 %v3022
    %3268 = vmatpush1.bf16.msra.mxu0 %v3021
    %3269 = vmatprep.subr.bf16.mxu0 %v3026
    %3270 = vmatpush1.bf16.msra.mxu0 %v3025
    %3271 = vmatprep.subr.bf16.mxu0 %v3030
    %3272 = vmatpush1.bf16.msra.mxu0 %v3029
    %3273 = vmatprep.subr.bf16.mxu0 %v3034
    %3274 = vmatpush1.bf16.msra.mxu0 %v3033
    %3275 = vmatprep.subr.bf16.mxu0 %v3038
    %3276 = vmatpush1.bf16.msra.mxu0 %v3037
    %3277 = vmatprep.subr.bf16.mxu0 %v3042
    %3278 = vmatpush1.bf16.msra.mxu0 %v3041
    %3279 = vmatprep.subr.bf16.mxu0 %v3046
    %3280 = vmatpush1.bf16.msra.mxu0 %v3045
    %3281 = vmatprep.subr.bf16.mxu0 %v3050
    %3282 = vmatpush1.bf16.msra.mxu0 %v3049
    %3283 = vmatprep.subr.bf16.mxu0 %v3054
    %3284 = vmatpush1.bf16.msra.mxu0 %v3053
    %3285 = vmatprep.subr.bf16.mxu0 %v3058
    %3286 = vmatpush1.bf16.msra.mxu0 %v3057
    %3287 = vmatprep.subr.bf16.mxu0 %v3062
    %3288 = vmatpush1.bf16.msra.mxu0 %v3061
    %3289 = vmatprep.mubr.bf16.mxu0 %v2452
    %3290 = vmatmul.mubr.bf16.gmra.mrb[0].mxu0 %v2451
    %v3291 = vpop.f32.mrb[0].mxu0
    %v3292 = vadd.f32 %v2600, %v3291
    %v3293 = vpop.f32.mrb[0].mxu0
    %v3294 = vadd.f32 %v2604, %v3293
    %v3295 = vpop.f32.mrb[0].mxu0
    %v3296 = vadd.f32 %v2600, %v3295
    %v3297 = vpop.f32.mrb[0].mxu0
    %v3298 = vadd.f32 %v2604, %v3297
    %3299 = vmatprep.mubr.bf16.mxu0 %v2456
    %3300 = vmatmul.mubr.bf16.gmra.mrb[0].mxu0 %v2455
    %v3301 = vpop.f32.mrb[0].mxu0
    %v3302 = vadd.f32 %v2600, %v3301
    %v3303 = vpop.f32.mrb[0].mxu0
    %v3304 = vadd.f32 %v2604, %v3303
    %v3305 = vpop.f32.mrb[0].mxu0
    %v3306 = vadd.f32 %v2600, %v3305
    %v3307 = vpop.f32.mrb[0].mxu0
    %v3308 = vadd.f32 %v2604, %v3307
    %3309 = vdwg.mxu0
    %3310 = vmatprep.subr.bf16.mxu0 %v3066
    %3311 = vmatpush1.bf16.msra.mxu0 %v3065
    %3312 = vmatprep.subr.bf16.mxu0 %v3070
    %3313 = vmatpush1.bf16.msra.mxu0 %v3069
    %3314 = vmatprep.subr.bf16.mxu0 %v3074
    %3315 = vmatpush1.bf16.msra.mxu0 %v3073
    %3316 = vmatprep.subr.bf16.mxu0 %v3078
    %3317 = vmatpush1.bf16.msra.mxu0 %v3077
    %3318 = vmatprep.subr.bf16.mxu0 %v3082
    %3319 = vmatpush1.bf16.msra.mxu0 %v3081
    %3320 = vmatprep.subr.bf16.mxu0 %v3086
    %3321 = vmatpush1.bf16.msra.mxu0 %v3085
    %3322 = vmatprep.subr.bf16.mxu0 %v3090
    %3323 = vmatpush1.bf16.msra.mxu0 %v3089
    %3324 = vmatprep.subr.bf16.mxu0 %v3094
    %3325 = vmatpush1.bf16.msra.mxu0 %v3093
    %3326 = vmatprep.subr.bf16.mxu0 %v3098
    %3327 = vmatpush1.bf16.msra.mxu0 %v3097
    %3328 = vmatprep.subr.bf16.mxu0 %v3102
    %3329 = vmatpush1.bf16.msra.mxu0 %v3101
    %3330 = vmatprep.subr.bf16.mxu0 %v3106
    %3331 = vmatpush1.bf16.msra.mxu0 %v3105
    %3332 = vmatprep.subr.bf16.mxu0 %v3110
    %3333 = vmatpush1.bf16.msra.mxu0 %v3109
    %3334 = vmatprep.subr.bf16.mxu0 %v3114
    %3335 = vmatpush1.bf16.msra.mxu0 %v3113
    %3336 = vmatprep.subr.bf16.mxu0 %v3118
    %3337 = vmatpush1.bf16.msra.mxu0 %v3117
    %3338 = vmatprep.subr.bf16.mxu0 %v3122
    %3339 = vmatpush1.bf16.msra.mxu0 %v3121
    %3340 = vmatprep.subr.bf16.mxu0 %v3126
    %3341 = vmatpush1.bf16.msra.mxu0 %v3125
    %3342 = vmatprep.mubr.bf16.mxu0 %v2454
    %3343 = vmatmul.mubr.bf16.gmra.mrb[0].mxu0 %v2453
    %v3344 = vpop.f32.mrb[0].mxu0
    %v3345 = vadd.f32 %v3292, %v3344
    %v3346 = vpop.f32.mrb[0].mxu0
    %v3347 = vadd.f32 %v3294, %v3346
    %v3348 = vpop.f32.mrb[0].mxu0
    %v3349 = vadd.f32 %v3296, %v3348
    %v3350 = vpop.f32.mrb[0].mxu0
    %v3351 = vadd.f32 %v3298, %v3350
    %3352 = vmatprep.mubr.bf16.mxu0 %v2458
    %3353 = vmatmul.mubr.bf16.gmra.mrb[0].mxu0 %v2457
    %v3354 = vpop.f32.mrb[0].mxu0
    %v3355 = vadd.f32 %v3302, %v3354
    %v3356 = vpop.f32.mrb[0].mxu0
    %v3357 = vadd.f32 %v3304, %v3356
    %v3358 = vpop.f32.mrb[0].mxu0
    %v3359 = vadd.f32 %v3306, %v3358
    %v3360 = vpop.f32.mrb[0].mxu0
    %v3361 = vadd.f32 %v3308, %v3360
    %3362 = vdwg.mxu0
    %3363 = vmatprep.subr.bf16.mxu0 %v3004
    %3364 = vmatpush1.bf16.msra.mxu0 %v3003
    %3365 = vmatprep.subr.bf16.mxu0 %v3008
    %3366 = vmatpush1.bf16.msra.mxu0 %v3007
    %3367 = vmatprep.subr.bf16.mxu0 %v3012
    %3368 = vmatpush1.bf16.msra.mxu0 %v3011
    %3369 = vmatprep.subr.bf16.mxu0 %v3016
    %3370 = vmatpush1.bf16.msra.mxu0 %v3015
    %3371 = vmatprep.subr.bf16.mxu0 %v3020
    %3372 = vmatpush1.bf16.msra.mxu0 %v3019
    %3373 = vmatprep.subr.bf16.mxu0 %v3024
    %3374 = vmatpush1.bf16.msra.mxu0 %v3023
    %3375 = vmatprep.subr.bf16.mxu0 %v3028
    %3376 = vmatpush1.bf16.msra.mxu0 %v3027
    %3377 = vmatprep.subr.bf16.mxu0 %v3032
    %3378 = vmatpush1.bf16.msra.mxu0 %v3031
    %3379 = vmatprep.subr.bf16.mxu0 %v3036
    %3380 = vmatpush1.bf16.msra.mxu0 %v3035
    %3381 = vmatprep.subr.bf16.mxu0 %v3040
    %3382 = vmatpush1.bf16.msra.mxu0 %v3039
    %3383 = vmatprep.subr.bf16.mxu0 %v3044
    %3384 = vmatpush1.bf16.msra.mxu0 %v3043
    %3385 = vmatprep.subr.bf16.mxu0 %v3048
    %3386 = vmatpush1.bf16.msra.mxu0 %v3047
    %3387 = vmatprep.subr.bf16.mxu0 %v3052
    %3388 = vmatpush1.bf16.msra.mxu0 %v3051
    %3389 = vmatprep.subr.bf16.mxu0 %v3056
    %3390 = vmatpush1.bf16.msra.mxu0 %v3055
    %3391 = vmatprep.subr.bf16.mxu0 %v3060
    %3392 = vmatpush1.bf16.msra.mxu0 %v3059
    %3393 = vmatprep.subr.bf16.mxu0 %v3064
    %3394 = vmatpush1.bf16.msra.mxu0 %v3063
    %3395 = vmatprep.mubr.bf16.mxu0 %v2452
    %3396 = vmatmul.mubr.bf16.gmra.mrb[0].mxu0 %v2451
    %v3397 = vpop.f32.mrb[0].mxu0
    %v3398 = vadd.f32 %v2608, %v3397
    %v3399 = vpop.f32.mrb[0].mxu0
    %v3400 = vadd.f32 %v2612, %v3399
    %v3401 = vpop.f32.mrb[0].mxu0
    %v3402 = vadd.f32 %v2608, %v3401
    %v3403 = vpop.f32.mrb[0].mxu0
    %v3404 = vadd.f32 %v2612, %v3403
    %3405 = vmatprep.mubr.bf16.mxu0 %v2456
    %3406 = vmatmul.mubr.bf16.gmra.mrb[0].mxu0 %v2455
    %v3407 = vpop.f32.mrb[0].mxu0
    %v3408 = vadd.f32 %v2608, %v3407
    %v3409 = vpop.f32.mrb[0].mxu0
    %v3410 = vadd.f32 %v2612, %v3409
    %v3411 = vpop.f32.mrb[0].mxu0
    %v3412 = vadd.f32 %v2608, %v3411
    %v3413 = vpop.f32.mrb[0].mxu0
    %v3414 = vadd.f32 %v2612, %v3413
    %3415 = vdwg.mxu0
    %3416 = vmatprep.subr.bf16.mxu0 %v3068
    %3417 = vmatpush1.bf16.msra.mxu0 %v3067
    %3418 = vmatprep.subr.bf16.mxu0 %v3072
    %3419 = vmatpush1.bf16.msra.mxu0 %v3071
    %3420 = vmatprep.subr.bf16.mxu0 %v3076
    %3421 = vmatpush1.bf16.msra.mxu0 %v3075
    %3422 = vmatprep.subr.bf16.mxu0 %v3080
    %3423 = vmatpush1.bf16.msra.mxu0 %v3079
    %3424 = vmatprep.subr.bf16.mxu0 %v3084
    %3425 = vmatpush1.bf16.msra.mxu0 %v3083
    %3426 = vmatprep.subr.bf16.mxu0 %v3088
    %3427 = vmatpush1.bf16.msra.mxu0 %v3087
    %3428 = vmatprep.subr.bf16.mxu0 %v3092
    %3429 = vmatpush1.bf16.msra.mxu0 %v3091
    %3430 = vmatprep.subr.bf16.mxu0 %v3096
    %3431 = vmatpush1.bf16.msra.mxu0 %v3095
    %3432 = vmatprep.subr.bf16.mxu0 %v3100
    %3433 = vmatpush1.bf16.msra.mxu0 %v3099
    %3434 = vmatprep.subr.bf16.mxu0 %v3104
    %3435 = vmatpush1.bf16.msra.mxu0 %v3103
    %3436 = vmatprep.subr.bf16.mxu0 %v3108
    %3437 = vmatpush1.bf16.msra.mxu0 %v3107
    %3438 = vmatprep.subr.bf16.mxu0 %v3112
    %3439 = vmatpush1.bf16.msra.mxu0 %v3111
    %3440 = vmatprep.subr.bf16.mxu0 %v3116
    %3441 = vmatpush1.bf16.msra.mxu0 %v3115
    %3442 = vmatprep.subr.bf16.mxu0 %v3120
    %3443 = vmatpush1.bf16.msra.mxu0 %v3119
    %3444 = vmatprep.subr.bf16.mxu0 %v3124
    %3445 = vmatpush1.bf16.msra.mxu0 %v3123
    %3446 = vmatprep.subr.bf16.mxu0 %v3128
    %3447 = vmatpush1.bf16.msra.mxu0 %v3127
    %3448 = vmatprep.mubr.bf16.mxu0 %v2454
    %3449 = vmatmul.mubr.bf16.gmra.mrb[0].mxu0 %v2453
    %v3450 = vpop.f32.mrb[0].mxu0
    %v3451 = vadd.f32 %v3398, %v3450
    %v3452 = vpop.f32.mrb[0].mxu0
    %v3453 = vadd.f32 %v3400, %v3452
    %v3454 = vpop.f32.mrb[0].mxu0
    %v3455 = vadd.f32 %v3402, %v3454
    %v3456 = vpop.f32.mrb[0].mxu0
    %v3457 = vadd.f32 %v3404, %v3456
    %3458 = vmatprep.mubr.bf16.mxu0 %v2458
    %3459 = vmatmul.mubr.bf16.gmra.mrb[0].mxu0 %v2457
    %v3460 = vpop.f32.mrb[0].mxu0
    %v3461 = vadd.f32 %v3408, %v3460
    %v3462 = vpop.f32.mrb[0].mxu0
    %v3463 = vadd.f32 %v3410, %v3462
    %v3464 = vpop.f32.mrb[0].mxu0
    %v3465 = vadd.f32 %v3412, %v3464
    %v3466 = vpop.f32.mrb[0].mxu0
    %v3467 = vadd.f32 %v3414, %v3466
    %3468 = vdwg.mxu0
    %v3469 = vmax.f32 %v3345, 0.0
    %v3470 = vmax.f32 %v3347, 0.0
    %v3471 = vmax.f32 %v3451, 0.0
    %v3472 = vmax.f32 %v3453, 0.0
    %v3473 = vmax.f32 %v3349, 0.0
    %v3474 = vmax.f32 %v3351, 0.0
    %v3475 = vmax.f32 %v3455, 0.0
    %v3476 = vmax.f32 %v3457, 0.0
    %v3477 = vmax.f32 %v3355, 0.0
    %v3478 = vmax.f32 %v3357, 0.0
    %v3479 = vmax.f32 %v3461, 0.0
    %v3480 = vmax.f32 %v3463, 0.0
    %v3481 = vmax.f32 %v3359, 0.0
    %v3482 = vmax.f32 %v3361, 0.0
    %v3483 = vmax.f32 %v3465, 0.0
    %v3484 = vmax.f32 %v3467, 0.0
    %v3485 = vld [vmem:[#allocation10] sm:$0xff]
    %v3486 = vld [vmem:[#allocation10 + $0x8] sm:$0xff]
    %v3487 = vld [vmem:[#allocation10 + $0x10] sm:$0xff]
    %v3488 = vld [vmem:[#allocation10 + $0x18] sm:$0xff]
    %v3489 = vld [vmem:[#allocation10 + $0x20] sm:$0xff]
    %v3490 = vld [vmem:[#allocation10 + $0x28] sm:$0xff]
    %v3491 = vld [vmem:[#allocation10 + $0x30] sm:$0xff]
    %v3492 = vld [vmem:[#allocation10 + $0x38] sm:$0xff]
    %v3493 = vld [vmem:[#allocation10 + $0x40] sm:$0xff]
    %v3494 = vld [vmem:[#allocation10 + $0x48] sm:$0xff]
    %v3495 = vld [vmem:[#allocation10 + $0x50] sm:$0xff]
    %v3496 = vld [vmem:[#allocation10 + $0x58] sm:$0xff]
    %v3497 = vld [vmem:[#allocation10 + $0x60] sm:$0xff]
    %v3498 = vld [vmem:[#allocation10 + $0x68] sm:$0xff]
    %v3499 = vld [vmem:[#allocation10 + $0x70] sm:$0xff]
    %v3500 = vld [vmem:[#allocation10 + $0x78] sm:$0xff]
    %v3501 = vld [vmem:[#allocation10 + $0x80] sm:$0xff]
    %v3502 = vld [vmem:[#allocation10 + $0x88] sm:$0xff]
    %v3503 = vld [vmem:[#allocation10 + $0x90] sm:$0xff]
    %v3504 = vld [vmem:[#allocation10 + $0x98] sm:$0xff]
    %v3505 = vld [vmem:[#allocation10 + $0xa0] sm:$0xff]
    %v3506 = vld [vmem:[#allocation10 + $0xa8] sm:$0xff]
    %v3507 = vld [vmem:[#allocation10 + $0xb0] sm:$0xff]
    %v3508 = vld [vmem:[#allocation10 + $0xb8] sm:$0xff]
    %v3509 = vld [vmem:[#allocation10 + $0xc0] sm:$0xff]
    %v3510 = vld [vmem:[#allocation10 + $0xc8] sm:$0xff]
    %v3511 = vld [vmem:[#allocation10 + $0xd0] sm:$0xff]
    %v3512 = vld [vmem:[#allocation10 + $0xd8] sm:$0xff]
    %v3513 = vld [vmem:[#allocation10 + $0xe0] sm:$0xff]
    %v3514 = vld [vmem:[#allocation10 + $0xe8] sm:$0xff]
    %v3515 = vld [vmem:[#allocation10 + $0xf0] sm:$0xff]
    %v3516 = vld [vmem:[#allocation10 + $0xf8] sm:$0xff]
    %v3517 = vld [vmem:[#allocation10 + $0x100] sm:$0xff]
    %v3518 = vld [vmem:[#allocation10 + $0x108] sm:$0xff]
    %v3519 = vld [vmem:[#allocation10 + $0x110] sm:$0xff]
    %v3520 = vld [vmem:[#allocation10 + $0x118] sm:$0xff]
    %v3521 = vld [vmem:[#allocation10 + $0x120] sm:$0xff]
    %v3522 = vld [vmem:[#allocation10 + $0x128] sm:$0xff]
    %v3523 = vld [vmem:[#allocation10 + $0x130] sm:$0xff]
    %v3524 = vld [vmem:[#allocation10 + $0x138] sm:$0xff]
    %v3525 = vld [vmem:[#allocation10 + $0x140] sm:$0xff]
    %v3526 = vld [vmem:[#allocation10 + $0x148] sm:$0xff]
    %v3527 = vld [vmem:[#allocation10 + $0x150] sm:$0xff]
    %v3528 = vld [vmem:[#allocation10 + $0x158] sm:$0xff]
    %v3529 = vld [vmem:[#allocation10 + $0x160] sm:$0xff]
    %v3530 = vld [vmem:[#allocation10 + $0x168] sm:$0xff]
    %v3531 = vld [vmem:[#allocation10 + $0x170] sm:$0xff]
    %v3532 = vld [vmem:[#allocation10 + $0x178] sm:$0xff]
    %v3533 = vld [vmem:[#allocation10 + $0x180] sm:$0xff]
    %v3534 = vld [vmem:[#allocation10 + $0x188] sm:$0xff]
    %v3535 = vld [vmem:[#allocation10 + $0x190] sm:$0xff]
    %v3536 = vld [vmem:[#allocation10 + $0x198] sm:$0xff]
    %v3537 = vld [vmem:[#allocation10 + $0x1a0] sm:$0xff]
    %v3538 = vld [vmem:[#allocation10 + $0x1a8] sm:$0xff]
    %v3539 = vld [vmem:[#allocation10 + $0x1b0] sm:$0xff]
    %v3540 = vld [vmem:[#allocation10 + $0x1b8] sm:$0xff]
    %v3541 = vld [vmem:[#allocation10 + $0x1c0] sm:$0xff]
    %v3542 = vld [vmem:[#allocation10 + $0x1c8] sm:$0xff]
    %v3543 = vld [vmem:[#allocation10 + $0x1d0] sm:$0xff]
    %v3544 = vld [vmem:[#allocation10 + $0x1d8] sm:$0xff]
    %v3545 = vld [vmem:[#allocation10 + $0x1e0] sm:$0xff]
    %v3546 = vld [vmem:[#allocation10 + $0x1e8] sm:$0xff]
    %v3547 = vld [vmem:[#allocation10 + $0x1f0] sm:$0xff]
    %v3548 = vld [vmem:[#allocation10 + $0x1f8] sm:$0xff]
    %v3549 = vld [vmem:[#allocation10 + $0x200] sm:$0xff]
    %v3550 = vld [vmem:[#allocation10 + $0x208] sm:$0xff]
    %v3551 = vld [vmem:[#allocation10 + $0x210] sm:$0xff]
    %v3552 = vld [vmem:[#allocation10 + $0x218] sm:$0xff]
    %v3553 = vld [vmem:[#allocation10 + $0x220] sm:$0xff]
    %v3554 = vld [vmem:[#allocation10 + $0x228] sm:$0xff]
    %v3555 = vld [vmem:[#allocation10 + $0x230] sm:$0xff]
    %v3556 = vld [vmem:[#allocation10 + $0x238] sm:$0xff]
    %v3557 = vld [vmem:[#allocation10 + $0x240] sm:$0xff]
    %v3558 = vld [vmem:[#allocation10 + $0x248] sm:$0xff]
    %v3559 = vld [vmem:[#allocation10 + $0x250] sm:$0xff]
    %v3560 = vld [vmem:[#allocation10 + $0x258] sm:$0xff]
    %v3561 = vld [vmem:[#allocation10 + $0x260] sm:$0xff]
    %v3562 = vld [vmem:[#allocation10 + $0x268] sm:$0xff]
    %v3563 = vld [vmem:[#allocation10 + $0x270] sm:$0xff]
    %v3564 = vld [vmem:[#allocation10 + $0x278] sm:$0xff]
    %v3565 = vld [vmem:[#allocation10 + $0x280] sm:$0xff]
    %v3566 = vld [vmem:[#allocation10 + $0x288] sm:$0xff]
    %v3567 = vld [vmem:[#allocation10 + $0x290] sm:$0xff]
    %v3568 = vld [vmem:[#allocation10 + $0x298] sm:$0xff]
    %v3569 = vld [vmem:[#allocation10 + $0x2a0] sm:$0xff]
    %v3570 = vld [vmem:[#allocation10 + $0x2a8] sm:$0xff]
    %v3571 = vld [vmem:[#allocation10 + $0x2b0] sm:$0xff]
    %v3572 = vld [vmem:[#allocation10 + $0x2b8] sm:$0xff]
    %v3573 = vld [vmem:[#allocation10 + $0x2c0] sm:$0xff]
    %v3574 = vld [vmem:[#allocation10 + $0x2c8] sm:$0xff]
    %v3575 = vld [vmem:[#allocation10 + $0x2d0] sm:$0xff]
    %v3576 = vld [vmem:[#allocation10 + $0x2d8] sm:$0xff]
    %v3577 = vld [vmem:[#allocation10 + $0x2e0] sm:$0xff]
    %v3578 = vld [vmem:[#allocation10 + $0x2e8] sm:$0xff]
    %v3579 = vld [vmem:[#allocation10 + $0x2f0] sm:$0xff]
    %v3580 = vld [vmem:[#allocation10 + $0x2f8] sm:$0xff]
    %v3581 = vld [vmem:[#allocation10 + $0x300] sm:$0xff]
    %v3582 = vld [vmem:[#allocation10 + $0x308] sm:$0xff]
    %v3583 = vld [vmem:[#allocation10 + $0x310] sm:$0xff]
    %v3584 = vld [vmem:[#allocation10 + $0x318] sm:$0xff]
    %v3585 = vld [vmem:[#allocation10 + $0x320] sm:$0xff]
    %v3586 = vld [vmem:[#allocation10 + $0x328] sm:$0xff]
    %v3587 = vld [vmem:[#allocation10 + $0x330] sm:$0xff]
    %v3588 = vld [vmem:[#allocation10 + $0x338] sm:$0xff]
    %v3589 = vld [vmem:[#allocation10 + $0x340] sm:$0xff]
    %v3590 = vld [vmem:[#allocation10 + $0x348] sm:$0xff]
    %v3591 = vld [vmem:[#allocation10 + $0x350] sm:$0xff]
    %v3592 = vld [vmem:[#allocation10 + $0x358] sm:$0xff]
    %v3593 = vld [vmem:[#allocation10 + $0x360] sm:$0xff]
    %v3594 = vld [vmem:[#allocation10 + $0x368] sm:$0xff]
    %v3595 = vld [vmem:[#allocation10 + $0x370] sm:$0xff]
    %v3596 = vld [vmem:[#allocation10 + $0x378] sm:$0xff]
    %v3597 = vld [vmem:[#allocation10 + $0x380] sm:$0xff]
    %v3598 = vld [vmem:[#allocation10 + $0x388] sm:$0xff]
    %v3599 = vld [vmem:[#allocation10 + $0x390] sm:$0xff]
    %v3600 = vld [vmem:[#allocation10 + $0x398] sm:$0xff]
    %v3601 = vld [vmem:[#allocation10 + $0x3a0] sm:$0xff]
    %v3602 = vld [vmem:[#allocation10 + $0x3a8] sm:$0xff]
    %v3603 = vld [vmem:[#allocation10 + $0x3b0] sm:$0xff]
    %v3604 = vld [vmem:[#allocation10 + $0x3b8] sm:$0xff]
    %v3605 = vld [vmem:[#allocation10 + $0x3c0] sm:$0xff]
    %v3606 = vld [vmem:[#allocation10 + $0x3c8] sm:$0xff]
    %v3607 = vld [vmem:[#allocation10 + $0x3d0] sm:$0xff]
    %v3608 = vld [vmem:[#allocation10 + $0x3d8] sm:$0xff]
    %v3609 = vld [vmem:[#allocation10 + $0x3e0] sm:$0xff]
    %v3610 = vld [vmem:[#allocation10 + $0x3e8] sm:$0xff]
    %v3611 = vld [vmem:[#allocation10 + $0x3f0] sm:$0xff]
    %v3612 = vld [vmem:[#allocation10 + $0x3f8] sm:$0xff]
    %v3613 = vld [vmem:[%s6] sm:$0xf]
    %v3615 = vlaneseq
    %v3616 = vshrl.u32 %v3615, 7
    %v3617 = vsub.s32 0, %v3616
    %v3618 = vrot.slane %v3613, %v3617
    %v3619 = vlaneseq
    %v3620 = vshrl.u32 %v3619, 7
    %v3621 = vsub.s32 1, %v3620
    %v3622 = vrot.slane %v3613, %v3621
    %v3623 = vlaneseq
    %v3624 = vshrl.u32 %v3623, 7
    %v3625 = vsub.s32 2, %v3624
    %v3626 = vrot.slane %v3613, %v3625
    %v3627 = vlaneseq
    %v3628 = vshrl.u32 %v3627, 7
    %v3629 = vsub.s32 3, %v3628
    %v3630 = vrot.slane %v3613, %v3629
    %v3763 = vunpack.c.l.b16 %v3485
    %v3764 = vunpack.c.h.b16 %v3485
    %v3765 = vunpack.c.l.b16 %v3486
    %v3766 = vunpack.c.h.b16 %v3486
    %v3767 = vunpack.c.l.b16 %v3487
    %v3768 = vunpack.c.h.b16 %v3487
    %v3769 = vunpack.c.l.b16 %v3488
    %v3770 = vunpack.c.h.b16 %v3488
    %v3771 = vunpack.c.l.b16 %v3489
    %v3772 = vunpack.c.h.b16 %v3489
    %v3773 = vunpack.c.l.b16 %v3490
    %v3774 = vunpack.c.h.b16 %v3490
    %v3775 = vunpack.c.l.b16 %v3491
    %v3776 = vunpack.c.h.b16 %v3491
    %v3777 = vunpack.c.l.b16 %v3492
    %v3778 = vunpack.c.h.b16 %v3492
    %v3779 = vunpack.c.l.b16 %v3493
    %v3780 = vunpack.c.h.b16 %v3493
    %v3781 = vunpack.c.l.b16 %v3494
    %v3782 = vunpack.c.h.b16 %v3494
    %v3783 = vunpack.c.l.b16 %v3495
    %v3784 = vunpack.c.h.b16 %v3495
    %v3785 = vunpack.c.l.b16 %v3496
    %v3786 = vunpack.c.h.b16 %v3496
    %v3787 = vunpack.c.l.b16 %v3497
    %v3788 = vunpack.c.h.b16 %v3497
    %v3789 = vunpack.c.l.b16 %v3498
    %v3790 = vunpack.c.h.b16 %v3498
    %v3791 = vunpack.c.l.b16 %v3499
    %v3792 = vunpack.c.h.b16 %v3499
    %v3793 = vunpack.c.l.b16 %v3500
    %v3794 = vunpack.c.h.b16 %v3500
    %v3795 = vunpack.c.l.b16 %v3501
    %v3796 = vunpack.c.h.b16 %v3501
    %v3797 = vunpack.c.l.b16 %v3502
    %v3798 = vunpack.c.h.b16 %v3502
    %v3799 = vunpack.c.l.b16 %v3503
    %v3800 = vunpack.c.h.b16 %v3503
    %v3801 = vunpack.c.l.b16 %v3504
    %v3802 = vunpack.c.h.b16 %v3504
    %v3803 = vunpack.c.l.b16 %v3505
    %v3804 = vunpack.c.h.b16 %v3505
    %v3805 = vunpack.c.l.b16 %v3506
    %v3806 = vunpack.c.h.b16 %v3506
    %v3807 = vunpack.c.l.b16 %v3507
    %v3808 = vunpack.c.h.b16 %v3507
    %v3809 = vunpack.c.l.b16 %v3508
    %v3810 = vunpack.c.h.b16 %v3508
    %v3811 = vunpack.c.l.b16 %v3509
    %v3812 = vunpack.c.h.b16 %v3509
    %v3813 = vunpack.c.l.b16 %v3510
    %v3814 = vunpack.c.h.b16 %v3510
    %v3815 = vunpack.c.l.b16 %v3511
    %v3816 = vunpack.c.h.b16 %v3511
    %v3817 = vunpack.c.l.b16 %v3512
    %v3818 = vunpack.c.h.b16 %v3512
    %v3819 = vunpack.c.l.b16 %v3513
    %v3820 = vunpack.c.h.b16 %v3513
    %v3821 = vunpack.c.l.b16 %v3514
    %v3822 = vunpack.c.h.b16 %v3514
    %v3823 = vunpack.c.l.b16 %v3515
    %v3824 = vunpack.c.h.b16 %v3515
    %v3825 = vunpack.c.l.b16 %v3516
    %v3826 = vunpack.c.h.b16 %v3516
    %v3827 = vunpack.c.l.b16 %v3517
    %v3828 = vunpack.c.h.b16 %v3517
    %v3829 = vunpack.c.l.b16 %v3518
    %v3830 = vunpack.c.h.b16 %v3518
    %v3831 = vunpack.c.l.b16 %v3519
    %v3832 = vunpack.c.h.b16 %v3519
    %v3833 = vunpack.c.l.b16 %v3520
    %v3834 = vunpack.c.h.b16 %v3520
    %v3835 = vunpack.c.l.b16 %v3521
    %v3836 = vunpack.c.h.b16 %v3521
    %v3837 = vunpack.c.l.b16 %v3522
    %v3838 = vunpack.c.h.b16 %v3522
    %v3839 = vunpack.c.l.b16 %v3523
    %v3840 = vunpack.c.h.b16 %v3523
    %v3841 = vunpack.c.l.b16 %v3524
    %v3842 = vunpack.c.h.b16 %v3524
    %v3843 = vunpack.c.l.b16 %v3525
    %v3844 = vunpack.c.h.b16 %v3525
    %v3845 = vunpack.c.l.b16 %v3526
    %v3846 = vunpack.c.h.b16 %v3526
    %v3847 = vunpack.c.l.b16 %v3527
    %v3848 = vunpack.c.h.b16 %v3527
    %v3849 = vunpack.c.l.b16 %v3528
    %v3850 = vunpack.c.h.b16 %v3528
    %v3851 = vunpack.c.l.b16 %v3529
    %v3852 = vunpack.c.h.b16 %v3529
    %v3853 = vunpack.c.l.b16 %v3530
    %v3854 = vunpack.c.h.b16 %v3530
    %v3855 = vunpack.c.l.b16 %v3531
    %v3856 = vunpack.c.h.b16 %v3531
    %v3857 = vunpack.c.l.b16 %v3532
    %v3858 = vunpack.c.h.b16 %v3532
    %v3859 = vunpack.c.l.b16 %v3533
    %v3860 = vunpack.c.h.b16 %v3533
    %v3861 = vunpack.c.l.b16 %v3534
    %v3862 = vunpack.c.h.b16 %v3534
    %v3863 = vunpack.c.l.b16 %v3535
    %v3864 = vunpack.c.h.b16 %v3535
    %v3865 = vunpack.c.l.b16 %v3536
    %v3866 = vunpack.c.h.b16 %v3536
    %v3867 = vunpack.c.l.b16 %v3537
    %v3868 = vunpack.c.h.b16 %v3537
    %v3869 = vunpack.c.l.b16 %v3538
    %v3870 = vunpack.c.h.b16 %v3538
    %v3871 = vunpack.c.l.b16 %v3539
    %v3872 = vunpack.c.h.b16 %v3539
    %v3873 = vunpack.c.l.b16 %v3540
    %v3874 = vunpack.c.h.b16 %v3540
    %v3875 = vunpack.c.l.b16 %v3541
    %v3876 = vunpack.c.h.b16 %v3541
    %v3877 = vunpack.c.l.b16 %v3542
    %v3878 = vunpack.c.h.b16 %v3542
    %v3879 = vunpack.c.l.b16 %v3543
    %v3880 = vunpack.c.h.b16 %v3543
    %v3881 = vunpack.c.l.b16 %v3544
    %v3882 = vunpack.c.h.b16 %v3544
    %v3883 = vunpack.c.l.b16 %v3545
    %v3884 = vunpack.c.h.b16 %v3545
    %v3885 = vunpack.c.l.b16 %v3546
    %v3886 = vunpack.c.h.b16 %v3546
    %v3887 = vunpack.c.l.b16 %v3547
    %v3888 = vunpack.c.h.b16 %v3547
    %v3889 = vunpack.c.l.b16 %v3548
    %v3890 = vunpack.c.h.b16 %v3548
    %v3891 = vunpack.c.l.b16 %v3549
    %v3892 = vunpack.c.h.b16 %v3549
    %v3893 = vunpack.c.l.b16 %v3550
    %v3894 = vunpack.c.h.b16 %v3550
    %v3895 = vunpack.c.l.b16 %v3551
    %v3896 = vunpack.c.h.b16 %v3551
    %v3897 = vunpack.c.l.b16 %v3552
    %v3898 = vunpack.c.h.b16 %v3552
    %v3899 = vunpack.c.l.b16 %v3553
    %v3900 = vunpack.c.h.b16 %v3553
    %v3901 = vunpack.c.l.b16 %v3554
    %v3902 = vunpack.c.h.b16 %v3554
    %v3903 = vunpack.c.l.b16 %v3555
    %v3904 = vunpack.c.h.b16 %v3555
    %v3905 = vunpack.c.l.b16 %v3556
    %v3906 = vunpack.c.h.b16 %v3556
    %v3907 = vunpack.c.l.b16 %v3557
    %v3908 = vunpack.c.h.b16 %v3557
    %v3909 = vunpack.c.l.b16 %v3558
    %v3910 = vunpack.c.h.b16 %v3558
    %v3911 = vunpack.c.l.b16 %v3559
    %v3912 = vunpack.c.h.b16 %v3559
    %v3913 = vunpack.c.l.b16 %v3560
    %v3914 = vunpack.c.h.b16 %v3560
    %v3915 = vunpack.c.l.b16 %v3561
    %v3916 = vunpack.c.h.b16 %v3561
    %v3917 = vunpack.c.l.b16 %v3562
    %v3918 = vunpack.c.h.b16 %v3562
    %v3919 = vunpack.c.l.b16 %v3563
    %v3920 = vunpack.c.h.b16 %v3563
    %v3921 = vunpack.c.l.b16 %v3564
    %v3922 = vunpack.c.h.b16 %v3564
    %v3923 = vunpack.c.l.b16 %v3565
    %v3924 = vunpack.c.h.b16 %v3565
    %v3925 = vunpack.c.l.b16 %v3566
    %v3926 = vunpack.c.h.b16 %v3566
    %v3927 = vunpack.c.l.b16 %v3567
    %v3928 = vunpack.c.h.b16 %v3567
    %v3929 = vunpack.c.l.b16 %v3568
    %v3930 = vunpack.c.h.b16 %v3568
    %v3931 = vunpack.c.l.b16 %v3569
    %v3932 = vunpack.c.h.b16 %v3569
    %v3933 = vunpack.c.l.b16 %v3570
    %v3934 = vunpack.c.h.b16 %v3570
    %v3935 = vunpack.c.l.b16 %v3571
    %v3936 = vunpack.c.h.b16 %v3571
    %v3937 = vunpack.c.l.b16 %v3572
    %v3938 = vunpack.c.h.b16 %v3572
    %v3939 = vunpack.c.l.b16 %v3573
    %v3940 = vunpack.c.h.b16 %v3573
    %v3941 = vunpack.c.l.b16 %v3574
    %v3942 = vunpack.c.h.b16 %v3574
    %v3943 = vunpack.c.l.b16 %v3575
    %v3944 = vunpack.c.h.b16 %v3575
    %v3945 = vunpack.c.l.b16 %v3576
    %v3946 = vunpack.c.h.b16 %v3576
    %v3947 = vunpack.c.l.b16 %v3577
    %v3948 = vunpack.c.h.b16 %v3577
    %v3949 = vunpack.c.l.b16 %v3578
    %v3950 = vunpack.c.h.b16 %v3578
    %v3951 = vunpack.c.l.b16 %v3579
    %v3952 = vunpack.c.h.b16 %v3579
    %v3953 = vunpack.c.l.b16 %v3580
    %v3954 = vunpack.c.h.b16 %v3580
    %v3955 = vunpack.c.l.b16 %v3581
    %v3956 = vunpack.c.h.b16 %v3581
    %v3957 = vunpack.c.l.b16 %v3582
    %v3958 = vunpack.c.h.b16 %v3582
    %v3959 = vunpack.c.l.b16 %v3583
    %v3960 = vunpack.c.h.b16 %v3583
    %v3961 = vunpack.c.l.b16 %v3584
    %v3962 = vunpack.c.h.b16 %v3584
    %v3963 = vunpack.c.l.b16 %v3585
    %v3964 = vunpack.c.h.b16 %v3585
    %v3965 = vunpack.c.l.b16 %v3586
    %v3966 = vunpack.c.h.b16 %v3586
    %v3967 = vunpack.c.l.b16 %v3587
    %v3968 = vunpack.c.h.b16 %v3587
    %v3969 = vunpack.c.l.b16 %v3588
    %v3970 = vunpack.c.h.b16 %v3588
    %v3971 = vunpack.c.l.b16 %v3589
    %v3972 = vunpack.c.h.b16 %v3589
    %v3973 = vunpack.c.l.b16 %v3590
    %v3974 = vunpack.c.h.b16 %v3590
    %v3975 = vunpack.c.l.b16 %v3591
    %v3976 = vunpack.c.h.b16 %v3591
    %v3977 = vunpack.c.l.b16 %v3592
    %v3978 = vunpack.c.h.b16 %v3592
    %v3979 = vunpack.c.l.b16 %v3593
    %v3980 = vunpack.c.h.b16 %v3593
    %v3981 = vunpack.c.l.b16 %v3594
    %v3982 = vunpack.c.h.b16 %v3594
    %v3983 = vunpack.c.l.b16 %v3595
    %v3984 = vunpack.c.h.b16 %v3595
    %v3985 = vunpack.c.l.b16 %v3596
    %v3986 = vunpack.c.h.b16 %v3596
    %v3987 = vunpack.c.l.b16 %v3597
    %v3988 = vunpack.c.h.b16 %v3597
    %v3989 = vunpack.c.l.b16 %v3598
    %v3990 = vunpack.c.h.b16 %v3598
    %v3991 = vunpack.c.l.b16 %v3599
    %v3992 = vunpack.c.h.b16 %v3599
    %v3993 = vunpack.c.l.b16 %v3600
    %v3994 = vunpack.c.h.b16 %v3600
    %v3995 = vunpack.c.l.b16 %v3601
    %v3996 = vunpack.c.h.b16 %v3601
    %v3997 = vunpack.c.l.b16 %v3602
    %v3998 = vunpack.c.h.b16 %v3602
    %v3999 = vunpack.c.l.b16 %v3603
    %v4000 = vunpack.c.h.b16 %v3603
    %v4001 = vunpack.c.l.b16 %v3604
    %v4002 = vunpack.c.h.b16 %v3604
    %v4003 = vunpack.c.l.b16 %v3605
    %v4004 = vunpack.c.h.b16 %v3605
    %v4005 = vunpack.c.l.b16 %v3606
    %v4006 = vunpack.c.h.b16 %v3606
    %v4007 = vunpack.c.l.b16 %v3607
    %v4008 = vunpack.c.h.b16 %v3607
    %v4009 = vunpack.c.l.b16 %v3608
    %v4010 = vunpack.c.h.b16 %v3608
    %v4011 = vunpack.c.l.b16 %v3609
    %v4012 = vunpack.c.h.b16 %v3609
    %v4013 = vunpack.c.l.b16 %v3610
    %v4014 = vunpack.c.h.b16 %v3610
    %v4015 = vunpack.c.l.b16 %v3611
    %v4016 = vunpack.c.h.b16 %v3611
    %v4017 = vunpack.c.l.b16 %v3612
    %v4018 = vunpack.c.h.b16 %v3612
    %v4019 = vpack.c.b16 %v3767, %v3763
    %v4020 = vpack.c.b16 %v3768, %v3764
    %v4021 = vpack.c.b16 %v3769, %v3765
    %v4022 = vpack.c.b16 %v3770, %v3766
    %v4023 = vpack.c.b16 %v3775, %v3771
    %v4024 = vpack.c.b16 %v3776, %v3772
    %v4025 = vpack.c.b16 %v3777, %v3773
    %v4026 = vpack.c.b16 %v3778, %v3774
    %v4027 = vpack.c.b16 %v3783, %v3779
    %v4028 = vpack.c.b16 %v3784, %v3780
    %v4029 = vpack.c.b16 %v3785, %v3781
    %v4030 = vpack.c.b16 %v3786, %v3782
    %v4031 = vpack.c.b16 %v3791, %v3787
    %v4032 = vpack.c.b16 %v3792, %v3788
    %v4033 = vpack.c.b16 %v3793, %v3789
    %v4034 = vpack.c.b16 %v3794, %v3790
    %v4035 = vpack.c.b16 %v3799, %v3795
    %v4036 = vpack.c.b16 %v3800, %v3796
    %v4037 = vpack.c.b16 %v3801, %v3797
    %v4038 = vpack.c.b16 %v3802, %v3798
    %v4039 = vpack.c.b16 %v3807, %v3803
    %v4040 = vpack.c.b16 %v3808, %v3804
    %v4041 = vpack.c.b16 %v3809, %v3805
    %v4042 = vpack.c.b16 %v3810, %v3806
    %v4043 = vpack.c.b16 %v3815, %v3811
    %v4044 = vpack.c.b16 %v3816, %v3812
    %v4045 = vpack.c.b16 %v3817, %v3813
    %v4046 = vpack.c.b16 %v3818, %v3814
    %v4047 = vpack.c.b16 %v3823, %v3819
    %v4048 = vpack.c.b16 %v3824, %v3820
    %v4049 = vpack.c.b16 %v3825, %v3821
    %v4050 = vpack.c.b16 %v3826, %v3822
    %v4051 = vpack.c.b16 %v3831, %v3827
    %v4052 = vpack.c.b16 %v3832, %v3828
    %v4053 = vpack.c.b16 %v3833, %v3829
    %v4054 = vpack.c.b16 %v3834, %v3830
    %v4055 = vpack.c.b16 %v3839, %v3835
    %v4056 = vpack.c.b16 %v3840, %v3836
    %v4057 = vpack.c.b16 %v3841, %v3837
    %v4058 = vpack.c.b16 %v3842, %v3838
    %v4059 = vpack.c.b16 %v3847, %v3843
    %v4060 = vpack.c.b16 %v3848, %v3844
    %v4061 = vpack.c.b16 %v3849, %v3845
    %v4062 = vpack.c.b16 %v3850, %v3846
    %v4063 = vpack.c.b16 %v3855, %v3851
    %v4064 = vpack.c.b16 %v3856, %v3852
    %v4065 = vpack.c.b16 %v3857, %v3853
    %v4066 = vpack.c.b16 %v3858, %v3854
    %v4067 = vpack.c.b16 %v3863, %v3859
    %v4068 = vpack.c.b16 %v3864, %v3860
    %v4069 = vpack.c.b16 %v3865, %v3861
    %v4070 = vpack.c.b16 %v3866, %v3862
    %v4071 = vpack.c.b16 %v3871, %v3867
    %v4072 = vpack.c.b16 %v3872, %v3868
    %v4073 = vpack.c.b16 %v3873, %v3869
    %v4074 = vpack.c.b16 %v3874, %v3870
    %v4075 = vpack.c.b16 %v3879, %v3875
    %v4076 = vpack.c.b16 %v3880, %v3876
    %v4077 = vpack.c.b16 %v3881, %v3877
    %v4078 = vpack.c.b16 %v3882, %v3878
    %v4079 = vpack.c.b16 %v3887, %v3883
    %v4080 = vpack.c.b16 %v3888, %v3884
    %v4081 = vpack.c.b16 %v3889, %v3885
    %v4082 = vpack.c.b16 %v3890, %v3886
    %v4083 = vpack.c.b16 %v3895, %v3891
    %v4084 = vpack.c.b16 %v3896, %v3892
    %v4085 = vpack.c.b16 %v3897, %v3893
    %v4086 = vpack.c.b16 %v3898, %v3894
    %v4087 = vpack.c.b16 %v3903, %v3899
    %v4088 = vpack.c.b16 %v3904, %v3900
    %v4089 = vpack.c.b16 %v3905, %v3901
    %v4090 = vpack.c.b16 %v3906, %v3902
    %v4091 = vpack.c.b16 %v3911, %v3907
    %v4092 = vpack.c.b16 %v3912, %v3908
    %v4093 = vpack.c.b16 %v3913, %v3909
    %v4094 = vpack.c.b16 %v3914, %v3910
    %v4095 = vpack.c.b16 %v3919, %v3915
    %v4096 = vpack.c.b16 %v3920, %v3916
    %v4097 = vpack.c.b16 %v3921, %v3917
    %v4098 = vpack.c.b16 %v3922, %v3918
    %v4099 = vpack.c.b16 %v3927, %v3923
    %v4100 = vpack.c.b16 %v3928, %v3924
    %v4101 = vpack.c.b16 %v3929, %v3925
    %v4102 = vpack.c.b16 %v3930, %v3926
    %v4103 = vpack.c.b16 %v3935, %v3931
    %v4104 = vpack.c.b16 %v3936, %v3932
    %v4105 = vpack.c.b16 %v3937, %v3933
    %v4106 = vpack.c.b16 %v3938, %v3934
    %v4107 = vpack.c.b16 %v3943, %v3939
    %v4108 = vpack.c.b16 %v3944, %v3940
    %v4109 = vpack.c.b16 %v3945, %v3941
    %v4110 = vpack.c.b16 %v3946, %v3942
    %v4111 = vpack.c.b16 %v3951, %v3947
    %v4112 = vpack.c.b16 %v3952, %v3948
    %v4113 = vpack.c.b16 %v3953, %v3949
    %v4114 = vpack.c.b16 %v3954, %v3950
    %v4115 = vpack.c.b16 %v3959, %v3955
    %v4116 = vpack.c.b16 %v3960, %v3956
    %v4117 = vpack.c.b16 %v3961, %v3957
    %v4118 = vpack.c.b16 %v3962, %v3958
    %v4119 = vpack.c.b16 %v3967, %v3963
    %v4120 = vpack.c.b16 %v3968, %v3964
    %v4121 = vpack.c.b16 %v3969, %v3965
    %v4122 = vpack.c.b16 %v3970, %v3966
    %v4123 = vpack.c.b16 %v3975, %v3971
    %v4124 = vpack.c.b16 %v3976, %v3972
    %v4125 = vpack.c.b16 %v3977, %v3973
    %v4126 = vpack.c.b16 %v3978, %v3974
    %v4127 = vpack.c.b16 %v3983, %v3979
    %v4128 = vpack.c.b16 %v3984, %v3980
    %v4129 = vpack.c.b16 %v3985, %v3981
    %v4130 = vpack.c.b16 %v3986, %v3982
    %v4131 = vpack.c.b16 %v3991, %v3987
    %v4132 = vpack.c.b16 %v3992, %v3988
    %v4133 = vpack.c.b16 %v3993, %v3989
    %v4134 = vpack.c.b16 %v3994, %v3990
    %v4135 = vpack.c.b16 %v3999, %v3995
    %v4136 = vpack.c.b16 %v4000, %v3996
    %v4137 = vpack.c.b16 %v4001, %v3997
    %v4138 = vpack.c.b16 %v4002, %v3998
    %v4139 = vpack.c.b16 %v4007, %v4003
    %v4140 = vpack.c.b16 %v4008, %v4004
    %v4141 = vpack.c.b16 %v4009, %v4005
    %v4142 = vpack.c.b16 %v4010, %v4006
    %v4143 = vpack.c.b16 %v4015, %v4011
    %v4144 = vpack.c.b16 %v4016, %v4012
    %v4145 = vpack.c.b16 %v4017, %v4013
    %v4146 = vpack.c.b16 %v4018, %v4014
    %4275 = vmatprep.subr.bf16.mxu0 %v4020
    %4276 = vmatpush1.bf16.msra.mxu0 %v4019
    %4277 = vmatprep.subr.bf16.mxu0 %v4024
    %4278 = vmatpush1.bf16.msra.mxu0 %v4023
    %4279 = vmatprep.subr.bf16.mxu0 %v4028
    %4280 = vmatpush1.bf16.msra.mxu0 %v4027
    %4281 = vmatprep.subr.bf16.mxu0 %v4032
    %4282 = vmatpush1.bf16.msra.mxu0 %v4031
    %4283 = vmatprep.subr.bf16.mxu0 %v4036
    %4284 = vmatpush1.bf16.msra.mxu0 %v4035
    %4285 = vmatprep.subr.bf16.mxu0 %v4040
    %4286 = vmatpush1.bf16.msra.mxu0 %v4039
    %4287 = vmatprep.subr.bf16.mxu0 %v4044
    %4288 = vmatpush1.bf16.msra.mxu0 %v4043
    %4289 = vmatprep.subr.bf16.mxu0 %v4048
    %4290 = vmatpush1.bf16.msra.mxu0 %v4047
    %4291 = vmatprep.subr.bf16.mxu0 %v4052
    %4292 = vmatpush1.bf16.msra.mxu0 %v4051
    %4293 = vmatprep.subr.bf16.mxu0 %v4056
    %4294 = vmatpush1.bf16.msra.mxu0 %v4055
    %4295 = vmatprep.subr.bf16.mxu0 %v4060
    %4296 = vmatpush1.bf16.msra.mxu0 %v4059
    %4297 = vmatprep.subr.bf16.mxu0 %v4064
    %4298 = vmatpush1.bf16.msra.mxu0 %v4063
    %4299 = vmatprep.subr.bf16.mxu0 %v4068
    %4300 = vmatpush1.bf16.msra.mxu0 %v4067
    %4301 = vmatprep.subr.bf16.mxu0 %v4072
    %4302 = vmatpush1.bf16.msra.mxu0 %v4071
    %4303 = vmatprep.subr.bf16.mxu0 %v4076
    %4304 = vmatpush1.bf16.msra.mxu0 %v4075
    %4305 = vmatprep.subr.bf16.mxu0 %v4080
    %4306 = vmatpush1.bf16.msra.mxu0 %v4079
    %4307 = vmatprep.mubr.bf16.mxu0 %v2460
    %4308 = vmatmul.mubr.bf16.gmra.mrb[0].mxu0 %v2459
    %v4309 = vpop.f32.mrb[0].mxu0
    %v4310 = vadd.f32 %v3618, %v4309
    %v4311 = vpop.f32.mrb[0].mxu0
    %v4312 = vadd.f32 %v3622, %v4311
    %v4313 = vpop.f32.mrb[0].mxu0
    %v4314 = vadd.f32 %v3618, %v4313
    %v4315 = vpop.f32.mrb[0].mxu0
    %v4316 = vadd.f32 %v3622, %v4315
    %4317 = vmatprep.mubr.bf16.mxu0 %v2464
    %4318 = vmatmul.mubr.bf16.gmra.mrb[0].mxu0 %v2463
    %v4319 = vpop.f32.mrb[0].mxu0
    %v4320 = vadd.f32 %v3618, %v4319
    %v4321 = vpop.f32.mrb[0].mxu0
    %v4322 = vadd.f32 %v3622, %v4321
    %v4323 = vpop.f32.mrb[0].mxu0
    %v4324 = vadd.f32 %v3618, %v4323
    %v4325 = vpop.f32.mrb[0].mxu0
    %v4326 = vadd.f32 %v3622, %v4325
    %4327 = vdwg.mxu0
    %4328 = vmatprep.subr.bf16.mxu0 %v4084
    %4329 = vmatpush1.bf16.msra.mxu0 %v4083
    %4330 = vmatprep.subr.bf16.mxu0 %v4088
    %4331 = vmatpush1.bf16.msra.mxu0 %v4087
    %4332 = vmatprep.subr.bf16.mxu0 %v4092
    %4333 = vmatpush1.bf16.msra.mxu0 %v4091
    %4334 = vmatprep.subr.bf16.mxu0 %v4096
    %4335 = vmatpush1.bf16.msra.mxu0 %v4095
    %4336 = vmatprep.subr.bf16.mxu0 %v4100
    %4337 = vmatpush1.bf16.msra.mxu0 %v4099
    %4338 = vmatprep.subr.bf16.mxu0 %v4104
    %4339 = vmatpush1.bf16.msra.mxu0 %v4103
    %4340 = vmatprep.subr.bf16.mxu0 %v4108
    %4341 = vmatpush1.bf16.msra.mxu0 %v4107
    %4342 = vmatprep.subr.bf16.mxu0 %v4112
    %4343 = vmatpush1.bf16.msra.mxu0 %v4111
    %4344 = vmatprep.subr.bf16.mxu0 %v4116
    %4345 = vmatpush1.bf16.msra.mxu0 %v4115
    %4346 = vmatprep.subr.bf16.mxu0 %v4120
    %4347 = vmatpush1.bf16.msra.mxu0 %v4119
    %4348 = vmatprep.subr.bf16.mxu0 %v4124
    %4349 = vmatpush1.bf16.msra.mxu0 %v4123
    %4350 = vmatprep.subr.bf16.mxu0 %v4128
    %4351 = vmatpush1.bf16.msra.mxu0 %v4127
    %4352 = vmatprep.subr.bf16.mxu0 %v4132
    %4353 = vmatpush1.bf16.msra.mxu0 %v4131
    %4354 = vmatprep.subr.bf16.mxu0 %v4136
    %4355 = vmatpush1.bf16.msra.mxu0 %v4135
    %4356 = vmatprep.subr.bf16.mxu0 %v4140
    %4357 = vmatpush1.bf16.msra.mxu0 %v4139
    %4358 = vmatprep.subr.bf16.mxu0 %v4144
    %4359 = vmatpush1.bf16.msra.mxu0 %v4143
    %4360 = vmatprep.mubr.bf16.mxu0 %v2462
    %4361 = vmatmul.mubr.bf16.gmra.mrb[0].mxu0 %v2461
    %v4362 = vpop.f32.mrb[0].mxu0
    %v4363 = vadd.f32 %v4310, %v4362
    %v4364 = vpop.f32.mrb[0].mxu0
    %v4365 = vadd.f32 %v4312, %v4364
    %v4366 = vpop.f32.mrb[0].mxu0
    %v4367 = vadd.f32 %v4314, %v4366
    %v4368 = vpop.f32.mrb[0].mxu0
    %v4369 = vadd.f32 %v4316, %v4368
    %4370 = vmatprep.mubr.bf16.mxu0 %v2466
    %4371 = vmatmul.mubr.bf16.gmra.mrb[0].mxu0 %v2465
    %v4372 = vpop.f32.mrb[0].mxu0
    %v4373 = vadd.f32 %v4320, %v4372
    %v4374 = vpop.f32.mrb[0].mxu0
    %v4375 = vadd.f32 %v4322, %v4374
    %v4376 = vpop.f32.mrb[0].mxu0
    %v4377 = vadd.f32 %v4324, %v4376
    %v4378 = vpop.f32.mrb[0].mxu0
    %v4379 = vadd.f32 %v4326, %v4378
    %4380 = vdwg.mxu0
    %4381 = vmatprep.subr.bf16.mxu0 %v4022
    %4382 = vmatpush1.bf16.msra.mxu0 %v4021
    %4383 = vmatprep.subr.bf16.mxu0 %v4026
    %4384 = vmatpush1.bf16.msra.mxu0 %v4025
    %4385 = vmatprep.subr.bf16.mxu0 %v4030
    %4386 = vmatpush1.bf16.msra.mxu0 %v4029
    %4387 = vmatprep.subr.bf16.mxu0 %v4034
    %4388 = vmatpush1.bf16.msra.mxu0 %v4033
    %4389 = vmatprep.subr.bf16.mxu0 %v4038
    %4390 = vmatpush1.bf16.msra.mxu0 %v4037
    %4391 = vmatprep.subr.bf16.mxu0 %v4042
    %4392 = vmatpush1.bf16.msra.mxu0 %v4041
    %4393 = vmatprep.subr.bf16.mxu0 %v4046
    %4394 = vmatpush1.bf16.msra.mxu0 %v4045
    %4395 = vmatprep.subr.bf16.mxu0 %v4050
    %4396 = vmatpush1.bf16.msra.mxu0 %v4049
    %4397 = vmatprep.subr.bf16.mxu0 %v4054
    %4398 = vmatpush1.bf16.msra.mxu0 %v4053
    %4399 = vmatprep.subr.bf16.mxu0 %v4058
    %4400 = vmatpush1.bf16.msra.mxu0 %v4057
    %4401 = vmatprep.subr.bf16.mxu0 %v4062
    %4402 = vmatpush1.bf16.msra.mxu0 %v4061
    %4403 = vmatprep.subr.bf16.mxu0 %v4066
    %4404 = vmatpush1.bf16.msra.mxu0 %v4065
    %4405 = vmatprep.subr.bf16.mxu0 %v4070
    %4406 = vmatpush1.bf16.msra.mxu0 %v4069
    %4407 = vmatprep.subr.bf16.mxu0 %v4074
    %4408 = vmatpush1.bf16.msra.mxu0 %v4073
    %4409 = vmatprep.subr.bf16.mxu0 %v4078
    %4410 = vmatpush1.bf16.msra.mxu0 %v4077
    %4411 = vmatprep.subr.bf16.mxu0 %v4082
    %4412 = vmatpush1.bf16.msra.mxu0 %v4081
    %4413 = vmatprep.mubr.bf16.mxu0 %v2460
    %4414 = vmatmul.mubr.bf16.gmra.mrb[0].mxu0 %v2459
    %v4415 = vpop.f32.mrb[0].mxu0
    %v4416 = vadd.f32 %v3626, %v4415
    %v4417 = vpop.f32.mrb[0].mxu0
    %v4418 = vadd.f32 %v3630, %v4417
    %v4419 = vpop.f32.mrb[0].mxu0
    %v4420 = vadd.f32 %v3626, %v4419
    %v4421 = vpop.f32.mrb[0].mxu0
    %v4422 = vadd.f32 %v3630, %v4421
    %4423 = vmatprep.mubr.bf16.mxu0 %v2464
    %4424 = vmatmul.mubr.bf16.gmra.mrb[0].mxu0 %v2463
    %v4425 = vpop.f32.mrb[0].mxu0
    %v4426 = vadd.f32 %v3626, %v4425
    %v4427 = vpop.f32.mrb[0].mxu0
    %v4428 = vadd.f32 %v3630, %v4427
    %v4429 = vpop.f32.mrb[0].mxu0
    %v4430 = vadd.f32 %v3626, %v4429
    %v4431 = vpop.f32.mrb[0].mxu0
    %v4432 = vadd.f32 %v3630, %v4431
    %4433 = vdwg.mxu0
    %4434 = vmatprep.subr.bf16.mxu0 %v4086
    %4435 = vmatpush1.bf16.msra.mxu0 %v4085
    %4436 = vmatprep.subr.bf16.mxu0 %v4090
    %4437 = vmatpush1.bf16.msra.mxu0 %v4089
    %4438 = vmatprep.subr.bf16.mxu0 %v4094
    %4439 = vmatpush1.bf16.msra.mxu0 %v4093
    %4440 = vmatprep.subr.bf16.mxu0 %v4098
    %4441 = vmatpush1.bf16.msra.mxu0 %v4097
    %4442 = vmatprep.subr.bf16.mxu0 %v4102
    %4443 = vmatpush1.bf16.msra.mxu0 %v4101
    %4444 = vmatprep.subr.bf16.mxu0 %v4106
    %4445 = vmatpush1.bf16.msra.mxu0 %v4105
    %4446 = vmatprep.subr.bf16.mxu0 %v4110
    %4447 = vmatpush1.bf16.msra.mxu0 %v4109
    %4448 = vmatprep.subr.bf16.mxu0 %v4114
    %4449 = vmatpush1.bf16.msra.mxu0 %v4113
    %4450 = vmatprep.subr.bf16.mxu0 %v4118
    %4451 = vmatpush1.bf16.msra.mxu0 %v4117
    %4452 = vmatprep.subr.bf16.mxu0 %v4122
    %4453 = vmatpush1.bf16.msra.mxu0 %v4121
    %4454 = vmatprep.subr.bf16.mxu0 %v4126
    %4455 = vmatpush1.bf16.msra.mxu0 %v4125
    %4456 = vmatprep.subr.bf16.mxu0 %v4130
    %4457 = vmatpush1.bf16.msra.mxu0 %v4129
    %4458 = vmatprep.subr.bf16.mxu0 %v4134
    %4459 = vmatpush1.bf16.msra.mxu0 %v4133
    %4460 = vmatprep.subr.bf16.mxu0 %v4138
    %4461 = vmatpush1.bf16.msra.mxu0 %v4137
    %4462 = vmatprep.subr.bf16.mxu0 %v4142
    %4463 = vmatpush1.bf16.msra.mxu0 %v4141
    %4464 = vmatprep.subr.bf16.mxu0 %v4146
    %4465 = vmatpush1.bf16.msra.mxu0 %v4145
    %4466 = vmatprep.mubr.bf16.mxu0 %v2462
    %4467 = vmatmul.mubr.bf16.gmra.mrb[0].mxu0 %v2461
    %v4468 = vpop.f32.mrb[0].mxu0
    %v4469 = vadd.f32 %v4416, %v4468
    %v4470 = vpop.f32.mrb[0].mxu0
    %v4471 = vadd.f32 %v4418, %v4470
    %v4472 = vpop.f32.mrb[0].mxu0
    %v4473 = vadd.f32 %v4420, %v4472
    %v4474 = vpop.f32.mrb[0].mxu0
    %v4475 = vadd.f32 %v4422, %v4474
    %4476 = vmatprep.mubr.bf16.mxu0 %v2466
    %4477 = vmatmul.mubr.bf16.gmra.mrb[0].mxu0 %v2465
    %v4478 = vpop.f32.mrb[0].mxu0
    %v4479 = vadd.f32 %v4426, %v4478
    %v4480 = vpop.f32.mrb[0].mxu0
    %v4481 = vadd.f32 %v4428, %v4480
    %v4482 = vpop.f32.mrb[0].mxu0
    %v4483 = vadd.f32 %v4430, %v4482
    %v4484 = vpop.f32.mrb[0].mxu0
    %v4485 = vadd.f32 %v4432, %v4484
    %4486 = vdwg.mxu0
    %v4487 = vmax.f32 %v4363, 0.0
    %v4488 = vmax.f32 %v4365, 0.0
    %v4489 = vmax.f32 %v4469, 0.0
    %v4490 = vmax.f32 %v4471, 0.0
    %v4491 = vmax.f32 %v4367, 0.0
    %v4492 = vmax.f32 %v4369, 0.0
    %v4493 = vmax.f32 %v4473, 0.0
    %v4494 = vmax.f32 %v4475, 0.0
    %v4495 = vmax.f32 %v4373, 0.0
    %v4496 = vmax.f32 %v4375, 0.0
    %v4497 = vmax.f32 %v4479, 0.0
    %v4498 = vmax.f32 %v4481, 0.0
    %v4499 = vmax.f32 %v4377, 0.0
    %v4500 = vmax.f32 %v4379, 0.0
    %v4501 = vmax.f32 %v4483, 0.0
    %v4502 = vmax.f32 %v4485, 0.0
    %v4503 = vadd.f32 %v3469, %v4487
    %v4504 = vadd.f32 %v3470, %v4488
    %v4505 = vadd.f32 %v3471, %v4489
    %v4506 = vadd.f32 %v3472, %v4490
    %v4507 = vadd.f32 %v3473, %v4491
    %v4508 = vadd.f32 %v3474, %v4492
    %v4509 = vadd.f32 %v3475, %v4493
    %v4510 = vadd.f32 %v3476, %v4494
    %v4511 = vadd.f32 %v3477, %v4495
    %v4512 = vadd.f32 %v3478, %v4496
    %v4513 = vadd.f32 %v3479, %v4497
    %v4514 = vadd.f32 %v3480, %v4498
    %v4515 = vadd.f32 %v3481, %v4499
    %v4516 = vadd.f32 %v3482, %v4500
    %v4517 = vadd.f32 %v3483, %v4501
    %v4518 = vadd.f32 %v3484, %v4502
    %v4519 = vpack.c.bf16 %v4507, %v4503
    %v4520 = vpack.c.bf16 %v4508, %v4504
    %v4521 = vpack.c.bf16 %v4509, %v4505
    %v4522 = vpack.c.bf16 %v4510, %v4506
    %v4523 = vpack.c.bf16 %v4515, %v4511
    %v4524 = vpack.c.bf16 %v4516, %v4512
    %v4525 = vpack.c.bf16 %v4517, %v4513
    %v4526 = vpack.c.bf16 %v4518, %v4514
    %v4527 = vld [vmem:[#allocation11] sm:$0xff]
    %v4528 = vld [vmem:[#allocation11 + $0x8] sm:$0xff]
    %v4529 = vld [vmem:[#allocation11 + $0x10] sm:$0xff]
    %v4530 = vld [vmem:[#allocation11 + $0x18] sm:$0xff]
    %v4531 = vld [vmem:[#allocation11 + $0x20] sm:$0xff]
    %v4532 = vld [vmem:[#allocation11 + $0x28] sm:$0xff]
    %v4533 = vld [vmem:[#allocation11 + $0x30] sm:$0xff]
    %v4534 = vld [vmem:[#allocation11 + $0x38] sm:$0xff]
    %v4535 = vld [vmem:[#allocation11 + $0x40] sm:$0xff]
    %v4536 = vld [vmem:[#allocation11 + $0x48] sm:$0xff]
    %v4537 = vld [vmem:[#allocation11 + $0x50] sm:$0xff]
    %v4538 = vld [vmem:[#allocation11 + $0x58] sm:$0xff]
    %v4539 = vld [vmem:[#allocation11 + $0x60] sm:$0xff]
    %v4540 = vld [vmem:[#allocation11 + $0x68] sm:$0xff]
    %v4541 = vld [vmem:[#allocation11 + $0x70] sm:$0xff]
    %v4542 = vld [vmem:[#allocation11 + $0x78] sm:$0xff]
    %v4543 = vld [vmem:[#allocation11 + $0x80] sm:$0xff]
    %v4544 = vld [vmem:[#allocation11 + $0x88] sm:$0xff]
    %v4545 = vld [vmem:[#allocation11 + $0x90] sm:$0xff]
    %v4546 = vld [vmem:[#allocation11 + $0x98] sm:$0xff]
    %v4547 = vld [vmem:[#allocation11 + $0xa0] sm:$0xff]
    %v4548 = vld [vmem:[#allocation11 + $0xa8] sm:$0xff]
    %v4549 = vld [vmem:[#allocation11 + $0xb0] sm:$0xff]
    %v4550 = vld [vmem:[#allocation11 + $0xb8] sm:$0xff]
    %v4551 = vld [vmem:[#allocation11 + $0xc0] sm:$0xff]
    %v4552 = vld [vmem:[#allocation11 + $0xc8] sm:$0xff]
    %v4553 = vld [vmem:[#allocation11 + $0xd0] sm:$0xff]
    %v4554 = vld [vmem:[#allocation11 + $0xd8] sm:$0xff]
    %v4555 = vld [vmem:[#allocation11 + $0xe0] sm:$0xff]
    %v4556 = vld [vmem:[#allocation11 + $0xe8] sm:$0xff]
    %v4557 = vld [vmem:[#allocation11 + $0xf0] sm:$0xff]
    %v4558 = vld [vmem:[#allocation11 + $0xf8] sm:$0xff]
    %v4559 = vld [vmem:[#allocation11 + $0x100] sm:$0xff]
    %v4560 = vld [vmem:[#allocation11 + $0x108] sm:$0xff]
    %v4561 = vld [vmem:[#allocation11 + $0x110] sm:$0xff]
    %v4562 = vld [vmem:[#allocation11 + $0x118] sm:$0xff]
    %v4563 = vld [vmem:[#allocation11 + $0x120] sm:$0xff]
    %v4564 = vld [vmem:[#allocation11 + $0x128] sm:$0xff]
    %v4565 = vld [vmem:[#allocation11 + $0x130] sm:$0xff]
    %v4566 = vld [vmem:[#allocation11 + $0x138] sm:$0xff]
    %v4567 = vld [vmem:[#allocation11 + $0x140] sm:$0xff]
    %v4568 = vld [vmem:[#allocation11 + $0x148] sm:$0xff]
    %v4569 = vld [vmem:[#allocation11 + $0x150] sm:$0xff]
    %v4570 = vld [vmem:[#allocation11 + $0x158] sm:$0xff]
    %v4571 = vld [vmem:[#allocation11 + $0x160] sm:$0xff]
    %v4572 = vld [vmem:[#allocation11 + $0x168] sm:$0xff]
    %v4573 = vld [vmem:[#allocation11 + $0x170] sm:$0xff]
    %v4574 = vld [vmem:[#allocation11 + $0x178] sm:$0xff]
    %v4575 = vld [vmem:[#allocation11 + $0x180] sm:$0xff]
    %v4576 = vld [vmem:[#allocation11 + $0x188] sm:$0xff]
    %v4577 = vld [vmem:[#allocation11 + $0x190] sm:$0xff]
    %v4578 = vld [vmem:[#allocation11 + $0x198] sm:$0xff]
    %v4579 = vld [vmem:[#allocation11 + $0x1a0] sm:$0xff]
    %v4580 = vld [vmem:[#allocation11 + $0x1a8] sm:$0xff]
    %v4581 = vld [vmem:[#allocation11 + $0x1b0] sm:$0xff]
    %v4582 = vld [vmem:[#allocation11 + $0x1b8] sm:$0xff]
    %v4583 = vld [vmem:[#allocation11 + $0x1c0] sm:$0xff]
    %v4584 = vld [vmem:[#allocation11 + $0x1c8] sm:$0xff]
    %v4585 = vld [vmem:[#allocation11 + $0x1d0] sm:$0xff]
    %v4586 = vld [vmem:[#allocation11 + $0x1d8] sm:$0xff]
    %v4587 = vld [vmem:[#allocation11 + $0x1e0] sm:$0xff]
    %v4588 = vld [vmem:[#allocation11 + $0x1e8] sm:$0xff]
    %v4589 = vld [vmem:[#allocation11 + $0x1f0] sm:$0xff]
    %v4590 = vld [vmem:[#allocation11 + $0x1f8] sm:$0xff]
    %v4591 = vld [vmem:[#allocation11 + $0x200] sm:$0xff]
    %v4592 = vld [vmem:[#allocation11 + $0x208] sm:$0xff]
    %v4593 = vld [vmem:[#allocation11 + $0x210] sm:$0xff]
    %v4594 = vld [vmem:[#allocation11 + $0x218] sm:$0xff]
    %v4595 = vld [vmem:[#allocation11 + $0x220] sm:$0xff]
    %v4596 = vld [vmem:[#allocation11 + $0x228] sm:$0xff]
    %v4597 = vld [vmem:[#allocation11 + $0x230] sm:$0xff]
    %v4598 = vld [vmem:[#allocation11 + $0x238] sm:$0xff]
    %v4599 = vld [vmem:[#allocation11 + $0x240] sm:$0xff]
    %v4600 = vld [vmem:[#allocation11 + $0x248] sm:$0xff]
    %v4601 = vld [vmem:[#allocation11 + $0x250] sm:$0xff]
    %v4602 = vld [vmem:[#allocation11 + $0x258] sm:$0xff]
    %v4603 = vld [vmem:[#allocation11 + $0x260] sm:$0xff]
    %v4604 = vld [vmem:[#allocation11 + $0x268] sm:$0xff]
    %v4605 = vld [vmem:[#allocation11 + $0x270] sm:$0xff]
    %v4606 = vld [vmem:[#allocation11 + $0x278] sm:$0xff]
    %v4607 = vld [vmem:[#allocation11 + $0x280] sm:$0xff]
    %v4608 = vld [vmem:[#allocation11 + $0x288] sm:$0xff]
    %v4609 = vld [vmem:[#allocation11 + $0x290] sm:$0xff]
    %v4610 = vld [vmem:[#allocation11 + $0x298] sm:$0xff]
    %v4611 = vld [vmem:[#allocation11 + $0x2a0] sm:$0xff]
    %v4612 = vld [vmem:[#allocation11 + $0x2a8] sm:$0xff]
    %v4613 = vld [vmem:[#allocation11 + $0x2b0] sm:$0xff]
    %v4614 = vld [vmem:[#allocation11 + $0x2b8] sm:$0xff]
    %v4615 = vld [vmem:[#allocation11 + $0x2c0] sm:$0xff]
    %v4616 = vld [vmem:[#allocation11 + $0x2c8] sm:$0xff]
    %v4617 = vld [vmem:[#allocation11 + $0x2d0] sm:$0xff]
    %v4618 = vld [vmem:[#allocation11 + $0x2d8] sm:$0xff]
    %v4619 = vld [vmem:[#allocation11 + $0x2e0] sm:$0xff]
    %v4620 = vld [vmem:[#allocation11 + $0x2e8] sm:$0xff]
    %v4621 = vld [vmem:[#allocation11 + $0x2f0] sm:$0xff]
    %v4622 = vld [vmem:[#allocation11 + $0x2f8] sm:$0xff]
    %v4623 = vld [vmem:[#allocation11 + $0x300] sm:$0xff]
    %v4624 = vld [vmem:[#allocation11 + $0x308] sm:$0xff]
    %v4625 = vld [vmem:[#allocation11 + $0x310] sm:$0xff]
    %v4626 = vld [vmem:[#allocation11 + $0x318] sm:$0xff]
    %v4627 = vld [vmem:[#allocation11 + $0x320] sm:$0xff]
    %v4628 = vld [vmem:[#allocation11 + $0x328] sm:$0xff]
    %v4629 = vld [vmem:[#allocation11 + $0x330] sm:$0xff]
    %v4630 = vld [vmem:[#allocation11 + $0x338] sm:$0xff]
    %v4631 = vld [vmem:[#allocation11 + $0x340] sm:$0xff]
    %v4632 = vld [vmem:[#allocation11 + $0x348] sm:$0xff]
    %v4633 = vld [vmem:[#allocation11 + $0x350] sm:$0xff]
    %v4634 = vld [vmem:[#allocation11 + $0x358] sm:$0xff]
    %v4635 = vld [vmem:[#allocation11 + $0x360] sm:$0xff]
    %v4636 = vld [vmem:[#allocation11 + $0x368] sm:$0xff]
    %v4637 = vld [vmem:[#allocation11 + $0x370] sm:$0xff]
    %v4638 = vld [vmem:[#allocation11 + $0x378] sm:$0xff]
    %v4639 = vld [vmem:[#allocation11 + $0x380] sm:$0xff]
    %v4640 = vld [vmem:[#allocation11 + $0x388] sm:$0xff]
    %v4641 = vld [vmem:[#allocation11 + $0x390] sm:$0xff]
    %v4642 = vld [vmem:[#allocation11 + $0x398] sm:$0xff]
    %v4643 = vld [vmem:[#allocation11 + $0x3a0] sm:$0xff]
    %v4644 = vld [vmem:[#allocation11 + $0x3a8] sm:$0xff]
    %v4645 = vld [vmem:[#allocation11 + $0x3b0] sm:$0xff]
    %v4646 = vld [vmem:[#allocation11 + $0x3b8] sm:$0xff]
    %v4647 = vld [vmem:[#allocation11 + $0x3c0] sm:$0xff]
    %v4648 = vld [vmem:[#allocation11 + $0x3c8] sm:$0xff]
    %v4649 = vld [vmem:[#allocation11 + $0x3d0] sm:$0xff]
    %v4650 = vld [vmem:[#allocation11 + $0x3d8] sm:$0xff]
    %v4651 = vld [vmem:[#allocation11 + $0x3e0] sm:$0xff]
    %v4652 = vld [vmem:[#allocation11 + $0x3e8] sm:$0xff]
    %v4653 = vld [vmem:[#allocation11 + $0x3f0] sm:$0xff]
    %v4654 = vld [vmem:[#allocation11 + $0x3f8] sm:$0xff]
    %v4655 = vld [vmem:[%s8] sm:$0xf]
    %v4657 = vlaneseq
    %v4658 = vshrl.u32 %v4657, 7
    %v4659 = vsub.s32 0, %v4658
    %v4660 = vrot.slane %v4655, %v4659
    %v4661 = vlaneseq
    %v4662 = vshrl.u32 %v4661, 7
    %v4663 = vsub.s32 1, %v4662
    %v4664 = vrot.slane %v4655, %v4663
    %v4665 = vlaneseq
    %v4666 = vshrl.u32 %v4665, 7
    %v4667 = vsub.s32 2, %v4666
    %v4668 = vrot.slane %v4655, %v4667
    %v4669 = vlaneseq
    %v4670 = vshrl.u32 %v4669, 7
    %v4671 = vsub.s32 3, %v4670
    %v4672 = vrot.slane %v4655, %v4671
    %v4805 = vunpack.c.l.b16 %v4527
    %v4806 = vunpack.c.h.b16 %v4527
    %v4807 = vunpack.c.l.b16 %v4528
    %v4808 = vunpack.c.h.b16 %v4528
    %v4809 = vunpack.c.l.b16 %v4529
    %v4810 = vunpack.c.h.b16 %v4529
    %v4811 = vunpack.c.l.b16 %v4530
    %v4812 = vunpack.c.h.b16 %v4530
    %v4813 = vunpack.c.l.b16 %v4531
    %v4814 = vunpack.c.h.b16 %v4531
    %v4815 = vunpack.c.l.b16 %v4532
    %v4816 = vunpack.c.h.b16 %v4532
    %v4817 = vunpack.c.l.b16 %v4533
    %v4818 = vunpack.c.h.b16 %v4533
    %v4819 = vunpack.c.l.b16 %v4534
    %v4820 = vunpack.c.h.b16 %v4534
    %v4821 = vunpack.c.l.b16 %v4535
    %v4822 = vunpack.c.h.b16 %v4535
    %v4823 = vunpack.c.l.b16 %v4536
    %v4824 = vunpack.c.h.b16 %v4536
    %v4825 = vunpack.c.l.b16 %v4537
    %v4826 = vunpack.c.h.b16 %v4537
    %v4827 = vunpack.c.l.b16 %v4538
    %v4828 = vunpack.c.h.b16 %v4538
    %v4829 = vunpack.c.l.b16 %v4539
    %v4830 = vunpack.c.h.b16 %v4539
    %v4831 = vunpack.c.l.b16 %v4540
    %v4832 = vunpack.c.h.b16 %v4540
    %v4833 = vunpack.c.l.b16 %v4541
    %v4834 = vunpack.c.h.b16 %v4541
    %v4835 = vunpack.c.l.b16 %v4542
    %v4836 = vunpack.c.h.b16 %v4542
    %v4837 = vunpack.c.l.b16 %v4543
    %v4838 = vunpack.c.h.b16 %v4543
    %v4839 = vunpack.c.l.b16 %v4544
    %v4840 = vunpack.c.h.b16 %v4544
    %v4841 = vunpack.c.l.b16 %v4545
    %v4842 = vunpack.c.h.b16 %v4545
    %v4843 = vunpack.c.l.b16 %v4546
    %v4844 = vunpack.c.h.b16 %v4546
    %v4845 = vunpack.c.l.b16 %v4547
    %v4846 = vunpack.c.h.b16 %v4547
    %v4847 = vunpack.c.l.b16 %v4548
    %v4848 = vunpack.c.h.b16 %v4548
    %v4849 = vunpack.c.l.b16 %v4549
    %v4850 = vunpack.c.h.b16 %v4549
    %v4851 = vunpack.c.l.b16 %v4550
    %v4852 = vunpack.c.h.b16 %v4550
    %v4853 = vunpack.c.l.b16 %v4551
    %v4854 = vunpack.c.h.b16 %v4551
    %v4855 = vunpack.c.l.b16 %v4552
    %v4856 = vunpack.c.h.b16 %v4552
    %v4857 = vunpack.c.l.b16 %v4553
    %v4858 = vunpack.c.h.b16 %v4553
    %v4859 = vunpack.c.l.b16 %v4554
    %v4860 = vunpack.c.h.b16 %v4554
    %v4861 = vunpack.c.l.b16 %v4555
    %v4862 = vunpack.c.h.b16 %v4555
    %v4863 = vunpack.c.l.b16 %v4556
    %v4864 = vunpack.c.h.b16 %v4556
    %v4865 = vunpack.c.l.b16 %v4557
    %v4866 = vunpack.c.h.b16 %v4557
    %v4867 = vunpack.c.l.b16 %v4558
    %v4868 = vunpack.c.h.b16 %v4558
    %v4869 = vunpack.c.l.b16 %v4559
    %v4870 = vunpack.c.h.b16 %v4559
    %v4871 = vunpack.c.l.b16 %v4560
    %v4872 = vunpack.c.h.b16 %v4560
    %v4873 = vunpack.c.l.b16 %v4561
    %v4874 = vunpack.c.h.b16 %v4561
    %v4875 = vunpack.c.l.b16 %v4562
    %v4876 = vunpack.c.h.b16 %v4562
    %v4877 = vunpack.c.l.b16 %v4563
    %v4878 = vunpack.c.h.b16 %v4563
    %v4879 = vunpack.c.l.b16 %v4564
    %v4880 = vunpack.c.h.b16 %v4564
    %v4881 = vunpack.c.l.b16 %v4565
    %v4882 = vunpack.c.h.b16 %v4565
    %v4883 = vunpack.c.l.b16 %v4566
    %v4884 = vunpack.c.h.b16 %v4566
    %v4885 = vunpack.c.l.b16 %v4567
    %v4886 = vunpack.c.h.b16 %v4567
    %v4887 = vunpack.c.l.b16 %v4568
    %v4888 = vunpack.c.h.b16 %v4568
    %v4889 = vunpack.c.l.b16 %v4569
    %v4890 = vunpack.c.h.b16 %v4569
    %v4891 = vunpack.c.l.b16 %v4570
    %v4892 = vunpack.c.h.b16 %v4570
    %v4893 = vunpack.c.l.b16 %v4571
    %v4894 = vunpack.c.h.b16 %v4571
    %v4895 = vunpack.c.l.b16 %v4572
    %v4896 = vunpack.c.h.b16 %v4572
    %v4897 = vunpack.c.l.b16 %v4573
    %v4898 = vunpack.c.h.b16 %v4573
    %v4899 = vunpack.c.l.b16 %v4574
    %v4900 = vunpack.c.h.b16 %v4574
    %v4901 = vunpack.c.l.b16 %v4575
    %v4902 = vunpack.c.h.b16 %v4575
    %v4903 = vunpack.c.l.b16 %v4576
    %v4904 = vunpack.c.h.b16 %v4576
    %v4905 = vunpack.c.l.b16 %v4577
    %v4906 = vunpack.c.h.b16 %v4577
    %v4907 = vunpack.c.l.b16 %v4578
    %v4908 = vunpack.c.h.b16 %v4578
    %v4909 = vunpack.c.l.b16 %v4579
    %v4910 = vunpack.c.h.b16 %v4579
    %v4911 = vunpack.c.l.b16 %v4580
    %v4912 = vunpack.c.h.b16 %v4580
    %v4913 = vunpack.c.l.b16 %v4581
    %v4914 = vunpack.c.h.b16 %v4581
    %v4915 = vunpack.c.l.b16 %v4582
    %v4916 = vunpack.c.h.b16 %v4582
    %v4917 = vunpack.c.l.b16 %v4583
    %v4918 = vunpack.c.h.b16 %v4583
    %v4919 = vunpack.c.l.b16 %v4584
    %v4920 = vunpack.c.h.b16 %v4584
    %v4921 = vunpack.c.l.b16 %v4585
    %v4922 = vunpack.c.h.b16 %v4585
    %v4923 = vunpack.c.l.b16 %v4586
    %v4924 = vunpack.c.h.b16 %v4586
    %v4925 = vunpack.c.l.b16 %v4587
    %v4926 = vunpack.c.h.b16 %v4587
    %v4927 = vunpack.c.l.b16 %v4588
    %v4928 = vunpack.c.h.b16 %v4588
    %v4929 = vunpack.c.l.b16 %v4589
    %v4930 = vunpack.c.h.b16 %v4589
    %v4931 = vunpack.c.l.b16 %v4590
    %v4932 = vunpack.c.h.b16 %v4590
    %v4933 = vunpack.c.l.b16 %v4591
    %v4934 = vunpack.c.h.b16 %v4591
    %v4935 = vunpack.c.l.b16 %v4592
    %v4936 = vunpack.c.h.b16 %v4592
    %v4937 = vunpack.c.l.b16 %v4593
    %v4938 = vunpack.c.h.b16 %v4593
    %v4939 = vunpack.c.l.b16 %v4594
    %v4940 = vunpack.c.h.b16 %v4594
    %v4941 = vunpack.c.l.b16 %v4595
    %v4942 = vunpack.c.h.b16 %v4595
    %v4943 = vunpack.c.l.b16 %v4596
    %v4944 = vunpack.c.h.b16 %v4596
    %v4945 = vunpack.c.l.b16 %v4597
    %v4946 = vunpack.c.h.b16 %v4597
    %v4947 = vunpack.c.l.b16 %v4598
    %v4948 = vunpack.c.h.b16 %v4598
    %v4949 = vunpack.c.l.b16 %v4599
    %v4950 = vunpack.c.h.b16 %v4599
    %v4951 = vunpack.c.l.b16 %v4600
    %v4952 = vunpack.c.h.b16 %v4600
    %v4953 = vunpack.c.l.b16 %v4601
    %v4954 = vunpack.c.h.b16 %v4601
    %v4955 = vunpack.c.l.b16 %v4602
    %v4956 = vunpack.c.h.b16 %v4602
    %v4957 = vunpack.c.l.b16 %v4603
    %v4958 = vunpack.c.h.b16 %v4603
    %v4959 = vunpack.c.l.b16 %v4604
    %v4960 = vunpack.c.h.b16 %v4604
    %v4961 = vunpack.c.l.b16 %v4605
    %v4962 = vunpack.c.h.b16 %v4605
    %v4963 = vunpack.c.l.b16 %v4606
    %v4964 = vunpack.c.h.b16 %v4606
    %v4965 = vunpack.c.l.b16 %v4607
    %v4966 = vunpack.c.h.b16 %v4607
    %v4967 = vunpack.c.l.b16 %v4608
    %v4968 = vunpack.c.h.b16 %v4608
    %v4969 = vunpack.c.l.b16 %v4609
    %v4970 = vunpack.c.h.b16 %v4609
    %v4971 = vunpack.c.l.b16 %v4610
    %v4972 = vunpack.c.h.b16 %v4610
    %v4973 = vunpack.c.l.b16 %v4611
    %v4974 = vunpack.c.h.b16 %v4611
    %v4975 = vunpack.c.l.b16 %v4612
    %v4976 = vunpack.c.h.b16 %v4612
    %v4977 = vunpack.c.l.b16 %v4613
    %v4978 = vunpack.c.h.b16 %v4613
    %v4979 = vunpack.c.l.b16 %v4614
    %v4980 = vunpack.c.h.b16 %v4614
    %v4981 = vunpack.c.l.b16 %v4615
    %v4982 = vunpack.c.h.b16 %v4615
    %v4983 = vunpack.c.l.b16 %v4616
    %v4984 = vunpack.c.h.b16 %v4616
    %v4985 = vunpack.c.l.b16 %v4617
    %v4986 = vunpack.c.h.b16 %v4617
    %v4987 = vunpack.c.l.b16 %v4618
    %v4988 = vunpack.c.h.b16 %v4618
    %v4989 = vunpack.c.l.b16 %v4619
    %v4990 = vunpack.c.h.b16 %v4619
    %v4991 = vunpack.c.l.b16 %v4620
    %v4992 = vunpack.c.h.b16 %v4620
    %v4993 = vunpack.c.l.b16 %v4621
    %v4994 = vunpack.c.h.b16 %v4621
    %v4995 = vunpack.c.l.b16 %v4622
    %v4996 = vunpack.c.h.b16 %v4622
    %v4997 = vunpack.c.l.b16 %v4623
    %v4998 = vunpack.c.h.b16 %v4623
    %v4999 = vunpack.c.l.b16 %v4624
    %v5000 = vunpack.c.h.b16 %v4624
    %v5001 = vunpack.c.l.b16 %v4625
    %v5002 = vunpack.c.h.b16 %v4625
    %v5003 = vunpack.c.l.b16 %v4626
    %v5004 = vunpack.c.h.b16 %v4626
    %v5005 = vunpack.c.l.b16 %v4627
    %v5006 = vunpack.c.h.b16 %v4627
    %v5007 = vunpack.c.l.b16 %v4628
    %v5008 = vunpack.c.h.b16 %v4628
    %v5009 = vunpack.c.l.b16 %v4629
    %v5010 = vunpack.c.h.b16 %v4629
    %v5011 = vunpack.c.l.b16 %v4630
    %v5012 = vunpack.c.h.b16 %v4630
    %v5013 = vunpack.c.l.b16 %v4631
    %v5014 = vunpack.c.h.b16 %v4631
    %v5015 = vunpack.c.l.b16 %v4632
    %v5016 = vunpack.c.h.b16 %v4632
    %v5017 = vunpack.c.l.b16 %v4633
    %v5018 = vunpack.c.h.b16 %v4633
    %v5019 = vunpack.c.l.b16 %v4634
    %v5020 = vunpack.c.h.b16 %v4634
    %v5021 = vunpack.c.l.b16 %v4635
    %v5022 = vunpack.c.h.b16 %v4635
    %v5023 = vunpack.c.l.b16 %v4636
    %v5024 = vunpack.c.h.b16 %v4636
    %v5025 = vunpack.c.l.b16 %v4637
    %v5026 = vunpack.c.h.b16 %v4637
    %v5027 = vunpack.c.l.b16 %v4638
    %v5028 = vunpack.c.h.b16 %v4638
    %v5029 = vunpack.c.l.b16 %v4639
    %v5030 = vunpack.c.h.b16 %v4639
    %v5031 = vunpack.c.l.b16 %v4640
    %v5032 = vunpack.c.h.b16 %v4640
    %v5033 = vunpack.c.l.b16 %v4641
    %v5034 = vunpack.c.h.b16 %v4641
    %v5035 = vunpack.c.l.b16 %v4642
    %v5036 = vunpack.c.h.b16 %v4642
    %v5037 = vunpack.c.l.b16 %v4643
    %v5038 = vunpack.c.h.b16 %v4643
    %v5039 = vunpack.c.l.b16 %v4644
    %v5040 = vunpack.c.h.b16 %v4644
    %v5041 = vunpack.c.l.b16 %v4645
    %v5042 = vunpack.c.h.b16 %v4645
    %v5043 = vunpack.c.l.b16 %v4646
    %v5044 = vunpack.c.h.b16 %v4646
    %v5045 = vunpack.c.l.b16 %v4647
    %v5046 = vunpack.c.h.b16 %v4647
    %v5047 = vunpack.c.l.b16 %v4648
    %v5048 = vunpack.c.h.b16 %v4648
    %v5049 = vunpack.c.l.b16 %v4649
    %v5050 = vunpack.c.h.b16 %v4649
    %v5051 = vunpack.c.l.b16 %v4650
    %v5052 = vunpack.c.h.b16 %v4650
    %v5053 = vunpack.c.l.b16 %v4651
    %v5054 = vunpack.c.h.b16 %v4651
    %v5055 = vunpack.c.l.b16 %v4652
    %v5056 = vunpack.c.h.b16 %v4652
    %v5057 = vunpack.c.l.b16 %v4653
    %v5058 = vunpack.c.h.b16 %v4653
    %v5059 = vunpack.c.l.b16 %v4654
    %v5060 = vunpack.c.h.b16 %v4654
    %v5061 = vpack.c.b16 %v4809, %v4805
    %v5062 = vpack.c.b16 %v4810, %v4806
    %v5063 = vpack.c.b16 %v4811, %v4807
    %v5064 = vpack.c.b16 %v4812, %v4808
    %v5065 = vpack.c.b16 %v4817, %v4813
    %v5066 = vpack.c.b16 %v4818, %v4814
    %v5067 = vpack.c.b16 %v4819, %v4815
    %v5068 = vpack.c.b16 %v4820, %v4816
    %v5069 = vpack.c.b16 %v4825, %v4821
    %v5070 = vpack.c.b16 %v4826, %v4822
    %v5071 = vpack.c.b16 %v4827, %v4823
    %v5072 = vpack.c.b16 %v4828, %v4824
    %v5073 = vpack.c.b16 %v4833, %v4829
    %v5074 = vpack.c.b16 %v4834, %v4830
    %v5075 = vpack.c.b16 %v4835, %v4831
    %v5076 = vpack.c.b16 %v4836, %v4832
    %v5077 = vpack.c.b16 %v4841, %v4837
    %v5078 = vpack.c.b16 %v4842, %v4838
    %v5079 = vpack.c.b16 %v4843, %v4839
    %v5080 = vpack.c.b16 %v4844, %v4840
    %v5081 = vpack.c.b16 %v4849, %v4845
    %v5082 = vpack.c.b16 %v4850, %v4846
    %v5083 = vpack.c.b16 %v4851, %v4847
    %v5084 = vpack.c.b16 %v4852, %v4848
    %v5085 = vpack.c.b16 %v4857, %v4853
    %v5086 = vpack.c.b16 %v4858, %v4854
    %v5087 = vpack.c.b16 %v4859, %v4855
    %v5088 = vpack.c.b16 %v4860, %v4856
    %v5089 = vpack.c.b16 %v4865, %v4861
    %v5090 = vpack.c.b16 %v4866, %v4862
    %v5091 = vpack.c.b16 %v4867, %v4863
    %v5092 = vpack.c.b16 %v4868, %v4864
    %v5093 = vpack.c.b16 %v4873, %v4869
    %v5094 = vpack.c.b16 %v4874, %v4870
    %v5095 = vpack.c.b16 %v4875, %v4871
    %v5096 = vpack.c.b16 %v4876, %v4872
    %v5097 = vpack.c.b16 %v4881, %v4877
    %v5098 = vpack.c.b16 %v4882, %v4878
    %v5099 = vpack.c.b16 %v4883, %v4879
    %v5100 = vpack.c.b16 %v4884, %v4880
    %v5101 = vpack.c.b16 %v4889, %v4885
    %v5102 = vpack.c.b16 %v4890, %v4886
    %v5103 = vpack.c.b16 %v4891, %v4887
    %v5104 = vpack.c.b16 %v4892, %v4888
    %v5105 = vpack.c.b16 %v4897, %v4893
    %v5106 = vpack.c.b16 %v4898, %v4894
    %v5107 = vpack.c.b16 %v4899, %v4895
    %v5108 = vpack.c.b16 %v4900, %v4896
    %v5109 = vpack.c.b16 %v4905, %v4901
    %v5110 = vpack.c.b16 %v4906, %v4902
    %v5111 = vpack.c.b16 %v4907, %v4903
    %v5112 = vpack.c.b16 %v4908, %v4904
    %v5113 = vpack.c.b16 %v4913, %v4909
    %v5114 = vpack.c.b16 %v4914, %v4910
    %v5115 = vpack.c.b16 %v4915, %v4911
    %v5116 = vpack.c.b16 %v4916, %v4912
    %v5117 = vpack.c.b16 %v4921, %v4917
    %v5118 = vpack.c.b16 %v4922, %v4918
    %v5119 = vpack.c.b16 %v4923, %v4919
    %v5120 = vpack.c.b16 %v4924, %v4920
    %v5121 = vpack.c.b16 %v4929, %v4925
    %v5122 = vpack.c.b16 %v4930, %v4926
    %v5123 = vpack.c.b16 %v4931, %v4927
    %v5124 = vpack.c.b16 %v4932, %v4928
    %v5125 = vpack.c.b16 %v4937, %v4933
    %v5126 = vpack.c.b16 %v4938, %v4934
    %v5127 = vpack.c.b16 %v4939, %v4935
    %v5128 = vpack.c.b16 %v4940, %v4936
    %v5129 = vpack.c.b16 %v4945, %v4941
    %v5130 = vpack.c.b16 %v4946, %v4942
    %v5131 = vpack.c.b16 %v4947, %v4943
    %v5132 = vpack.c.b16 %v4948, %v4944
    %v5133 = vpack.c.b16 %v4953, %v4949
    %v5134 = vpack.c.b16 %v4954, %v4950
    %v5135 = vpack.c.b16 %v4955, %v4951
    %v5136 = vpack.c.b16 %v4956, %v4952
    %v5137 = vpack.c.b16 %v4961, %v4957
    %v5138 = vpack.c.b16 %v4962, %v4958
    %v5139 = vpack.c.b16 %v4963, %v4959
    %v5140 = vpack.c.b16 %v4964, %v4960
    %v5141 = vpack.c.b16 %v4969, %v4965
    %v5142 = vpack.c.b16 %v4970, %v4966
    %v5143 = vpack.c.b16 %v4971, %v4967
    %v5144 = vpack.c.b16 %v4972, %v4968
    %v5145 = vpack.c.b16 %v4977, %v4973
    %v5146 = vpack.c.b16 %v4978, %v4974
    %v5147 = vpack.c.b16 %v4979, %v4975
    %v5148 = vpack.c.b16 %v4980, %v4976
    %v5149 = vpack.c.b16 %v4985, %v4981
    %v5150 = vpack.c.b16 %v4986, %v4982
    %v5151 = vpack.c.b16 %v4987, %v4983
    %v5152 = vpack.c.b16 %v4988, %v4984
    %v5153 = vpack.c.b16 %v4993, %v4989
    %v5154 = vpack.c.b16 %v4994, %v4990
    %v5155 = vpack.c.b16 %v4995, %v4991
    %v5156 = vpack.c.b16 %v4996, %v4992
    %v5157 = vpack.c.b16 %v5001, %v4997
    %v5158 = vpack.c.b16 %v5002, %v4998
    %v5159 = vpack.c.b16 %v5003, %v4999
    %v5160 = vpack.c.b16 %v5004, %v5000
    %v5161 = vpack.c.b16 %v5009, %v5005
    %v5162 = vpack.c.b16 %v5010, %v5006
    %v5163 = vpack.c.b16 %v5011, %v5007
    %v5164 = vpack.c.b16 %v5012, %v5008
    %v5165 = vpack.c.b16 %v5017, %v5013
    %v5166 = vpack.c.b16 %v5018, %v5014
    %v5167 = vpack.c.b16 %v5019, %v5015
    %v5168 = vpack.c.b16 %v5020, %v5016
    %v5169 = vpack.c.b16 %v5025, %v5021
    %v5170 = vpack.c.b16 %v5026, %v5022
    %v5171 = vpack.c.b16 %v5027, %v5023
    %v5172 = vpack.c.b16 %v5028, %v5024
    %v5173 = vpack.c.b16 %v5033, %v5029
    %v5174 = vpack.c.b16 %v5034, %v5030
    %v5175 = vpack.c.b16 %v5035, %v5031
    %v5176 = vpack.c.b16 %v5036, %v5032
    %v5177 = vpack.c.b16 %v5041, %v5037
    %v5178 = vpack.c.b16 %v5042, %v5038
    %v5179 = vpack.c.b16 %v5043, %v5039
    %v5180 = vpack.c.b16 %v5044, %v5040
    %v5181 = vpack.c.b16 %v5049, %v5045
    %v5182 = vpack.c.b16 %v5050, %v5046
    %v5183 = vpack.c.b16 %v5051, %v5047
    %v5184 = vpack.c.b16 %v5052, %v5048
    %v5185 = vpack.c.b16 %v5057, %v5053
    %v5186 = vpack.c.b16 %v5058, %v5054
    %v5187 = vpack.c.b16 %v5059, %v5055
    %v5188 = vpack.c.b16 %v5060, %v5056
    %5317 = vmatprep.subr.bf16.mxu0 %v5062
    %5318 = vmatpush1.bf16.msra.mxu0 %v5061
    %5319 = vmatprep.subr.bf16.mxu0 %v5066
    %5320 = vmatpush1.bf16.msra.mxu0 %v5065
    %5321 = vmatprep.subr.bf16.mxu0 %v5070
    %5322 = vmatpush1.bf16.msra.mxu0 %v5069
    %5323 = vmatprep.subr.bf16.mxu0 %v5074
    %5324 = vmatpush1.bf16.msra.mxu0 %v5073
    %5325 = vmatprep.subr.bf16.mxu0 %v5078
    %5326 = vmatpush1.bf16.msra.mxu0 %v5077
    %5327 = vmatprep.subr.bf16.mxu0 %v5082
    %5328 = vmatpush1.bf16.msra.mxu0 %v5081
    %5329 = vmatprep.subr.bf16.mxu0 %v5086
    %5330 = vmatpush1.bf16.msra.mxu0 %v5085
    %5331 = vmatprep.subr.bf16.mxu0 %v5090
    %5332 = vmatpush1.bf16.msra.mxu0 %v5089
    %5333 = vmatprep.subr.bf16.mxu0 %v5094
    %5334 = vmatpush1.bf16.msra.mxu0 %v5093
    %5335 = vmatprep.subr.bf16.mxu0 %v5098
    %5336 = vmatpush1.bf16.msra.mxu0 %v5097
    %5337 = vmatprep.subr.bf16.mxu0 %v5102
    %5338 = vmatpush1.bf16.msra.mxu0 %v5101
    %5339 = vmatprep.subr.bf16.mxu0 %v5106
    %5340 = vmatpush1.bf16.msra.mxu0 %v5105
    %5341 = vmatprep.subr.bf16.mxu0 %v5110
    %5342 = vmatpush1.bf16.msra.mxu0 %v5109
    %5343 = vmatprep.subr.bf16.mxu0 %v5114
    %5344 = vmatpush1.bf16.msra.mxu0 %v5113
    %5345 = vmatprep.subr.bf16.mxu0 %v5118
    %5346 = vmatpush1.bf16.msra.mxu0 %v5117
    %5347 = vmatprep.subr.bf16.mxu0 %v5122
    %5348 = vmatpush1.bf16.msra.mxu0 %v5121
    %5349 = vmatprep.mubr.bf16.mxu0 %v4520
    %5350 = vmatmul.mubr.bf16.gmra.mrb[0].mxu0 %v4519
    %v5351 = vpop.f32.mrb[0].mxu0
    %v5352 = vadd.f32 %v4660, %v5351
    %v5353 = vpop.f32.mrb[0].mxu0
    %v5354 = vadd.f32 %v4664, %v5353
    %v5355 = vpop.f32.mrb[0].mxu0
    %v5356 = vadd.f32 %v4660, %v5355
    %v5357 = vpop.f32.mrb[0].mxu0
    %v5358 = vadd.f32 %v4664, %v5357
    %5359 = vmatprep.mubr.bf16.mxu0 %v4524
    %5360 = vmatmul.mubr.bf16.gmra.mrb[0].mxu0 %v4523
    %v5361 = vpop.f32.mrb[0].mxu0
    %v5362 = vadd.f32 %v4660, %v5361
    %v5363 = vpop.f32.mrb[0].mxu0
    %v5364 = vadd.f32 %v4664, %v5363
    %v5365 = vpop.f32.mrb[0].mxu0
    %v5366 = vadd.f32 %v4660, %v5365
    %v5367 = vpop.f32.mrb[0].mxu0
    %v5368 = vadd.f32 %v4664, %v5367
    %5369 = vdwg.mxu0
    %5370 = vmatprep.subr.bf16.mxu0 %v5126
    %5371 = vmatpush1.bf16.msra.mxu0 %v5125
    %5372 = vmatprep.subr.bf16.mxu0 %v5130
    %5373 = vmatpush1.bf16.msra.mxu0 %v5129
    %5374 = vmatprep.subr.bf16.mxu0 %v5134
    %5375 = vmatpush1.bf16.msra.mxu0 %v5133
    %5376 = vmatprep.subr.bf16.mxu0 %v5138
    %5377 = vmatpush1.bf16.msra.mxu0 %v5137
    %5378 = vmatprep.subr.bf16.mxu0 %v5142
    %5379 = vmatpush1.bf16.msra.mxu0 %v5141
    %5380 = vmatprep.subr.bf16.mxu0 %v5146
    %5381 = vmatpush1.bf16.msra.mxu0 %v5145
    %5382 = vmatprep.subr.bf16.mxu0 %v5150
    %5383 = vmatpush1.bf16.msra.mxu0 %v5149
    %5384 = vmatprep.subr.bf16.mxu0 %v5154
    %5385 = vmatpush1.bf16.msra.mxu0 %v5153
    %5386 = vmatprep.subr.bf16.mxu0 %v5158
    %5387 = vmatpush1.bf16.msra.mxu0 %v5157
    %5388 = vmatprep.subr.bf16.mxu0 %v5162
    %5389 = vmatpush1.bf16.msra.mxu0 %v5161
    %5390 = vmatprep.subr.bf16.mxu0 %v5166
    %5391 = vmatpush1.bf16.msra.mxu0 %v5165
    %5392 = vmatprep.subr.bf16.mxu0 %v5170
    %5393 = vmatpush1.bf16.msra.mxu0 %v5169
    %5394 = vmatprep.subr.bf16.mxu0 %v5174
    %5395 = vmatpush1.bf16.msra.mxu0 %v5173
    %5396 = vmatprep.subr.bf16.mxu0 %v5178
    %5397 = vmatpush1.bf16.msra.mxu0 %v5177
    %5398 = vmatprep.subr.bf16.mxu0 %v5182
    %5399 = vmatpush1.bf16.msra.mxu0 %v5181
    %5400 = vmatprep.subr.bf16.mxu0 %v5186
    %5401 = vmatpush1.bf16.msra.mxu0 %v5185
    %5402 = vmatprep.mubr.bf16.mxu0 %v4522
    %5403 = vmatmul.mubr.bf16.gmra.mrb[0].mxu0 %v4521
    %v5404 = vpop.f32.mrb[0].mxu0
    %v5405 = vadd.f32 %v5352, %v5404
    %v5406 = vpop.f32.mrb[0].mxu0
    %v5407 = vadd.f32 %v5354, %v5406
    %v5408 = vpop.f32.mrb[0].mxu0
    %v5409 = vadd.f32 %v5356, %v5408
    %v5410 = vpop.f32.mrb[0].mxu0
    %v5411 = vadd.f32 %v5358, %v5410
    %5412 = vmatprep.mubr.bf16.mxu0 %v4526
    %5413 = vmatmul.mubr.bf16.gmra.mrb[0].mxu0 %v4525
    %v5414 = vpop.f32.mrb[0].mxu0
    %v5415 = vadd.f32 %v5362, %v5414
    %v5416 = vpop.f32.mrb[0].mxu0
    %v5417 = vadd.f32 %v5364, %v5416
    %v5418 = vpop.f32.mrb[0].mxu0
    %v5419 = vadd.f32 %v5366, %v5418
    %v5420 = vpop.f32.mrb[0].mxu0
    %v5421 = vadd.f32 %v5368, %v5420
    %5422 = vdwg.mxu0
    %5423 = vmatprep.subr.bf16.mxu0 %v5064
    %5424 = vmatpush1.bf16.msra.mxu0 %v5063
    %5425 = vmatprep.subr.bf16.mxu0 %v5068
    %5426 = vmatpush1.bf16.msra.mxu0 %v5067
    %5427 = vmatprep.subr.bf16.mxu0 %v5072
    %5428 = vmatpush1.bf16.msra.mxu0 %v5071
    %5429 = vmatprep.subr.bf16.mxu0 %v5076
    %5430 = vmatpush1.bf16.msra.mxu0 %v5075
    %5431 = vmatprep.subr.bf16.mxu0 %v5080
    %5432 = vmatpush1.bf16.msra.mxu0 %v5079
    %5433 = vmatprep.subr.bf16.mxu0 %v5084
    %5434 = vmatpush1.bf16.msra.mxu0 %v5083
    %5435 = vmatprep.subr.bf16.mxu0 %v5088
    %5436 = vmatpush1.bf16.msra.mxu0 %v5087
    %5437 = vmatprep.subr.bf16.mxu0 %v5092
    %5438 = vmatpush1.bf16.msra.mxu0 %v5091
    %5439 = vmatprep.subr.bf16.mxu0 %v5096
    %5440 = vmatpush1.bf16.msra.mxu0 %v5095
    %5441 = vmatprep.subr.bf16.mxu0 %v5100
    %5442 = vmatpush1.bf16.msra.mxu0 %v5099
    %5443 = vmatprep.subr.bf16.mxu0 %v5104
    %5444 = vmatpush1.bf16.msra.mxu0 %v5103
    %5445 = vmatprep.subr.bf16.mxu0 %v5108
    %5446 = vmatpush1.bf16.msra.mxu0 %v5107
    %5447 = vmatprep.subr.bf16.mxu0 %v5112
    %5448 = vmatpush1.bf16.msra.mxu0 %v5111
    %5449 = vmatprep.subr.bf16.mxu0 %v5116
    %5450 = vmatpush1.bf16.msra.mxu0 %v5115
    %5451 = vmatprep.subr.bf16.mxu0 %v5120
    %5452 = vmatpush1.bf16.msra.mxu0 %v5119
    %5453 = vmatprep.subr.bf16.mxu0 %v5124
    %5454 = vmatpush1.bf16.msra.mxu0 %v5123
    %5455 = vmatprep.mubr.bf16.mxu0 %v4520
    %5456 = vmatmul.mubr.bf16.gmra.mrb[0].mxu0 %v4519
    %v5457 = vpop.f32.mrb[0].mxu0
    %v5458 = vadd.f32 %v4668, %v5457
    %v5459 = vpop.f32.mrb[0].mxu0
    %v5460 = vadd.f32 %v4672, %v5459
    %v5461 = vpop.f32.mrb[0].mxu0
    %v5462 = vadd.f32 %v4668, %v5461
    %v5463 = vpop.f32.mrb[0].mxu0
    %v5464 = vadd.f32 %v4672, %v5463
    %5465 = vmatprep.mubr.bf16.mxu0 %v4524
    %5466 = vmatmul.mubr.bf16.gmra.mrb[0].mxu0 %v4523
    %v5467 = vpop.f32.mrb[0].mxu0
    %v5468 = vadd.f32 %v4668, %v5467
    %v5469 = vpop.f32.mrb[0].mxu0
    %v5470 = vadd.f32 %v4672, %v5469
    %v5471 = vpop.f32.mrb[0].mxu0
    %v5472 = vadd.f32 %v4668, %v5471
    %v5473 = vpop.f32.mrb[0].mxu0
    %v5474 = vadd.f32 %v4672, %v5473
    %5475 = vdwg.mxu0
    %5476 = vmatprep.subr.bf16.mxu0 %v5128
    %5477 = vmatpush1.bf16.msra.mxu0 %v5127
    %5478 = vmatprep.subr.bf16.mxu0 %v5132
    %5479 = vmatpush1.bf16.msra.mxu0 %v5131
    %5480 = vmatprep.subr.bf16.mxu0 %v5136
    %5481 = vmatpush1.bf16.msra.mxu0 %v5135
    %5482 = vmatprep.subr.bf16.mxu0 %v5140
    %5483 = vmatpush1.bf16.msra.mxu0 %v5139
    %5484 = vmatprep.subr.bf16.mxu0 %v5144
    %5485 = vmatpush1.bf16.msra.mxu0 %v5143
    %5486 = vmatprep.subr.bf16.mxu0 %v5148
    %5487 = vmatpush1.bf16.msra.mxu0 %v5147
    %5488 = vmatprep.subr.bf16.mxu0 %v5152
    %5489 = vmatpush1.bf16.msra.mxu0 %v5151
    %5490 = vmatprep.subr.bf16.mxu0 %v5156
    %5491 = vmatpush1.bf16.msra.mxu0 %v5155
    %5492 = vmatprep.subr.bf16.mxu0 %v5160
    %5493 = vmatpush1.bf16.msra.mxu0 %v5159
    %5494 = vmatprep.subr.bf16.mxu0 %v5164
    %5495 = vmatpush1.bf16.msra.mxu0 %v5163
    %5496 = vmatprep.subr.bf16.mxu0 %v5168
    %5497 = vmatpush1.bf16.msra.mxu0 %v5167
    %5498 = vmatprep.subr.bf16.mxu0 %v5172
    %5499 = vmatpush1.bf16.msra.mxu0 %v5171
    %5500 = vmatprep.subr.bf16.mxu0 %v5176
    %5501 = vmatpush1.bf16.msra.mxu0 %v5175
    %5502 = vmatprep.subr.bf16.mxu0 %v5180
    %5503 = vmatpush1.bf16.msra.mxu0 %v5179
    %5504 = vmatprep.subr.bf16.mxu0 %v5184
    %5505 = vmatpush1.bf16.msra.mxu0 %v5183
    %5506 = vmatprep.subr.bf16.mxu0 %v5188
    %5507 = vmatpush1.bf16.msra.mxu0 %v5187
    %5508 = vmatprep.mubr.bf16.mxu0 %v4522
    %5509 = vmatmul.mubr.bf16.gmra.mrb[0].mxu0 %v4521
    %v5510 = vpop.f32.mrb[0].mxu0
    %v5511 = vadd.f32 %v5458, %v5510
    %v5512 = vpop.f32.mrb[0].mxu0
    %v5513 = vadd.f32 %v5460, %v5512
    %v5514 = vpop.f32.mrb[0].mxu0
    %v5515 = vadd.f32 %v5462, %v5514
    %v5516 = vpop.f32.mrb[0].mxu0
    %v5517 = vadd.f32 %v5464, %v5516
    %5518 = vmatprep.mubr.bf16.mxu0 %v4526
    %5519 = vmatmul.mubr.bf16.gmra.mrb[0].mxu0 %v4525
    %v5520 = vpop.f32.mrb[0].mxu0
    %v5521 = vadd.f32 %v5468, %v5520
    %v5522 = vpop.f32.mrb[0].mxu0
    %v5523 = vadd.f32 %v5470, %v5522
    %v5524 = vpop.f32.mrb[0].mxu0
    %v5525 = vadd.f32 %v5472, %v5524
    %v5526 = vpop.f32.mrb[0].mxu0
    %v5527 = vadd.f32 %v5474, %v5526
    %5528 = vdwg.mxu0
    %v5529 = vmax.f32 %v5405, 0.0
    %v5530 = vmax.f32 %v5407, 0.0
    %v5531 = vmax.f32 %v5511, 0.0
    %v5532 = vmax.f32 %v5513, 0.0
    %v5533 = vmax.f32 %v5409, 0.0
    %v5534 = vmax.f32 %v5411, 0.0
    %v5535 = vmax.f32 %v5515, 0.0
    %v5536 = vmax.f32 %v5517, 0.0
    %v5537 = vmax.f32 %v5415, 0.0
    %v5538 = vmax.f32 %v5417, 0.0
    %v5539 = vmax.f32 %v5521, 0.0
    %v5540 = vmax.f32 %v5523, 0.0
    %v5541 = vmax.f32 %v5419, 0.0
    %v5542 = vmax.f32 %v5421, 0.0
    %v5543 = vmax.f32 %v5525, 0.0
    %v5544 = vmax.f32 %v5527, 0.0
    %v5545 = vpack.c.bf16 %v5533, %v5529
    %v5546 = vpack.c.bf16 %v5534, %v5530
    %v5547 = vpack.c.bf16 %v5535, %v5531
    %v5548 = vpack.c.bf16 %v5536, %v5532
    %v5549 = vpack.c.bf16 %v5541, %v5537
    %v5550 = vpack.c.bf16 %v5542, %v5538
    %v5551 = vpack.c.bf16 %v5543, %v5539
    %v5552 = vpack.c.bf16 %v5544, %v5540
    %v5561 = vunpack.c.l.b16 %v5545
    %v5562 = vunpack.c.l.b16 %v5546
    %v5563 = vunpack.c.l.b16 %v5547
    %v5564 = vunpack.c.l.b16 %v5548
    %v5565 = vunpack.c.h.b16 %v5545
    %v5566 = vunpack.c.h.b16 %v5546
    %v5567 = vunpack.c.h.b16 %v5547
    %v5568 = vunpack.c.h.b16 %v5548
    %v5569 = vunpack.c.l.b16 %v5549
    %v5570 = vunpack.c.l.b16 %v5550
    %v5571 = vunpack.c.l.b16 %v5551
    %v5572 = vunpack.c.l.b16 %v5552
    %v5573 = vunpack.c.h.b16 %v5549
    %v5574 = vunpack.c.h.b16 %v5550
    %v5575 = vunpack.c.h.b16 %v5551
    %v5576 = vunpack.c.h.b16 %v5552
    %v5577 = vpack.c.b16 %v5562, %v5561
    %v5578 = vpack.c.b16 %v5564, %v5563
    %v5579 = vpack.c.b16 %v5566, %v5565
    %v5580 = vpack.c.b16 %v5568, %v5567
    %v5581 = vpack.c.b16 %v5570, %v5569
    %v5582 = vpack.c.b16 %v5572, %v5571
    %v5583 = vpack.c.b16 %v5574, %v5573
    %v5584 = vpack.c.b16 %v5576, %v5575
    %5593 = vst [vmem:[#allocation13] sm:$0xff] %v5577
    %5594 = vst [vmem:[#allocation13 + $0x8] sm:$0xff] %v5578
    %5595 = vst [vmem:[#allocation13 + $0x10] sm:$0xff] %v5579
    %5596 = vst [vmem:[#allocation13 + $0x18] sm:$0xff] %v5580
    %5597 = vst [vmem:[#allocation13 + $0x20] sm:$0xff] %v5581
    %5598 = vst [vmem:[#allocation13 + $0x28] sm:$0xff] %v5582
    %5599 = vst [vmem:[#allocation13 + $0x30] sm:$0xff] %v5583
    %5600 = vst [vmem:[#allocation13 + $0x38] sm:$0xff] %v5584
    // Predicated region
    $region62: #{tpu_custom_call.1} parent=1 // pred_check
      _
    $region63: #{tpu_custom_call.1} parent=1 // pred_check_branch
      %5602 = sbr.rel (0) target = $region65
    $region64: #{tpu_custom_call.1} parent=1 // pred_region
      %s5604 = ssub.s32 1024, 1024
      %5605 = vsyncadd [#allocation4], %s5604
      %s5606 = sshll.u32 [#allocation13], 4
      %s5607 = int_to_ptr.vmem [resolvable:$true] %s5606
      %5612 = dma.vmem_to_hbm [thread:$0]  %s5607, 1024, %s9, [#allocation4], 256, 256, 16
    $region65: #{tpu_custom_call.1} parent=1 // pred_fallthru
      _
    // Predicated region
    $region66: #{tpu_custom_call.1} parent=1 // pred_check
      _
    $region67: #{tpu_custom_call.1} parent=1 // pred_check_branch
      %5614 = sbr.rel (0) target = $region69
    $region68: #{tpu_custom_call.1} parent=1 // pred_region
      %5615 = dma.done [#allocation4], 1024
    $region69: #{tpu_custom_call.1} parent=1 // pred_fallthru
      _
    %5616 = vsyncpa [#allocation3], 1
    %5617 = vsyncpa [#allocation6], 1
    %5618 = vsyncpa [#allocation9], 1
    %5619 = vsyncpa [#allocation12], 1
    %5620 = vsyncpa [#allocation4], 1

</llo_original>
